<compile_context>
chip_gen: v7x
topology: tpu7x:2x2x1
jax: 0.10.0
libtpu: 0.0.40
codegen_flags: <defaults>
</compile_context>

<pallas_src>
import jax
import jax.numpy as jnp
from jax.experimental import pallas as pl
from jax.experimental.pallas import tpu as pltpu

# --- module constants (from neuralnets.py) ---
N_OF_FRAMES = 750
GLOBAL_FEATURES_SIZE = 1
INPUT_SIZE = 188

LANE = 128   # TPU lane width (last dim)
SUB = 8      # TPU sublane width (second-to-last dim)


def _round_up(x, m):
    return (x + m - 1) // m * m


# ------------------------------ fused TCN kernel ------------------------------

def _make_tcn_kernel(block_meta, t_pad, hist, t_last, c_max):
    """Build the fused TemporalConvNet kernel.

    block_meta: tuple of (dilation, cin_pad, cout_pad, has_downsample) per block
                (static Python metadata baked into the trace).
    Activations live in VMEM scratches with `hist` leading zero rows so the
    causal dilated tap h[t - d] is a plain ref slice at row offset hist - d.
    """
    n_params = sum(8 if has_ds else 6 for (_, _, _, has_ds) in block_meta)
    n_blocks = len(block_meta)
    t_base = (t_last // SUB) * SUB   # aligned 8-row slab containing the last frame

    def kernel(*refs):
        x_ref = refs[0]                           # (hist + t_pad, c0_pad)
        params = refs[1:1 + n_params]
        o_ref = refs[1 + n_params]                # (SUB, c_last_pad)
        scr_a, scr_b, scr_h = refs[2 + n_params:5 + n_params]

        # Zero the "time < 0" history rows once per batch element; shifted
        # reads below pick these up for t < dilation (causal zero padding).
        zeros_hist = jnp.zeros((hist, c_max), jnp.float32)
        scr_a[0:hist, :] = zeros_hist
        scr_b[0:hist, :] = zeros_hist
        scr_h[0:hist, :] = zeros_hist

        def window(ref, row0, ncols):
            # (t_pad, ncols) view of a padded activation, starting at row0.
            return ref[pl.ds(row0, t_pad), pl.ds(0, ncols)]

        act_scr = (scr_a, scr_b)
        in_ref = x_ref
        pi = 0
        for bi, (d, cin, cout, has_ds) in enumerate(block_meta):
            w1_0 = params[pi][...]; w1_1 = params[pi + 1][...]; b1 = params[pi + 2][...]
            w2_0 = params[pi + 3][...]; w2_1 = params[pi + 4][...]; b2 = params[pi + 5][...]
            pi += 6
            if has_ds:
                wd = params[pi][...]; bd = params[pi + 1][...]
                pi += 2

            x_sh = window(in_ref, hist - d, cin)   # x[t - d] (zeros for t < d)
            x_cu = window(in_ref, hist, cin)       # x[t]

            # conv1 (kernel_size=2, dilated, causal) + ReLU.  K is padded to a
            # multiple of 128, so each tap is a full-depth MXU pass.
            h1 = jnp.dot(x_sh, w1_0, preferred_element_type=jnp.float32)
            h1 = h1 + jnp.dot(x_cu, w1_1, preferred_element_type=jnp.float32)
            h1 = jnp.maximum(h1 + b1, 0.0)

            # conv2 needs h1[t - d]: stage h1 in a history-padded VMEM scratch
            # and re-read at the shifted offset (history rows are zero).
            scr_h[pl.ds(hist, t_pad), pl.ds(0, cout)] = h1
            h1_sh = window(scr_h, hist - d, cout)

            h2 = jnp.dot(h1_sh, w2_0, preferred_element_type=jnp.float32)
            h2 = h2 + jnp.dot(h1, w2_1, preferred_element_type=jnp.float32)
            h2 = jnp.maximum(h2 + b2, 0.0)

            # residual path: 1x1 downsample conv when channels differ, else identity.
            if has_ds:
                res = jnp.dot(x_cu, wd, preferred_element_type=jnp.float32) + bd
            else:
                res = x_cu
            hout = jnp.maximum(h2 + res, 0.0)

            if bi == n_blocks - 1:
                # Only the last frame feeds the linear head: emit the lane-dense,
                # sublane-aligned 8-row slab that contains it.
                o_ref[...] = hout[t_base:t_base + SUB, :]
            else:
                out_scr = act_scr[bi % 2]          # ping-pong across blocks
                out_scr[pl.ds(hist, t_pad), pl.ds(0, cout)] = hout
                in_ref = out_scr

    return kernel, n_params


# ------------------------------ wrapper ------------------------------

def tcn_forward(local_f, global_f, padded_blocks, lin_w, lin_b):
    """Matches TCN.forward: reshape -> TemporalConvNet -> last frame -> concat
    global features -> linear.  The whole TemporalConvNet is one pallas_call."""
    B = local_f.shape[0]
    T = N_OF_FRAMES
    C0 = INPUT_SIZE

    c0_pad = _round_up(C0, LANE)
    t_pad = _round_up(T, SUB)
    n_blocks = len(padded_blocks)
    hist = _round_up(max(2 ** (n_blocks - 1), SUB), SUB)   # >= max dilation, x8 aligned
    t_last = T - 1
    t_base = (t_last // SUB) * SUB

    # (B, C, T) NCW -> (B, T, C) channels-last; pad channels to 128 lanes and
    # time to (hist zero history rows) + multiple-of-8 frames.
    x = local_f.reshape((-1, C0, T))
    x = jnp.transpose(x, (0, 2, 1))
    x = jnp.pad(x, ((0, 0), (hist, t_pad - T), (0, c0_pad - C0)))

    # Flatten padded block params + static per-block metadata.
    block_meta = []
    flat_params = []
    cin_pad = c0_pad
    for i, blk in enumerate(padded_blocks):
        cout_pad = blk["w1_0"].shape[1]
        has_ds = "wd" in blk
        block_meta.append((2 ** i, cin_pad, cout_pad, has_ds))
        flat_params += [blk["w1_0"], blk["w1_1"], blk["b1"],
                        blk["w2_0"], blk["w2_1"], blk["b2"]]
        if has_ds:
            flat_params += [blk["wd"], blk["bd"]]
        cin_pad = cout_pad
    c_last_pad = cin_pad
    c_max = max(c0_pad, max(m[2] for m in block_meta))

    kernel, n_params = _make_tcn_kernel(tuple(block_meta), t_pad, hist, t_last, c_max)
    assert n_params == len(flat_params)

    in_specs = [pl.BlockSpec((None, hist + t_pad, c0_pad), lambda b: (b, 0, 0))]
    in_specs += [pl.BlockSpec(p.shape, lambda b: (0, 0)) for p in flat_params]

    y_slab = pl.pallas_call(
        kernel,
        out_shape=jax.ShapeDtypeStruct((B, SUB, c_last_pad), jnp.float32),
        grid_spec=pltpu.PrefetchScalarGridSpec(
            num_scalar_prefetch=0,
            grid=(B,),
            in_specs=in_specs,
            out_specs=pl.BlockSpec((None, SUB, c_last_pad), lambda b: (b, 0, 0)),
            scratch_shapes=[
                pltpu.VMEM((hist + t_pad, c_max), jnp.float32),  # block activations (ping)
                pltpu.VMEM((hist + t_pad, c_max), jnp.float32),  # block activations (pong)
                pltpu.VMEM((hist + t_pad, c_max), jnp.float32),  # h1 staging for dilated tap
            ],
        ),
        compiler_params=pltpu.CompilerParams(
            dimension_semantics=("parallel",),      # batches split across TCs on megacore
            vmem_limit_bytes=32 * 1024 * 1024,
        ),
    )(x, *flat_params)

    # last-frame features (drop channel padding) + global features -> linear head.
    c_last = lin_w.shape[0] - GLOBAL_FEATURES_SIZE
    y_last = y_slab[:, t_last - t_base, :c_last]               # == y1[:, :, -1]
    lin_in = jnp.concatenate([y_last, global_f], axis=1)
    # TODO(synk): head is only (B, 33) @ (33, 4); a pallas_call would cost more in
    # launch overhead than the matmul, so it stays in plain jnp per review.
    return lin_in @ lin_w + lin_b


# ------------------------------ params ------------------------------

def init_params(key, input_size, output_size, num_channels):
    # Deterministic synthetic init (normal(0, 0.01), matching init_weights spirit).
    def nrm(k, shape):
        return 0.01 * jax.random.normal(k, shape, jnp.float32)

    params = {"blocks": []}
    cin = input_size
    for cout in num_channels:
        key, k0, k1, k2, k3, k4, k5, k6, k7 = jax.random.split(key, 9)
        blk = {
            "w1_0": nrm(k0, (cin, cout)),   # conv1 weight tap at t - dilation
            "w1_1": nrm(k1, (cin, cout)),   # conv1 weight tap at t
            "b1": nrm(k2, (1, cout)),
            "w2_0": nrm(k3, (cout, cout)),
            "w2_1": nrm(k4, (cout, cout)),
            "b2": nrm(k5, (1, cout)),
        }
        if cin != cout:                     # 1x1 downsample conv on the residual path
            blk["wd"] = nrm(k6, (cin, cout))
            blk["bd"] = nrm(k7, (1, cout))
        params["blocks"].append(blk)
        cin = cout
    key, kw, kb = jax.random.split(key, 3)
    params["lin_w"] = nrm(kw, (cin + GLOBAL_FEATURES_SIZE, output_size))
    params["lin_b"] = nrm(kb, (1, output_size))
    return params


def _pad2(a, rows, cols):
    return jnp.pad(a, ((0, rows - a.shape[0]), (0, cols - a.shape[1])))


def pad_block_params(blocks):
    """Zero-pad all channel dims to multiples of 128 (lane-dense, full-depth MXU).
    Zero padding keeps the padded lanes exactly zero through ReLU / residuals."""
    padded = []
    for blk in blocks:
        cin, cout = blk["w1_0"].shape
        cin_p, cout_p = _round_up(cin, LANE), _round_up(cout, LANE)
        p = {
            "w1_0": _pad2(blk["w1_0"], cin_p, cout_p),
            "w1_1": _pad2(blk["w1_1"], cin_p, cout_p),
            "b1": _pad2(blk["b1"], 1, cout_p),
            "w2_0": _pad2(blk["w2_0"], cout_p, cout_p),
            "w2_1": _pad2(blk["w2_1"], cout_p, cout_p),
            "b2": _pad2(blk["b2"], 1, cout_p),
        }
        if "wd" in blk:
            p["wd"] = _pad2(blk["wd"], cin_p, cout_p)
            p["bd"] = _pad2(blk["bd"], 1, cout_p)
        padded.append(p)
    return padded


# ------------------------------ pure-JAX reference ------------------------------

def _shift_right(x, d):
    # causal shift along time: y[:, t, :] = x[:, t-d, :], zeros for t < d
    return jnp.pad(x, ((0, 0), (d, 0), (0, 0)))[:, : x.shape[1], :]


def ref_forward(local_f, global_f, params):
    x = jnp.transpose(local_f.reshape((-1, INPUT_SIZE, N_OF_FRAMES)), (0, 2, 1))
    for i, blk in enumerate(params["blocks"]):
        d = 2 ** i
        xp = _shift_right(x, d)
        h1 = jax.nn.relu(xp @ blk["w1_0"] + x @ blk["w1_1"] + blk["b1"])
        h1p = _shift_right(h1, d)
        h2 = jax.nn.relu(h1p @ blk["w2_0"] + h1 @ blk["w2_1"] + blk["b2"])
        res = (x @ blk["wd"] + blk["bd"]) if "wd" in blk else x
        x = jax.nn.relu(h2 + res)
    lin_in = jnp.concatenate([x[:, -1, :], global_f], axis=1)
    return lin_in @ params["lin_w"] + params["lin_b"]


if __name__ == "__main__":
    B = 2
    num_channels = [32, 32]   # two temporal blocks, dilations 1 and 2
    output_size = 4

    key = jax.random.PRNGKey(0)
    kp, kx, kg = jax.random.split(key, 3)
    params = init_params(kp, INPUT_SIZE, output_size, num_channels)
    padded_blocks = pad_block_params(params["blocks"])

    # forward expects (local_f, global_f); local_f is flattened per sample and
    # reshaped to (B, input_size, N_OF_FRAMES) inside forward.
    local_f = jax.random.normal(kx, (B, INPUT_SIZE * N_OF_FRAMES), jnp.float32)
    global_f = jax.random.normal(kg, (B, GLOBAL_FEATURES_SIZE), jnp.float32)

    out = jax.jit(tcn_forward)(local_f, global_f, padded_blocks,
                               params["lin_w"], params["lin_b"])
    out = jax.block_until_ready(out)
    assert out.shape == (B, output_size), out.shape

    ref = ref_forward(local_f, global_f, params)
    assert jnp.allclose(out, ref, atol=1e-4, rtol=1e-4), (out, ref)

    print("KERNEL_OK")
</pallas_src>

<mosaic_0001>
module attributes {stable_mosaic.version = 11 : i64} {
  func.func @kernel(%arg0: i32, %arg1: memref<1x760x256xf32, #tpu.memory_space<vmem>>, %arg2: memref<256x128xf32, #tpu.memory_space<vmem>>, %arg3: memref<256x128xf32, #tpu.memory_space<vmem>>, %arg4: memref<1x128xf32, #tpu.memory_space<vmem>>, %arg5: memref<128x128xf32, #tpu.memory_space<vmem>>, %arg6: memref<128x128xf32, #tpu.memory_space<vmem>>, %arg7: memref<1x128xf32, #tpu.memory_space<vmem>>, %arg8: memref<256x128xf32, #tpu.memory_space<vmem>>, %arg9: memref<1x128xf32, #tpu.memory_space<vmem>>, %arg10: memref<128x128xf32, #tpu.memory_space<vmem>>, %arg11: memref<128x128xf32, #tpu.memory_space<vmem>>, %arg12: memref<1x128xf32, #tpu.memory_space<vmem>>, %arg13: memref<128x128xf32, #tpu.memory_space<vmem>>, %arg14: memref<128x128xf32, #tpu.memory_space<vmem>>, %arg15: memref<1x128xf32, #tpu.memory_space<vmem>>, %arg16: memref<1x8x128xf32, #tpu.memory_space<vmem>>, %arg17: memref<760x256xf32, #tpu.memory_space<vmem>>, %arg18: memref<760x256xf32, #tpu.memory_space<vmem>>, %arg19: memref<760x256xf32, #tpu.memory_space<vmem>>) attributes {dimension_semantics = [#tpu.dimension_semantics<parallel>], iteration_bounds = array<i64: 2>, scalar_prefetch = 0 : i64, scratch_operands = 3 : i64, tpu.core_type = #tpu.core_type<tc>, window_params = [{transform_indices = @transform_0, window_bounds = array<i64: 1, 760, 256>}, {pipeline_mode = #tpu.pipeline_mode<synchronous>, transform_indices = @transform_1, window_bounds = array<i64: 256, 128>}, {pipeline_mode = #tpu.pipeline_mode<synchronous>, transform_indices = @transform_2, window_bounds = array<i64: 256, 128>}, {pipeline_mode = #tpu.pipeline_mode<synchronous>, transform_indices = @transform_3, window_bounds = array<i64: 1, 128>}, {pipeline_mode = #tpu.pipeline_mode<synchronous>, transform_indices = @transform_4, window_bounds = array<i64: 128, 128>}, {pipeline_mode = #tpu.pipeline_mode<synchronous>, transform_indices = @transform_5, window_bounds = array<i64: 128, 128>}, {pipeline_mode = #tpu.pipeline_mode<synchronous>, transform_indices = @transform_6, window_bounds = array<i64: 1, 128>}, {pipeline_mode = #tpu.pipeline_mode<synchronous>, transform_indices = @transform_7, window_bounds = array<i64: 256, 128>}, {pipeline_mode = #tpu.pipeline_mode<synchronous>, transform_indices = @transform_8, window_bounds = array<i64: 1, 128>}, {pipeline_mode = #tpu.pipeline_mode<synchronous>, transform_indices = @transform_9, window_bounds = array<i64: 128, 128>}, {pipeline_mode = #tpu.pipeline_mode<synchronous>, transform_indices = @transform_10, window_bounds = array<i64: 128, 128>}, {pipeline_mode = #tpu.pipeline_mode<synchronous>, transform_indices = @transform_11, window_bounds = array<i64: 1, 128>}, {pipeline_mode = #tpu.pipeline_mode<synchronous>, transform_indices = @transform_12, window_bounds = array<i64: 128, 128>}, {pipeline_mode = #tpu.pipeline_mode<synchronous>, transform_indices = @transform_13, window_bounds = array<i64: 128, 128>}, {pipeline_mode = #tpu.pipeline_mode<synchronous>, transform_indices = @transform_14, window_bounds = array<i64: 1, 128>}, {transform_indices = @transform_15, window_bounds = array<i64: 1, 8, 128>}]} {
    %cst = arith.constant 0.000000e+00 : f32
    %0 = vector.broadcast %cst : f32 to vector<8x256xf32>
    %c0 = arith.constant 0 : index
    %c0_0 = arith.constant 0 : index
    %1 = vector.load %arg17[%c0, %c0_0] : memref<760x256xf32, #tpu.memory_space<vmem>>, vector<8x256xf32>
    tpu.vector_store %arg17[%c0, %c0_0], %0 {strides = array<i32>} : memref<760x256xf32, #tpu.memory_space<vmem>>, vector<8x256xf32>,
    %c0_1 = arith.constant 0 : index
    %c0_2 = arith.constant 0 : index
    %2 = vector.load %arg18[%c0_1, %c0_2] : memref<760x256xf32, #tpu.memory_space<vmem>>, vector<8x256xf32>
    tpu.vector_store %arg18[%c0_1, %c0_2], %0 {strides = array<i32>} : memref<760x256xf32, #tpu.memory_space<vmem>>, vector<8x256xf32>,
    %c0_3 = arith.constant 0 : index
    %c0_4 = arith.constant 0 : index
    %3 = vector.load %arg19[%c0_3, %c0_4] : memref<760x256xf32, #tpu.memory_space<vmem>>, vector<8x256xf32>
    tpu.vector_store %arg19[%c0_3, %c0_4], %0 {strides = array<i32>} : memref<760x256xf32, #tpu.memory_space<vmem>>, vector<8x256xf32>,
    %c0_5 = arith.constant 0 : index
    %c0_6 = arith.constant 0 : index
    %4 = vector.load %arg2[%c0_5, %c0_6] : memref<256x128xf32, #tpu.memory_space<vmem>>, vector<256x128xf32>
    %c0_7 = arith.constant 0 : index
    %c0_8 = arith.constant 0 : index
    %5 = vector.load %arg3[%c0_7, %c0_8] : memref<256x128xf32, #tpu.memory_space<vmem>>, vector<256x128xf32>
    %c0_9 = arith.constant 0 : index
    %c0_10 = arith.constant 0 : index
    %6 = vector.load %arg4[%c0_9, %c0_10] : memref<1x128xf32, #tpu.memory_space<vmem>>, vector<1x128xf32>
    %c0_11 = arith.constant 0 : index
    %c0_12 = arith.constant 0 : index
    %7 = vector.load %arg5[%c0_11, %c0_12] : memref<128x128xf32, #tpu.memory_space<vmem>>, vector<128x128xf32>
    %c0_13 = arith.constant 0 : index
    %c0_14 = arith.constant 0 : index
    %8 = vector.load %arg6[%c0_13, %c0_14] : memref<128x128xf32, #tpu.memory_space<vmem>>, vector<128x128xf32>
    %c0_15 = arith.constant 0 : index
    %c0_16 = arith.constant 0 : index
    %9 = vector.load %arg7[%c0_15, %c0_16] : memref<1x128xf32, #tpu.memory_space<vmem>>, vector<1x128xf32>
    %c0_17 = arith.constant 0 : index
    %c0_18 = arith.constant 0 : index
    %10 = vector.load %arg8[%c0_17, %c0_18] : memref<256x128xf32, #tpu.memory_space<vmem>>, vector<256x128xf32>
    %c0_19 = arith.constant 0 : index
    %c0_20 = arith.constant 0 : index
    %11 = vector.load %arg9[%c0_19, %c0_20] : memref<1x128xf32, #tpu.memory_space<vmem>>, vector<1x128xf32>
    %c0_21 = arith.constant 0 : index
    %c7 = arith.constant 7 : index
    %c0_22 = arith.constant 0 : index
    %12 = vector.load %arg1[%c0_21, %c7, %c0_22] : memref<1x760x256xf32, #tpu.memory_space<vmem>>, vector<1x752x256xf32>
    %13 = vector.shape_cast %12 : vector<1x752x256xf32> to vector<752x256xf32>
    %c0_23 = arith.constant 0 : index
    %c8 = arith.constant 8 : index
    %c0_24 = arith.constant 0 : index
    %14 = vector.load %arg1[%c0_23, %c8, %c0_24] : memref<1x760x256xf32, #tpu.memory_space<vmem>>, vector<1x752x256xf32>
    %15 = vector.shape_cast %14 : vector<1x752x256xf32> to vector<752x256xf32>
    %cst_25 = arith.constant dense<0.000000e+00> : vector<752x128xf32>
    %16 = tpu.matmul %13, %4, %cst_25 {dimension_numbers = #tpu.dot_dimension_numbers<[1], [0], [0], [1], [0, 0, 1, 1], [], []>} : vector<752x256xf32>, vector<256x128xf32>, vector<752x128xf32> -> vector<752x128xf32>
    %cst_26 = arith.constant dense<0.000000e+00> : vector<752x128xf32>
    %17 = tpu.matmul %15, %5, %cst_26 {dimension_numbers = #tpu.dot_dimension_numbers<[1], [0], [0], [1], [0, 0, 1, 1], [], []>} : vector<752x256xf32>, vector<256x128xf32>, vector<752x128xf32> -> vector<752x128xf32>
    %18 = arith.addf %16, %17 : vector<752x128xf32>
    %19 = vector.broadcast %6 : vector<1x128xf32> to vector<752x128xf32>
    %20 = arith.addf %18, %19 : vector<752x128xf32>
    %cst_27 = arith.constant 0.000000e+00 : f32
    %21 = vector.broadcast %cst_27 : f32 to vector<752x128xf32>
    %22 = arith.maximumf %20, %21 : vector<752x128xf32>
    %c8_28 = arith.constant 8 : index
    %c0_29 = arith.constant 0 : index
    %23 = vector.load %arg19[%c8_28, %c0_29] : memref<760x256xf32, #tpu.memory_space<vmem>>, vector<752x128xf32>
    tpu.vector_store %arg19[%c8_28, %c0_29], %22 {strides = array<i32>} : memref<760x256xf32, #tpu.memory_space<vmem>>, vector<752x128xf32>,
    %c7_30 = arith.constant 7 : index
    %c0_31 = arith.constant 0 : index
    %24 = vector.load %arg19[%c7_30, %c0_31] : memref<760x256xf32, #tpu.memory_space<vmem>>, vector<752x128xf32>
    %cst_32 = arith.constant dense<0.000000e+00> : vector<752x128xf32>
    %25 = tpu.matmul %24, %7, %cst_32 {dimension_numbers = #tpu.dot_dimension_numbers<[1], [0], [0], [1], [0, 0, 1, 1], [], []>} : vector<752x128xf32>, vector<128x128xf32>, vector<752x128xf32> -> vector<752x128xf32>
    %cst_33 = arith.constant dense<0.000000e+00> : vector<752x128xf32>
    %26 = tpu.matmul %22, %8, %cst_33 {dimension_numbers = #tpu.dot_dimension_numbers<[1], [0], [0], [1], [0, 0, 1, 1], [], []>} : vector<752x128xf32>, vector<128x128xf32>, vector<752x128xf32> -> vector<752x128xf32>
    %27 = arith.addf %25, %26 : vector<752x128xf32>
    %28 = vector.broadcast %9 : vector<1x128xf32> to vector<752x128xf32>
    %29 = arith.addf %27, %28 : vector<752x128xf32>
    %cst_34 = arith.constant 0.000000e+00 : f32
    %30 = vector.broadcast %cst_34 : f32 to vector<752x128xf32>
    %31 = arith.maximumf %29, %30 : vector<752x128xf32>
    %cst_35 = arith.constant dense<0.000000e+00> : vector<752x128xf32>
    %32 = tpu.matmul %15, %10, %cst_35 {dimension_numbers = #tpu.dot_dimension_numbers<[1], [0], [0], [1], [0, 0, 1, 1], [], []>} : vector<752x256xf32>, vector<256x128xf32>, vector<752x128xf32> -> vector<752x128xf32>
    %33 = vector.broadcast %11 : vector<1x128xf32> to vector<752x128xf32>
    %34 = arith.addf %32, %33 : vector<752x128xf32>
    %35 = arith.addf %31, %34 : vector<752x128xf32>
    %cst_36 = arith.constant 0.000000e+00 : f32
    %36 = vector.broadcast %cst_36 : f32 to vector<752x128xf32>
    %37 = arith.maximumf %35, %36 : vector<752x128xf32>
    %c8_37 = arith.constant 8 : index
    %c0_38 = arith.constant 0 : index
    %38 = vector.load %arg17[%c8_37, %c0_38] : memref<760x256xf32, #tpu.memory_space<vmem>>, vector<752x128xf32>
    tpu.vector_store %arg17[%c8_37, %c0_38], %37 {strides = array<i32>} : memref<760x256xf32, #tpu.memory_space<vmem>>, vector<752x128xf32>,
    %c0_39 = arith.constant 0 : index
    %c0_40 = arith.constant 0 : index
    %39 = vector.load %arg10[%c0_39, %c0_40] : memref<128x128xf32, #tpu.memory_space<vmem>>, vector<128x128xf32>
    %c0_41 = arith.constant 0 : index
    %c0_42 = arith.constant 0 : index
    %40 = vector.load %arg11[%c0_41, %c0_42] : memref<128x128xf32, #tpu.memory_space<vmem>>, vector<128x128xf32>
    %c0_43 = arith.constant 0 : index
    %c0_44 = arith.constant 0 : index
    %41 = vector.load %arg12[%c0_43, %c0_44] : memref<1x128xf32, #tpu.memory_space<vmem>>, vector<1x128xf32>
    %c0_45 = arith.constant 0 : index
    %c0_46 = arith.constant 0 : index
    %42 = vector.load %arg13[%c0_45, %c0_46] : memref<128x128xf32, #tpu.memory_space<vmem>>, vector<128x128xf32>
    %c0_47 = arith.constant 0 : index
    %c0_48 = arith.constant 0 : index
    %43 = vector.load %arg14[%c0_47, %c0_48] : memref<128x128xf32, #tpu.memory_space<vmem>>, vector<128x128xf32>
    %c0_49 = arith.constant 0 : index
    %c0_50 = arith.constant 0 : index
    %44 = vector.load %arg15[%c0_49, %c0_50] : memref<1x128xf32, #tpu.memory_space<vmem>>, vector<1x128xf32>
    %c6 = arith.constant 6 : index
    %c0_51 = arith.constant 0 : index
    %45 = vector.load %arg17[%c6, %c0_51] : memref<760x256xf32, #tpu.memory_space<vmem>>, vector<752x128xf32>
    %c8_52 = arith.constant 8 : index
    %c0_53 = arith.constant 0 : index
    %46 = vector.load %arg17[%c8_52, %c0_53] : memref<760x256xf32, #tpu.memory_space<vmem>>, vector<752x128xf32>
    %cst_54 = arith.constant dense<0.000000e+00> : vector<752x128xf32>
    %47 = tpu.matmul %45, %39, %cst_54 {dimension_numbers = #tpu.dot_dimension_numbers<[1], [0], [0], [1], [0, 0, 1, 1], [], []>} : vector<752x128xf32>, vector<128x128xf32>, vector<752x128xf32> -> vector<752x128xf32>
    %cst_55 = arith.constant dense<0.000000e+00> : vector<752x128xf32>
    %48 = tpu.matmul %46, %40, %cst_55 {dimension_numbers = #tpu.dot_dimension_numbers<[1], [0], [0], [1], [0, 0, 1, 1], [], []>} : vector<752x128xf32>, vector<128x128xf32>, vector<752x128xf32> -> vector<752x128xf32>
    %49 = arith.addf %47, %48 : vector<752x128xf32>
    %50 = vector.broadcast %41 : vector<1x128xf32> to vector<752x128xf32>
    %51 = arith.addf %49, %50 : vector<752x128xf32>
    %cst_56 = arith.constant 0.000000e+00 : f32
    %52 = vector.broadcast %cst_56 : f32 to vector<752x128xf32>
    %53 = arith.maximumf %51, %52 : vector<752x128xf32>
    %c8_57 = arith.constant 8 : index
    %c0_58 = arith.constant 0 : index
    %54 = vector.load %arg19[%c8_57, %c0_58] : memref<760x256xf32, #tpu.memory_space<vmem>>, vector<752x128xf32>
    tpu.vector_store %arg19[%c8_57, %c0_58], %53 {strides = array<i32>} : memref<760x256xf32, #tpu.memory_space<vmem>>, vector<752x128xf32>,
    %c6_59 = arith.constant 6 : index
    %c0_60 = arith.constant 0 : index
    %55 = vector.load %arg19[%c6_59, %c0_60] : memref<760x256xf32, #tpu.memory_space<vmem>>, vector<752x128xf32>
    %cst_61 = arith.constant dense<0.000000e+00> : vector<752x128xf32>
    %56 = tpu.matmul %55, %42, %cst_61 {dimension_numbers = #tpu.dot_dimension_numbers<[1], [0], [0], [1], [0, 0, 1, 1], [], []>} : vector<752x128xf32>, vector<128x128xf32>, vector<752x128xf32> -> vector<752x128xf32>
    %cst_62 = arith.constant dense<0.000000e+00> : vector<752x128xf32>
    %57 = tpu.matmul %53, %43, %cst_62 {dimension_numbers = #tpu.dot_dimension_numbers<[1], [0], [0], [1], [0, 0, 1, 1], [], []>} : vector<752x128xf32>, vector<128x128xf32>, vector<752x128xf32> -> vector<752x128xf32>
    %58 = arith.addf %56, %57 : vector<752x128xf32>
    %59 = vector.broadcast %44 : vector<1x128xf32> to vector<752x128xf32>
    %60 = arith.addf %58, %59 : vector<752x128xf32>
    %cst_63 = arith.constant 0.000000e+00 : f32
    %61 = vector.broadcast %cst_63 : f32 to vector<752x128xf32>
    %62 = arith.maximumf %60, %61 : vector<752x128xf32>
    %63 = arith.addf %62, %46 : vector<752x128xf32>
    %cst_64 = arith.constant 0.000000e+00 : f32
    %64 = vector.broadcast %cst_64 : f32 to vector<752x128xf32>
    %65 = arith.maximumf %63, %64 : vector<752x128xf32>
    %66 = vector.extract_strided_slice %65 {offsets = [744, 0], sizes = [8, 128], strides = [1, 1]} : vector<752x128xf32> to vector<8x128xf32>
    %c0_65 = arith.constant 0 : index
    %c0_66 = arith.constant 0 : index
    %c0_67 = arith.constant 0 : index
    %67 = vector.load %arg16[%c0_65, %c0_66, %c0_67] : memref<1x8x128xf32, #tpu.memory_space<vmem>>, vector<1x8x128xf32>
    %68 = vector.shape_cast %67 : vector<1x8x128xf32> to vector<8x128xf32>
    %69 = vector.shape_cast %66 : vector<8x128xf32> to vector<1x8x128xf32>
    tpu.vector_store %arg16[%c0_65, %c0_66, %c0_67], %69 {strides = array<i32>} : memref<1x8x128xf32, #tpu.memory_space<vmem>>, vector<1x8x128xf32>,
    return
  }
  func.func @transform_0(%arg0: i32) -> (i32, i32, i32) {
    %c0_i32 = arith.constant 0 : i32
    %c0_i32_0 = arith.constant 0 : i32
    %c0_i32_1 = arith.constant 0 : i32
    return %arg0, %c0_i32, %c0_i32_0 : i32, i32, i32
  }
  func.func @transform_1(%arg0: i32) -> (i32, i32) {
    %c0_i32 = arith.constant 0 : i32
    %c0_i32_0 = arith.constant 0 : i32
    %c0_i32_1 = arith.constant 0 : i32
    return %c0_i32, %c0_i32_0 : i32, i32
  }
  func.func @transform_2(%arg0: i32) -> (i32, i32) {
    %c0_i32 = arith.constant 0 : i32
    %c0_i32_0 = arith.constant 0 : i32
    %c0_i32_1 = arith.constant 0 : i32
    return %c0_i32, %c0_i32_0 : i32, i32
  }
  func.func @transform_3(%arg0: i32) -> (i32, i32) {
    %c0_i32 = arith.constant 0 : i32
    %c0_i32_0 = arith.constant 0 : i32
    %c0_i32_1 = arith.constant 0 : i32
    return %c0_i32, %c0_i32_0 : i32, i32
  }
  func.func @transform_4(%arg0: i32) -> (i32, i32) {
    %c0_i32 = arith.constant 0 : i32
    %c0_i32_0 = arith.constant 0 : i32
    %c0_i32_1 = arith.constant 0 : i32
    return %c0_i32, %c0_i32_0 : i32, i32
  }
  func.func @transform_5(%arg0: i32) -> (i32, i32) {
    %c0_i32 = arith.constant 0 : i32
    %c0_i32_0 = arith.constant 0 : i32
    %c0_i32_1 = arith.constant 0 : i32
    return %c0_i32, %c0_i32_0 : i32, i32
  }
  func.func @transform_6(%arg0: i32) -> (i32, i32) {
    %c0_i32 = arith.constant 0 : i32
    %c0_i32_0 = arith.constant 0 : i32
    %c0_i32_1 = arith.constant 0 : i32
    return %c0_i32, %c0_i32_0 : i32, i32
  }
  func.func @transform_7(%arg0: i32) -> (i32, i32) {
    %c0_i32 = arith.constant 0 : i32
    %c0_i32_0 = arith.constant 0 : i32
    %c0_i32_1 = arith.constant 0 : i32
    return %c0_i32, %c0_i32_0 : i32, i32
  }
  func.func @transform_8(%arg0: i32) -> (i32, i32) {
    %c0_i32 = arith.constant 0 : i32
    %c0_i32_0 = arith.constant 0 : i32
    %c0_i32_1 = arith.constant 0 : i32
    return %c0_i32, %c0_i32_0 : i32, i32
  }
  func.func @transform_9(%arg0: i32) -> (i32, i32) {
    %c0_i32 = arith.constant 0 : i32
    %c0_i32_0 = arith.constant 0 : i32
    %c0_i32_1 = arith.constant 0 : i32
    return %c0_i32, %c0_i32_0 : i32, i32
  }
  func.func @transform_10(%arg0: i32) -> (i32, i32) {
    %c0_i32 = arith.constant 0 : i32
    %c0_i32_0 = arith.constant 0 : i32
    %c0_i32_1 = arith.constant 0 : i32
    return %c0_i32, %c0_i32_0 : i32, i32
  }
  func.func @transform_11(%arg0: i32) -> (i32, i32) {
    %c0_i32 = arith.constant 0 : i32
    %c0_i32_0 = arith.constant 0 : i32
    %c0_i32_1 = arith.constant 0 : i32
    return %c0_i32, %c0_i32_0 : i32, i32
  }
  func.func @transform_12(%arg0: i32) -> (i32, i32) {
    %c0_i32 = arith.constant 0 : i32
    %c0_i32_0 = arith.constant 0 : i32
    %c0_i32_1 = arith.constant 0 : i32
    return %c0_i32, %c0_i32_0 : i32, i32
  }
  func.func @transform_13(%arg0: i32) -> (i32, i32) {
    %c0_i32 = arith.constant 0 : i32
    %c0_i32_0 = arith.constant 0 : i32
    %c0_i32_1 = arith.constant 0 : i32
    return %c0_i32, %c0_i32_0 : i32, i32
  }
  func.func @transform_14(%arg0: i32) -> (i32, i32) {
    %c0_i32 = arith.constant 0 : i32
    %c0_i32_0 = arith.constant 0 : i32
    %c0_i32_1 = arith.constant 0 : i32
    return %c0_i32, %c0_i32_0 : i32, i32
  }
  func.func @transform_15(%arg0: i32) -> (i32, i32, i32) {
    %c0_i32 = arith.constant 0 : i32
    %c0_i32_0 = arith.constant 0 : i32
    %c0_i32_1 = arith.constant 0 : i32
    return %arg0, %c0_i32, %c0_i32_0 : i32, i32, i32
  }
}

</mosaic_0001>

<llo_original>
// kernel: tcn_forward.1
$region0: #{tcn_forward.1}
  #allocation0 [shape = 'u32[]', space=smem, size = 0x4, offset = 0x4, fixed_abs, tag = 'smem constant byte address 0x4 - core index']
  #allocation1 [shape = 'u32[144,128]{1,0:T(1,128)}', space=vmem, size = 0x12000, scoped, tag = 'internal scratch']
  #allocation2 [shape = 'f32[760,256]{1,0:T(8,128)}', space=vmem, size = 0xbe000, scoped, tag = 'scratch operand']
  #allocation3 [shape = 'f32[760,256]{1,0:T(8,128)}', space=vmem, size = 0xbe000, scoped, tag = 'scratch operand']
  #allocation4 [shape = 'f32[760,256]{1,0:T(8,128)}', space=vmem, size = 0xbe000, scoped, tag = 'scratch operand']
  %s0 = inlined_call_operand.vmem [shape: f32[2,760,256], index: 0, kind: input, shape index: {}]
  %s1 = inlined_call_operand.vmem [shape: f32[256,128], index: 1, kind: input, shape index: {}]
  %s2 = inlined_call_operand.vmem [shape: f32[256,128], index: 2, kind: input, shape index: {}]
  %s3 = inlined_call_operand.vmem [shape: f32[1,128], index: 3, kind: input, shape index: {}]
  %s4 = inlined_call_operand.vmem [shape: f32[128,128], index: 4, kind: input, shape index: {}]
  %s5 = inlined_call_operand.vmem [shape: f32[128,128], index: 5, kind: input, shape index: {}]
  %s6 = inlined_call_operand.vmem [shape: f32[1,128], index: 6, kind: input, shape index: {}]
  %s7 = inlined_call_operand.vmem [shape: f32[256,128], index: 7, kind: input, shape index: {}]
  %s8 = inlined_call_operand.vmem [shape: f32[1,128], index: 8, kind: input, shape index: {}]
  %s9 = inlined_call_operand.vmem [shape: f32[128,128], index: 9, kind: input, shape index: {}]
  %s10 = inlined_call_operand.vmem [shape: f32[128,128], index: 10, kind: input, shape index: {}]
  %s11 = inlined_call_operand.vmem [shape: f32[1,128], index: 11, kind: input, shape index: {}]
  %s12 = inlined_call_operand.vmem [shape: f32[128,128], index: 12, kind: input, shape index: {}]
  %s13 = inlined_call_operand.vmem [shape: f32[128,128], index: 13, kind: input, shape index: {}]
  %s14 = inlined_call_operand.vmem [shape: f32[1,128], index: 14, kind: input, shape index: {}]
  %s15 = inlined_call_operand.vmem [shape: f32[2,8,128], index: 15, kind: output, shape index: {}]
  %s16 = sld [smem:[#allocation0]]
  $region93: #{tcn_forward.1} parent=0
    _
  %s18 = ssub.s32 1, %s16
  %s19 = scalar_select 0, %s18, %s16
  loop: start=0, step=1, limit=4
  $region2: #{tcn_forward.1} parent=0 // loop_pre_header
    _
  $region3: #{tcn_forward.1} parent=0 // loop_header
    %s21 = sphi 0, %s25
    %p22 = scmp.ge.s32.totalorder %s21, 4
    %s31 = sphi 0, %s33
    %s34 = sphi 0, %s31
    %s35 = sphi 0, %s34
    %s51 = sphi 0, %s35
    %s55 = sphi 0, %s55
    %s57 = sphi 0, %s55
    %s58 = sphi 0, %s57
    %s72 = sphi 0, %s58
    %s76 = sphi 0, %s76
    %s78 = sphi 0, %s76
    %s79 = sphi 0, %s78
    %s93 = sphi 0, %s79
    %s97 = sphi 0, %s97
    %s99 = sphi 0, %s97
    %s100 = sphi 0, %s99
    %s114 = sphi 0, %s100
    %s118 = sphi 0, %s118
    %s120 = sphi 0, %s118
    %s121 = sphi 0, %s120
    %s135 = sphi 0, %s121
    %s139 = sphi 0, %s139
    %s141 = sphi 0, %s139
    %s142 = sphi 0, %s141
    %s156 = sphi 0, %s142
    %s160 = sphi 0, %s160
    %s162 = sphi 0, %s160
    %s163 = sphi 0, %s162
    %s177 = sphi 0, %s163
    %s181 = sphi 0, %s181
    %s183 = sphi 0, %s181
    %s184 = sphi 0, %s183
    %s198 = sphi 0, %s184
    %s202 = sphi 0, %s202
    %s204 = sphi 0, %s202
    %s205 = sphi 0, %s204
    %s219 = sphi 0, %s205
    %s223 = sphi 0, %s223
    %s225 = sphi 0, %s223
    %s226 = sphi 0, %s225
    %s240 = sphi 0, %s226
    %s244 = sphi 0, %s244
    %s246 = sphi 0, %s244
    %s247 = sphi 0, %s246
    %s261 = sphi 0, %s247
    %s265 = sphi 0, %s265
    %s267 = sphi 0, %s265
    %s268 = sphi 0, %s267
    %s282 = sphi 0, %s268
    %s286 = sphi 0, %s286
    %s288 = sphi 0, %s286
    %s289 = sphi 0, %s288
    %s303 = sphi 0, %s289
    %s307 = sphi 0, %s307
    %s309 = sphi 0, %s307
    %s310 = sphi 0, %s309
    %s324 = sphi 0, %s310
    %s328 = sphi 0, %s328
    %s330 = sphi 0, %s328
    %s331 = sphi 0, %s330
    %s345 = sphi 0, %s331
    %s351 = sphi 0, %s353
    %s354 = sphi 0, %s351
    %s355 = sphi 0, %s354
    %s371 = sphi 0, %s355
  $region4: #{tcn_forward.1} parent=0 // loop_header_branch
    %24 = sbr.rel (%p22) target = $region8
  $region5: #{tcn_forward.1} parent=0 // loop_body
    %s26 = ssub.s32 %s21, 1
    %s27 = ssub.s32 %s21, 2
    %s28 = sadd.s32 %s21, 1
    %s29 = ssub.s32 %s21, %s28
    %p30 = scmp.eq.s32.totalorder %s29, 0
    %s32 = sadd.s32 %s31, 1
    %s33 = scalar_select %p30, %s31, %s32
    %p36 = pneg %p30
    %p37 = scmp.eq.s32.totalorder %s21, 1
    %p38 = por %p36, %p37
    %p39 = scmp.ne.s32.totalorder %s31, %s34
    %p40 = scmp.eq.s32.totalorder %s21, 0
    %p41 = por %p39, %p40
    %p42 = scmp.ne.s32.totalorder %s31, %s34
    %p43 = scmp.eq.s32.totalorder %s26, 1
    %p44 = por %p42, %p43
    %p45 = scmp.ne.s32.totalorder %s34, %s35
    %p46 = scmp.eq.s32.totalorder %s26, 0
    %p47 = por %p45, %p46
    %p48 = scmp.ne.s32.totalorder %s34, %s35
    %p49 = scmp.eq.s32.totalorder %s27, 1
    %p50 = por %p48, %p49
    %p52 = scmp.ne.s32.totalorder %s35, %s51
    %p53 = scmp.eq.s32.totalorder %s27, 0
    %p54 = por %p52, %p53
    %s56 = sadd.s32 %s55, 1
    %p59 = scmp.eq.s32.totalorder %s21, 1
    %p60 = scmp.ne.s32.totalorder %s55, %s57
    %p61 = scmp.eq.s32.totalorder %s21, 0
    %p62 = por %p60, %p61
    %p63 = scmp.ne.s32.totalorder %s55, %s57
    %p64 = scmp.eq.s32.totalorder %s26, 1
    %p65 = por %p63, %p64
    %p66 = scmp.ne.s32.totalorder %s57, %s58
    %p67 = scmp.eq.s32.totalorder %s26, 0
    %p68 = por %p66, %p67
    %p69 = scmp.ne.s32.totalorder %s57, %s58
    %p70 = scmp.eq.s32.totalorder %s27, 1
    %p71 = por %p69, %p70
    %p73 = scmp.ne.s32.totalorder %s58, %s72
    %p74 = scmp.eq.s32.totalorder %s27, 0
    %p75 = por %p73, %p74
    %s77 = sadd.s32 %s76, 1
    %p80 = scmp.eq.s32.totalorder %s21, 1
    %p81 = scmp.ne.s32.totalorder %s76, %s78
    %p82 = scmp.eq.s32.totalorder %s21, 0
    %p83 = por %p81, %p82
    %p84 = scmp.ne.s32.totalorder %s76, %s78
    %p85 = scmp.eq.s32.totalorder %s26, 1
    %p86 = por %p84, %p85
    %p87 = scmp.ne.s32.totalorder %s78, %s79
    %p88 = scmp.eq.s32.totalorder %s26, 0
    %p89 = por %p87, %p88
    %p90 = scmp.ne.s32.totalorder %s78, %s79
    %p91 = scmp.eq.s32.totalorder %s27, 1
    %p92 = por %p90, %p91
    %p94 = scmp.ne.s32.totalorder %s79, %s93
    %p95 = scmp.eq.s32.totalorder %s27, 0
    %p96 = por %p94, %p95
    %s98 = sadd.s32 %s97, 1
    %p101 = scmp.eq.s32.totalorder %s21, 1
    %p102 = scmp.ne.s32.totalorder %s97, %s99
    %p103 = scmp.eq.s32.totalorder %s21, 0
    %p104 = por %p102, %p103
    %p105 = scmp.ne.s32.totalorder %s97, %s99
    %p106 = scmp.eq.s32.totalorder %s26, 1
    %p107 = por %p105, %p106
    %p108 = scmp.ne.s32.totalorder %s99, %s100
    %p109 = scmp.eq.s32.totalorder %s26, 0
    %p110 = por %p108, %p109
    %p111 = scmp.ne.s32.totalorder %s99, %s100
    %p112 = scmp.eq.s32.totalorder %s27, 1
    %p113 = por %p111, %p112
    %p115 = scmp.ne.s32.totalorder %s100, %s114
    %p116 = scmp.eq.s32.totalorder %s27, 0
    %p117 = por %p115, %p116
    %s119 = sadd.s32 %s118, 1
    %p122 = scmp.eq.s32.totalorder %s21, 1
    %p123 = scmp.ne.s32.totalorder %s118, %s120
    %p124 = scmp.eq.s32.totalorder %s21, 0
    %p125 = por %p123, %p124
    %p126 = scmp.ne.s32.totalorder %s118, %s120
    %p127 = scmp.eq.s32.totalorder %s26, 1
    %p128 = por %p126, %p127
    %p129 = scmp.ne.s32.totalorder %s120, %s121
    %p130 = scmp.eq.s32.totalorder %s26, 0
    %p131 = por %p129, %p130
    %p132 = scmp.ne.s32.totalorder %s120, %s121
    %p133 = scmp.eq.s32.totalorder %s27, 1
    %p134 = por %p132, %p133
    %p136 = scmp.ne.s32.totalorder %s121, %s135
    %p137 = scmp.eq.s32.totalorder %s27, 0
    %p138 = por %p136, %p137
    %s140 = sadd.s32 %s139, 1
    %p143 = scmp.eq.s32.totalorder %s21, 1
    %p144 = scmp.ne.s32.totalorder %s139, %s141
    %p145 = scmp.eq.s32.totalorder %s21, 0
    %p146 = por %p144, %p145
    %p147 = scmp.ne.s32.totalorder %s139, %s141
    %p148 = scmp.eq.s32.totalorder %s26, 1
    %p149 = por %p147, %p148
    %p150 = scmp.ne.s32.totalorder %s141, %s142
    %p151 = scmp.eq.s32.totalorder %s26, 0
    %p152 = por %p150, %p151
    %p153 = scmp.ne.s32.totalorder %s141, %s142
    %p154 = scmp.eq.s32.totalorder %s27, 1
    %p155 = por %p153, %p154
    %p157 = scmp.ne.s32.totalorder %s142, %s156
    %p158 = scmp.eq.s32.totalorder %s27, 0
    %p159 = por %p157, %p158
    %s161 = sadd.s32 %s160, 1
    %p164 = scmp.eq.s32.totalorder %s21, 1
    %p165 = scmp.ne.s32.totalorder %s160, %s162
    %p166 = scmp.eq.s32.totalorder %s21, 0
    %p167 = por %p165, %p166
    %p168 = scmp.ne.s32.totalorder %s160, %s162
    %p169 = scmp.eq.s32.totalorder %s26, 1
    %p170 = por %p168, %p169
    %p171 = scmp.ne.s32.totalorder %s162, %s163
    %p172 = scmp.eq.s32.totalorder %s26, 0
    %p173 = por %p171, %p172
    %p174 = scmp.ne.s32.totalorder %s162, %s163
    %p175 = scmp.eq.s32.totalorder %s27, 1
    %p176 = por %p174, %p175
    %p178 = scmp.ne.s32.totalorder %s163, %s177
    %p179 = scmp.eq.s32.totalorder %s27, 0
    %p180 = por %p178, %p179
    %s182 = sadd.s32 %s181, 1
    %p185 = scmp.eq.s32.totalorder %s21, 1
    %p186 = scmp.ne.s32.totalorder %s181, %s183
    %p187 = scmp.eq.s32.totalorder %s21, 0
    %p188 = por %p186, %p187
    %p189 = scmp.ne.s32.totalorder %s181, %s183
    %p190 = scmp.eq.s32.totalorder %s26, 1
    %p191 = por %p189, %p190
    %p192 = scmp.ne.s32.totalorder %s183, %s184
    %p193 = scmp.eq.s32.totalorder %s26, 0
    %p194 = por %p192, %p193
    %p195 = scmp.ne.s32.totalorder %s183, %s184
    %p196 = scmp.eq.s32.totalorder %s27, 1
    %p197 = por %p195, %p196
    %p199 = scmp.ne.s32.totalorder %s184, %s198
    %p200 = scmp.eq.s32.totalorder %s27, 0
    %p201 = por %p199, %p200
    %s203 = sadd.s32 %s202, 1
    %p206 = scmp.eq.s32.totalorder %s21, 1
    %p207 = scmp.ne.s32.totalorder %s202, %s204
    %p208 = scmp.eq.s32.totalorder %s21, 0
    %p209 = por %p207, %p208
    %p210 = scmp.ne.s32.totalorder %s202, %s204
    %p211 = scmp.eq.s32.totalorder %s26, 1
    %p212 = por %p210, %p211
    %p213 = scmp.ne.s32.totalorder %s204, %s205
    %p214 = scmp.eq.s32.totalorder %s26, 0
    %p215 = por %p213, %p214
    %p216 = scmp.ne.s32.totalorder %s204, %s205
    %p217 = scmp.eq.s32.totalorder %s27, 1
    %p218 = por %p216, %p217
    %p220 = scmp.ne.s32.totalorder %s205, %s219
    %p221 = scmp.eq.s32.totalorder %s27, 0
    %p222 = por %p220, %p221
    %s224 = sadd.s32 %s223, 1
    %p227 = scmp.eq.s32.totalorder %s21, 1
    %p228 = scmp.ne.s32.totalorder %s223, %s225
    %p229 = scmp.eq.s32.totalorder %s21, 0
    %p230 = por %p228, %p229
    %p231 = scmp.ne.s32.totalorder %s223, %s225
    %p232 = scmp.eq.s32.totalorder %s26, 1
    %p233 = por %p231, %p232
    %p234 = scmp.ne.s32.totalorder %s225, %s226
    %p235 = scmp.eq.s32.totalorder %s26, 0
    %p236 = por %p234, %p235
    %p237 = scmp.ne.s32.totalorder %s225, %s226
    %p238 = scmp.eq.s32.totalorder %s27, 1
    %p239 = por %p237, %p238
    %p241 = scmp.ne.s32.totalorder %s226, %s240
    %p242 = scmp.eq.s32.totalorder %s27, 0
    %p243 = por %p241, %p242
    %s245 = sadd.s32 %s244, 1
    %p248 = scmp.eq.s32.totalorder %s21, 1
    %p249 = scmp.ne.s32.totalorder %s244, %s246
    %p250 = scmp.eq.s32.totalorder %s21, 0
    %p251 = por %p249, %p250
    %p252 = scmp.ne.s32.totalorder %s244, %s246
    %p253 = scmp.eq.s32.totalorder %s26, 1
    %p254 = por %p252, %p253
    %p255 = scmp.ne.s32.totalorder %s246, %s247
    %p256 = scmp.eq.s32.totalorder %s26, 0
    %p257 = por %p255, %p256
    %p258 = scmp.ne.s32.totalorder %s246, %s247
    %p259 = scmp.eq.s32.totalorder %s27, 1
    %p260 = por %p258, %p259
    %p262 = scmp.ne.s32.totalorder %s247, %s261
    %p263 = scmp.eq.s32.totalorder %s27, 0
    %p264 = por %p262, %p263
    %s266 = sadd.s32 %s265, 1
    %p269 = scmp.eq.s32.totalorder %s21, 1
    %p270 = scmp.ne.s32.totalorder %s265, %s267
    %p271 = scmp.eq.s32.totalorder %s21, 0
    %p272 = por %p270, %p271
    %p273 = scmp.ne.s32.totalorder %s265, %s267
    %p274 = scmp.eq.s32.totalorder %s26, 1
    %p275 = por %p273, %p274
    %p276 = scmp.ne.s32.totalorder %s267, %s268
    %p277 = scmp.eq.s32.totalorder %s26, 0
    %p278 = por %p276, %p277
    %p279 = scmp.ne.s32.totalorder %s267, %s268
    %p280 = scmp.eq.s32.totalorder %s27, 1
    %p281 = por %p279, %p280
    %p283 = scmp.ne.s32.totalorder %s268, %s282
    %p284 = scmp.eq.s32.totalorder %s27, 0
    %p285 = por %p283, %p284
    %s287 = sadd.s32 %s286, 1
    %p290 = scmp.eq.s32.totalorder %s21, 1
    %p291 = scmp.ne.s32.totalorder %s286, %s288
    %p292 = scmp.eq.s32.totalorder %s21, 0
    %p293 = por %p291, %p292
    %p294 = scmp.ne.s32.totalorder %s286, %s288
    %p295 = scmp.eq.s32.totalorder %s26, 1
    %p296 = por %p294, %p295
    %p297 = scmp.ne.s32.totalorder %s288, %s289
    %p298 = scmp.eq.s32.totalorder %s26, 0
    %p299 = por %p297, %p298
    %p300 = scmp.ne.s32.totalorder %s288, %s289
    %p301 = scmp.eq.s32.totalorder %s27, 1
    %p302 = por %p300, %p301
    %p304 = scmp.ne.s32.totalorder %s289, %s303
    %p305 = scmp.eq.s32.totalorder %s27, 0
    %p306 = por %p304, %p305
    %s308 = sadd.s32 %s307, 1
    %p311 = scmp.eq.s32.totalorder %s21, 1
    %p312 = scmp.ne.s32.totalorder %s307, %s309
    %p313 = scmp.eq.s32.totalorder %s21, 0
    %p314 = por %p312, %p313
    %p315 = scmp.ne.s32.totalorder %s307, %s309
    %p316 = scmp.eq.s32.totalorder %s26, 1
    %p317 = por %p315, %p316
    %p318 = scmp.ne.s32.totalorder %s309, %s310
    %p319 = scmp.eq.s32.totalorder %s26, 0
    %p320 = por %p318, %p319
    %p321 = scmp.ne.s32.totalorder %s309, %s310
    %p322 = scmp.eq.s32.totalorder %s27, 1
    %p323 = por %p321, %p322
    %p325 = scmp.ne.s32.totalorder %s310, %s324
    %p326 = scmp.eq.s32.totalorder %s27, 0
    %p327 = por %p325, %p326
    %s329 = sadd.s32 %s328, 1
    %p332 = scmp.eq.s32.totalorder %s21, 1
    %p333 = scmp.ne.s32.totalorder %s328, %s330
    %p334 = scmp.eq.s32.totalorder %s21, 0
    %p335 = por %p333, %p334
    %p336 = scmp.ne.s32.totalorder %s328, %s330
    %p337 = scmp.eq.s32.totalorder %s26, 1
    %p338 = por %p336, %p337
    %p339 = scmp.ne.s32.totalorder %s330, %s331
    %p340 = scmp.eq.s32.totalorder %s26, 0
    %p341 = por %p339, %p340
    %p342 = scmp.ne.s32.totalorder %s330, %s331
    %p343 = scmp.eq.s32.totalorder %s27, 1
    %p344 = por %p342, %p343
    %p346 = scmp.ne.s32.totalorder %s331, %s345
    %p347 = scmp.eq.s32.totalorder %s27, 0
    %p348 = por %p346, %p347
    %s349 = ssub.s32 %s21, %s28
    %p350 = scmp.eq.s32.totalorder %s349, 0
    %s352 = sadd.s32 %s351, 1
    %s353 = scalar_select %p350, %s351, %s352
    %p356 = pneg %p350
    %p357 = scmp.eq.s32.totalorder %s21, 1
    %p358 = por %p356, %p357
    %p359 = scmp.ne.s32.totalorder %s351, %s354
    %p360 = scmp.eq.s32.totalorder %s21, 0
    %p361 = por %p359, %p360
    %p362 = scmp.ne.s32.totalorder %s351, %s354
    %p363 = scmp.eq.s32.totalorder %s26, 1
    %p364 = por %p362, %p363
    %p365 = scmp.ne.s32.totalorder %s354, %s355
    %p366 = scmp.eq.s32.totalorder %s26, 0
    %p367 = por %p365, %p366
    %p368 = scmp.ne.s32.totalorder %s354, %s355
    %p369 = scmp.eq.s32.totalorder %s27, 1
    %p370 = por %p368, %p369
    %p372 = scmp.ne.s32.totalorder %s355, %s371
    %p373 = scmp.eq.s32.totalorder %s27, 0
    %p374 = por %p372, %p373
    %p375 = scmp.le.s32.totalorder 1, %s21
    %p376 = scmp.lt.s32.totalorder %s21, 3
    %p377 = pnand %p375, %p376
    %p378 = pneg %p377
    // Predicated region
    $region9: #{tcn_forward.1} parent=5 // pred_check
      _
    $region10: #{tcn_forward.1} parent=5 // pred_check_branch
      %380 = sbr.rel (%p377) target = $region12
    $region11: #{tcn_forward.1} parent=5 // pred_region
      %s381 = ssub.s32 %s21, 1
      // Predicated region
      $region13: #{tcn_forward.1} parent=11 // pred_check
        %p382 = pneg %p68
      $region14: #{tcn_forward.1} parent=11 // pred_check_branch
        %384 = sbr.rel (%p382) target = $region16
      $region15: #{tcn_forward.1} parent=11 // pred_region
        _
      $region16: #{tcn_forward.1} parent=11 // pred_fallthru
        _
      // Predicated region
      $region17: #{tcn_forward.1} parent=11 // pred_check
        %p385 = pneg %p89
      $region18: #{tcn_forward.1} parent=11 // pred_check_branch
        %387 = sbr.rel (%p385) target = $region20
      $region19: #{tcn_forward.1} parent=11 // pred_region
        _
      $region20: #{tcn_forward.1} parent=11 // pred_fallthru
        _
      // Predicated region
      $region21: #{tcn_forward.1} parent=11 // pred_check
        %p388 = pneg %p110
      $region22: #{tcn_forward.1} parent=11 // pred_check_branch
        %390 = sbr.rel (%p388) target = $region24
      $region23: #{tcn_forward.1} parent=11 // pred_region
        _
      $region24: #{tcn_forward.1} parent=11 // pred_fallthru
        _
      // Predicated region
      $region25: #{tcn_forward.1} parent=11 // pred_check
        %p391 = pneg %p131
      $region26: #{tcn_forward.1} parent=11 // pred_check_branch
        %393 = sbr.rel (%p391) target = $region28
      $region27: #{tcn_forward.1} parent=11 // pred_region
        _
      $region28: #{tcn_forward.1} parent=11 // pred_fallthru
        _
      // Predicated region
      $region29: #{tcn_forward.1} parent=11 // pred_check
        %p394 = pneg %p152
      $region30: #{tcn_forward.1} parent=11 // pred_check_branch
        %396 = sbr.rel (%p394) target = $region32
      $region31: #{tcn_forward.1} parent=11 // pred_region
        _
      $region32: #{tcn_forward.1} parent=11 // pred_fallthru
        _
      // Predicated region
      $region33: #{tcn_forward.1} parent=11 // pred_check
        %p397 = pneg %p173
      $region34: #{tcn_forward.1} parent=11 // pred_check_branch
        %399 = sbr.rel (%p397) target = $region36
      $region35: #{tcn_forward.1} parent=11 // pred_region
        _
      $region36: #{tcn_forward.1} parent=11 // pred_fallthru
        _
      // Predicated region
      $region37: #{tcn_forward.1} parent=11 // pred_check
        %p400 = pneg %p194
      $region38: #{tcn_forward.1} parent=11 // pred_check_branch
        %402 = sbr.rel (%p400) target = $region40
      $region39: #{tcn_forward.1} parent=11 // pred_region
        _
      $region40: #{tcn_forward.1} parent=11 // pred_fallthru
        _
      // Predicated region
      $region41: #{tcn_forward.1} parent=11 // pred_check
        %p403 = pneg %p215
      $region42: #{tcn_forward.1} parent=11 // pred_check_branch
        %405 = sbr.rel (%p403) target = $region44
      $region43: #{tcn_forward.1} parent=11 // pred_region
        _
      $region44: #{tcn_forward.1} parent=11 // pred_fallthru
        _
      // Predicated region
      $region45: #{tcn_forward.1} parent=11 // pred_check
        %p406 = pneg %p236
      $region46: #{tcn_forward.1} parent=11 // pred_check_branch
        %408 = sbr.rel (%p406) target = $region48
      $region47: #{tcn_forward.1} parent=11 // pred_region
        _
      $region48: #{tcn_forward.1} parent=11 // pred_fallthru
        _
      // Predicated region
      $region49: #{tcn_forward.1} parent=11 // pred_check
        %p409 = pneg %p257
      $region50: #{tcn_forward.1} parent=11 // pred_check_branch
        %411 = sbr.rel (%p409) target = $region52
      $region51: #{tcn_forward.1} parent=11 // pred_region
        _
      $region52: #{tcn_forward.1} parent=11 // pred_fallthru
        _
      // Predicated region
      $region53: #{tcn_forward.1} parent=11 // pred_check
        %p412 = pneg %p278
      $region54: #{tcn_forward.1} parent=11 // pred_check_branch
        %414 = sbr.rel (%p412) target = $region56
      $region55: #{tcn_forward.1} parent=11 // pred_region
        _
      $region56: #{tcn_forward.1} parent=11 // pred_fallthru
        _
      // Predicated region
      $region57: #{tcn_forward.1} parent=11 // pred_check
        %p415 = pneg %p299
      $region58: #{tcn_forward.1} parent=11 // pred_check_branch
        %417 = sbr.rel (%p415) target = $region60
      $region59: #{tcn_forward.1} parent=11 // pred_region
        _
      $region60: #{tcn_forward.1} parent=11 // pred_fallthru
        _
      // Predicated region
      $region61: #{tcn_forward.1} parent=11 // pred_check
        %p418 = pneg %p320
      $region62: #{tcn_forward.1} parent=11 // pred_check_branch
        %420 = sbr.rel (%p418) target = $region64
      $region63: #{tcn_forward.1} parent=11 // pred_region
        _
      $region64: #{tcn_forward.1} parent=11 // pred_fallthru
        _
      // Predicated region
      $region65: #{tcn_forward.1} parent=11 // pred_check
        %p421 = pneg %p341
      $region66: #{tcn_forward.1} parent=11 // pred_check_branch
        %423 = sbr.rel (%p421) target = $region68
      $region67: #{tcn_forward.1} parent=11 // pred_region
        _
      $region68: #{tcn_forward.1} parent=11 // pred_fallthru
        _
    $region12: #{tcn_forward.1} parent=5 // pred_fallthru
      _
    %p424 = scmp.lt.s32.totalorder %s21, 2
    // Predicated region
    $region69: #{tcn_forward.1} parent=5 // pred_check
      %p425 = pneg %p424
    $region70: #{tcn_forward.1} parent=5 // pred_check_branch
      %427 = sbr.rel (%p425) target = $region72
    $region71: #{tcn_forward.1} parent=5 // pred_region
      // Predicated region
      $region73: #{tcn_forward.1} parent=71 // pred_check
        %p428 = pneg %p41
      $region74: #{tcn_forward.1} parent=71 // pred_check_branch
        %430 = sbr.rel (%p428) target = $region76
      $region75: #{tcn_forward.1} parent=71 // pred_region
        %p431 = scmp.lt.s32.totalorder %s21, 1
        %s432 = scalar_select %p431, %s21, 1
        %s433 = smul.addr %s432, 190
        %s434 = smul.addr %s433, 8
        %s435 = scalar_lea.vmem %s0, %s434
      $region76: #{tcn_forward.1} parent=71 // pred_fallthru
        _
    $region72: #{tcn_forward.1} parent=5 // pred_fallthru
      _
    %p436 = scmp.le.s32.totalorder 1, %s21
    %p437 = scmp.lt.s32.totalorder %s21, 3
    %p438 = pnand %p436, %p437
    %p439 = pneg %p438
    // Predicated region
    $region77: #{tcn_forward.1} parent=5 // pred_check
      _
    $region78: #{tcn_forward.1} parent=5 // pred_check_branch
      %441 = sbr.rel (%p438) target = $region80
    $region79: #{tcn_forward.1} parent=5 // pred_region
      %s442 = ssub.s32 %s21, 1
      %p443 = scmp.lt.s32.totalorder %s26, 1
      %s444 = scalar_select %p443, %s26, 1
      %s445 = smul.addr %s444, 190
      %s446 = smul.addr %s445, 8
      %s447 = scalar_lea.vmem %s0, %s446
      %p448 = pneg %p47
      %p449 = pneg %p44
      %p450 = pneg %p68
      %p451 = pneg %p65
      %p452 = pneg %p89
      %p453 = pneg %p86
      %p454 = pneg %p110
      %p455 = pneg %p107
      %p456 = pneg %p131
      %p457 = pneg %p128
      %p458 = pneg %p152
      %p459 = pneg %p149
      %p460 = pneg %p173
      %p461 = pneg %p170
      %p462 = pneg %p194
      %p463 = pneg %p191
      %p464 = pneg %p215
      %p465 = pneg %p212
      %p466 = pneg %p236
      %p467 = pneg %p233
      %p468 = pneg %p257
      %p469 = pneg %p254
      %p470 = pneg %p278
      %p471 = pneg %p275
      %p472 = pneg %p299
      %p473 = pneg %p296
      %p474 = pneg %p320
      %p475 = pneg %p317
      %p476 = pneg %p341
      %p477 = pneg %p338
      %p478 = pneg %p367
      %p479 = pneg %p364
      %p480 = scmp.lt.s32.totalorder %s26, 1
      %s481 = scalar_select %p480, %s26, 1
      %s482 = smul.addr %s481, 8
      %s483 = scalar_lea.vmem %s15, %s482
      %p484 = scmp.lt.s32.totalorder %s26, 1
      %s485 = scalar_select %p484, %s26, 1
      %s486 = smul.addr %s485, 190
      %s487 = smul.addr %s486, 8
      %s488 = scalar_lea.vmem %s0, %s487
      %p489 = scmp.lt.s32.totalorder %s26, 1
      %s490 = scalar_select %p489, %s26, 1
      %s491 = smul.addr %s490, 8
      %s492 = scalar_lea.vmem %s15, %s491
      %493 = vst [vmem:[#allocation2] sm:$0xff] 0.0
      %494 = vst [vmem:[#allocation2 + $0x8] sm:$0xff] 0.0
      %495 = vst [vmem:[#allocation3] sm:$0xff] 0.0
      %496 = vst [vmem:[#allocation3 + $0x8] sm:$0xff] 0.0
      %497 = vst [vmem:[#allocation4] sm:$0xff] 0.0
      %498 = vst [vmem:[#allocation4 + $0x8] sm:$0xff] 0.0
      %v499 = vld [vmem:[%s1] sm:$0xff]
      %v500 = vld [vmem:[%s1 + $0x8] sm:$0xff]
      %v501 = vld [vmem:[%s1 + $0x10] sm:$0xff]
      %v502 = vld [vmem:[%s1 + $0x18] sm:$0xff]
      %v503 = vld [vmem:[%s1 + $0x20] sm:$0xff]
      %v504 = vld [vmem:[%s1 + $0x28] sm:$0xff]
      %v505 = vld [vmem:[%s1 + $0x30] sm:$0xff]
      %v506 = vld [vmem:[%s1 + $0x38] sm:$0xff]
      %v507 = vld [vmem:[%s1 + $0x40] sm:$0xff]
      %v508 = vld [vmem:[%s1 + $0x48] sm:$0xff]
      %v509 = vld [vmem:[%s1 + $0x50] sm:$0xff]
      %v510 = vld [vmem:[%s1 + $0x58] sm:$0xff]
      %v511 = vld [vmem:[%s1 + $0x60] sm:$0xff]
      %v512 = vld [vmem:[%s1 + $0x68] sm:$0xff]
      %v513 = vld [vmem:[%s1 + $0x70] sm:$0xff]
      %v514 = vld [vmem:[%s1 + $0x78] sm:$0xff]
      %v515 = vld [vmem:[%s1 + $0x80] sm:$0xff]
      %v516 = vld [vmem:[%s1 + $0x88] sm:$0xff]
      %v517 = vld [vmem:[%s1 + $0x90] sm:$0xff]
      %v518 = vld [vmem:[%s1 + $0x98] sm:$0xff]
      %v519 = vld [vmem:[%s1 + $0xa0] sm:$0xff]
      %v520 = vld [vmem:[%s1 + $0xa8] sm:$0xff]
      %v521 = vld [vmem:[%s1 + $0xb0] sm:$0xff]
      %v522 = vld [vmem:[%s1 + $0xb8] sm:$0xff]
      %v523 = vld [vmem:[%s1 + $0xc0] sm:$0xff]
      %v524 = vld [vmem:[%s1 + $0xc8] sm:$0xff]
      %v525 = vld [vmem:[%s1 + $0xd0] sm:$0xff]
      %v526 = vld [vmem:[%s1 + $0xd8] sm:$0xff]
      %v527 = vld [vmem:[%s1 + $0xe0] sm:$0xff]
      %v528 = vld [vmem:[%s1 + $0xe8] sm:$0xff]
      %v529 = vld [vmem:[%s1 + $0xf0] sm:$0xff]
      %v530 = vld [vmem:[%s1 + $0xf8] sm:$0xff]
      %v531 = vld [vmem:[%s2] sm:$0xff]
      %v532 = vld [vmem:[%s2 + $0x8] sm:$0xff]
      %v533 = vld [vmem:[%s2 + $0x10] sm:$0xff]
      %v534 = vld [vmem:[%s2 + $0x18] sm:$0xff]
      %v535 = vld [vmem:[%s2 + $0x20] sm:$0xff]
      %v536 = vld [vmem:[%s2 + $0x28] sm:$0xff]
      %v537 = vld [vmem:[%s2 + $0x30] sm:$0xff]
      %v538 = vld [vmem:[%s2 + $0x38] sm:$0xff]
      %v539 = vld [vmem:[%s2 + $0x40] sm:$0xff]
      %v540 = vld [vmem:[%s2 + $0x48] sm:$0xff]
      %v541 = vld [vmem:[%s2 + $0x50] sm:$0xff]
      %v542 = vld [vmem:[%s2 + $0x58] sm:$0xff]
      %v543 = vld [vmem:[%s2 + $0x60] sm:$0xff]
      %v544 = vld [vmem:[%s2 + $0x68] sm:$0xff]
      %v545 = vld [vmem:[%s2 + $0x70] sm:$0xff]
      %v546 = vld [vmem:[%s2 + $0x78] sm:$0xff]
      %v547 = vld [vmem:[%s2 + $0x80] sm:$0xff]
      %v548 = vld [vmem:[%s2 + $0x88] sm:$0xff]
      %v549 = vld [vmem:[%s2 + $0x90] sm:$0xff]
      %v550 = vld [vmem:[%s2 + $0x98] sm:$0xff]
      %v551 = vld [vmem:[%s2 + $0xa0] sm:$0xff]
      %v552 = vld [vmem:[%s2 + $0xa8] sm:$0xff]
      %v553 = vld [vmem:[%s2 + $0xb0] sm:$0xff]
      %v554 = vld [vmem:[%s2 + $0xb8] sm:$0xff]
      %v555 = vld [vmem:[%s2 + $0xc0] sm:$0xff]
      %v556 = vld [vmem:[%s2 + $0xc8] sm:$0xff]
      %v557 = vld [vmem:[%s2 + $0xd0] sm:$0xff]
      %v558 = vld [vmem:[%s2 + $0xd8] sm:$0xff]
      %v559 = vld [vmem:[%s2 + $0xe0] sm:$0xff]
      %v560 = vld [vmem:[%s2 + $0xe8] sm:$0xff]
      %v561 = vld [vmem:[%s2 + $0xf0] sm:$0xff]
      %v562 = vld [vmem:[%s2 + $0xf8] sm:$0xff]
      %v563 = vld [vmem:[%s3] sm:$0x1]
      %v564 = vld [vmem:[%s4] sm:$0xff]
      %v565 = vld [vmem:[%s4 + $0x8] sm:$0xff]
      %v566 = vld [vmem:[%s4 + $0x10] sm:$0xff]
      %v567 = vld [vmem:[%s4 + $0x18] sm:$0xff]
      %v568 = vld [vmem:[%s4 + $0x20] sm:$0xff]
      %v569 = vld [vmem:[%s4 + $0x28] sm:$0xff]
      %v570 = vld [vmem:[%s4 + $0x30] sm:$0xff]
      %v571 = vld [vmem:[%s4 + $0x38] sm:$0xff]
      %v572 = vld [vmem:[%s4 + $0x40] sm:$0xff]
      %v573 = vld [vmem:[%s4 + $0x48] sm:$0xff]
      %v574 = vld [vmem:[%s4 + $0x50] sm:$0xff]
      %v575 = vld [vmem:[%s4 + $0x58] sm:$0xff]
      %v576 = vld [vmem:[%s4 + $0x60] sm:$0xff]
      %v577 = vld [vmem:[%s4 + $0x68] sm:$0xff]
      %v578 = vld [vmem:[%s4 + $0x70] sm:$0xff]
      %v579 = vld [vmem:[%s4 + $0x78] sm:$0xff]
      %v580 = vld [vmem:[%s5] sm:$0xff]
      %v581 = vld [vmem:[%s5 + $0x8] sm:$0xff]
      %v582 = vld [vmem:[%s5 + $0x10] sm:$0xff]
      %v583 = vld [vmem:[%s5 + $0x18] sm:$0xff]
      %v584 = vld [vmem:[%s5 + $0x20] sm:$0xff]
      %v585 = vld [vmem:[%s5 + $0x28] sm:$0xff]
      %v586 = vld [vmem:[%s5 + $0x30] sm:$0xff]
      %v587 = vld [vmem:[%s5 + $0x38] sm:$0xff]
      %v588 = vld [vmem:[%s5 + $0x40] sm:$0xff]
      %v589 = vld [vmem:[%s5 + $0x48] sm:$0xff]
      %v590 = vld [vmem:[%s5 + $0x50] sm:$0xff]
      %v591 = vld [vmem:[%s5 + $0x58] sm:$0xff]
      %v592 = vld [vmem:[%s5 + $0x60] sm:$0xff]
      %v593 = vld [vmem:[%s5 + $0x68] sm:$0xff]
      %v594 = vld [vmem:[%s5 + $0x70] sm:$0xff]
      %v595 = vld [vmem:[%s5 + $0x78] sm:$0xff]
      %v596 = vld [vmem:[%s6] sm:$0x1]
      %v597 = vld [vmem:[%s7] sm:$0xff]
      %v598 = vld [vmem:[%s7 + $0x8] sm:$0xff]
      %v599 = vld [vmem:[%s7 + $0x10] sm:$0xff]
      %v600 = vld [vmem:[%s7 + $0x18] sm:$0xff]
      %v601 = vld [vmem:[%s7 + $0x20] sm:$0xff]
      %v602 = vld [vmem:[%s7 + $0x28] sm:$0xff]
      %v603 = vld [vmem:[%s7 + $0x30] sm:$0xff]
      %v604 = vld [vmem:[%s7 + $0x38] sm:$0xff]
      %v605 = vld [vmem:[%s7 + $0x40] sm:$0xff]
      %v606 = vld [vmem:[%s7 + $0x48] sm:$0xff]
      %v607 = vld [vmem:[%s7 + $0x50] sm:$0xff]
      %v608 = vld [vmem:[%s7 + $0x58] sm:$0xff]
      %v609 = vld [vmem:[%s7 + $0x60] sm:$0xff]
      %v610 = vld [vmem:[%s7 + $0x68] sm:$0xff]
      %v611 = vld [vmem:[%s7 + $0x70] sm:$0xff]
      %v612 = vld [vmem:[%s7 + $0x78] sm:$0xff]
      %v613 = vld [vmem:[%s7 + $0x80] sm:$0xff]
      %v614 = vld [vmem:[%s7 + $0x88] sm:$0xff]
      %v615 = vld [vmem:[%s7 + $0x90] sm:$0xff]
      %v616 = vld [vmem:[%s7 + $0x98] sm:$0xff]
      %v617 = vld [vmem:[%s7 + $0xa0] sm:$0xff]
      %v618 = vld [vmem:[%s7 + $0xa8] sm:$0xff]
      %v619 = vld [vmem:[%s7 + $0xb0] sm:$0xff]
      %v620 = vld [vmem:[%s7 + $0xb8] sm:$0xff]
      %v621 = vld [vmem:[%s7 + $0xc0] sm:$0xff]
      %v622 = vld [vmem:[%s7 + $0xc8] sm:$0xff]
      %v623 = vld [vmem:[%s7 + $0xd0] sm:$0xff]
      %v624 = vld [vmem:[%s7 + $0xd8] sm:$0xff]
      %v625 = vld [vmem:[%s7 + $0xe0] sm:$0xff]
      %v626 = vld [vmem:[%s7 + $0xe8] sm:$0xff]
      %v627 = vld [vmem:[%s7 + $0xf0] sm:$0xff]
      %v628 = vld [vmem:[%s7 + $0xf8] sm:$0xff]
      %v629 = vld [vmem:[%s8] sm:$0x1]
      %v630 = vld [vmem:[%s488] sm:$0x80]
      %v631 = vld [vmem:[%s488 + $0x8] sm:$0x80]
      %v632 = vld [vmem:[%s488 + $0x10] sm:$0xff]
      %v633 = vld [vmem:[%s488 + $0x18] sm:$0xff]
      %v634 = vld [vmem:[%s488 + $0x20] sm:$0xff]
      %v635 = vld [vmem:[%s488 + $0x28] sm:$0xff]
      %v636 = vld [vmem:[%s488 + $0x30] sm:$0xff]
      %v637 = vld [vmem:[%s488 + $0x38] sm:$0xff]
      %v638 = vld [vmem:[%s488 + $0x40] sm:$0xff]
      %v639 = vld [vmem:[%s488 + $0x48] sm:$0xff]
      %v640 = vld [vmem:[%s488 + $0x50] sm:$0xff]
      %v641 = vld [vmem:[%s488 + $0x58] sm:$0xff]
      %v642 = vld [vmem:[%s488 + $0x60] sm:$0xff]
      %v643 = vld [vmem:[%s488 + $0x68] sm:$0xff]
      %v644 = vld [vmem:[%s488 + $0x70] sm:$0xff]
      %v645 = vld [vmem:[%s488 + $0x78] sm:$0xff]
      %v646 = vld [vmem:[%s488 + $0x80] sm:$0xff]
      %v647 = vld [vmem:[%s488 + $0x88] sm:$0xff]
      %v648 = vld [vmem:[%s488 + $0x90] sm:$0xff]
      %v649 = vld [vmem:[%s488 + $0x98] sm:$0xff]
      %v650 = vld [vmem:[%s488 + $0xa0] sm:$0xff]
      %v651 = vld [vmem:[%s488 + $0xa8] sm:$0xff]
      %v652 = vld [vmem:[%s488 + $0xb0] sm:$0xff]
      %v653 = vld [vmem:[%s488 + $0xb8] sm:$0xff]
      %v654 = vld [vmem:[%s488 + $0xc0] sm:$0xff]
      %v655 = vld [vmem:[%s488 + $0xc8] sm:$0xff]
      %v656 = vld [vmem:[%s488 + $0xd0] sm:$0xff]
      %v657 = vld [vmem:[%s488 + $0xd8] sm:$0xff]
      %v658 = vld [vmem:[%s488 + $0xe0] sm:$0xff]
      %v659 = vld [vmem:[%s488 + $0xe8] sm:$0xff]
      %v660 = vld [vmem:[%s488 + $0xf0] sm:$0xff]
      %v661 = vld [vmem:[%s488 + $0xf8] sm:$0xff]
      %v662 = vld [vmem:[%s488 + $0x100] sm:$0xff]
      %v663 = vld [vmem:[%s488 + $0x108] sm:$0xff]
      %v664 = vld [vmem:[%s488 + $0x110] sm:$0xff]
      %v665 = vld [vmem:[%s488 + $0x118] sm:$0xff]
      %v666 = vld [vmem:[%s488 + $0x120] sm:$0xff]
      %v667 = vld [vmem:[%s488 + $0x128] sm:$0xff]
      %v668 = vld [vmem:[%s488 + $0x130] sm:$0xff]
      %v669 = vld [vmem:[%s488 + $0x138] sm:$0xff]
      %v670 = vld [vmem:[%s488 + $0x140] sm:$0xff]
      %v671 = vld [vmem:[%s488 + $0x148] sm:$0xff]
      %v672 = vld [vmem:[%s488 + $0x150] sm:$0xff]
      %v673 = vld [vmem:[%s488 + $0x158] sm:$0xff]
      %v674 = vld [vmem:[%s488 + $0x160] sm:$0xff]
      %v675 = vld [vmem:[%s488 + $0x168] sm:$0xff]
      %v676 = vld [vmem:[%s488 + $0x170] sm:$0xff]
      %v677 = vld [vmem:[%s488 + $0x178] sm:$0xff]
      %v678 = vld [vmem:[%s488 + $0x180] sm:$0xff]
      %v679 = vld [vmem:[%s488 + $0x188] sm:$0xff]
      %v680 = vld [vmem:[%s488 + $0x190] sm:$0xff]
      %v681 = vld [vmem:[%s488 + $0x198] sm:$0xff]
      %v682 = vld [vmem:[%s488 + $0x1a0] sm:$0xff]
      %v683 = vld [vmem:[%s488 + $0x1a8] sm:$0xff]
      %v684 = vld [vmem:[%s488 + $0x1b0] sm:$0xff]
      %v685 = vld [vmem:[%s488 + $0x1b8] sm:$0xff]
      %v686 = vld [vmem:[%s488 + $0x1c0] sm:$0xff]
      %v687 = vld [vmem:[%s488 + $0x1c8] sm:$0xff]
      %v688 = vld [vmem:[%s488 + $0x1d0] sm:$0xff]
      %v689 = vld [vmem:[%s488 + $0x1d8] sm:$0xff]
      %v690 = vld [vmem:[%s488 + $0x1e0] sm:$0xff]
      %v691 = vld [vmem:[%s488 + $0x1e8] sm:$0xff]
      %v692 = vld [vmem:[%s488 + $0x1f0] sm:$0xff]
      %v693 = vld [vmem:[%s488 + $0x1f8] sm:$0xff]
      %v694 = vld [vmem:[%s488 + $0x200] sm:$0xff]
      %v695 = vld [vmem:[%s488 + $0x208] sm:$0xff]
      %v696 = vld [vmem:[%s488 + $0x210] sm:$0xff]
      %v697 = vld [vmem:[%s488 + $0x218] sm:$0xff]
      %v698 = vld [vmem:[%s488 + $0x220] sm:$0xff]
      %v699 = vld [vmem:[%s488 + $0x228] sm:$0xff]
      %v700 = vld [vmem:[%s488 + $0x230] sm:$0xff]
      %v701 = vld [vmem:[%s488 + $0x238] sm:$0xff]
      %v702 = vld [vmem:[%s488 + $0x240] sm:$0xff]
      %v703 = vld [vmem:[%s488 + $0x248] sm:$0xff]
      %v704 = vld [vmem:[%s488 + $0x250] sm:$0xff]
      %v705 = vld [vmem:[%s488 + $0x258] sm:$0xff]
      %v706 = vld [vmem:[%s488 + $0x260] sm:$0xff]
      %v707 = vld [vmem:[%s488 + $0x268] sm:$0xff]
      %v708 = vld [vmem:[%s488 + $0x270] sm:$0xff]
      %v709 = vld [vmem:[%s488 + $0x278] sm:$0xff]
      %v710 = vld [vmem:[%s488 + $0x280] sm:$0xff]
      %v711 = vld [vmem:[%s488 + $0x288] sm:$0xff]
      %v712 = vld [vmem:[%s488 + $0x290] sm:$0xff]
      %v713 = vld [vmem:[%s488 + $0x298] sm:$0xff]
      %v714 = vld [vmem:[%s488 + $0x2a0] sm:$0xff]
      %v715 = vld [vmem:[%s488 + $0x2a8] sm:$0xff]
      %v716 = vld [vmem:[%s488 + $0x2b0] sm:$0xff]
      %v717 = vld [vmem:[%s488 + $0x2b8] sm:$0xff]
      %v718 = vld [vmem:[%s488 + $0x2c0] sm:$0xff]
      %v719 = vld [vmem:[%s488 + $0x2c8] sm:$0xff]
      %v720 = vld [vmem:[%s488 + $0x2d0] sm:$0xff]
      %v721 = vld [vmem:[%s488 + $0x2d8] sm:$0xff]
      %v722 = vld [vmem:[%s488 + $0x2e0] sm:$0xff]
      %v723 = vld [vmem:[%s488 + $0x2e8] sm:$0xff]
      %v724 = vld [vmem:[%s488 + $0x2f0] sm:$0xff]
      %v725 = vld [vmem:[%s488 + $0x2f8] sm:$0xff]
      %v726 = vld [vmem:[%s488 + $0x300] sm:$0xff]
      %v727 = vld [vmem:[%s488 + $0x308] sm:$0xff]
      %v728 = vld [vmem:[%s488 + $0x310] sm:$0xff]
      %v729 = vld [vmem:[%s488 + $0x318] sm:$0xff]
      %v730 = vld [vmem:[%s488 + $0x320] sm:$0xff]
      %v731 = vld [vmem:[%s488 + $0x328] sm:$0xff]
      %v732 = vld [vmem:[%s488 + $0x330] sm:$0xff]
      %v733 = vld [vmem:[%s488 + $0x338] sm:$0xff]
      %v734 = vld [vmem:[%s488 + $0x340] sm:$0xff]
      %v735 = vld [vmem:[%s488 + $0x348] sm:$0xff]
      %v736 = vld [vmem:[%s488 + $0x350] sm:$0xff]
      %v737 = vld [vmem:[%s488 + $0x358] sm:$0xff]
      %v738 = vld [vmem:[%s488 + $0x360] sm:$0xff]
      %v739 = vld [vmem:[%s488 + $0x368] sm:$0xff]
      %v740 = vld [vmem:[%s488 + $0x370] sm:$0xff]
      %v741 = vld [vmem:[%s488 + $0x378] sm:$0xff]
      %v742 = vld [vmem:[%s488 + $0x380] sm:$0xff]
      %v743 = vld [vmem:[%s488 + $0x388] sm:$0xff]
      %v744 = vld [vmem:[%s488 + $0x390] sm:$0xff]
      %v745 = vld [vmem:[%s488 + $0x398] sm:$0xff]
      %v746 = vld [vmem:[%s488 + $0x3a0] sm:$0xff]
      %v747 = vld [vmem:[%s488 + $0x3a8] sm:$0xff]
      %v748 = vld [vmem:[%s488 + $0x3b0] sm:$0xff]
      %v749 = vld [vmem:[%s488 + $0x3b8] sm:$0xff]
      %v750 = vld [vmem:[%s488 + $0x3c0] sm:$0xff]
      %v751 = vld [vmem:[%s488 + $0x3c8] sm:$0xff]
      %v752 = vld [vmem:[%s488 + $0x3d0] sm:$0xff]
      %v753 = vld [vmem:[%s488 + $0x3d8] sm:$0xff]
      %v754 = vld [vmem:[%s488 + $0x3e0] sm:$0xff]
      %v755 = vld [vmem:[%s488 + $0x3e8] sm:$0xff]
      %v756 = vld [vmem:[%s488 + $0x3f0] sm:$0xff]
      %v757 = vld [vmem:[%s488 + $0x3f8] sm:$0xff]
      %v758 = vld [vmem:[%s488 + $0x400] sm:$0xff]
      %v759 = vld [vmem:[%s488 + $0x408] sm:$0xff]
      %v760 = vld [vmem:[%s488 + $0x410] sm:$0xff]
      %v761 = vld [vmem:[%s488 + $0x418] sm:$0xff]
      %v762 = vld [vmem:[%s488 + $0x420] sm:$0xff]
      %v763 = vld [vmem:[%s488 + $0x428] sm:$0xff]
      %v764 = vld [vmem:[%s488 + $0x430] sm:$0xff]
      %v765 = vld [vmem:[%s488 + $0x438] sm:$0xff]
      %v766 = vld [vmem:[%s488 + $0x440] sm:$0xff]
      %v767 = vld [vmem:[%s488 + $0x448] sm:$0xff]
      %v768 = vld [vmem:[%s488 + $0x450] sm:$0xff]
      %v769 = vld [vmem:[%s488 + $0x458] sm:$0xff]
      %v770 = vld [vmem:[%s488 + $0x460] sm:$0xff]
      %v771 = vld [vmem:[%s488 + $0x468] sm:$0xff]
      %v772 = vld [vmem:[%s488 + $0x470] sm:$0xff]
      %v773 = vld [vmem:[%s488 + $0x478] sm:$0xff]
      %v774 = vld [vmem:[%s488 + $0x480] sm:$0xff]
      %v775 = vld [vmem:[%s488 + $0x488] sm:$0xff]
      %v776 = vld [vmem:[%s488 + $0x490] sm:$0xff]
      %v777 = vld [vmem:[%s488 + $0x498] sm:$0xff]
      %v778 = vld [vmem:[%s488 + $0x4a0] sm:$0xff]
      %v779 = vld [vmem:[%s488 + $0x4a8] sm:$0xff]
      %v780 = vld [vmem:[%s488 + $0x4b0] sm:$0xff]
      %v781 = vld [vmem:[%s488 + $0x4b8] sm:$0xff]
      %v782 = vld [vmem:[%s488 + $0x4c0] sm:$0xff]
      %v783 = vld [vmem:[%s488 + $0x4c8] sm:$0xff]
      %v784 = vld [vmem:[%s488 + $0x4d0] sm:$0xff]
      %v785 = vld [vmem:[%s488 + $0x4d8] sm:$0xff]
      %v786 = vld [vmem:[%s488 + $0x4e0] sm:$0xff]
      %v787 = vld [vmem:[%s488 + $0x4e8] sm:$0xff]
      %v788 = vld [vmem:[%s488 + $0x4f0] sm:$0xff]
      %v789 = vld [vmem:[%s488 + $0x4f8] sm:$0xff]
      %v790 = vld [vmem:[%s488 + $0x500] sm:$0xff]
      %v791 = vld [vmem:[%s488 + $0x508] sm:$0xff]
      %v792 = vld [vmem:[%s488 + $0x510] sm:$0xff]
      %v793 = vld [vmem:[%s488 + $0x518] sm:$0xff]
      %v794 = vld [vmem:[%s488 + $0x520] sm:$0xff]
      %v795 = vld [vmem:[%s488 + $0x528] sm:$0xff]
      %v796 = vld [vmem:[%s488 + $0x530] sm:$0xff]
      %v797 = vld [vmem:[%s488 + $0x538] sm:$0xff]
      %v798 = vld [vmem:[%s488 + $0x540] sm:$0xff]
      %v799 = vld [vmem:[%s488 + $0x548] sm:$0xff]
      %v800 = vld [vmem:[%s488 + $0x550] sm:$0xff]
      %v801 = vld [vmem:[%s488 + $0x558] sm:$0xff]
      %v802 = vld [vmem:[%s488 + $0x560] sm:$0xff]
      %v803 = vld [vmem:[%s488 + $0x568] sm:$0xff]
      %v804 = vld [vmem:[%s488 + $0x570] sm:$0xff]
      %v805 = vld [vmem:[%s488 + $0x578] sm:$0xff]
      %v806 = vld [vmem:[%s488 + $0x580] sm:$0xff]
      %v807 = vld [vmem:[%s488 + $0x588] sm:$0xff]
      %v808 = vld [vmem:[%s488 + $0x590] sm:$0xff]
      %v809 = vld [vmem:[%s488 + $0x598] sm:$0xff]
      %v810 = vld [vmem:[%s488 + $0x5a0] sm:$0xff]
      %v811 = vld [vmem:[%s488 + $0x5a8] sm:$0xff]
      %v812 = vld [vmem:[%s488 + $0x5b0] sm:$0xff]
      %v813 = vld [vmem:[%s488 + $0x5b8] sm:$0xff]
      %v814 = vld [vmem:[%s488 + $0x5c0] sm:$0xff]
      %v815 = vld [vmem:[%s488 + $0x5c8] sm:$0xff]
      %v816 = vld [vmem:[%s488 + $0x5d0] sm:$0xff]
      %v817 = vld [vmem:[%s488 + $0x5d8] sm:$0xff]
      %v818 = vld [vmem:[%s488 + $0x5e0] sm:$0x7f]
      %v819 = vld [vmem:[%s488 + $0x5e8] sm:$0x7f]
      %v820 = vld [vmem:[%s488 + $0x5e0] sm:$0xff]
      %v821 = vld [vmem:[%s488 + $0x5e8] sm:$0xff]
      %822 = vmatprep.subr.mxu0 0.0
      %823 = vmatpush1.msra.mxu0 %v531
      %824 = vmatprep.subr.mxu0 0.0
      %825 = vmatpush1.msra.mxu0 %v532
      %826 = vmatprep.subr.mxu0 0.0
      %827 = vmatpush1.msra.mxu0 %v533
      %828 = vmatprep.subr.mxu0 0.0
      %829 = vmatpush1.msra.mxu0 %v534
      %830 = vmatprep.subr.mxu0 0.0
      %831 = vmatpush1.msra.mxu0 %v535
      %832 = vmatprep.subr.mxu0 0.0
      %833 = vmatpush1.msra.mxu0 %v536
      %834 = vmatprep.subr.mxu0 0.0
      %835 = vmatpush1.msra.mxu0 %v537
      %836 = vmatprep.subr.mxu0 0.0
      %837 = vmatpush1.msra.mxu0 %v538
      %838 = vmatprep.subr.mxu0 0.0
      %839 = vmatpush1.msra.mxu0 %v539
      %840 = vmatprep.subr.mxu0 0.0
      %841 = vmatpush1.msra.mxu0 %v540
      %842 = vmatprep.subr.mxu0 0.0
      %843 = vmatpush1.msra.mxu0 %v541
      %844 = vmatprep.subr.mxu0 0.0
      %845 = vmatpush1.msra.mxu0 %v542
      %846 = vmatprep.subr.mxu0 0.0
      %847 = vmatpush1.msra.mxu0 %v543
      %848 = vmatprep.subr.mxu0 0.0
      %849 = vmatpush1.msra.mxu0 %v544
      %850 = vmatprep.subr.mxu0 0.0
      %851 = vmatpush1.msra.mxu0 %v545
      %852 = vmatprep.subr.mxu0 0.0
      %853 = vmatpush1.msra.mxu0 %v546
      %854 = vmatprep.subr.mxu0 0.0
      %855 = vmatpush1.msra.mxu0 %v547
      %856 = vmatprep.subr.mxu0 0.0
      %857 = vmatpush1.msra.mxu0 %v548
      %858 = vmatprep.subr.mxu0 0.0
      %859 = vmatpush1.msra.mxu0 %v549
      %860 = vmatprep.subr.mxu0 0.0
      %861 = vmatpush1.msra.mxu0 %v550
      %862 = vmatprep.subr.mxu0 0.0
      %863 = vmatpush1.msra.mxu0 %v551
      %864 = vmatprep.subr.mxu0 0.0
      %865 = vmatpush1.msra.mxu0 %v552
      %866 = vmatprep.subr.mxu0 0.0
      %867 = vmatpush1.msra.mxu0 %v553
      %868 = vmatprep.subr.mxu0 0.0
      %869 = vmatpush1.msra.mxu0 %v554
      %870 = vmatprep.subr.mxu0 0.0
      %871 = vmatpush1.msra.mxu0 %v555
      %872 = vmatprep.subr.mxu0 0.0
      %873 = vmatpush1.msra.mxu0 %v556
      %874 = vmatprep.subr.mxu0 0.0
      %875 = vmatpush1.msra.mxu0 %v557
      %876 = vmatprep.subr.mxu0 0.0
      %877 = vmatpush1.msra.mxu0 %v558
      %878 = vmatprep.subr.mxu0 0.0
      %879 = vmatpush1.msra.mxu0 %v559
      %880 = vmatprep.subr.mxu0 0.0
      %881 = vmatpush1.msra.mxu0 %v560
      %882 = vmatprep.subr.mxu0 0.0
      %883 = vmatpush1.msra.mxu0 %v561
      %884 = vmatprep.subr.mxu0 0.0
      %885 = vmatpush1.msra.mxu0 %v562
      %886 = vmatprep.mubr.f32.mxu0 %v633
      %887 = vmatmul.mubr.f32.gmra.mrb[0].mxu0 %v632
      %v888 = vpop.f32.mrb[0].mxu0
      %v889 = vadd.f32 0.0, %v888
      %v890 = vpop.f32.mrb[0].mxu0
      %891 = vmatprep.mubr.f32.mxu0 %v635
      %892 = vmatmul.mubr.f32.gmra.mrb[0].mxu0 %v634
      %v893 = vpop.f32.mrb[0].mxu0
      %v894 = vadd.f32 0.0, %v893
      %v895 = vpop.f32.mrb[0].mxu0
      %896 = vmatprep.mubr.f32.mxu0 %v637
      %897 = vmatmul.mubr.f32.gmra.mrb[0].mxu0 %v636
      %v898 = vpop.f32.mrb[0].mxu0
      %v899 = vadd.f32 0.0, %v898
      %v900 = vpop.f32.mrb[0].mxu0
      %901 = vmatprep.mubr.f32.mxu0 %v639
      %902 = vmatmul.mubr.f32.gmra.mrb[0].mxu0 %v638
      %v903 = vpop.f32.mrb[0].mxu0
      %v904 = vadd.f32 0.0, %v903
      %v905 = vpop.f32.mrb[0].mxu0
      %906 = vmatprep.mubr.f32.mxu0 %v641
      %907 = vmatmul.mubr.f32.gmra.mrb[0].mxu0 %v640
      %v908 = vpop.f32.mrb[0].mxu0
      %v909 = vadd.f32 0.0, %v908
      %v910 = vpop.f32.mrb[0].mxu0
      %911 = vmatprep.mubr.f32.mxu0 %v643
      %912 = vmatmul.mubr.f32.gmra.mrb[0].mxu0 %v642
      %v913 = vpop.f32.mrb[0].mxu0
      %v914 = vadd.f32 0.0, %v913
      %v915 = vpop.f32.mrb[0].mxu0
      %916 = vmatprep.mubr.f32.mxu0 %v645
      %917 = vmatmul.mubr.f32.gmra.mrb[0].mxu0 %v644
      %v918 = vpop.f32.mrb[0].mxu0
      %v919 = vadd.f32 0.0, %v918
      %v920 = vpop.f32.mrb[0].mxu0
      %921 = vmatprep.mubr.f32.mxu0 %v647
      %922 = vmatmul.mubr.f32.gmra.mrb[0].mxu0 %v646
      %v923 = vpop.f32.mrb[0].mxu0
      %v924 = vadd.f32 0.0, %v923
      %v925 = vpop.f32.mrb[0].mxu0
      %926 = vmatprep.mubr.f32.mxu0 %v649
      %927 = vmatmul.mubr.f32.gmra.mrb[0].mxu0 %v648
      %v928 = vpop.f32.mrb[0].mxu0
      %v929 = vadd.f32 0.0, %v928
      %v930 = vpop.f32.mrb[0].mxu0
      %931 = vmatprep.mubr.f32.mxu0 %v651
      %932 = vmatmul.mubr.f32.gmra.mrb[0].mxu0 %v650
      %v933 = vpop.f32.mrb[0].mxu0
      %v934 = vadd.f32 0.0, %v933
      %v935 = vpop.f32.mrb[0].mxu0
      %936 = vmatprep.mubr.f32.mxu0 %v653
      %937 = vmatmul.mubr.f32.gmra.mrb[0].mxu0 %v652
      %v938 = vpop.f32.mrb[0].mxu0
      %v939 = vadd.f32 0.0, %v938
      %v940 = vpop.f32.mrb[0].mxu0
      %941 = vmatprep.mubr.f32.mxu0 %v655
      %942 = vmatmul.mubr.f32.gmra.mrb[0].mxu0 %v654
      %v943 = vpop.f32.mrb[0].mxu0
      %v944 = vadd.f32 0.0, %v943
      %v945 = vpop.f32.mrb[0].mxu0
      %946 = vmatprep.mubr.f32.mxu0 %v657
      %947 = vmatmul.mubr.f32.gmra.mrb[0].mxu0 %v656
      %v948 = vpop.f32.mrb[0].mxu0
      %v949 = vadd.f32 0.0, %v948
      %v950 = vpop.f32.mrb[0].mxu0
      %951 = vmatprep.mubr.f32.mxu0 %v659
      %952 = vmatmul.mubr.f32.gmra.mrb[0].mxu0 %v658
      %v953 = vpop.f32.mrb[0].mxu0
      %v954 = vadd.f32 0.0, %v953
      %v955 = vpop.f32.mrb[0].mxu0
      %956 = vmatprep.mubr.f32.mxu0 %v661
      %957 = vmatmul.mubr.f32.gmra.mrb[0].mxu0 %v660
      %v958 = vpop.f32.mrb[0].mxu0
      %v959 = vadd.f32 0.0, %v958
      %v960 = vpop.f32.mrb[0].mxu0
      %961 = vmatprep.mubr.f32.mxu0 %v663
      %962 = vmatmul.mubr.f32.gmra.mrb[0].mxu0 %v662
      %v963 = vpop.f32.mrb[0].mxu0
      %v964 = vadd.f32 0.0, %v963
      %v965 = vpop.f32.mrb[0].mxu0
      %966 = vmatprep.mubr.f32.mxu0 %v665
      %967 = vmatmul.mubr.f32.gmra.mrb[0].mxu0 %v664
      %v968 = vpop.f32.mrb[0].mxu0
      %v969 = vadd.f32 0.0, %v968
      %v970 = vpop.f32.mrb[0].mxu0
      %971 = vmatprep.mubr.f32.mxu0 %v667
      %972 = vmatmul.mubr.f32.gmra.mrb[0].mxu0 %v666
      %v973 = vpop.f32.mrb[0].mxu0
      %v974 = vadd.f32 0.0, %v973
      %v975 = vpop.f32.mrb[0].mxu0
      %976 = vmatprep.mubr.f32.mxu0 %v669
      %977 = vmatmul.mubr.f32.gmra.mrb[0].mxu0 %v668
      %v978 = vpop.f32.mrb[0].mxu0
      %v979 = vadd.f32 0.0, %v978
      %v980 = vpop.f32.mrb[0].mxu0
      %981 = vmatprep.mubr.f32.mxu0 %v671
      %982 = vmatmul.mubr.f32.gmra.mrb[0].mxu0 %v670
      %v983 = vpop.f32.mrb[0].mxu0
      %v984 = vadd.f32 0.0, %v983
      %v985 = vpop.f32.mrb[0].mxu0
      %986 = vmatprep.mubr.f32.mxu0 %v673
      %987 = vmatmul.mubr.f32.gmra.mrb[0].mxu0 %v672
      %v988 = vpop.f32.mrb[0].mxu0
      %v989 = vadd.f32 0.0, %v988
      %v990 = vpop.f32.mrb[0].mxu0
      %991 = vmatprep.mubr.f32.mxu0 %v675
      %992 = vmatmul.mubr.f32.gmra.mrb[0].mxu0 %v674
      %v993 = vpop.f32.mrb[0].mxu0
      %v994 = vadd.f32 0.0, %v993
      %v995 = vpop.f32.mrb[0].mxu0
      %996 = vmatprep.mubr.f32.mxu0 %v677
      %997 = vmatmul.mubr.f32.gmra.mrb[0].mxu0 %v676
      %v998 = vpop.f32.mrb[0].mxu0
      %v999 = vadd.f32 0.0, %v998
      %v1000 = vpop.f32.mrb[0].mxu0
      %1001 = vmatprep.mubr.f32.mxu0 %v679
      %1002 = vmatmul.mubr.f32.gmra.mrb[0].mxu0 %v678
      %v1003 = vpop.f32.mrb[0].mxu0
      %v1004 = vadd.f32 0.0, %v1003
      %v1005 = vpop.f32.mrb[0].mxu0
      %1006 = vmatprep.mubr.f32.mxu0 %v681
      %1007 = vmatmul.mubr.f32.gmra.mrb[0].mxu0 %v680
      %v1008 = vpop.f32.mrb[0].mxu0
      %v1009 = vadd.f32 0.0, %v1008
      %v1010 = vpop.f32.mrb[0].mxu0
      %1011 = vmatprep.mubr.f32.mxu0 %v683
      %1012 = vmatmul.mubr.f32.gmra.mrb[0].mxu0 %v682
      %v1013 = vpop.f32.mrb[0].mxu0
      %v1014 = vadd.f32 0.0, %v1013
      %v1015 = vpop.f32.mrb[0].mxu0
      %1016 = vmatprep.mubr.f32.mxu0 %v685
      %1017 = vmatmul.mubr.f32.gmra.mrb[0].mxu0 %v684
      %v1018 = vpop.f32.mrb[0].mxu0
      %v1019 = vadd.f32 0.0, %v1018
      %v1020 = vpop.f32.mrb[0].mxu0
      %1021 = vmatprep.mubr.f32.mxu0 %v687
      %1022 = vmatmul.mubr.f32.gmra.mrb[0].mxu0 %v686
      %v1023 = vpop.f32.mrb[0].mxu0
      %v1024 = vadd.f32 0.0, %v1023
      %v1025 = vpop.f32.mrb[0].mxu0
      %1026 = vmatprep.mubr.f32.mxu0 %v689
      %1027 = vmatmul.mubr.f32.gmra.mrb[0].mxu0 %v688
      %v1028 = vpop.f32.mrb[0].mxu0
      %v1029 = vadd.f32 0.0, %v1028
      %v1030 = vpop.f32.mrb[0].mxu0
      %1031 = vmatprep.mubr.f32.mxu0 %v691
      %1032 = vmatmul.mubr.f32.gmra.mrb[0].mxu0 %v690
      %v1033 = vpop.f32.mrb[0].mxu0
      %v1034 = vadd.f32 0.0, %v1033
      %v1035 = vpop.f32.mrb[0].mxu0
      %1036 = vmatprep.mubr.f32.mxu0 %v693
      %1037 = vmatmul.mubr.f32.gmra.mrb[0].mxu0 %v692
      %v1038 = vpop.f32.mrb[0].mxu0
      %v1039 = vadd.f32 0.0, %v1038
      %v1040 = vpop.f32.mrb[0].mxu0
      %1041 = vmatprep.mubr.f32.mxu0 %v695
      %1042 = vmatmul.mubr.f32.gmra.mrb[0].mxu0 %v694
      %v1043 = vpop.f32.mrb[0].mxu0
      %v1044 = vadd.f32 0.0, %v1043
      %v1045 = vpop.f32.mrb[0].mxu0
      %1046 = vmatprep.mubr.f32.mxu0 %v697
      %1047 = vmatmul.mubr.f32.gmra.mrb[0].mxu0 %v696
      %v1048 = vpop.f32.mrb[0].mxu0
      %v1049 = vadd.f32 0.0, %v1048
      %v1050 = vpop.f32.mrb[0].mxu0
      %1051 = vmatprep.mubr.f32.mxu0 %v699
      %1052 = vmatmul.mubr.f32.gmra.mrb[0].mxu0 %v698
      %v1053 = vpop.f32.mrb[0].mxu0
      %v1054 = vadd.f32 0.0, %v1053
      %v1055 = vpop.f32.mrb[0].mxu0
      %1056 = vmatprep.mubr.f32.mxu0 %v701
      %1057 = vmatmul.mubr.f32.gmra.mrb[0].mxu0 %v700
      %v1058 = vpop.f32.mrb[0].mxu0
      %v1059 = vadd.f32 0.0, %v1058
      %v1060 = vpop.f32.mrb[0].mxu0
      %1061 = vmatprep.mubr.f32.mxu0 %v703
      %1062 = vmatmul.mubr.f32.gmra.mrb[0].mxu0 %v702
      %v1063 = vpop.f32.mrb[0].mxu0
      %v1064 = vadd.f32 0.0, %v1063
      %v1065 = vpop.f32.mrb[0].mxu0
      %1066 = vmatprep.mubr.f32.mxu0 %v705
      %1067 = vmatmul.mubr.f32.gmra.mrb[0].mxu0 %v704
      %v1068 = vpop.f32.mrb[0].mxu0
      %v1069 = vadd.f32 0.0, %v1068
      %v1070 = vpop.f32.mrb[0].mxu0
      %1071 = vmatprep.mubr.f32.mxu0 %v707
      %1072 = vmatmul.mubr.f32.gmra.mrb[0].mxu0 %v706
      %v1073 = vpop.f32.mrb[0].mxu0
      %v1074 = vadd.f32 0.0, %v1073
      %v1075 = vpop.f32.mrb[0].mxu0
      %1076 = vmatprep.mubr.f32.mxu0 %v709
      %1077 = vmatmul.mubr.f32.gmra.mrb[0].mxu0 %v708
      %v1078 = vpop.f32.mrb[0].mxu0
      %v1079 = vadd.f32 0.0, %v1078
      %v1080 = vpop.f32.mrb[0].mxu0
      %1081 = vmatprep.mubr.f32.mxu0 %v711
      %1082 = vmatmul.mubr.f32.gmra.mrb[0].mxu0 %v710
      %v1083 = vpop.f32.mrb[0].mxu0
      %v1084 = vadd.f32 0.0, %v1083
      %v1085 = vpop.f32.mrb[0].mxu0
      %1086 = vmatprep.mubr.f32.mxu0 %v713
      %1087 = vmatmul.mubr.f32.gmra.mrb[0].mxu0 %v712
      %v1088 = vpop.f32.mrb[0].mxu0
      %v1089 = vadd.f32 0.0, %v1088
      %v1090 = vpop.f32.mrb[0].mxu0
      %1091 = vmatprep.mubr.f32.mxu0 %v715
      %1092 = vmatmul.mubr.f32.gmra.mrb[0].mxu0 %v714
      %v1093 = vpop.f32.mrb[0].mxu0
      %v1094 = vadd.f32 0.0, %v1093
      %v1095 = vpop.f32.mrb[0].mxu0
      %1096 = vmatprep.mubr.f32.mxu0 %v717
      %1097 = vmatmul.mubr.f32.gmra.mrb[0].mxu0 %v716
      %v1098 = vpop.f32.mrb[0].mxu0
      %v1099 = vadd.f32 0.0, %v1098
      %v1100 = vpop.f32.mrb[0].mxu0
      %1101 = vmatprep.mubr.f32.mxu0 %v719
      %1102 = vmatmul.mubr.f32.gmra.mrb[0].mxu0 %v718
      %v1103 = vpop.f32.mrb[0].mxu0
      %v1104 = vadd.f32 0.0, %v1103
      %v1105 = vpop.f32.mrb[0].mxu0
      %1106 = vmatprep.mubr.f32.mxu0 %v721
      %1107 = vmatmul.mubr.f32.gmra.mrb[0].mxu0 %v720
      %v1108 = vpop.f32.mrb[0].mxu0
      %v1109 = vadd.f32 0.0, %v1108
      %v1110 = vpop.f32.mrb[0].mxu0
      %1111 = vmatprep.mubr.f32.mxu0 %v723
      %1112 = vmatmul.mubr.f32.gmra.mrb[0].mxu0 %v722
      %v1113 = vpop.f32.mrb[0].mxu0
      %v1114 = vadd.f32 0.0, %v1113
      %v1115 = vpop.f32.mrb[0].mxu0
      %1116 = vmatprep.mubr.f32.mxu0 %v725
      %1117 = vmatmul.mubr.f32.gmra.mrb[0].mxu0 %v724
      %v1118 = vpop.f32.mrb[0].mxu0
      %v1119 = vadd.f32 0.0, %v1118
      %v1120 = vpop.f32.mrb[0].mxu0
      %1121 = vmatprep.mubr.f32.mxu0 %v727
      %1122 = vmatmul.mubr.f32.gmra.mrb[0].mxu0 %v726
      %v1123 = vpop.f32.mrb[0].mxu0
      %v1124 = vadd.f32 0.0, %v1123
      %v1125 = vpop.f32.mrb[0].mxu0
      %1126 = vmatprep.mubr.f32.mxu0 %v729
      %1127 = vmatmul.mubr.f32.gmra.mrb[0].mxu0 %v728
      %v1128 = vpop.f32.mrb[0].mxu0
      %v1129 = vadd.f32 0.0, %v1128
      %v1130 = vpop.f32.mrb[0].mxu0
      %1131 = vmatprep.mubr.f32.mxu0 %v731
      %1132 = vmatmul.mubr.f32.gmra.mrb[0].mxu0 %v730
      %v1133 = vpop.f32.mrb[0].mxu0
      %v1134 = vadd.f32 0.0, %v1133
      %v1135 = vpop.f32.mrb[0].mxu0
      %1136 = vmatprep.mubr.f32.mxu0 %v733
      %1137 = vmatmul.mubr.f32.gmra.mrb[0].mxu0 %v732
      %v1138 = vpop.f32.mrb[0].mxu0
      %v1139 = vadd.f32 0.0, %v1138
      %v1140 = vpop.f32.mrb[0].mxu0
      %1141 = vmatprep.mubr.f32.mxu0 %v735
      %1142 = vmatmul.mubr.f32.gmra.mrb[0].mxu0 %v734
      %v1143 = vpop.f32.mrb[0].mxu0
      %v1144 = vadd.f32 0.0, %v1143
      %v1145 = vpop.f32.mrb[0].mxu0
      %1146 = vmatprep.mubr.f32.mxu0 %v737
      %1147 = vmatmul.mubr.f32.gmra.mrb[0].mxu0 %v736
      %v1148 = vpop.f32.mrb[0].mxu0
      %v1149 = vadd.f32 0.0, %v1148
      %v1150 = vpop.f32.mrb[0].mxu0
      %1151 = vmatprep.mubr.f32.mxu0 %v739
      %1152 = vmatmul.mubr.f32.gmra.mrb[0].mxu0 %v738
      %v1153 = vpop.f32.mrb[0].mxu0
      %v1154 = vadd.f32 0.0, %v1153
      %v1155 = vpop.f32.mrb[0].mxu0
      %1156 = vmatprep.mubr.f32.mxu0 %v741
      %1157 = vmatmul.mubr.f32.gmra.mrb[0].mxu0 %v740
      %v1158 = vpop.f32.mrb[0].mxu0
      %v1159 = vadd.f32 0.0, %v1158
      %v1160 = vpop.f32.mrb[0].mxu0
      %1161 = vmatprep.mubr.f32.mxu0 %v743
      %1162 = vmatmul.mubr.f32.gmra.mrb[0].mxu0 %v742
      %v1163 = vpop.f32.mrb[0].mxu0
      %v1164 = vadd.f32 0.0, %v1163
      %v1165 = vpop.f32.mrb[0].mxu0
      %1166 = vmatprep.mubr.f32.mxu0 %v745
      %1167 = vmatmul.mubr.f32.gmra.mrb[0].mxu0 %v744
      %v1168 = vpop.f32.mrb[0].mxu0
      %v1169 = vadd.f32 0.0, %v1168
      %v1170 = vpop.f32.mrb[0].mxu0
      %1171 = vmatprep.mubr.f32.mxu0 %v747
      %1172 = vmatmul.mubr.f32.gmra.mrb[0].mxu0 %v746
      %v1173 = vpop.f32.mrb[0].mxu0
      %v1174 = vadd.f32 0.0, %v1173
      %v1175 = vpop.f32.mrb[0].mxu0
      %1176 = vmatprep.mubr.f32.mxu0 %v749
      %1177 = vmatmul.mubr.f32.gmra.mrb[0].mxu0 %v748
      %v1178 = vpop.f32.mrb[0].mxu0
      %v1179 = vadd.f32 0.0, %v1178
      %v1180 = vpop.f32.mrb[0].mxu0
      %1181 = vmatprep.mubr.f32.mxu0 %v751
      %1182 = vmatmul.mubr.f32.gmra.mrb[0].mxu0 %v750
      %v1183 = vpop.f32.mrb[0].mxu0
      %v1184 = vadd.f32 0.0, %v1183
      %v1185 = vpop.f32.mrb[0].mxu0
      %1186 = vmatprep.mubr.f32.mxu0 %v753
      %1187 = vmatmul.mubr.f32.gmra.mrb[0].mxu0 %v752
      %v1188 = vpop.f32.mrb[0].mxu0
      %v1189 = vadd.f32 0.0, %v1188
      %v1190 = vpop.f32.mrb[0].mxu0
      %1191 = vmatprep.mubr.f32.mxu0 %v755
      %1192 = vmatmul.mubr.f32.gmra.mrb[0].mxu0 %v754
      %v1193 = vpop.f32.mrb[0].mxu0
      %v1194 = vadd.f32 0.0, %v1193
      %v1195 = vpop.f32.mrb[0].mxu0
      %1196 = vmatprep.mubr.f32.mxu0 %v757
      %1197 = vmatmul.mubr.f32.gmra.mrb[0].mxu0 %v756
      %v1198 = vpop.f32.mrb[0].mxu0
      %v1199 = vadd.f32 0.0, %v1198
      %v1200 = vpop.f32.mrb[0].mxu0
      %1201 = vmatprep.mubr.f32.mxu0 %v759
      %1202 = vmatmul.mubr.f32.gmra.mrb[0].mxu0 %v758
      %v1203 = vpop.f32.mrb[0].mxu0
      %v1204 = vadd.f32 0.0, %v1203
      %v1205 = vpop.f32.mrb[0].mxu0
      %1206 = vmatprep.mubr.f32.mxu0 %v761
      %1207 = vmatmul.mubr.f32.gmra.mrb[0].mxu0 %v760
      %v1208 = vpop.f32.mrb[0].mxu0
      %v1209 = vadd.f32 0.0, %v1208
      %v1210 = vpop.f32.mrb[0].mxu0
      %1211 = vmatprep.mubr.f32.mxu0 %v763
      %1212 = vmatmul.mubr.f32.gmra.mrb[0].mxu0 %v762
      %v1213 = vpop.f32.mrb[0].mxu0
      %v1214 = vadd.f32 0.0, %v1213
      %v1215 = vpop.f32.mrb[0].mxu0
      %1216 = vmatprep.mubr.f32.mxu0 %v765
      %1217 = vmatmul.mubr.f32.gmra.mrb[0].mxu0 %v764
      %v1218 = vpop.f32.mrb[0].mxu0
      %v1219 = vadd.f32 0.0, %v1218
      %v1220 = vpop.f32.mrb[0].mxu0
      %1221 = vmatprep.mubr.f32.mxu0 %v767
      %1222 = vmatmul.mubr.f32.gmra.mrb[0].mxu0 %v766
      %v1223 = vpop.f32.mrb[0].mxu0
      %v1224 = vadd.f32 0.0, %v1223
      %v1225 = vpop.f32.mrb[0].mxu0
      %1226 = vmatprep.mubr.f32.mxu0 %v769
      %1227 = vmatmul.mubr.f32.gmra.mrb[0].mxu0 %v768
      %v1228 = vpop.f32.mrb[0].mxu0
      %v1229 = vadd.f32 0.0, %v1228
      %v1230 = vpop.f32.mrb[0].mxu0
      %1231 = vmatprep.mubr.f32.mxu0 %v771
      %1232 = vmatmul.mubr.f32.gmra.mrb[0].mxu0 %v770
      %v1233 = vpop.f32.mrb[0].mxu0
      %v1234 = vadd.f32 0.0, %v1233
      %v1235 = vpop.f32.mrb[0].mxu0
      %1236 = vmatprep.mubr.f32.mxu0 %v773
      %1237 = vmatmul.mubr.f32.gmra.mrb[0].mxu0 %v772
      %v1238 = vpop.f32.mrb[0].mxu0
      %v1239 = vadd.f32 0.0, %v1238
      %v1240 = vpop.f32.mrb[0].mxu0
      %1241 = vmatprep.mubr.f32.mxu0 %v775
      %1242 = vmatmul.mubr.f32.gmra.mrb[0].mxu0 %v774
      %v1243 = vpop.f32.mrb[0].mxu0
      %v1244 = vadd.f32 0.0, %v1243
      %v1245 = vpop.f32.mrb[0].mxu0
      %1246 = vmatprep.mubr.f32.mxu0 %v777
      %1247 = vmatmul.mubr.f32.gmra.mrb[0].mxu0 %v776
      %v1248 = vpop.f32.mrb[0].mxu0
      %v1249 = vadd.f32 0.0, %v1248
      %v1250 = vpop.f32.mrb[0].mxu0
      %1251 = vmatprep.mubr.f32.mxu0 %v779
      %1252 = vmatmul.mubr.f32.gmra.mrb[0].mxu0 %v778
      %v1253 = vpop.f32.mrb[0].mxu0
      %v1254 = vadd.f32 0.0, %v1253
      %v1255 = vpop.f32.mrb[0].mxu0
      %1256 = vmatprep.mubr.f32.mxu0 %v781
      %1257 = vmatmul.mubr.f32.gmra.mrb[0].mxu0 %v780
      %v1258 = vpop.f32.mrb[0].mxu0
      %v1259 = vadd.f32 0.0, %v1258
      %v1260 = vpop.f32.mrb[0].mxu0
      %1261 = vmatprep.mubr.f32.mxu0 %v783
      %1262 = vmatmul.mubr.f32.gmra.mrb[0].mxu0 %v782
      %v1263 = vpop.f32.mrb[0].mxu0
      %v1264 = vadd.f32 0.0, %v1263
      %v1265 = vpop.f32.mrb[0].mxu0
      %1266 = vmatprep.mubr.f32.mxu0 %v785
      %1267 = vmatmul.mubr.f32.gmra.mrb[0].mxu0 %v784
      %v1268 = vpop.f32.mrb[0].mxu0
      %v1269 = vadd.f32 0.0, %v1268
      %v1270 = vpop.f32.mrb[0].mxu0
      %1271 = vmatprep.mubr.f32.mxu0 %v787
      %1272 = vmatmul.mubr.f32.gmra.mrb[0].mxu0 %v786
      %v1273 = vpop.f32.mrb[0].mxu0
      %v1274 = vadd.f32 0.0, %v1273
      %v1275 = vpop.f32.mrb[0].mxu0
      %1276 = vmatprep.mubr.f32.mxu0 %v789
      %1277 = vmatmul.mubr.f32.gmra.mrb[0].mxu0 %v788
      %v1278 = vpop.f32.mrb[0].mxu0
      %v1279 = vadd.f32 0.0, %v1278
      %v1280 = vpop.f32.mrb[0].mxu0
      %1281 = vmatprep.mubr.f32.mxu0 %v791
      %1282 = vmatmul.mubr.f32.gmra.mrb[0].mxu0 %v790
      %v1283 = vpop.f32.mrb[0].mxu0
      %v1284 = vadd.f32 0.0, %v1283
      %v1285 = vpop.f32.mrb[0].mxu0
      %1286 = vmatprep.mubr.f32.mxu0 %v793
      %1287 = vmatmul.mubr.f32.gmra.mrb[0].mxu0 %v792
      %v1288 = vpop.f32.mrb[0].mxu0
      %v1289 = vadd.f32 0.0, %v1288
      %v1290 = vpop.f32.mrb[0].mxu0
      %1291 = vmatprep.mubr.f32.mxu0 %v795
      %1292 = vmatmul.mubr.f32.gmra.mrb[0].mxu0 %v794
      %v1293 = vpop.f32.mrb[0].mxu0
      %v1294 = vadd.f32 0.0, %v1293
      %v1295 = vpop.f32.mrb[0].mxu0
      %1296 = vmatprep.mubr.f32.mxu0 %v797
      %1297 = vmatmul.mubr.f32.gmra.mrb[0].mxu0 %v796
      %v1298 = vpop.f32.mrb[0].mxu0
      %v1299 = vadd.f32 0.0, %v1298
      %v1300 = vpop.f32.mrb[0].mxu0
      %1301 = vmatprep.mubr.f32.mxu0 %v799
      %1302 = vmatmul.mubr.f32.gmra.mrb[0].mxu0 %v798
      %v1303 = vpop.f32.mrb[0].mxu0
      %v1304 = vadd.f32 0.0, %v1303
      %v1305 = vpop.f32.mrb[0].mxu0
      %1306 = vmatprep.mubr.f32.mxu0 %v801
      %1307 = vmatmul.mubr.f32.gmra.mrb[0].mxu0 %v800
      %v1308 = vpop.f32.mrb[0].mxu0
      %v1309 = vadd.f32 0.0, %v1308
      %v1310 = vpop.f32.mrb[0].mxu0
      %1311 = vmatprep.mubr.f32.mxu0 %v803
      %1312 = vmatmul.mubr.f32.gmra.mrb[0].mxu0 %v802
      %v1313 = vpop.f32.mrb[0].mxu0
      %v1314 = vadd.f32 0.0, %v1313
      %v1315 = vpop.f32.mrb[0].mxu0
      %1316 = vmatprep.mubr.f32.mxu0 %v805
      %1317 = vmatmul.mubr.f32.gmra.mrb[0].mxu0 %v804
      %v1318 = vpop.f32.mrb[0].mxu0
      %v1319 = vadd.f32 0.0, %v1318
      %v1320 = vpop.f32.mrb[0].mxu0
      %1321 = vmatprep.mubr.f32.mxu0 %v807
      %1322 = vmatmul.mubr.f32.gmra.mrb[0].mxu0 %v806
      %v1323 = vpop.f32.mrb[0].mxu0
      %v1324 = vadd.f32 0.0, %v1323
      %v1325 = vpop.f32.mrb[0].mxu0
      %1326 = vmatprep.mubr.f32.mxu0 %v809
      %1327 = vmatmul.mubr.f32.gmra.mrb[0].mxu0 %v808
      %v1328 = vpop.f32.mrb[0].mxu0
      %v1329 = vadd.f32 0.0, %v1328
      %v1330 = vpop.f32.mrb[0].mxu0
      %1331 = vmatprep.mubr.f32.mxu0 %v811
      %1332 = vmatmul.mubr.f32.gmra.mrb[0].mxu0 %v810
      %v1333 = vpop.f32.mrb[0].mxu0
      %v1334 = vadd.f32 0.0, %v1333
      %v1335 = vpop.f32.mrb[0].mxu0
      %1336 = vmatprep.mubr.f32.mxu0 %v813
      %1337 = vmatmul.mubr.f32.gmra.mrb[0].mxu0 %v812
      %v1338 = vpop.f32.mrb[0].mxu0
      %v1339 = vadd.f32 0.0, %v1338
      %v1340 = vpop.f32.mrb[0].mxu0
      %1341 = vmatprep.mubr.f32.mxu0 %v815
      %1342 = vmatmul.mubr.f32.gmra.mrb[0].mxu0 %v814
      %v1343 = vpop.f32.mrb[0].mxu0
      %v1344 = vadd.f32 0.0, %v1343
      %v1345 = vpop.f32.mrb[0].mxu0
      %1346 = vmatprep.mubr.f32.mxu0 %v817
      %1347 = vmatmul.mubr.f32.gmra.mrb[0].mxu0 %v816
      %v1348 = vpop.f32.mrb[0].mxu0
      %v1349 = vadd.f32 0.0, %v1348
      %v1350 = vpop.f32.mrb[0].mxu0
      %1351 = vmatprep.mubr.f32.mxu0 %v821
      %1352 = vmatmul.mubr.f32.gmra.mrb[0].mxu0 %v820
      %v1353 = vpop.f32.mrb[0].mxu0
      %v1354 = vadd.f32 0.0, %v1353
      %v1355 = vpop.f32.mrb[0].mxu0
      %1356 = vdwg.mxu0
      %vm1547 = vcmask 1040384
      %v1548 = vrot.slane %v630, 7
      %v1549 = vrot.slane %v632, 7
      %v1550 = vsel %vm1547, %v1548, %v1549
      %v1551 = vrot.slane %v631, 7
      %v1552 = vrot.slane %v633, 7
      %v1553 = vsel %vm1547, %v1551, %v1552
      %v1554 = vrot.slane %v634, 7
      %v1555 = vsel %vm1547, %v1549, %v1554
      %v1556 = vrot.slane %v635, 7
      %v1557 = vsel %vm1547, %v1552, %v1556
      %v1558 = vrot.slane %v636, 7
      %v1559 = vsel %vm1547, %v1554, %v1558
      %v1560 = vrot.slane %v637, 7
      %v1561 = vsel %vm1547, %v1556, %v1560
      %v1562 = vrot.slane %v638, 7
      %v1563 = vsel %vm1547, %v1558, %v1562
      %v1564 = vrot.slane %v639, 7
      %v1565 = vsel %vm1547, %v1560, %v1564
      %v1566 = vrot.slane %v640, 7
      %v1567 = vsel %vm1547, %v1562, %v1566
      %v1568 = vrot.slane %v641, 7
      %v1569 = vsel %vm1547, %v1564, %v1568
      %v1570 = vrot.slane %v642, 7
      %v1571 = vsel %vm1547, %v1566, %v1570
      %v1572 = vrot.slane %v643, 7
      %v1573 = vsel %vm1547, %v1568, %v1572
      %v1574 = vrot.slane %v644, 7
      %v1575 = vsel %vm1547, %v1570, %v1574
      %v1576 = vrot.slane %v645, 7
      %v1577 = vsel %vm1547, %v1572, %v1576
      %v1578 = vrot.slane %v646, 7
      %v1579 = vsel %vm1547, %v1574, %v1578
      %v1580 = vrot.slane %v647, 7
      %v1581 = vsel %vm1547, %v1576, %v1580
      %v1582 = vrot.slane %v648, 7
      %v1583 = vsel %vm1547, %v1578, %v1582
      %v1584 = vrot.slane %v649, 7
      %v1585 = vsel %vm1547, %v1580, %v1584
      %v1586 = vrot.slane %v650, 7
      %v1587 = vsel %vm1547, %v1582, %v1586
      %v1588 = vrot.slane %v651, 7
      %v1589 = vsel %vm1547, %v1584, %v1588
      %v1590 = vrot.slane %v652, 7
      %v1591 = vsel %vm1547, %v1586, %v1590
      %v1592 = vrot.slane %v653, 7
      %v1593 = vsel %vm1547, %v1588, %v1592
      %v1594 = vrot.slane %v654, 7
      %v1595 = vsel %vm1547, %v1590, %v1594
      %v1596 = vrot.slane %v655, 7
      %v1597 = vsel %vm1547, %v1592, %v1596
      %v1598 = vrot.slane %v656, 7
      %v1599 = vsel %vm1547, %v1594, %v1598
      %v1600 = vrot.slane %v657, 7
      %v1601 = vsel %vm1547, %v1596, %v1600
      %v1602 = vrot.slane %v658, 7
      %v1603 = vsel %vm1547, %v1598, %v1602
      %v1604 = vrot.slane %v659, 7
      %v1605 = vsel %vm1547, %v1600, %v1604
      %v1606 = vrot.slane %v660, 7
      %v1607 = vsel %vm1547, %v1602, %v1606
      %v1608 = vrot.slane %v661, 7
      %v1609 = vsel %vm1547, %v1604, %v1608
      %v1610 = vrot.slane %v662, 7
      %v1611 = vsel %vm1547, %v1606, %v1610
      %v1612 = vrot.slane %v663, 7
      %v1613 = vsel %vm1547, %v1608, %v1612
      %v1614 = vrot.slane %v664, 7
      %v1615 = vsel %vm1547, %v1610, %v1614
      %v1616 = vrot.slane %v665, 7
      %v1617 = vsel %vm1547, %v1612, %v1616
      %v1618 = vrot.slane %v666, 7
      %v1619 = vsel %vm1547, %v1614, %v1618
      %v1620 = vrot.slane %v667, 7
      %v1621 = vsel %vm1547, %v1616, %v1620
      %v1622 = vrot.slane %v668, 7
      %v1623 = vsel %vm1547, %v1618, %v1622
      %v1624 = vrot.slane %v669, 7
      %v1625 = vsel %vm1547, %v1620, %v1624
      %v1626 = vrot.slane %v670, 7
      %v1627 = vsel %vm1547, %v1622, %v1626
      %v1628 = vrot.slane %v671, 7
      %v1629 = vsel %vm1547, %v1624, %v1628
      %v1630 = vrot.slane %v672, 7
      %v1631 = vsel %vm1547, %v1626, %v1630
      %v1632 = vrot.slane %v673, 7
      %v1633 = vsel %vm1547, %v1628, %v1632
      %v1634 = vrot.slane %v674, 7
      %v1635 = vsel %vm1547, %v1630, %v1634
      %v1636 = vrot.slane %v675, 7
      %v1637 = vsel %vm1547, %v1632, %v1636
      %v1638 = vrot.slane %v676, 7
      %v1639 = vsel %vm1547, %v1634, %v1638
      %v1640 = vrot.slane %v677, 7
      %v1641 = vsel %vm1547, %v1636, %v1640
      %v1642 = vrot.slane %v678, 7
      %v1643 = vsel %vm1547, %v1638, %v1642
      %v1644 = vrot.slane %v679, 7
      %v1645 = vsel %vm1547, %v1640, %v1644
      %v1646 = vrot.slane %v680, 7
      %v1647 = vsel %vm1547, %v1642, %v1646
      %v1648 = vrot.slane %v681, 7
      %v1649 = vsel %vm1547, %v1644, %v1648
      %v1650 = vrot.slane %v682, 7
      %v1651 = vsel %vm1547, %v1646, %v1650
      %v1652 = vrot.slane %v683, 7
      %v1653 = vsel %vm1547, %v1648, %v1652
      %v1654 = vrot.slane %v684, 7
      %v1655 = vsel %vm1547, %v1650, %v1654
      %v1656 = vrot.slane %v685, 7
      %v1657 = vsel %vm1547, %v1652, %v1656
      %v1658 = vrot.slane %v686, 7
      %v1659 = vsel %vm1547, %v1654, %v1658
      %v1660 = vrot.slane %v687, 7
      %v1661 = vsel %vm1547, %v1656, %v1660
      %v1662 = vrot.slane %v688, 7
      %v1663 = vsel %vm1547, %v1658, %v1662
      %v1664 = vrot.slane %v689, 7
      %v1665 = vsel %vm1547, %v1660, %v1664
      %v1666 = vrot.slane %v690, 7
      %v1667 = vsel %vm1547, %v1662, %v1666
      %v1668 = vrot.slane %v691, 7
      %v1669 = vsel %vm1547, %v1664, %v1668
      %v1670 = vrot.slane %v692, 7
      %v1671 = vsel %vm1547, %v1666, %v1670
      %v1672 = vrot.slane %v693, 7
      %v1673 = vsel %vm1547, %v1668, %v1672
      %v1674 = vrot.slane %v694, 7
      %v1675 = vsel %vm1547, %v1670, %v1674
      %v1676 = vrot.slane %v695, 7
      %v1677 = vsel %vm1547, %v1672, %v1676
      %v1678 = vrot.slane %v696, 7
      %v1679 = vsel %vm1547, %v1674, %v1678
      %v1680 = vrot.slane %v697, 7
      %v1681 = vsel %vm1547, %v1676, %v1680
      %v1682 = vrot.slane %v698, 7
      %v1683 = vsel %vm1547, %v1678, %v1682
      %v1684 = vrot.slane %v699, 7
      %v1685 = vsel %vm1547, %v1680, %v1684
      %v1686 = vrot.slane %v700, 7
      %v1687 = vsel %vm1547, %v1682, %v1686
      %v1688 = vrot.slane %v701, 7
      %v1689 = vsel %vm1547, %v1684, %v1688
      %v1690 = vrot.slane %v702, 7
      %v1691 = vsel %vm1547, %v1686, %v1690
      %v1692 = vrot.slane %v703, 7
      %v1693 = vsel %vm1547, %v1688, %v1692
      %v1694 = vrot.slane %v704, 7
      %v1695 = vsel %vm1547, %v1690, %v1694
      %v1696 = vrot.slane %v705, 7
      %v1697 = vsel %vm1547, %v1692, %v1696
      %v1698 = vrot.slane %v706, 7
      %v1699 = vsel %vm1547, %v1694, %v1698
      %v1700 = vrot.slane %v707, 7
      %v1701 = vsel %vm1547, %v1696, %v1700
      %v1702 = vrot.slane %v708, 7
      %v1703 = vsel %vm1547, %v1698, %v1702
      %v1704 = vrot.slane %v709, 7
      %v1705 = vsel %vm1547, %v1700, %v1704
      %v1706 = vrot.slane %v710, 7
      %v1707 = vsel %vm1547, %v1702, %v1706
      %v1708 = vrot.slane %v711, 7
      %v1709 = vsel %vm1547, %v1704, %v1708
      %v1710 = vrot.slane %v712, 7
      %v1711 = vsel %vm1547, %v1706, %v1710
      %v1712 = vrot.slane %v713, 7
      %v1713 = vsel %vm1547, %v1708, %v1712
      %v1714 = vrot.slane %v714, 7
      %v1715 = vsel %vm1547, %v1710, %v1714
      %v1716 = vrot.slane %v715, 7
      %v1717 = vsel %vm1547, %v1712, %v1716
      %v1718 = vrot.slane %v716, 7
      %v1719 = vsel %vm1547, %v1714, %v1718
      %v1720 = vrot.slane %v717, 7
      %v1721 = vsel %vm1547, %v1716, %v1720
      %v1722 = vrot.slane %v718, 7
      %v1723 = vsel %vm1547, %v1718, %v1722
      %v1724 = vrot.slane %v719, 7
      %v1725 = vsel %vm1547, %v1720, %v1724
      %v1726 = vrot.slane %v720, 7
      %v1727 = vsel %vm1547, %v1722, %v1726
      %v1728 = vrot.slane %v721, 7
      %v1729 = vsel %vm1547, %v1724, %v1728
      %v1730 = vrot.slane %v722, 7
      %v1731 = vsel %vm1547, %v1726, %v1730
      %v1732 = vrot.slane %v723, 7
      %v1733 = vsel %vm1547, %v1728, %v1732
      %v1734 = vrot.slane %v724, 7
      %v1735 = vsel %vm1547, %v1730, %v1734
      %v1736 = vrot.slane %v725, 7
      %v1737 = vsel %vm1547, %v1732, %v1736
      %v1738 = vrot.slane %v726, 7
      %v1739 = vsel %vm1547, %v1734, %v1738
      %v1740 = vrot.slane %v727, 7
      %v1741 = vsel %vm1547, %v1736, %v1740
      %v1742 = vrot.slane %v728, 7
      %v1743 = vsel %vm1547, %v1738, %v1742
      %v1744 = vrot.slane %v729, 7
      %v1745 = vsel %vm1547, %v1740, %v1744
      %v1746 = vrot.slane %v730, 7
      %v1747 = vsel %vm1547, %v1742, %v1746
      %v1748 = vrot.slane %v731, 7
      %v1749 = vsel %vm1547, %v1744, %v1748
      %v1750 = vrot.slane %v732, 7
      %v1751 = vsel %vm1547, %v1746, %v1750
      %v1752 = vrot.slane %v733, 7
      %v1753 = vsel %vm1547, %v1748, %v1752
      %v1754 = vrot.slane %v734, 7
      %v1755 = vsel %vm1547, %v1750, %v1754
      %v1756 = vrot.slane %v735, 7
      %v1757 = vsel %vm1547, %v1752, %v1756
      %v1758 = vrot.slane %v736, 7
      %v1759 = vsel %vm1547, %v1754, %v1758
      %v1760 = vrot.slane %v737, 7
      %v1761 = vsel %vm1547, %v1756, %v1760
      %v1762 = vrot.slane %v738, 7
      %v1763 = vsel %vm1547, %v1758, %v1762
      %v1764 = vrot.slane %v739, 7
      %v1765 = vsel %vm1547, %v1760, %v1764
      %v1766 = vrot.slane %v740, 7
      %v1767 = vsel %vm1547, %v1762, %v1766
      %v1768 = vrot.slane %v741, 7
      %v1769 = vsel %vm1547, %v1764, %v1768
      %v1770 = vrot.slane %v742, 7
      %v1771 = vsel %vm1547, %v1766, %v1770
      %v1772 = vrot.slane %v743, 7
      %v1773 = vsel %vm1547, %v1768, %v1772
      %v1774 = vrot.slane %v744, 7
      %v1775 = vsel %vm1547, %v1770, %v1774
      %v1776 = vrot.slane %v745, 7
      %v1777 = vsel %vm1547, %v1772, %v1776
      %v1778 = vrot.slane %v746, 7
      %v1779 = vsel %vm1547, %v1774, %v1778
      %v1780 = vrot.slane %v747, 7
      %v1781 = vsel %vm1547, %v1776, %v1780
      %v1782 = vrot.slane %v748, 7
      %v1783 = vsel %vm1547, %v1778, %v1782
      %v1784 = vrot.slane %v749, 7
      %v1785 = vsel %vm1547, %v1780, %v1784
      %v1786 = vrot.slane %v750, 7
      %v1787 = vsel %vm1547, %v1782, %v1786
      %v1788 = vrot.slane %v751, 7
      %v1789 = vsel %vm1547, %v1784, %v1788
      %v1790 = vrot.slane %v752, 7
      %v1791 = vsel %vm1547, %v1786, %v1790
      %v1792 = vrot.slane %v753, 7
      %v1793 = vsel %vm1547, %v1788, %v1792
      %v1794 = vrot.slane %v754, 7
      %v1795 = vsel %vm1547, %v1790, %v1794
      %v1796 = vrot.slane %v755, 7
      %v1797 = vsel %vm1547, %v1792, %v1796
      %v1798 = vrot.slane %v756, 7
      %v1799 = vsel %vm1547, %v1794, %v1798
      %v1800 = vrot.slane %v757, 7
      %v1801 = vsel %vm1547, %v1796, %v1800
      %v1802 = vrot.slane %v758, 7
      %v1803 = vsel %vm1547, %v1798, %v1802
      %v1804 = vrot.slane %v759, 7
      %v1805 = vsel %vm1547, %v1800, %v1804
      %v1806 = vrot.slane %v760, 7
      %v1807 = vsel %vm1547, %v1802, %v1806
      %v1808 = vrot.slane %v761, 7
      %v1809 = vsel %vm1547, %v1804, %v1808
      %v1810 = vrot.slane %v762, 7
      %v1811 = vsel %vm1547, %v1806, %v1810
      %v1812 = vrot.slane %v763, 7
      %v1813 = vsel %vm1547, %v1808, %v1812
      %v1814 = vrot.slane %v764, 7
      %v1815 = vsel %vm1547, %v1810, %v1814
      %v1816 = vrot.slane %v765, 7
      %v1817 = vsel %vm1547, %v1812, %v1816
      %v1818 = vrot.slane %v766, 7
      %v1819 = vsel %vm1547, %v1814, %v1818
      %v1820 = vrot.slane %v767, 7
      %v1821 = vsel %vm1547, %v1816, %v1820
      %v1822 = vrot.slane %v768, 7
      %v1823 = vsel %vm1547, %v1818, %v1822
      %v1824 = vrot.slane %v769, 7
      %v1825 = vsel %vm1547, %v1820, %v1824
      %v1826 = vrot.slane %v770, 7
      %v1827 = vsel %vm1547, %v1822, %v1826
      %v1828 = vrot.slane %v771, 7
      %v1829 = vsel %vm1547, %v1824, %v1828
      %v1830 = vrot.slane %v772, 7
      %v1831 = vsel %vm1547, %v1826, %v1830
      %v1832 = vrot.slane %v773, 7
      %v1833 = vsel %vm1547, %v1828, %v1832
      %v1834 = vrot.slane %v774, 7
      %v1835 = vsel %vm1547, %v1830, %v1834
      %v1836 = vrot.slane %v775, 7
      %v1837 = vsel %vm1547, %v1832, %v1836
      %v1838 = vrot.slane %v776, 7
      %v1839 = vsel %vm1547, %v1834, %v1838
      %v1840 = vrot.slane %v777, 7
      %v1841 = vsel %vm1547, %v1836, %v1840
      %v1842 = vrot.slane %v778, 7
      %v1843 = vsel %vm1547, %v1838, %v1842
      %v1844 = vrot.slane %v779, 7
      %v1845 = vsel %vm1547, %v1840, %v1844
      %v1846 = vrot.slane %v780, 7
      %v1847 = vsel %vm1547, %v1842, %v1846
      %v1848 = vrot.slane %v781, 7
      %v1849 = vsel %vm1547, %v1844, %v1848
      %v1850 = vrot.slane %v782, 7
      %v1851 = vsel %vm1547, %v1846, %v1850
      %v1852 = vrot.slane %v783, 7
      %v1853 = vsel %vm1547, %v1848, %v1852
      %v1854 = vrot.slane %v784, 7
      %v1855 = vsel %vm1547, %v1850, %v1854
      %v1856 = vrot.slane %v785, 7
      %v1857 = vsel %vm1547, %v1852, %v1856
      %v1858 = vrot.slane %v786, 7
      %v1859 = vsel %vm1547, %v1854, %v1858
      %v1860 = vrot.slane %v787, 7
      %v1861 = vsel %vm1547, %v1856, %v1860
      %v1862 = vrot.slane %v788, 7
      %v1863 = vsel %vm1547, %v1858, %v1862
      %v1864 = vrot.slane %v789, 7
      %v1865 = vsel %vm1547, %v1860, %v1864
      %v1866 = vrot.slane %v790, 7
      %v1867 = vsel %vm1547, %v1862, %v1866
      %v1868 = vrot.slane %v791, 7
      %v1869 = vsel %vm1547, %v1864, %v1868
      %v1870 = vrot.slane %v792, 7
      %v1871 = vsel %vm1547, %v1866, %v1870
      %v1872 = vrot.slane %v793, 7
      %v1873 = vsel %vm1547, %v1868, %v1872
      %v1874 = vrot.slane %v794, 7
      %v1875 = vsel %vm1547, %v1870, %v1874
      %v1876 = vrot.slane %v795, 7
      %v1877 = vsel %vm1547, %v1872, %v1876
      %v1878 = vrot.slane %v796, 7
      %v1879 = vsel %vm1547, %v1874, %v1878
      %v1880 = vrot.slane %v797, 7
      %v1881 = vsel %vm1547, %v1876, %v1880
      %v1882 = vrot.slane %v798, 7
      %v1883 = vsel %vm1547, %v1878, %v1882
      %v1884 = vrot.slane %v799, 7
      %v1885 = vsel %vm1547, %v1880, %v1884
      %v1886 = vrot.slane %v800, 7
      %v1887 = vsel %vm1547, %v1882, %v1886
      %v1888 = vrot.slane %v801, 7
      %v1889 = vsel %vm1547, %v1884, %v1888
      %v1890 = vrot.slane %v802, 7
      %v1891 = vsel %vm1547, %v1886, %v1890
      %v1892 = vrot.slane %v803, 7
      %v1893 = vsel %vm1547, %v1888, %v1892
      %v1894 = vrot.slane %v804, 7
      %v1895 = vsel %vm1547, %v1890, %v1894
      %v1896 = vrot.slane %v805, 7
      %v1897 = vsel %vm1547, %v1892, %v1896
      %v1898 = vrot.slane %v806, 7
      %v1899 = vsel %vm1547, %v1894, %v1898
      %v1900 = vrot.slane %v807, 7
      %v1901 = vsel %vm1547, %v1896, %v1900
      %v1902 = vrot.slane %v808, 7
      %v1903 = vsel %vm1547, %v1898, %v1902
      %v1904 = vrot.slane %v809, 7
      %v1905 = vsel %vm1547, %v1900, %v1904
      %v1906 = vrot.slane %v810, 7
      %v1907 = vsel %vm1547, %v1902, %v1906
      %v1908 = vrot.slane %v811, 7
      %v1909 = vsel %vm1547, %v1904, %v1908
      %v1910 = vrot.slane %v812, 7
      %v1911 = vsel %vm1547, %v1906, %v1910
      %v1912 = vrot.slane %v813, 7
      %v1913 = vsel %vm1547, %v1908, %v1912
      %v1914 = vrot.slane %v814, 7
      %v1915 = vsel %vm1547, %v1910, %v1914
      %v1916 = vrot.slane %v815, 7
      %v1917 = vsel %vm1547, %v1912, %v1916
      %v1918 = vrot.slane %v816, 7
      %v1919 = vsel %vm1547, %v1914, %v1918
      %v1920 = vrot.slane %v817, 7
      %v1921 = vsel %vm1547, %v1916, %v1920
      %v1922 = vrot.slane %v818, 7
      %v1923 = vsel %vm1547, %v1918, %v1922
      %v1924 = vrot.slane %v819, 7
      %v1925 = vsel %vm1547, %v1920, %v1924
      %2114 = vmatprep.subr.mxu0 0.0
      %2115 = vmatpush1.msra.mxu0 %v499
      %2116 = vmatprep.subr.mxu0 0.0
      %2117 = vmatpush1.msra.mxu0 %v500
      %2118 = vmatprep.subr.mxu0 0.0
      %2119 = vmatpush1.msra.mxu0 %v501
      %2120 = vmatprep.subr.mxu0 0.0
      %2121 = vmatpush1.msra.mxu0 %v502
      %2122 = vmatprep.subr.mxu0 0.0
      %2123 = vmatpush1.msra.mxu0 %v503
      %2124 = vmatprep.subr.mxu0 0.0
      %2125 = vmatpush1.msra.mxu0 %v504
      %2126 = vmatprep.subr.mxu0 0.0
      %2127 = vmatpush1.msra.mxu0 %v505
      %2128 = vmatprep.subr.mxu0 0.0
      %2129 = vmatpush1.msra.mxu0 %v506
      %2130 = vmatprep.subr.mxu0 0.0
      %2131 = vmatpush1.msra.mxu0 %v507
      %2132 = vmatprep.subr.mxu0 0.0
      %2133 = vmatpush1.msra.mxu0 %v508
      %2134 = vmatprep.subr.mxu0 0.0
      %2135 = vmatpush1.msra.mxu0 %v509
      %2136 = vmatprep.subr.mxu0 0.0
      %2137 = vmatpush1.msra.mxu0 %v510
      %2138 = vmatprep.subr.mxu0 0.0
      %2139 = vmatpush1.msra.mxu0 %v511
      %2140 = vmatprep.subr.mxu0 0.0
      %2141 = vmatpush1.msra.mxu0 %v512
      %2142 = vmatprep.subr.mxu0 0.0
      %2143 = vmatpush1.msra.mxu0 %v513
      %2144 = vmatprep.subr.mxu0 0.0
      %2145 = vmatpush1.msra.mxu0 %v514
      %2146 = vmatprep.subr.mxu0 0.0
      %2147 = vmatpush1.msra.mxu0 %v515
      %2148 = vmatprep.subr.mxu0 0.0
      %2149 = vmatpush1.msra.mxu0 %v516
      %2150 = vmatprep.subr.mxu0 0.0
      %2151 = vmatpush1.msra.mxu0 %v517
      %2152 = vmatprep.subr.mxu0 0.0
      %2153 = vmatpush1.msra.mxu0 %v518
      %2154 = vmatprep.subr.mxu0 0.0
      %2155 = vmatpush1.msra.mxu0 %v519
      %2156 = vmatprep.subr.mxu0 0.0
      %2157 = vmatpush1.msra.mxu0 %v520
      %2158 = vmatprep.subr.mxu0 0.0
      %2159 = vmatpush1.msra.mxu0 %v521
      %2160 = vmatprep.subr.mxu0 0.0
      %2161 = vmatpush1.msra.mxu0 %v522
      %2162 = vmatprep.subr.mxu0 0.0
      %2163 = vmatpush1.msra.mxu0 %v523
      %2164 = vmatprep.subr.mxu0 0.0
      %2165 = vmatpush1.msra.mxu0 %v524
      %2166 = vmatprep.subr.mxu0 0.0
      %2167 = vmatpush1.msra.mxu0 %v525
      %2168 = vmatprep.subr.mxu0 0.0
      %2169 = vmatpush1.msra.mxu0 %v526
      %2170 = vmatprep.subr.mxu0 0.0
      %2171 = vmatpush1.msra.mxu0 %v527
      %2172 = vmatprep.subr.mxu0 0.0
      %2173 = vmatpush1.msra.mxu0 %v528
      %2174 = vmatprep.subr.mxu0 0.0
      %2175 = vmatpush1.msra.mxu0 %v529
      %2176 = vmatprep.subr.mxu0 0.0
      %2177 = vmatpush1.msra.mxu0 %v530
      %2178 = vmatprep.mubr.f32.mxu0 %v1553
      %2179 = vmatmul.mubr.f32.gmra.mrb[0].mxu0 %v1550
      %v2180 = vpop.f32.mrb[0].mxu0
      %v2181 = vadd.f32 %v889, %v2180
      %v2182 = vpop.f32.mrb[0].mxu0
      %2183 = vmatprep.mubr.f32.mxu0 %v1557
      %2184 = vmatmul.mubr.f32.gmra.mrb[0].mxu0 %v1555
      %v2185 = vpop.f32.mrb[0].mxu0
      %v2186 = vadd.f32 %v894, %v2185
      %v2187 = vpop.f32.mrb[0].mxu0
      %2188 = vmatprep.mubr.f32.mxu0 %v1561
      %2189 = vmatmul.mubr.f32.gmra.mrb[0].mxu0 %v1559
      %v2190 = vpop.f32.mrb[0].mxu0
      %v2191 = vadd.f32 %v899, %v2190
      %v2192 = vpop.f32.mrb[0].mxu0
      %2193 = vmatprep.mubr.f32.mxu0 %v1565
      %2194 = vmatmul.mubr.f32.gmra.mrb[0].mxu0 %v1563
      %v2195 = vpop.f32.mrb[0].mxu0
      %v2196 = vadd.f32 %v904, %v2195
      %v2197 = vpop.f32.mrb[0].mxu0
      %2198 = vmatprep.mubr.f32.mxu0 %v1569
      %2199 = vmatmul.mubr.f32.gmra.mrb[0].mxu0 %v1567
      %v2200 = vpop.f32.mrb[0].mxu0
      %v2201 = vadd.f32 %v909, %v2200
      %v2202 = vpop.f32.mrb[0].mxu0
      %2203 = vmatprep.mubr.f32.mxu0 %v1573
      %2204 = vmatmul.mubr.f32.gmra.mrb[0].mxu0 %v1571
      %v2205 = vpop.f32.mrb[0].mxu0
      %v2206 = vadd.f32 %v914, %v2205
      %v2207 = vpop.f32.mrb[0].mxu0
      %2208 = vmatprep.mubr.f32.mxu0 %v1577
      %2209 = vmatmul.mubr.f32.gmra.mrb[0].mxu0 %v1575
      %v2210 = vpop.f32.mrb[0].mxu0
      %v2211 = vadd.f32 %v919, %v2210
      %v2212 = vpop.f32.mrb[0].mxu0
      %2213 = vmatprep.mubr.f32.mxu0 %v1581
      %2214 = vmatmul.mubr.f32.gmra.mrb[0].mxu0 %v1579
      %v2215 = vpop.f32.mrb[0].mxu0
      %v2216 = vadd.f32 %v924, %v2215
      %v2217 = vpop.f32.mrb[0].mxu0
      %2218 = vmatprep.mubr.f32.mxu0 %v1585
      %2219 = vmatmul.mubr.f32.gmra.mrb[0].mxu0 %v1583
      %v2220 = vpop.f32.mrb[0].mxu0
      %v2221 = vadd.f32 %v929, %v2220
      %v2222 = vpop.f32.mrb[0].mxu0
      %2223 = vmatprep.mubr.f32.mxu0 %v1589
      %2224 = vmatmul.mubr.f32.gmra.mrb[0].mxu0 %v1587
      %v2225 = vpop.f32.mrb[0].mxu0
      %v2226 = vadd.f32 %v934, %v2225
      %v2227 = vpop.f32.mrb[0].mxu0
      %2228 = vmatprep.mubr.f32.mxu0 %v1593
      %2229 = vmatmul.mubr.f32.gmra.mrb[0].mxu0 %v1591
      %v2230 = vpop.f32.mrb[0].mxu0
      %v2231 = vadd.f32 %v939, %v2230
      %v2232 = vpop.f32.mrb[0].mxu0
      %2233 = vmatprep.mubr.f32.mxu0 %v1597
      %2234 = vmatmul.mubr.f32.gmra.mrb[0].mxu0 %v1595
      %v2235 = vpop.f32.mrb[0].mxu0
      %v2236 = vadd.f32 %v944, %v2235
      %v2237 = vpop.f32.mrb[0].mxu0
      %2238 = vmatprep.mubr.f32.mxu0 %v1601
      %2239 = vmatmul.mubr.f32.gmra.mrb[0].mxu0 %v1599
      %v2240 = vpop.f32.mrb[0].mxu0
      %v2241 = vadd.f32 %v949, %v2240
      %v2242 = vpop.f32.mrb[0].mxu0
      %2243 = vmatprep.mubr.f32.mxu0 %v1605
      %2244 = vmatmul.mubr.f32.gmra.mrb[0].mxu0 %v1603
      %v2245 = vpop.f32.mrb[0].mxu0
      %v2246 = vadd.f32 %v954, %v2245
      %v2247 = vpop.f32.mrb[0].mxu0
      %2248 = vmatprep.mubr.f32.mxu0 %v1609
      %2249 = vmatmul.mubr.f32.gmra.mrb[0].mxu0 %v1607
      %v2250 = vpop.f32.mrb[0].mxu0
      %v2251 = vadd.f32 %v959, %v2250
      %v2252 = vpop.f32.mrb[0].mxu0
      %2253 = vmatprep.mubr.f32.mxu0 %v1613
      %2254 = vmatmul.mubr.f32.gmra.mrb[0].mxu0 %v1611
      %v2255 = vpop.f32.mrb[0].mxu0
      %v2256 = vadd.f32 %v964, %v2255
      %v2257 = vpop.f32.mrb[0].mxu0
      %2258 = vmatprep.mubr.f32.mxu0 %v1617
      %2259 = vmatmul.mubr.f32.gmra.mrb[0].mxu0 %v1615
      %v2260 = vpop.f32.mrb[0].mxu0
      %v2261 = vadd.f32 %v969, %v2260
      %v2262 = vpop.f32.mrb[0].mxu0
      %2263 = vmatprep.mubr.f32.mxu0 %v1621
      %2264 = vmatmul.mubr.f32.gmra.mrb[0].mxu0 %v1619
      %v2265 = vpop.f32.mrb[0].mxu0
      %v2266 = vadd.f32 %v974, %v2265
      %v2267 = vpop.f32.mrb[0].mxu0
      %2268 = vmatprep.mubr.f32.mxu0 %v1625
      %2269 = vmatmul.mubr.f32.gmra.mrb[0].mxu0 %v1623
      %v2270 = vpop.f32.mrb[0].mxu0
      %v2271 = vadd.f32 %v979, %v2270
      %v2272 = vpop.f32.mrb[0].mxu0
      %2273 = vmatprep.mubr.f32.mxu0 %v1629
      %2274 = vmatmul.mubr.f32.gmra.mrb[0].mxu0 %v1627
      %v2275 = vpop.f32.mrb[0].mxu0
      %v2276 = vadd.f32 %v984, %v2275
      %v2277 = vpop.f32.mrb[0].mxu0
      %2278 = vmatprep.mubr.f32.mxu0 %v1633
      %2279 = vmatmul.mubr.f32.gmra.mrb[0].mxu0 %v1631
      %v2280 = vpop.f32.mrb[0].mxu0
      %v2281 = vadd.f32 %v989, %v2280
      %v2282 = vpop.f32.mrb[0].mxu0
      %2283 = vmatprep.mubr.f32.mxu0 %v1637
      %2284 = vmatmul.mubr.f32.gmra.mrb[0].mxu0 %v1635
      %v2285 = vpop.f32.mrb[0].mxu0
      %v2286 = vadd.f32 %v994, %v2285
      %v2287 = vpop.f32.mrb[0].mxu0
      %2288 = vmatprep.mubr.f32.mxu0 %v1641
      %2289 = vmatmul.mubr.f32.gmra.mrb[0].mxu0 %v1639
      %v2290 = vpop.f32.mrb[0].mxu0
      %v2291 = vadd.f32 %v999, %v2290
      %v2292 = vpop.f32.mrb[0].mxu0
      %2293 = vmatprep.mubr.f32.mxu0 %v1645
      %2294 = vmatmul.mubr.f32.gmra.mrb[0].mxu0 %v1643
      %v2295 = vpop.f32.mrb[0].mxu0
      %v2296 = vadd.f32 %v1004, %v2295
      %v2297 = vpop.f32.mrb[0].mxu0
      %2298 = vmatprep.mubr.f32.mxu0 %v1649
      %2299 = vmatmul.mubr.f32.gmra.mrb[0].mxu0 %v1647
      %v2300 = vpop.f32.mrb[0].mxu0
      %v2301 = vadd.f32 %v1009, %v2300
      %v2302 = vpop.f32.mrb[0].mxu0
      %2303 = vmatprep.mubr.f32.mxu0 %v1653
      %2304 = vmatmul.mubr.f32.gmra.mrb[0].mxu0 %v1651
      %v2305 = vpop.f32.mrb[0].mxu0
      %v2306 = vadd.f32 %v1014, %v2305
      %v2307 = vpop.f32.mrb[0].mxu0
      %2308 = vmatprep.mubr.f32.mxu0 %v1657
      %2309 = vmatmul.mubr.f32.gmra.mrb[0].mxu0 %v1655
      %v2310 = vpop.f32.mrb[0].mxu0
      %v2311 = vadd.f32 %v1019, %v2310
      %v2312 = vpop.f32.mrb[0].mxu0
      %2313 = vmatprep.mubr.f32.mxu0 %v1661
      %2314 = vmatmul.mubr.f32.gmra.mrb[0].mxu0 %v1659
      %v2315 = vpop.f32.mrb[0].mxu0
      %v2316 = vadd.f32 %v1024, %v2315
      %v2317 = vpop.f32.mrb[0].mxu0
      %2318 = vmatprep.mubr.f32.mxu0 %v1665
      %2319 = vmatmul.mubr.f32.gmra.mrb[0].mxu0 %v1663
      %v2320 = vpop.f32.mrb[0].mxu0
      %v2321 = vadd.f32 %v1029, %v2320
      %v2322 = vpop.f32.mrb[0].mxu0
      %2323 = vmatprep.mubr.f32.mxu0 %v1669
      %2324 = vmatmul.mubr.f32.gmra.mrb[0].mxu0 %v1667
      %v2325 = vpop.f32.mrb[0].mxu0
      %v2326 = vadd.f32 %v1034, %v2325
      %v2327 = vpop.f32.mrb[0].mxu0
      %2328 = vmatprep.mubr.f32.mxu0 %v1673
      %2329 = vmatmul.mubr.f32.gmra.mrb[0].mxu0 %v1671
      %v2330 = vpop.f32.mrb[0].mxu0
      %v2331 = vadd.f32 %v1039, %v2330
      %v2332 = vpop.f32.mrb[0].mxu0
      %2333 = vmatprep.mubr.f32.mxu0 %v1677
      %2334 = vmatmul.mubr.f32.gmra.mrb[0].mxu0 %v1675
      %v2335 = vpop.f32.mrb[0].mxu0
      %v2336 = vadd.f32 %v1044, %v2335
      %v2337 = vpop.f32.mrb[0].mxu0
      %2338 = vmatprep.mubr.f32.mxu0 %v1681
      %2339 = vmatmul.mubr.f32.gmra.mrb[0].mxu0 %v1679
      %v2340 = vpop.f32.mrb[0].mxu0
      %v2341 = vadd.f32 %v1049, %v2340
      %v2342 = vpop.f32.mrb[0].mxu0
      %2343 = vmatprep.mubr.f32.mxu0 %v1685
      %2344 = vmatmul.mubr.f32.gmra.mrb[0].mxu0 %v1683
      %v2345 = vpop.f32.mrb[0].mxu0
      %v2346 = vadd.f32 %v1054, %v2345
      %v2347 = vpop.f32.mrb[0].mxu0
      %2348 = vmatprep.mubr.f32.mxu0 %v1689
      %2349 = vmatmul.mubr.f32.gmra.mrb[0].mxu0 %v1687
      %v2350 = vpop.f32.mrb[0].mxu0
      %v2351 = vadd.f32 %v1059, %v2350
      %v2352 = vpop.f32.mrb[0].mxu0
      %2353 = vmatprep.mubr.f32.mxu0 %v1693
      %2354 = vmatmul.mubr.f32.gmra.mrb[0].mxu0 %v1691
      %v2355 = vpop.f32.mrb[0].mxu0
      %v2356 = vadd.f32 %v1064, %v2355
      %v2357 = vpop.f32.mrb[0].mxu0
      %2358 = vmatprep.mubr.f32.mxu0 %v1697
      %2359 = vmatmul.mubr.f32.gmra.mrb[0].mxu0 %v1695
      %v2360 = vpop.f32.mrb[0].mxu0
      %v2361 = vadd.f32 %v1069, %v2360
      %v2362 = vpop.f32.mrb[0].mxu0
      %2363 = vmatprep.mubr.f32.mxu0 %v1701
      %2364 = vmatmul.mubr.f32.gmra.mrb[0].mxu0 %v1699
      %v2365 = vpop.f32.mrb[0].mxu0
      %v2366 = vadd.f32 %v1074, %v2365
      %v2367 = vpop.f32.mrb[0].mxu0
      %2368 = vmatprep.mubr.f32.mxu0 %v1705
      %2369 = vmatmul.mubr.f32.gmra.mrb[0].mxu0 %v1703
      %v2370 = vpop.f32.mrb[0].mxu0
      %v2371 = vadd.f32 %v1079, %v2370
      %v2372 = vpop.f32.mrb[0].mxu0
      %2373 = vmatprep.mubr.f32.mxu0 %v1709
      %2374 = vmatmul.mubr.f32.gmra.mrb[0].mxu0 %v1707
      %v2375 = vpop.f32.mrb[0].mxu0
      %v2376 = vadd.f32 %v1084, %v2375
      %v2377 = vpop.f32.mrb[0].mxu0
      %2378 = vmatprep.mubr.f32.mxu0 %v1713
      %2379 = vmatmul.mubr.f32.gmra.mrb[0].mxu0 %v1711
      %v2380 = vpop.f32.mrb[0].mxu0
      %v2381 = vadd.f32 %v1089, %v2380
      %v2382 = vpop.f32.mrb[0].mxu0
      %2383 = vmatprep.mubr.f32.mxu0 %v1717
      %2384 = vmatmul.mubr.f32.gmra.mrb[0].mxu0 %v1715
      %v2385 = vpop.f32.mrb[0].mxu0
      %v2386 = vadd.f32 %v1094, %v2385
      %v2387 = vpop.f32.mrb[0].mxu0
      %2388 = vmatprep.mubr.f32.mxu0 %v1721
      %2389 = vmatmul.mubr.f32.gmra.mrb[0].mxu0 %v1719
      %v2390 = vpop.f32.mrb[0].mxu0
      %v2391 = vadd.f32 %v1099, %v2390
      %v2392 = vpop.f32.mrb[0].mxu0
      %2393 = vmatprep.mubr.f32.mxu0 %v1725
      %2394 = vmatmul.mubr.f32.gmra.mrb[0].mxu0 %v1723
      %v2395 = vpop.f32.mrb[0].mxu0
      %v2396 = vadd.f32 %v1104, %v2395
      %v2397 = vpop.f32.mrb[0].mxu0
      %2398 = vmatprep.mubr.f32.mxu0 %v1729
      %2399 = vmatmul.mubr.f32.gmra.mrb[0].mxu0 %v1727
      %v2400 = vpop.f32.mrb[0].mxu0
      %v2401 = vadd.f32 %v1109, %v2400
      %v2402 = vpop.f32.mrb[0].mxu0
      %2403 = vmatprep.mubr.f32.mxu0 %v1733
      %2404 = vmatmul.mubr.f32.gmra.mrb[0].mxu0 %v1731
      %v2405 = vpop.f32.mrb[0].mxu0
      %v2406 = vadd.f32 %v1114, %v2405
      %v2407 = vpop.f32.mrb[0].mxu0
      %2408 = vmatprep.mubr.f32.mxu0 %v1737
      %2409 = vmatmul.mubr.f32.gmra.mrb[0].mxu0 %v1735
      %v2410 = vpop.f32.mrb[0].mxu0
      %v2411 = vadd.f32 %v1119, %v2410
      %v2412 = vpop.f32.mrb[0].mxu0
      %2413 = vmatprep.mubr.f32.mxu0 %v1741
      %2414 = vmatmul.mubr.f32.gmra.mrb[0].mxu0 %v1739
      %v2415 = vpop.f32.mrb[0].mxu0
      %v2416 = vadd.f32 %v1124, %v2415
      %v2417 = vpop.f32.mrb[0].mxu0
      %2418 = vmatprep.mubr.f32.mxu0 %v1745
      %2419 = vmatmul.mubr.f32.gmra.mrb[0].mxu0 %v1743
      %v2420 = vpop.f32.mrb[0].mxu0
      %v2421 = vadd.f32 %v1129, %v2420
      %v2422 = vpop.f32.mrb[0].mxu0
      %2423 = vmatprep.mubr.f32.mxu0 %v1749
      %2424 = vmatmul.mubr.f32.gmra.mrb[0].mxu0 %v1747
      %v2425 = vpop.f32.mrb[0].mxu0
      %v2426 = vadd.f32 %v1134, %v2425
      %v2427 = vpop.f32.mrb[0].mxu0
      %2428 = vmatprep.mubr.f32.mxu0 %v1753
      %2429 = vmatmul.mubr.f32.gmra.mrb[0].mxu0 %v1751
      %v2430 = vpop.f32.mrb[0].mxu0
      %v2431 = vadd.f32 %v1139, %v2430
      %v2432 = vpop.f32.mrb[0].mxu0
      %2433 = vmatprep.mubr.f32.mxu0 %v1757
      %2434 = vmatmul.mubr.f32.gmra.mrb[0].mxu0 %v1755
      %v2435 = vpop.f32.mrb[0].mxu0
      %v2436 = vadd.f32 %v1144, %v2435
      %v2437 = vpop.f32.mrb[0].mxu0
      %2438 = vmatprep.mubr.f32.mxu0 %v1761
      %2439 = vmatmul.mubr.f32.gmra.mrb[0].mxu0 %v1759
      %v2440 = vpop.f32.mrb[0].mxu0
      %v2441 = vadd.f32 %v1149, %v2440
      %v2442 = vpop.f32.mrb[0].mxu0
      %2443 = vmatprep.mubr.f32.mxu0 %v1765
      %2444 = vmatmul.mubr.f32.gmra.mrb[0].mxu0 %v1763
      %v2445 = vpop.f32.mrb[0].mxu0
      %v2446 = vadd.f32 %v1154, %v2445
      %v2447 = vpop.f32.mrb[0].mxu0
      %2448 = vmatprep.mubr.f32.mxu0 %v1769
      %2449 = vmatmul.mubr.f32.gmra.mrb[0].mxu0 %v1767
      %v2450 = vpop.f32.mrb[0].mxu0
      %v2451 = vadd.f32 %v1159, %v2450
      %v2452 = vpop.f32.mrb[0].mxu0
      %2453 = vmatprep.mubr.f32.mxu0 %v1773
      %2454 = vmatmul.mubr.f32.gmra.mrb[0].mxu0 %v1771
      %v2455 = vpop.f32.mrb[0].mxu0
      %v2456 = vadd.f32 %v1164, %v2455
      %v2457 = vpop.f32.mrb[0].mxu0
      %2458 = vmatprep.mubr.f32.mxu0 %v1777
      %2459 = vmatmul.mubr.f32.gmra.mrb[0].mxu0 %v1775
      %v2460 = vpop.f32.mrb[0].mxu0
      %v2461 = vadd.f32 %v1169, %v2460
      %v2462 = vpop.f32.mrb[0].mxu0
      %2463 = vmatprep.mubr.f32.mxu0 %v1781
      %2464 = vmatmul.mubr.f32.gmra.mrb[0].mxu0 %v1779
      %v2465 = vpop.f32.mrb[0].mxu0
      %v2466 = vadd.f32 %v1174, %v2465
      %v2467 = vpop.f32.mrb[0].mxu0
      %2468 = vmatprep.mubr.f32.mxu0 %v1785
      %2469 = vmatmul.mubr.f32.gmra.mrb[0].mxu0 %v1783
      %v2470 = vpop.f32.mrb[0].mxu0
      %v2471 = vadd.f32 %v1179, %v2470
      %v2472 = vpop.f32.mrb[0].mxu0
      %2473 = vmatprep.mubr.f32.mxu0 %v1789
      %2474 = vmatmul.mubr.f32.gmra.mrb[0].mxu0 %v1787
      %v2475 = vpop.f32.mrb[0].mxu0
      %v2476 = vadd.f32 %v1184, %v2475
      %v2477 = vpop.f32.mrb[0].mxu0
      %2478 = vmatprep.mubr.f32.mxu0 %v1793
      %2479 = vmatmul.mubr.f32.gmra.mrb[0].mxu0 %v1791
      %v2480 = vpop.f32.mrb[0].mxu0
      %v2481 = vadd.f32 %v1189, %v2480
      %v2482 = vpop.f32.mrb[0].mxu0
      %2483 = vmatprep.mubr.f32.mxu0 %v1797
      %2484 = vmatmul.mubr.f32.gmra.mrb[0].mxu0 %v1795
      %v2485 = vpop.f32.mrb[0].mxu0
      %v2486 = vadd.f32 %v1194, %v2485
      %v2487 = vpop.f32.mrb[0].mxu0
      %2488 = vmatprep.mubr.f32.mxu0 %v1801
      %2489 = vmatmul.mubr.f32.gmra.mrb[0].mxu0 %v1799
      %v2490 = vpop.f32.mrb[0].mxu0
      %v2491 = vadd.f32 %v1199, %v2490
      %v2492 = vpop.f32.mrb[0].mxu0
      %2493 = vmatprep.mubr.f32.mxu0 %v1805
      %2494 = vmatmul.mubr.f32.gmra.mrb[0].mxu0 %v1803
      %v2495 = vpop.f32.mrb[0].mxu0
      %v2496 = vadd.f32 %v1204, %v2495
      %v2497 = vpop.f32.mrb[0].mxu0
      %2498 = vmatprep.mubr.f32.mxu0 %v1809
      %2499 = vmatmul.mubr.f32.gmra.mrb[0].mxu0 %v1807
      %v2500 = vpop.f32.mrb[0].mxu0
      %v2501 = vadd.f32 %v1209, %v2500
      %v2502 = vpop.f32.mrb[0].mxu0
      %2503 = vmatprep.mubr.f32.mxu0 %v1813
      %2504 = vmatmul.mubr.f32.gmra.mrb[0].mxu0 %v1811
      %v2505 = vpop.f32.mrb[0].mxu0
      %v2506 = vadd.f32 %v1214, %v2505
      %v2507 = vpop.f32.mrb[0].mxu0
      %2508 = vmatprep.mubr.f32.mxu0 %v1817
      %2509 = vmatmul.mubr.f32.gmra.mrb[0].mxu0 %v1815
      %v2510 = vpop.f32.mrb[0].mxu0
      %v2511 = vadd.f32 %v1219, %v2510
      %v2512 = vpop.f32.mrb[0].mxu0
      %2513 = vmatprep.mubr.f32.mxu0 %v1821
      %2514 = vmatmul.mubr.f32.gmra.mrb[0].mxu0 %v1819
      %v2515 = vpop.f32.mrb[0].mxu0
      %v2516 = vadd.f32 %v1224, %v2515
      %v2517 = vpop.f32.mrb[0].mxu0
      %2518 = vmatprep.mubr.f32.mxu0 %v1825
      %2519 = vmatmul.mubr.f32.gmra.mrb[0].mxu0 %v1823
      %v2520 = vpop.f32.mrb[0].mxu0
      %v2521 = vadd.f32 %v1229, %v2520
      %v2522 = vpop.f32.mrb[0].mxu0
      %2523 = vmatprep.mubr.f32.mxu0 %v1829
      %2524 = vmatmul.mubr.f32.gmra.mrb[0].mxu0 %v1827
      %v2525 = vpop.f32.mrb[0].mxu0
      %v2526 = vadd.f32 %v1234, %v2525
      %v2527 = vpop.f32.mrb[0].mxu0
      %2528 = vmatprep.mubr.f32.mxu0 %v1833
      %2529 = vmatmul.mubr.f32.gmra.mrb[0].mxu0 %v1831
      %v2530 = vpop.f32.mrb[0].mxu0
      %v2531 = vadd.f32 %v1239, %v2530
      %v2532 = vpop.f32.mrb[0].mxu0
      %2533 = vmatprep.mubr.f32.mxu0 %v1837
      %2534 = vmatmul.mubr.f32.gmra.mrb[0].mxu0 %v1835
      %v2535 = vpop.f32.mrb[0].mxu0
      %v2536 = vadd.f32 %v1244, %v2535
      %v2537 = vpop.f32.mrb[0].mxu0
      %2538 = vmatprep.mubr.f32.mxu0 %v1841
      %2539 = vmatmul.mubr.f32.gmra.mrb[0].mxu0 %v1839
      %v2540 = vpop.f32.mrb[0].mxu0
      %v2541 = vadd.f32 %v1249, %v2540
      %v2542 = vpop.f32.mrb[0].mxu0
      %2543 = vmatprep.mubr.f32.mxu0 %v1845
      %2544 = vmatmul.mubr.f32.gmra.mrb[0].mxu0 %v1843
      %v2545 = vpop.f32.mrb[0].mxu0
      %v2546 = vadd.f32 %v1254, %v2545
      %v2547 = vpop.f32.mrb[0].mxu0
      %2548 = vmatprep.mubr.f32.mxu0 %v1849
      %2549 = vmatmul.mubr.f32.gmra.mrb[0].mxu0 %v1847
      %v2550 = vpop.f32.mrb[0].mxu0
      %v2551 = vadd.f32 %v1259, %v2550
      %v2552 = vpop.f32.mrb[0].mxu0
      %2553 = vmatprep.mubr.f32.mxu0 %v1853
      %2554 = vmatmul.mubr.f32.gmra.mrb[0].mxu0 %v1851
      %v2555 = vpop.f32.mrb[0].mxu0
      %v2556 = vadd.f32 %v1264, %v2555
      %v2557 = vpop.f32.mrb[0].mxu0
      %2558 = vmatprep.mubr.f32.mxu0 %v1857
      %2559 = vmatmul.mubr.f32.gmra.mrb[0].mxu0 %v1855
      %v2560 = vpop.f32.mrb[0].mxu0
      %v2561 = vadd.f32 %v1269, %v2560
      %v2562 = vpop.f32.mrb[0].mxu0
      %2563 = vmatprep.mubr.f32.mxu0 %v1861
      %2564 = vmatmul.mubr.f32.gmra.mrb[0].mxu0 %v1859
      %v2565 = vpop.f32.mrb[0].mxu0
      %v2566 = vadd.f32 %v1274, %v2565
      %v2567 = vpop.f32.mrb[0].mxu0
      %2568 = vmatprep.mubr.f32.mxu0 %v1865
      %2569 = vmatmul.mubr.f32.gmra.mrb[0].mxu0 %v1863
      %v2570 = vpop.f32.mrb[0].mxu0
      %v2571 = vadd.f32 %v1279, %v2570
      %v2572 = vpop.f32.mrb[0].mxu0
      %2573 = vmatprep.mubr.f32.mxu0 %v1869
      %2574 = vmatmul.mubr.f32.gmra.mrb[0].mxu0 %v1867
      %v2575 = vpop.f32.mrb[0].mxu0
      %v2576 = vadd.f32 %v1284, %v2575
      %v2577 = vpop.f32.mrb[0].mxu0
      %2578 = vmatprep.mubr.f32.mxu0 %v1873
      %2579 = vmatmul.mubr.f32.gmra.mrb[0].mxu0 %v1871
      %v2580 = vpop.f32.mrb[0].mxu0
      %v2581 = vadd.f32 %v1289, %v2580
      %v2582 = vpop.f32.mrb[0].mxu0
      %2583 = vmatprep.mubr.f32.mxu0 %v1877
      %2584 = vmatmul.mubr.f32.gmra.mrb[0].mxu0 %v1875
      %v2585 = vpop.f32.mrb[0].mxu0
      %v2586 = vadd.f32 %v1294, %v2585
      %v2587 = vpop.f32.mrb[0].mxu0
      %2588 = vmatprep.mubr.f32.mxu0 %v1881
      %2589 = vmatmul.mubr.f32.gmra.mrb[0].mxu0 %v1879
      %v2590 = vpop.f32.mrb[0].mxu0
      %v2591 = vadd.f32 %v1299, %v2590
      %v2592 = vpop.f32.mrb[0].mxu0
      %2593 = vmatprep.mubr.f32.mxu0 %v1885
      %2594 = vmatmul.mubr.f32.gmra.mrb[0].mxu0 %v1883
      %v2595 = vpop.f32.mrb[0].mxu0
      %v2596 = vadd.f32 %v1304, %v2595
      %v2597 = vpop.f32.mrb[0].mxu0
      %2598 = vmatprep.mubr.f32.mxu0 %v1889
      %2599 = vmatmul.mubr.f32.gmra.mrb[0].mxu0 %v1887
      %v2600 = vpop.f32.mrb[0].mxu0
      %v2601 = vadd.f32 %v1309, %v2600
      %v2602 = vpop.f32.mrb[0].mxu0
      %2603 = vmatprep.mubr.f32.mxu0 %v1893
      %2604 = vmatmul.mubr.f32.gmra.mrb[0].mxu0 %v1891
      %v2605 = vpop.f32.mrb[0].mxu0
      %v2606 = vadd.f32 %v1314, %v2605
      %v2607 = vpop.f32.mrb[0].mxu0
      %2608 = vmatprep.mubr.f32.mxu0 %v1897
      %2609 = vmatmul.mubr.f32.gmra.mrb[0].mxu0 %v1895
      %v2610 = vpop.f32.mrb[0].mxu0
      %v2611 = vadd.f32 %v1319, %v2610
      %v2612 = vpop.f32.mrb[0].mxu0
      %2613 = vmatprep.mubr.f32.mxu0 %v1901
      %2614 = vmatmul.mubr.f32.gmra.mrb[0].mxu0 %v1899
      %v2615 = vpop.f32.mrb[0].mxu0
      %v2616 = vadd.f32 %v1324, %v2615
      %v2617 = vpop.f32.mrb[0].mxu0
      %2618 = vmatprep.mubr.f32.mxu0 %v1905
      %2619 = vmatmul.mubr.f32.gmra.mrb[0].mxu0 %v1903
      %v2620 = vpop.f32.mrb[0].mxu0
      %v2621 = vadd.f32 %v1329, %v2620
      %v2622 = vpop.f32.mrb[0].mxu0
      %2623 = vmatprep.mubr.f32.mxu0 %v1909
      %2624 = vmatmul.mubr.f32.gmra.mrb[0].mxu0 %v1907
      %v2625 = vpop.f32.mrb[0].mxu0
      %v2626 = vadd.f32 %v1334, %v2625
      %v2627 = vpop.f32.mrb[0].mxu0
      %2628 = vmatprep.mubr.f32.mxu0 %v1913
      %2629 = vmatmul.mubr.f32.gmra.mrb[0].mxu0 %v1911
      %v2630 = vpop.f32.mrb[0].mxu0
      %v2631 = vadd.f32 %v1339, %v2630
      %v2632 = vpop.f32.mrb[0].mxu0
      %2633 = vmatprep.mubr.f32.mxu0 %v1917
      %2634 = vmatmul.mubr.f32.gmra.mrb[0].mxu0 %v1915
      %v2635 = vpop.f32.mrb[0].mxu0
      %v2636 = vadd.f32 %v1344, %v2635
      %v2637 = vpop.f32.mrb[0].mxu0
      %2638 = vmatprep.mubr.f32.mxu0 %v1921
      %2639 = vmatmul.mubr.f32.gmra.mrb[0].mxu0 %v1919
      %v2640 = vpop.f32.mrb[0].mxu0
      %v2641 = vadd.f32 %v1349, %v2640
      %v2642 = vpop.f32.mrb[0].mxu0
      %2643 = vmatprep.mubr.f32.mxu0 %v1925
      %2644 = vmatmul.mubr.f32.gmra.mrb[0].mxu0 %v1923
      %v2645 = vpop.f32.mrb[0].mxu0
      %v2646 = vadd.f32 %v1354, %v2645
      %v2647 = vpop.f32.mrb[0].mxu0
      %2648 = vdwg.mxu0
      %v2650 = vlaneseq
      %v2651 = vshrl.u32 %v2650, 7
      %v2652 = vsub.s32 0, %v2651
      %v2653 = vrot.slane %v563, %v2652
      %v2655 = vadd.f32 %v2181, %v2653
      %v2656 = vadd.f32 %v2186, %v2653
      %v2657 = vadd.f32 %v2191, %v2653
      %v2658 = vadd.f32 %v2196, %v2653
      %v2659 = vadd.f32 %v2201, %v2653
      %v2660 = vadd.f32 %v2206, %v2653
      %v2661 = vadd.f32 %v2211, %v2653
      %v2662 = vadd.f32 %v2216, %v2653
      %v2663 = vadd.f32 %v2221, %v2653
      %v2664 = vadd.f32 %v2226, %v2653
      %v2665 = vadd.f32 %v2231, %v2653
      %v2666 = vadd.f32 %v2236, %v2653
      %v2667 = vadd.f32 %v2241, %v2653
      %v2668 = vadd.f32 %v2246, %v2653
      %v2669 = vadd.f32 %v2251, %v2653
      %v2670 = vadd.f32 %v2256, %v2653
      %v2671 = vadd.f32 %v2261, %v2653
      %v2672 = vadd.f32 %v2266, %v2653
      %v2673 = vadd.f32 %v2271, %v2653
      %v2674 = vadd.f32 %v2276, %v2653
      %v2675 = vadd.f32 %v2281, %v2653
      %v2676 = vadd.f32 %v2286, %v2653
      %v2677 = vadd.f32 %v2291, %v2653
      %v2678 = vadd.f32 %v2296, %v2653
      %v2679 = vadd.f32 %v2301, %v2653
      %v2680 = vadd.f32 %v2306, %v2653
      %v2681 = vadd.f32 %v2311, %v2653
      %v2682 = vadd.f32 %v2316, %v2653
      %v2683 = vadd.f32 %v2321, %v2653
      %v2684 = vadd.f32 %v2326, %v2653
      %v2685 = vadd.f32 %v2331, %v2653
      %v2686 = vadd.f32 %v2336, %v2653
      %v2687 = vadd.f32 %v2341, %v2653
      %v2688 = vadd.f32 %v2346, %v2653
      %v2689 = vadd.f32 %v2351, %v2653
      %v2690 = vadd.f32 %v2356, %v2653
      %v2691 = vadd.f32 %v2361, %v2653
      %v2692 = vadd.f32 %v2366, %v2653
      %v2693 = vadd.f32 %v2371, %v2653
      %v2694 = vadd.f32 %v2376, %v2653
      %v2695 = vadd.f32 %v2381, %v2653
      %v2696 = vadd.f32 %v2386, %v2653
      %v2697 = vadd.f32 %v2391, %v2653
      %v2698 = vadd.f32 %v2396, %v2653
      %v2699 = vadd.f32 %v2401, %v2653
      %v2700 = vadd.f32 %v2406, %v2653
      %v2701 = vadd.f32 %v2411, %v2653
      %v2702 = vadd.f32 %v2416, %v2653
      %v2703 = vadd.f32 %v2421, %v2653
      %v2704 = vadd.f32 %v2426, %v2653
      %v2705 = vadd.f32 %v2431, %v2653
      %v2706 = vadd.f32 %v2436, %v2653
      %v2707 = vadd.f32 %v2441, %v2653
      %v2708 = vadd.f32 %v2446, %v2653
      %v2709 = vadd.f32 %v2451, %v2653
      %v2710 = vadd.f32 %v2456, %v2653
      %v2711 = vadd.f32 %v2461, %v2653
      %v2712 = vadd.f32 %v2466, %v2653
      %v2713 = vadd.f32 %v2471, %v2653
      %v2714 = vadd.f32 %v2476, %v2653
      %v2715 = vadd.f32 %v2481, %v2653
      %v2716 = vadd.f32 %v2486, %v2653
      %v2717 = vadd.f32 %v2491, %v2653
      %v2718 = vadd.f32 %v2496, %v2653
      %v2719 = vadd.f32 %v2501, %v2653
      %v2720 = vadd.f32 %v2506, %v2653
      %v2721 = vadd.f32 %v2511, %v2653
      %v2722 = vadd.f32 %v2516, %v2653
      %v2723 = vadd.f32 %v2521, %v2653
      %v2724 = vadd.f32 %v2526, %v2653
      %v2725 = vadd.f32 %v2531, %v2653
      %v2726 = vadd.f32 %v2536, %v2653
      %v2727 = vadd.f32 %v2541, %v2653
      %v2728 = vadd.f32 %v2546, %v2653
      %v2729 = vadd.f32 %v2551, %v2653
      %v2730 = vadd.f32 %v2556, %v2653
      %v2731 = vadd.f32 %v2561, %v2653
      %v2732 = vadd.f32 %v2566, %v2653
      %v2733 = vadd.f32 %v2571, %v2653
      %v2734 = vadd.f32 %v2576, %v2653
      %v2735 = vadd.f32 %v2581, %v2653
      %v2736 = vadd.f32 %v2586, %v2653
      %v2737 = vadd.f32 %v2591, %v2653
      %v2738 = vadd.f32 %v2596, %v2653
      %v2739 = vadd.f32 %v2601, %v2653
      %v2740 = vadd.f32 %v2606, %v2653
      %v2741 = vadd.f32 %v2611, %v2653
      %v2742 = vadd.f32 %v2616, %v2653
      %v2743 = vadd.f32 %v2621, %v2653
      %v2744 = vadd.f32 %v2626, %v2653
      %v2745 = vadd.f32 %v2631, %v2653
      %v2746 = vadd.f32 %v2636, %v2653
      %v2747 = vadd.f32 %v2641, %v2653
      %v2748 = vadd.f32 %v2646, %v2653
      %v2749 = vmax.f32 %v2655, 0.0
      %v2750 = vmax.f32 %v2656, 0.0
      %v2751 = vmax.f32 %v2657, 0.0
      %v2752 = vmax.f32 %v2658, 0.0
      %v2753 = vmax.f32 %v2659, 0.0
      %v2754 = vmax.f32 %v2660, 0.0
      %v2755 = vmax.f32 %v2661, 0.0
      %v2756 = vmax.f32 %v2662, 0.0
      %v2757 = vmax.f32 %v2663, 0.0
      %v2758 = vmax.f32 %v2664, 0.0
      %v2759 = vmax.f32 %v2665, 0.0
      %v2760 = vmax.f32 %v2666, 0.0
      %v2761 = vmax.f32 %v2667, 0.0
      %v2762 = vmax.f32 %v2668, 0.0
      %v2763 = vmax.f32 %v2669, 0.0
      %v2764 = vmax.f32 %v2670, 0.0
      %v2765 = vmax.f32 %v2671, 0.0
      %v2766 = vmax.f32 %v2672, 0.0
      %v2767 = vmax.f32 %v2673, 0.0
      %v2768 = vmax.f32 %v2674, 0.0
      %v2769 = vmax.f32 %v2675, 0.0
      %v2770 = vmax.f32 %v2676, 0.0
      %v2771 = vmax.f32 %v2677, 0.0
      %v2772 = vmax.f32 %v2678, 0.0
      %v2773 = vmax.f32 %v2679, 0.0
      %v2774 = vmax.f32 %v2680, 0.0
      %v2775 = vmax.f32 %v2681, 0.0
      %v2776 = vmax.f32 %v2682, 0.0
      %v2777 = vmax.f32 %v2683, 0.0
      %v2778 = vmax.f32 %v2684, 0.0
      %v2779 = vmax.f32 %v2685, 0.0
      %v2780 = vmax.f32 %v2686, 0.0
      %v2781 = vmax.f32 %v2687, 0.0
      %v2782 = vmax.f32 %v2688, 0.0
      %v2783 = vmax.f32 %v2689, 0.0
      %v2784 = vmax.f32 %v2690, 0.0
      %v2785 = vmax.f32 %v2691, 0.0
      %v2786 = vmax.f32 %v2692, 0.0
      %v2787 = vmax.f32 %v2693, 0.0
      %v2788 = vmax.f32 %v2694, 0.0
      %v2789 = vmax.f32 %v2695, 0.0
      %v2790 = vmax.f32 %v2696, 0.0
      %v2791 = vmax.f32 %v2697, 0.0
      %v2792 = vmax.f32 %v2698, 0.0
      %v2793 = vmax.f32 %v2699, 0.0
      %v2794 = vmax.f32 %v2700, 0.0
      %v2795 = vmax.f32 %v2701, 0.0
      %v2796 = vmax.f32 %v2702, 0.0
      %v2797 = vmax.f32 %v2703, 0.0
      %v2798 = vmax.f32 %v2704, 0.0
      %v2799 = vmax.f32 %v2705, 0.0
      %v2800 = vmax.f32 %v2706, 0.0
      %v2801 = vmax.f32 %v2707, 0.0
      %v2802 = vmax.f32 %v2708, 0.0
      %v2803 = vmax.f32 %v2709, 0.0
      %v2804 = vmax.f32 %v2710, 0.0
      %v2805 = vmax.f32 %v2711, 0.0
      %v2806 = vmax.f32 %v2712, 0.0
      %v2807 = vmax.f32 %v2713, 0.0
      %v2808 = vmax.f32 %v2714, 0.0
      %v2809 = vmax.f32 %v2715, 0.0
      %v2810 = vmax.f32 %v2716, 0.0
      %v2811 = vmax.f32 %v2717, 0.0
      %v2812 = vmax.f32 %v2718, 0.0
      %v2813 = vmax.f32 %v2719, 0.0
      %v2814 = vmax.f32 %v2720, 0.0
      %v2815 = vmax.f32 %v2721, 0.0
      %v2816 = vmax.f32 %v2722, 0.0
      %v2817 = vmax.f32 %v2723, 0.0
      %v2818 = vmax.f32 %v2724, 0.0
      %v2819 = vmax.f32 %v2725, 0.0
      %v2820 = vmax.f32 %v2726, 0.0
      %v2821 = vmax.f32 %v2727, 0.0
      %v2822 = vmax.f32 %v2728, 0.0
      %v2823 = vmax.f32 %v2729, 0.0
      %v2824 = vmax.f32 %v2730, 0.0
      %v2825 = vmax.f32 %v2731, 0.0
      %v2826 = vmax.f32 %v2732, 0.0
      %v2827 = vmax.f32 %v2733, 0.0
      %v2828 = vmax.f32 %v2734, 0.0
      %v2829 = vmax.f32 %v2735, 0.0
      %v2830 = vmax.f32 %v2736, 0.0
      %v2831 = vmax.f32 %v2737, 0.0
      %v2832 = vmax.f32 %v2738, 0.0
      %v2833 = vmax.f32 %v2739, 0.0
      %v2834 = vmax.f32 %v2740, 0.0
      %v2835 = vmax.f32 %v2741, 0.0
      %v2836 = vmax.f32 %v2742, 0.0
      %v2837 = vmax.f32 %v2743, 0.0
      %v2838 = vmax.f32 %v2744, 0.0
      %v2839 = vmax.f32 %v2745, 0.0
      %v2840 = vmax.f32 %v2746, 0.0
      %v2841 = vmax.f32 %v2747, 0.0
      %v2842 = vmax.f32 %v2748, 0.0
      %2843 = vst [vmem:[#allocation4 + $0x10] sm:$0xff] %v2749
      %2844 = vst [vmem:[#allocation4 + $0x20] sm:$0xff] %v2750
      %2845 = vst [vmem:[#allocation4 + $0x30] sm:$0xff] %v2751
      %2846 = vst [vmem:[#allocation4 + $0x40] sm:$0xff] %v2752
      %2847 = vst [vmem:[#allocation4 + $0x50] sm:$0xff] %v2753
      %2848 = vst [vmem:[#allocation4 + $0x60] sm:$0xff] %v2754
      %2849 = vst [vmem:[#allocation4 + $0x70] sm:$0xff] %v2755
      %2850 = vst [vmem:[#allocation4 + $0x80] sm:$0xff] %v2756
      %2851 = vst [vmem:[#allocation4 + $0x90] sm:$0xff] %v2757
      %2852 = vst [vmem:[#allocation4 + $0xa0] sm:$0xff] %v2758
      %2853 = vst [vmem:[#allocation4 + $0xb0] sm:$0xff] %v2759
      %2854 = vst [vmem:[#allocation4 + $0xc0] sm:$0xff] %v2760
      %2855 = vst [vmem:[#allocation4 + $0xd0] sm:$0xff] %v2761
      %2856 = vst [vmem:[#allocation4 + $0xe0] sm:$0xff] %v2762
      %2857 = vst [vmem:[#allocation4 + $0xf0] sm:$0xff] %v2763
      %2858 = vst [vmem:[#allocation4 + $0x100] sm:$0xff] %v2764
      %2859 = vst [vmem:[#allocation4 + $0x110] sm:$0xff] %v2765
      %2860 = vst [vmem:[#allocation4 + $0x120] sm:$0xff] %v2766
      %2861 = vst [vmem:[#allocation4 + $0x130] sm:$0xff] %v2767
      %2862 = vst [vmem:[#allocation4 + $0x140] sm:$0xff] %v2768
      %2863 = vst [vmem:[#allocation4 + $0x150] sm:$0xff] %v2769
      %2864 = vst [vmem:[#allocation4 + $0x160] sm:$0xff] %v2770
      %2865 = vst [vmem:[#allocation4 + $0x170] sm:$0xff] %v2771
      %2866 = vst [vmem:[#allocation4 + $0x180] sm:$0xff] %v2772
      %2867 = vst [vmem:[#allocation4 + $0x190] sm:$0xff] %v2773
      %2868 = vst [vmem:[#allocation4 + $0x1a0] sm:$0xff] %v2774
      %2869 = vst [vmem:[#allocation4 + $0x1b0] sm:$0xff] %v2775
      %2870 = vst [vmem:[#allocation4 + $0x1c0] sm:$0xff] %v2776
      %2871 = vst [vmem:[#allocation4 + $0x1d0] sm:$0xff] %v2777
      %2872 = vst [vmem:[#allocation4 + $0x1e0] sm:$0xff] %v2778
      %2873 = vst [vmem:[#allocation4 + $0x1f0] sm:$0xff] %v2779
      %2874 = vst [vmem:[#allocation4 + $0x200] sm:$0xff] %v2780
      %2875 = vst [vmem:[#allocation4 + $0x210] sm:$0xff] %v2781
      %2876 = vst [vmem:[#allocation4 + $0x220] sm:$0xff] %v2782
      %2877 = vst [vmem:[#allocation4 + $0x230] sm:$0xff] %v2783
      %2878 = vst [vmem:[#allocation4 + $0x240] sm:$0xff] %v2784
      %2879 = vst [vmem:[#allocation4 + $0x250] sm:$0xff] %v2785
      %2880 = vst [vmem:[#allocation4 + $0x260] sm:$0xff] %v2786
      %2881 = vst [vmem:[#allocation4 + $0x270] sm:$0xff] %v2787
      %2882 = vst [vmem:[#allocation4 + $0x280] sm:$0xff] %v2788
      %2883 = vst [vmem:[#allocation4 + $0x290] sm:$0xff] %v2789
      %2884 = vst [vmem:[#allocation4 + $0x2a0] sm:$0xff] %v2790
      %2885 = vst [vmem:[#allocation4 + $0x2b0] sm:$0xff] %v2791
      %2886 = vst [vmem:[#allocation4 + $0x2c0] sm:$0xff] %v2792
      %2887 = vst [vmem:[#allocation4 + $0x2d0] sm:$0xff] %v2793
      %2888 = vst [vmem:[#allocation4 + $0x2e0] sm:$0xff] %v2794
      %2889 = vst [vmem:[#allocation4 + $0x2f0] sm:$0xff] %v2795
      %2890 = vst [vmem:[#allocation4 + $0x300] sm:$0xff] %v2796
      %2891 = vst [vmem:[#allocation4 + $0x310] sm:$0xff] %v2797
      %2892 = vst [vmem:[#allocation4 + $0x320] sm:$0xff] %v2798
      %2893 = vst [vmem:[#allocation4 + $0x330] sm:$0xff] %v2799
      %2894 = vst [vmem:[#allocation4 + $0x340] sm:$0xff] %v2800
      %2895 = vst [vmem:[#allocation4 + $0x350] sm:$0xff] %v2801
      %2896 = vst [vmem:[#allocation4 + $0x360] sm:$0xff] %v2802
      %2897 = vst [vmem:[#allocation4 + $0x370] sm:$0xff] %v2803
      %2898 = vst [vmem:[#allocation4 + $0x380] sm:$0xff] %v2804
      %2899 = vst [vmem:[#allocation4 + $0x390] sm:$0xff] %v2805
      %2900 = vst [vmem:[#allocation4 + $0x3a0] sm:$0xff] %v2806
      %2901 = vst [vmem:[#allocation4 + $0x3b0] sm:$0xff] %v2807
      %2902 = vst [vmem:[#allocation4 + $0x3c0] sm:$0xff] %v2808
      %2903 = vst [vmem:[#allocation4 + $0x3d0] sm:$0xff] %v2809
      %2904 = vst [vmem:[#allocation4 + $0x3e0] sm:$0xff] %v2810
      %2905 = vst [vmem:[#allocation4 + $0x3f0] sm:$0xff] %v2811
      %2906 = vst [vmem:[#allocation4 + $0x400] sm:$0xff] %v2812
      %2907 = vst [vmem:[#allocation4 + $0x410] sm:$0xff] %v2813
      %2908 = vst [vmem:[#allocation4 + $0x420] sm:$0xff] %v2814
      %2909 = vst [vmem:[#allocation4 + $0x430] sm:$0xff] %v2815
      %2910 = vst [vmem:[#allocation4 + $0x440] sm:$0xff] %v2816
      %2911 = vst [vmem:[#allocation4 + $0x450] sm:$0xff] %v2817
      %2912 = vst [vmem:[#allocation4 + $0x460] sm:$0xff] %v2818
      %2913 = vst [vmem:[#allocation4 + $0x470] sm:$0xff] %v2819
      %2914 = vst [vmem:[#allocation4 + $0x480] sm:$0xff] %v2820
      %2915 = vst [vmem:[#allocation4 + $0x490] sm:$0xff] %v2821
      %2916 = vst [vmem:[#allocation4 + $0x4a0] sm:$0xff] %v2822
      %2917 = vst [vmem:[#allocation4 + $0x4b0] sm:$0xff] %v2823
      %2918 = vst [vmem:[#allocation4 + $0x4c0] sm:$0xff] %v2824
      %2919 = vst [vmem:[#allocation4 + $0x4d0] sm:$0xff] %v2825
      %2920 = vst [vmem:[#allocation4 + $0x4e0] sm:$0xff] %v2826
      %2921 = vst [vmem:[#allocation4 + $0x4f0] sm:$0xff] %v2827
      %2922 = vst [vmem:[#allocation4 + $0x500] sm:$0xff] %v2828
      %2923 = vst [vmem:[#allocation4 + $0x510] sm:$0xff] %v2829
      %2924 = vst [vmem:[#allocation4 + $0x520] sm:$0xff] %v2830
      %2925 = vst [vmem:[#allocation4 + $0x530] sm:$0xff] %v2831
      %2926 = vst [vmem:[#allocation4 + $0x540] sm:$0xff] %v2832
      %2927 = vst [vmem:[#allocation4 + $0x550] sm:$0xff] %v2833
      %2928 = vst [vmem:[#allocation4 + $0x560] sm:$0xff] %v2834
      %2929 = vst [vmem:[#allocation4 + $0x570] sm:$0xff] %v2835
      %2930 = vst [vmem:[#allocation4 + $0x580] sm:$0xff] %v2836
      %2931 = vst [vmem:[#allocation4 + $0x590] sm:$0xff] %v2837
      %2932 = vst [vmem:[#allocation4 + $0x5a0] sm:$0xff] %v2838
      %2933 = vst [vmem:[#allocation4 + $0x5b0] sm:$0xff] %v2839
      %2934 = vst [vmem:[#allocation4 + $0x5c0] sm:$0xff] %v2840
      %2935 = vst [vmem:[#allocation4 + $0x5d0] sm:$0xff] %v2841
      %2936 = vst [vmem:[#allocation4 + $0x5e0] sm:$0xff] %v2842
      %v2937 = vld [vmem:[#allocation4] sm:$0x80]
      %v2938 = vld [vmem:[#allocation4 + $0x10] sm:$0xff]
      %v2939 = vld [vmem:[#allocation4 + $0x20] sm:$0xff]
      %v2940 = vld [vmem:[#allocation4 + $0x30] sm:$0xff]
      %v2941 = vld [vmem:[#allocation4 + $0x40] sm:$0xff]
      %v2942 = vld [vmem:[#allocation4 + $0x50] sm:$0xff]
      %v2943 = vld [vmem:[#allocation4 + $0x60] sm:$0xff]
      %v2944 = vld [vmem:[#allocation4 + $0x70] sm:$0xff]
      %v2945 = vld [vmem:[#allocation4 + $0x80] sm:$0xff]
      %v2946 = vld [vmem:[#allocation4 + $0x90] sm:$0xff]
      %v2947 = vld [vmem:[#allocation4 + $0xa0] sm:$0xff]
      %v2948 = vld [vmem:[#allocation4 + $0xb0] sm:$0xff]
      %v2949 = vld [vmem:[#allocation4 + $0xc0] sm:$0xff]
      %v2950 = vld [vmem:[#allocation4 + $0xd0] sm:$0xff]
      %v2951 = vld [vmem:[#allocation4 + $0xe0] sm:$0xff]
      %v2952 = vld [vmem:[#allocation4 + $0xf0] sm:$0xff]
      %v2953 = vld [vmem:[#allocation4 + $0x100] sm:$0xff]
      %v2954 = vld [vmem:[#allocation4 + $0x110] sm:$0xff]
      %v2955 = vld [vmem:[#allocation4 + $0x120] sm:$0xff]
      %v2956 = vld [vmem:[#allocation4 + $0x130] sm:$0xff]
      %v2957 = vld [vmem:[#allocation4 + $0x140] sm:$0xff]
      %v2958 = vld [vmem:[#allocation4 + $0x150] sm:$0xff]
      %v2959 = vld [vmem:[#allocation4 + $0x160] sm:$0xff]
      %v2960 = vld [vmem:[#allocation4 + $0x170] sm:$0xff]
      %v2961 = vld [vmem:[#allocation4 + $0x180] sm:$0xff]
      %v2962 = vld [vmem:[#allocation4 + $0x190] sm:$0xff]
      %v2963 = vld [vmem:[#allocation4 + $0x1a0] sm:$0xff]
      %v2964 = vld [vmem:[#allocation4 + $0x1b0] sm:$0xff]
      %v2965 = vld [vmem:[#allocation4 + $0x1c0] sm:$0xff]
      %v2966 = vld [vmem:[#allocation4 + $0x1d0] sm:$0xff]
      %v2967 = vld [vmem:[#allocation4 + $0x1e0] sm:$0xff]
      %v2968 = vld [vmem:[#allocation4 + $0x1f0] sm:$0xff]
      %v2969 = vld [vmem:[#allocation4 + $0x200] sm:$0xff]
      %v2970 = vld [vmem:[#allocation4 + $0x210] sm:$0xff]
      %v2971 = vld [vmem:[#allocation4 + $0x220] sm:$0xff]
      %v2972 = vld [vmem:[#allocation4 + $0x230] sm:$0xff]
      %v2973 = vld [vmem:[#allocation4 + $0x240] sm:$0xff]
      %v2974 = vld [vmem:[#allocation4 + $0x250] sm:$0xff]
      %v2975 = vld [vmem:[#allocation4 + $0x260] sm:$0xff]
      %v2976 = vld [vmem:[#allocation4 + $0x270] sm:$0xff]
      %v2977 = vld [vmem:[#allocation4 + $0x280] sm:$0xff]
      %v2978 = vld [vmem:[#allocation4 + $0x290] sm:$0xff]
      %v2979 = vld [vmem:[#allocation4 + $0x2a0] sm:$0xff]
      %v2980 = vld [vmem:[#allocation4 + $0x2b0] sm:$0xff]
      %v2981 = vld [vmem:[#allocation4 + $0x2c0] sm:$0xff]
      %v2982 = vld [vmem:[#allocation4 + $0x2d0] sm:$0xff]
      %v2983 = vld [vmem:[#allocation4 + $0x2e0] sm:$0xff]
      %v2984 = vld [vmem:[#allocation4 + $0x2f0] sm:$0xff]
      %v2985 = vld [vmem:[#allocation4 + $0x300] sm:$0xff]
      %v2986 = vld [vmem:[#allocation4 + $0x310] sm:$0xff]
      %v2987 = vld [vmem:[#allocation4 + $0x320] sm:$0xff]
      %v2988 = vld [vmem:[#allocation4 + $0x330] sm:$0xff]
      %v2989 = vld [vmem:[#allocation4 + $0x340] sm:$0xff]
      %v2990 = vld [vmem:[#allocation4 + $0x350] sm:$0xff]
      %v2991 = vld [vmem:[#allocation4 + $0x360] sm:$0xff]
      %v2992 = vld [vmem:[#allocation4 + $0x370] sm:$0xff]
      %v2993 = vld [vmem:[#allocation4 + $0x380] sm:$0xff]
      %v2994 = vld [vmem:[#allocation4 + $0x390] sm:$0xff]
      %v2995 = vld [vmem:[#allocation4 + $0x3a0] sm:$0xff]
      %v2996 = vld [vmem:[#allocation4 + $0x3b0] sm:$0xff]
      %v2997 = vld [vmem:[#allocation4 + $0x3c0] sm:$0xff]
      %v2998 = vld [vmem:[#allocation4 + $0x3d0] sm:$0xff]
      %v2999 = vld [vmem:[#allocation4 + $0x3e0] sm:$0xff]
      %v3000 = vld [vmem:[#allocation4 + $0x3f0] sm:$0xff]
      %v3001 = vld [vmem:[#allocation4 + $0x400] sm:$0xff]
      %v3002 = vld [vmem:[#allocation4 + $0x410] sm:$0xff]
      %v3003 = vld [vmem:[#allocation4 + $0x420] sm:$0xff]
      %v3004 = vld [vmem:[#allocation4 + $0x430] sm:$0xff]
      %v3005 = vld [vmem:[#allocation4 + $0x440] sm:$0xff]
      %v3006 = vld [vmem:[#allocation4 + $0x450] sm:$0xff]
      %v3007 = vld [vmem:[#allocation4 + $0x460] sm:$0xff]
      %v3008 = vld [vmem:[#allocation4 + $0x470] sm:$0xff]
      %v3009 = vld [vmem:[#allocation4 + $0x480] sm:$0xff]
      %v3010 = vld [vmem:[#allocation4 + $0x490] sm:$0xff]
      %v3011 = vld [vmem:[#allocation4 + $0x4a0] sm:$0xff]
      %v3012 = vld [vmem:[#allocation4 + $0x4b0] sm:$0xff]
      %v3013 = vld [vmem:[#allocation4 + $0x4c0] sm:$0xff]
      %v3014 = vld [vmem:[#allocation4 + $0x4d0] sm:$0xff]
      %v3015 = vld [vmem:[#allocation4 + $0x4e0] sm:$0xff]
      %v3016 = vld [vmem:[#allocation4 + $0x4f0] sm:$0xff]
      %v3017 = vld [vmem:[#allocation4 + $0x500] sm:$0xff]
      %v3018 = vld [vmem:[#allocation4 + $0x510] sm:$0xff]
      %v3019 = vld [vmem:[#allocation4 + $0x520] sm:$0xff]
      %v3020 = vld [vmem:[#allocation4 + $0x530] sm:$0xff]
      %v3021 = vld [vmem:[#allocation4 + $0x540] sm:$0xff]
      %v3022 = vld [vmem:[#allocation4 + $0x550] sm:$0xff]
      %v3023 = vld [vmem:[#allocation4 + $0x560] sm:$0xff]
      %v3024 = vld [vmem:[#allocation4 + $0x570] sm:$0xff]
      %v3025 = vld [vmem:[#allocation4 + $0x580] sm:$0xff]
      %v3026 = vld [vmem:[#allocation4 + $0x590] sm:$0xff]
      %v3027 = vld [vmem:[#allocation4 + $0x5a0] sm:$0xff]
      %v3028 = vld [vmem:[#allocation4 + $0x5b0] sm:$0xff]
      %v3029 = vld [vmem:[#allocation4 + $0x5c0] sm:$0xff]
      %v3030 = vld [vmem:[#allocation4 + $0x5d0] sm:$0xff]
      %v3031 = vld [vmem:[#allocation4 + $0x5e0] sm:$0x7f]
      %3032 = vmatprep.subr.mxu0 0.0
      %3033 = vmatpush1.msra.mxu0 %v580
      %3034 = vmatprep.subr.mxu0 0.0
      %3035 = vmatpush1.msra.mxu0 %v581
      %3036 = vmatprep.subr.mxu0 0.0
      %3037 = vmatpush1.msra.mxu0 %v582
      %3038 = vmatprep.subr.mxu0 0.0
      %3039 = vmatpush1.msra.mxu0 %v583
      %3040 = vmatprep.subr.mxu0 0.0
      %3041 = vmatpush1.msra.mxu0 %v584
      %3042 = vmatprep.subr.mxu0 0.0
      %3043 = vmatpush1.msra.mxu0 %v585
      %3044 = vmatprep.subr.mxu0 0.0
      %3045 = vmatpush1.msra.mxu0 %v586
      %3046 = vmatprep.subr.mxu0 0.0
      %3047 = vmatpush1.msra.mxu0 %v587
      %3048 = vmatprep.subr.mxu0 0.0
      %3049 = vmatpush1.msra.mxu0 %v588
      %3050 = vmatprep.subr.mxu0 0.0
      %3051 = vmatpush1.msra.mxu0 %v589
      %3052 = vmatprep.subr.mxu0 0.0
      %3053 = vmatpush1.msra.mxu0 %v590
      %3054 = vmatprep.subr.mxu0 0.0
      %3055 = vmatpush1.msra.mxu0 %v591
      %3056 = vmatprep.subr.mxu0 0.0
      %3057 = vmatpush1.msra.mxu0 %v592
      %3058 = vmatprep.subr.mxu0 0.0
      %3059 = vmatpush1.msra.mxu0 %v593
      %3060 = vmatprep.subr.mxu0 0.0
      %3061 = vmatpush1.msra.mxu0 %v594
      %3062 = vmatprep.subr.mxu0 0.0
      %3063 = vmatpush1.msra.mxu0 %v595
      %3064 = vmatprep.subr.mxu0 0.0
      %3065 = vmatpush1.msra.mxu0 0.0
      %3066 = vmatprep.subr.mxu0 0.0
      %3067 = vmatpush1.msra.mxu0 0.0
      %3068 = vmatprep.subr.mxu0 0.0
      %3069 = vmatpush1.msra.mxu0 0.0
      %3070 = vmatprep.subr.mxu0 0.0
      %3071 = vmatpush1.msra.mxu0 0.0
      %3072 = vmatprep.subr.mxu0 0.0
      %3073 = vmatpush1.msra.mxu0 0.0
      %3074 = vmatprep.subr.mxu0 0.0
      %3075 = vmatpush1.msra.mxu0 0.0
      %3076 = vmatprep.subr.mxu0 0.0
      %3077 = vmatpush1.msra.mxu0 0.0
      %3078 = vmatprep.subr.mxu0 0.0
      %3079 = vmatpush1.msra.mxu0 0.0
      %3080 = vmatprep.subr.mxu0 0.0
      %3081 = vmatpush1.msra.mxu0 0.0
      %3082 = vmatprep.subr.mxu0 0.0
      %3083 = vmatpush1.msra.mxu0 0.0
      %3084 = vmatprep.subr.mxu0 0.0
      %3085 = vmatpush1.msra.mxu0 0.0
      %3086 = vmatprep.subr.mxu0 0.0
      %3087 = vmatpush1.msra.mxu0 0.0
      %3088 = vmatprep.subr.mxu0 0.0
      %3089 = vmatpush1.msra.mxu0 0.0
      %3090 = vmatprep.subr.mxu0 0.0
      %3091 = vmatpush1.msra.mxu0 0.0
      %3092 = vmatprep.subr.mxu0 0.0
      %3093 = vmatpush1.msra.mxu0 0.0
      %3094 = vmatprep.subr.mxu0 0.0
      %3095 = vmatpush1.msra.mxu0 0.0
      %3096 = vmatprep.mubr.f32.mxu0 0.0
      %3097 = vmatmul.mubr.f32.gmra.mrb[0].mxu0 %v2749
      %v3098 = vpop.f32.mrb[0].mxu0
      %v3099 = vadd.f32 0.0, %v3098
      %v3100 = vpop.f32.mrb[0].mxu0
      %3101 = vmatprep.mubr.f32.mxu0 0.0
      %3102 = vmatmul.mubr.f32.gmra.mrb[0].mxu0 %v2750
      %v3103 = vpop.f32.mrb[0].mxu0
      %v3104 = vadd.f32 0.0, %v3103
      %v3105 = vpop.f32.mrb[0].mxu0
      %3106 = vmatprep.mubr.f32.mxu0 0.0
      %3107 = vmatmul.mubr.f32.gmra.mrb[0].mxu0 %v2751
      %v3108 = vpop.f32.mrb[0].mxu0
      %v3109 = vadd.f32 0.0, %v3108
      %v3110 = vpop.f32.mrb[0].mxu0
      %3111 = vmatprep.mubr.f32.mxu0 0.0
      %3112 = vmatmul.mubr.f32.gmra.mrb[0].mxu0 %v2752
      %v3113 = vpop.f32.mrb[0].mxu0
      %v3114 = vadd.f32 0.0, %v3113
      %v3115 = vpop.f32.mrb[0].mxu0
      %3116 = vmatprep.mubr.f32.mxu0 0.0
      %3117 = vmatmul.mubr.f32.gmra.mrb[0].mxu0 %v2753
      %v3118 = vpop.f32.mrb[0].mxu0
      %v3119 = vadd.f32 0.0, %v3118
      %v3120 = vpop.f32.mrb[0].mxu0
      %3121 = vmatprep.mubr.f32.mxu0 0.0
      %3122 = vmatmul.mubr.f32.gmra.mrb[0].mxu0 %v2754
      %v3123 = vpop.f32.mrb[0].mxu0
      %v3124 = vadd.f32 0.0, %v3123
      %v3125 = vpop.f32.mrb[0].mxu0
      %3126 = vmatprep.mubr.f32.mxu0 0.0
      %3127 = vmatmul.mubr.f32.gmra.mrb[0].mxu0 %v2755
      %v3128 = vpop.f32.mrb[0].mxu0
      %v3129 = vadd.f32 0.0, %v3128
      %v3130 = vpop.f32.mrb[0].mxu0
      %3131 = vmatprep.mubr.f32.mxu0 0.0
      %3132 = vmatmul.mubr.f32.gmra.mrb[0].mxu0 %v2756
      %v3133 = vpop.f32.mrb[0].mxu0
      %v3134 = vadd.f32 0.0, %v3133
      %v3135 = vpop.f32.mrb[0].mxu0
      %3136 = vmatprep.mubr.f32.mxu0 0.0
      %3137 = vmatmul.mubr.f32.gmra.mrb[0].mxu0 %v2757
      %v3138 = vpop.f32.mrb[0].mxu0
      %v3139 = vadd.f32 0.0, %v3138
      %v3140 = vpop.f32.mrb[0].mxu0
      %3141 = vmatprep.mubr.f32.mxu0 0.0
      %3142 = vmatmul.mubr.f32.gmra.mrb[0].mxu0 %v2758
      %v3143 = vpop.f32.mrb[0].mxu0
      %v3144 = vadd.f32 0.0, %v3143
      %v3145 = vpop.f32.mrb[0].mxu0
      %3146 = vmatprep.mubr.f32.mxu0 0.0
      %3147 = vmatmul.mubr.f32.gmra.mrb[0].mxu0 %v2759
      %v3148 = vpop.f32.mrb[0].mxu0
      %v3149 = vadd.f32 0.0, %v3148
      %v3150 = vpop.f32.mrb[0].mxu0
      %3151 = vmatprep.mubr.f32.mxu0 0.0
      %3152 = vmatmul.mubr.f32.gmra.mrb[0].mxu0 %v2760
      %v3153 = vpop.f32.mrb[0].mxu0
      %v3154 = vadd.f32 0.0, %v3153
      %v3155 = vpop.f32.mrb[0].mxu0
      %3156 = vmatprep.mubr.f32.mxu0 0.0
      %3157 = vmatmul.mubr.f32.gmra.mrb[0].mxu0 %v2761
      %v3158 = vpop.f32.mrb[0].mxu0
      %v3159 = vadd.f32 0.0, %v3158
      %v3160 = vpop.f32.mrb[0].mxu0
      %3161 = vmatprep.mubr.f32.mxu0 0.0
      %3162 = vmatmul.mubr.f32.gmra.mrb[0].mxu0 %v2762
      %v3163 = vpop.f32.mrb[0].mxu0
      %v3164 = vadd.f32 0.0, %v3163
      %v3165 = vpop.f32.mrb[0].mxu0
      %3166 = vmatprep.mubr.f32.mxu0 0.0
      %3167 = vmatmul.mubr.f32.gmra.mrb[0].mxu0 %v2763
      %v3168 = vpop.f32.mrb[0].mxu0
      %v3169 = vadd.f32 0.0, %v3168
      %v3170 = vpop.f32.mrb[0].mxu0
      %3171 = vmatprep.mubr.f32.mxu0 0.0
      %3172 = vmatmul.mubr.f32.gmra.mrb[0].mxu0 %v2764
      %v3173 = vpop.f32.mrb[0].mxu0
      %v3174 = vadd.f32 0.0, %v3173
      %v3175 = vpop.f32.mrb[0].mxu0
      %3176 = vmatprep.mubr.f32.mxu0 0.0
      %3177 = vmatmul.mubr.f32.gmra.mrb[0].mxu0 %v2765
      %v3178 = vpop.f32.mrb[0].mxu0
      %v3179 = vadd.f32 0.0, %v3178
      %v3180 = vpop.f32.mrb[0].mxu0
      %3181 = vmatprep.mubr.f32.mxu0 0.0
      %3182 = vmatmul.mubr.f32.gmra.mrb[0].mxu0 %v2766
      %v3183 = vpop.f32.mrb[0].mxu0
      %v3184 = vadd.f32 0.0, %v3183
      %v3185 = vpop.f32.mrb[0].mxu0
      %3186 = vmatprep.mubr.f32.mxu0 0.0
      %3187 = vmatmul.mubr.f32.gmra.mrb[0].mxu0 %v2767
      %v3188 = vpop.f32.mrb[0].mxu0
      %v3189 = vadd.f32 0.0, %v3188
      %v3190 = vpop.f32.mrb[0].mxu0
      %3191 = vmatprep.mubr.f32.mxu0 0.0
      %3192 = vmatmul.mubr.f32.gmra.mrb[0].mxu0 %v2768
      %v3193 = vpop.f32.mrb[0].mxu0
      %v3194 = vadd.f32 0.0, %v3193
      %v3195 = vpop.f32.mrb[0].mxu0
      %3196 = vmatprep.mubr.f32.mxu0 0.0
      %3197 = vmatmul.mubr.f32.gmra.mrb[0].mxu0 %v2769
      %v3198 = vpop.f32.mrb[0].mxu0
      %v3199 = vadd.f32 0.0, %v3198
      %v3200 = vpop.f32.mrb[0].mxu0
      %3201 = vmatprep.mubr.f32.mxu0 0.0
      %3202 = vmatmul.mubr.f32.gmra.mrb[0].mxu0 %v2770
      %v3203 = vpop.f32.mrb[0].mxu0
      %v3204 = vadd.f32 0.0, %v3203
      %v3205 = vpop.f32.mrb[0].mxu0
      %3206 = vmatprep.mubr.f32.mxu0 0.0
      %3207 = vmatmul.mubr.f32.gmra.mrb[0].mxu0 %v2771
      %v3208 = vpop.f32.mrb[0].mxu0
      %v3209 = vadd.f32 0.0, %v3208
      %v3210 = vpop.f32.mrb[0].mxu0
      %3211 = vmatprep.mubr.f32.mxu0 0.0
      %3212 = vmatmul.mubr.f32.gmra.mrb[0].mxu0 %v2772
      %v3213 = vpop.f32.mrb[0].mxu0
      %v3214 = vadd.f32 0.0, %v3213
      %v3215 = vpop.f32.mrb[0].mxu0
      %3216 = vmatprep.mubr.f32.mxu0 0.0
      %3217 = vmatmul.mubr.f32.gmra.mrb[0].mxu0 %v2773
      %v3218 = vpop.f32.mrb[0].mxu0
      %v3219 = vadd.f32 0.0, %v3218
      %v3220 = vpop.f32.mrb[0].mxu0
      %3221 = vmatprep.mubr.f32.mxu0 0.0
      %3222 = vmatmul.mubr.f32.gmra.mrb[0].mxu0 %v2774
      %v3223 = vpop.f32.mrb[0].mxu0
      %v3224 = vadd.f32 0.0, %v3223
      %v3225 = vpop.f32.mrb[0].mxu0
      %3226 = vmatprep.mubr.f32.mxu0 0.0
      %3227 = vmatmul.mubr.f32.gmra.mrb[0].mxu0 %v2775
      %v3228 = vpop.f32.mrb[0].mxu0
      %v3229 = vadd.f32 0.0, %v3228
      %v3230 = vpop.f32.mrb[0].mxu0
      %3231 = vmatprep.mubr.f32.mxu0 0.0
      %3232 = vmatmul.mubr.f32.gmra.mrb[0].mxu0 %v2776
      %v3233 = vpop.f32.mrb[0].mxu0
      %v3234 = vadd.f32 0.0, %v3233
      %v3235 = vpop.f32.mrb[0].mxu0
      %3236 = vmatprep.mubr.f32.mxu0 0.0
      %3237 = vmatmul.mubr.f32.gmra.mrb[0].mxu0 %v2777
      %v3238 = vpop.f32.mrb[0].mxu0
      %v3239 = vadd.f32 0.0, %v3238
      %v3240 = vpop.f32.mrb[0].mxu0
      %3241 = vmatprep.mubr.f32.mxu0 0.0
      %3242 = vmatmul.mubr.f32.gmra.mrb[0].mxu0 %v2778
      %v3243 = vpop.f32.mrb[0].mxu0
      %v3244 = vadd.f32 0.0, %v3243
      %v3245 = vpop.f32.mrb[0].mxu0
      %3246 = vmatprep.mubr.f32.mxu0 0.0
      %3247 = vmatmul.mubr.f32.gmra.mrb[0].mxu0 %v2779
      %v3248 = vpop.f32.mrb[0].mxu0
      %v3249 = vadd.f32 0.0, %v3248
      %v3250 = vpop.f32.mrb[0].mxu0
      %3251 = vmatprep.mubr.f32.mxu0 0.0
      %3252 = vmatmul.mubr.f32.gmra.mrb[0].mxu0 %v2780
      %v3253 = vpop.f32.mrb[0].mxu0
      %v3254 = vadd.f32 0.0, %v3253
      %v3255 = vpop.f32.mrb[0].mxu0
      %3256 = vmatprep.mubr.f32.mxu0 0.0
      %3257 = vmatmul.mubr.f32.gmra.mrb[0].mxu0 %v2781
      %v3258 = vpop.f32.mrb[0].mxu0
      %v3259 = vadd.f32 0.0, %v3258
      %v3260 = vpop.f32.mrb[0].mxu0
      %3261 = vmatprep.mubr.f32.mxu0 0.0
      %3262 = vmatmul.mubr.f32.gmra.mrb[0].mxu0 %v2782
      %v3263 = vpop.f32.mrb[0].mxu0
      %v3264 = vadd.f32 0.0, %v3263
      %v3265 = vpop.f32.mrb[0].mxu0
      %3266 = vmatprep.mubr.f32.mxu0 0.0
      %3267 = vmatmul.mubr.f32.gmra.mrb[0].mxu0 %v2783
      %v3268 = vpop.f32.mrb[0].mxu0
      %v3269 = vadd.f32 0.0, %v3268
      %v3270 = vpop.f32.mrb[0].mxu0
      %3271 = vmatprep.mubr.f32.mxu0 0.0
      %3272 = vmatmul.mubr.f32.gmra.mrb[0].mxu0 %v2784
      %v3273 = vpop.f32.mrb[0].mxu0
      %v3274 = vadd.f32 0.0, %v3273
      %v3275 = vpop.f32.mrb[0].mxu0
      %3276 = vmatprep.mubr.f32.mxu0 0.0
      %3277 = vmatmul.mubr.f32.gmra.mrb[0].mxu0 %v2785
      %v3278 = vpop.f32.mrb[0].mxu0
      %v3279 = vadd.f32 0.0, %v3278
      %v3280 = vpop.f32.mrb[0].mxu0
      %3281 = vmatprep.mubr.f32.mxu0 0.0
      %3282 = vmatmul.mubr.f32.gmra.mrb[0].mxu0 %v2786
      %v3283 = vpop.f32.mrb[0].mxu0
      %v3284 = vadd.f32 0.0, %v3283
      %v3285 = vpop.f32.mrb[0].mxu0
      %3286 = vmatprep.mubr.f32.mxu0 0.0
      %3287 = vmatmul.mubr.f32.gmra.mrb[0].mxu0 %v2787
      %v3288 = vpop.f32.mrb[0].mxu0
      %v3289 = vadd.f32 0.0, %v3288
      %v3290 = vpop.f32.mrb[0].mxu0
      %3291 = vmatprep.mubr.f32.mxu0 0.0
      %3292 = vmatmul.mubr.f32.gmra.mrb[0].mxu0 %v2788
      %v3293 = vpop.f32.mrb[0].mxu0
      %v3294 = vadd.f32 0.0, %v3293
      %v3295 = vpop.f32.mrb[0].mxu0
      %3296 = vmatprep.mubr.f32.mxu0 0.0
      %3297 = vmatmul.mubr.f32.gmra.mrb[0].mxu0 %v2789
      %v3298 = vpop.f32.mrb[0].mxu0
      %v3299 = vadd.f32 0.0, %v3298
      %v3300 = vpop.f32.mrb[0].mxu0
      %3301 = vmatprep.mubr.f32.mxu0 0.0
      %3302 = vmatmul.mubr.f32.gmra.mrb[0].mxu0 %v2790
      %v3303 = vpop.f32.mrb[0].mxu0
      %v3304 = vadd.f32 0.0, %v3303
      %v3305 = vpop.f32.mrb[0].mxu0
      %3306 = vmatprep.mubr.f32.mxu0 0.0
      %3307 = vmatmul.mubr.f32.gmra.mrb[0].mxu0 %v2791
      %v3308 = vpop.f32.mrb[0].mxu0
      %v3309 = vadd.f32 0.0, %v3308
      %v3310 = vpop.f32.mrb[0].mxu0
      %3311 = vmatprep.mubr.f32.mxu0 0.0
      %3312 = vmatmul.mubr.f32.gmra.mrb[0].mxu0 %v2792
      %v3313 = vpop.f32.mrb[0].mxu0
      %v3314 = vadd.f32 0.0, %v3313
      %v3315 = vpop.f32.mrb[0].mxu0
      %3316 = vmatprep.mubr.f32.mxu0 0.0
      %3317 = vmatmul.mubr.f32.gmra.mrb[0].mxu0 %v2793
      %v3318 = vpop.f32.mrb[0].mxu0
      %v3319 = vadd.f32 0.0, %v3318
      %v3320 = vpop.f32.mrb[0].mxu0
      %3321 = vmatprep.mubr.f32.mxu0 0.0
      %3322 = vmatmul.mubr.f32.gmra.mrb[0].mxu0 %v2794
      %v3323 = vpop.f32.mrb[0].mxu0
      %v3324 = vadd.f32 0.0, %v3323
      %v3325 = vpop.f32.mrb[0].mxu0
      %3326 = vmatprep.mubr.f32.mxu0 0.0
      %3327 = vmatmul.mubr.f32.gmra.mrb[0].mxu0 %v2795
      %v3328 = vpop.f32.mrb[0].mxu0
      %v3329 = vadd.f32 0.0, %v3328
      %v3330 = vpop.f32.mrb[0].mxu0
      %3331 = vmatprep.mubr.f32.mxu0 0.0
      %3332 = vmatmul.mubr.f32.gmra.mrb[0].mxu0 %v2796
      %v3333 = vpop.f32.mrb[0].mxu0
      %v3334 = vadd.f32 0.0, %v3333
      %v3335 = vpop.f32.mrb[0].mxu0
      %3336 = vmatprep.mubr.f32.mxu0 0.0
      %3337 = vmatmul.mubr.f32.gmra.mrb[0].mxu0 %v2797
      %v3338 = vpop.f32.mrb[0].mxu0
      %v3339 = vadd.f32 0.0, %v3338
      %v3340 = vpop.f32.mrb[0].mxu0
      %3341 = vmatprep.mubr.f32.mxu0 0.0
      %3342 = vmatmul.mubr.f32.gmra.mrb[0].mxu0 %v2798
      %v3343 = vpop.f32.mrb[0].mxu0
      %v3344 = vadd.f32 0.0, %v3343
      %v3345 = vpop.f32.mrb[0].mxu0
      %3346 = vmatprep.mubr.f32.mxu0 0.0
      %3347 = vmatmul.mubr.f32.gmra.mrb[0].mxu0 %v2799
      %v3348 = vpop.f32.mrb[0].mxu0
      %v3349 = vadd.f32 0.0, %v3348
      %v3350 = vpop.f32.mrb[0].mxu0
      %3351 = vmatprep.mubr.f32.mxu0 0.0
      %3352 = vmatmul.mubr.f32.gmra.mrb[0].mxu0 %v2800
      %v3353 = vpop.f32.mrb[0].mxu0
      %v3354 = vadd.f32 0.0, %v3353
      %v3355 = vpop.f32.mrb[0].mxu0
      %3356 = vmatprep.mubr.f32.mxu0 0.0
      %3357 = vmatmul.mubr.f32.gmra.mrb[0].mxu0 %v2801
      %v3358 = vpop.f32.mrb[0].mxu0
      %v3359 = vadd.f32 0.0, %v3358
      %v3360 = vpop.f32.mrb[0].mxu0
      %3361 = vmatprep.mubr.f32.mxu0 0.0
      %3362 = vmatmul.mubr.f32.gmra.mrb[0].mxu0 %v2802
      %v3363 = vpop.f32.mrb[0].mxu0
      %v3364 = vadd.f32 0.0, %v3363
      %v3365 = vpop.f32.mrb[0].mxu0
      %3366 = vmatprep.mubr.f32.mxu0 0.0
      %3367 = vmatmul.mubr.f32.gmra.mrb[0].mxu0 %v2803
      %v3368 = vpop.f32.mrb[0].mxu0
      %v3369 = vadd.f32 0.0, %v3368
      %v3370 = vpop.f32.mrb[0].mxu0
      %3371 = vmatprep.mubr.f32.mxu0 0.0
      %3372 = vmatmul.mubr.f32.gmra.mrb[0].mxu0 %v2804
      %v3373 = vpop.f32.mrb[0].mxu0
      %v3374 = vadd.f32 0.0, %v3373
      %v3375 = vpop.f32.mrb[0].mxu0
      %3376 = vmatprep.mubr.f32.mxu0 0.0
      %3377 = vmatmul.mubr.f32.gmra.mrb[0].mxu0 %v2805
      %v3378 = vpop.f32.mrb[0].mxu0
      %v3379 = vadd.f32 0.0, %v3378
      %v3380 = vpop.f32.mrb[0].mxu0
      %3381 = vmatprep.mubr.f32.mxu0 0.0
      %3382 = vmatmul.mubr.f32.gmra.mrb[0].mxu0 %v2806
      %v3383 = vpop.f32.mrb[0].mxu0
      %v3384 = vadd.f32 0.0, %v3383
      %v3385 = vpop.f32.mrb[0].mxu0
      %3386 = vmatprep.mubr.f32.mxu0 0.0
      %3387 = vmatmul.mubr.f32.gmra.mrb[0].mxu0 %v2807
      %v3388 = vpop.f32.mrb[0].mxu0
      %v3389 = vadd.f32 0.0, %v3388
      %v3390 = vpop.f32.mrb[0].mxu0
      %3391 = vmatprep.mubr.f32.mxu0 0.0
      %3392 = vmatmul.mubr.f32.gmra.mrb[0].mxu0 %v2808
      %v3393 = vpop.f32.mrb[0].mxu0
      %v3394 = vadd.f32 0.0, %v3393
      %v3395 = vpop.f32.mrb[0].mxu0
      %3396 = vmatprep.mubr.f32.mxu0 0.0
      %3397 = vmatmul.mubr.f32.gmra.mrb[0].mxu0 %v2809
      %v3398 = vpop.f32.mrb[0].mxu0
      %v3399 = vadd.f32 0.0, %v3398
      %v3400 = vpop.f32.mrb[0].mxu0
      %3401 = vmatprep.mubr.f32.mxu0 0.0
      %3402 = vmatmul.mubr.f32.gmra.mrb[0].mxu0 %v2810
      %v3403 = vpop.f32.mrb[0].mxu0
      %v3404 = vadd.f32 0.0, %v3403
      %v3405 = vpop.f32.mrb[0].mxu0
      %3406 = vmatprep.mubr.f32.mxu0 0.0
      %3407 = vmatmul.mubr.f32.gmra.mrb[0].mxu0 %v2811
      %v3408 = vpop.f32.mrb[0].mxu0
      %v3409 = vadd.f32 0.0, %v3408
      %v3410 = vpop.f32.mrb[0].mxu0
      %3411 = vmatprep.mubr.f32.mxu0 0.0
      %3412 = vmatmul.mubr.f32.gmra.mrb[0].mxu0 %v2812
      %v3413 = vpop.f32.mrb[0].mxu0
      %v3414 = vadd.f32 0.0, %v3413
      %v3415 = vpop.f32.mrb[0].mxu0
      %3416 = vmatprep.mubr.f32.mxu0 0.0
      %3417 = vmatmul.mubr.f32.gmra.mrb[0].mxu0 %v2813
      %v3418 = vpop.f32.mrb[0].mxu0
      %v3419 = vadd.f32 0.0, %v3418
      %v3420 = vpop.f32.mrb[0].mxu0
      %3421 = vmatprep.mubr.f32.mxu0 0.0
      %3422 = vmatmul.mubr.f32.gmra.mrb[0].mxu0 %v2814
      %v3423 = vpop.f32.mrb[0].mxu0
      %v3424 = vadd.f32 0.0, %v3423
      %v3425 = vpop.f32.mrb[0].mxu0
      %3426 = vmatprep.mubr.f32.mxu0 0.0
      %3427 = vmatmul.mubr.f32.gmra.mrb[0].mxu0 %v2815
      %v3428 = vpop.f32.mrb[0].mxu0
      %v3429 = vadd.f32 0.0, %v3428
      %v3430 = vpop.f32.mrb[0].mxu0
      %3431 = vmatprep.mubr.f32.mxu0 0.0
      %3432 = vmatmul.mubr.f32.gmra.mrb[0].mxu0 %v2816
      %v3433 = vpop.f32.mrb[0].mxu0
      %v3434 = vadd.f32 0.0, %v3433
      %v3435 = vpop.f32.mrb[0].mxu0
      %3436 = vmatprep.mubr.f32.mxu0 0.0
      %3437 = vmatmul.mubr.f32.gmra.mrb[0].mxu0 %v2817
      %v3438 = vpop.f32.mrb[0].mxu0
      %v3439 = vadd.f32 0.0, %v3438
      %v3440 = vpop.f32.mrb[0].mxu0
      %3441 = vmatprep.mubr.f32.mxu0 0.0
      %3442 = vmatmul.mubr.f32.gmra.mrb[0].mxu0 %v2818
      %v3443 = vpop.f32.mrb[0].mxu0
      %v3444 = vadd.f32 0.0, %v3443
      %v3445 = vpop.f32.mrb[0].mxu0
      %3446 = vmatprep.mubr.f32.mxu0 0.0
      %3447 = vmatmul.mubr.f32.gmra.mrb[0].mxu0 %v2819
      %v3448 = vpop.f32.mrb[0].mxu0
      %v3449 = vadd.f32 0.0, %v3448
      %v3450 = vpop.f32.mrb[0].mxu0
      %3451 = vmatprep.mubr.f32.mxu0 0.0
      %3452 = vmatmul.mubr.f32.gmra.mrb[0].mxu0 %v2820
      %v3453 = vpop.f32.mrb[0].mxu0
      %v3454 = vadd.f32 0.0, %v3453
      %v3455 = vpop.f32.mrb[0].mxu0
      %3456 = vmatprep.mubr.f32.mxu0 0.0
      %3457 = vmatmul.mubr.f32.gmra.mrb[0].mxu0 %v2821
      %v3458 = vpop.f32.mrb[0].mxu0
      %v3459 = vadd.f32 0.0, %v3458
      %v3460 = vpop.f32.mrb[0].mxu0
      %3461 = vmatprep.mubr.f32.mxu0 0.0
      %3462 = vmatmul.mubr.f32.gmra.mrb[0].mxu0 %v2822
      %v3463 = vpop.f32.mrb[0].mxu0
      %v3464 = vadd.f32 0.0, %v3463
      %v3465 = vpop.f32.mrb[0].mxu0
      %3466 = vmatprep.mubr.f32.mxu0 0.0
      %3467 = vmatmul.mubr.f32.gmra.mrb[0].mxu0 %v2823
      %v3468 = vpop.f32.mrb[0].mxu0
      %v3469 = vadd.f32 0.0, %v3468
      %v3470 = vpop.f32.mrb[0].mxu0
      %3471 = vmatprep.mubr.f32.mxu0 0.0
      %3472 = vmatmul.mubr.f32.gmra.mrb[0].mxu0 %v2824
      %v3473 = vpop.f32.mrb[0].mxu0
      %v3474 = vadd.f32 0.0, %v3473
      %v3475 = vpop.f32.mrb[0].mxu0
      %3476 = vmatprep.mubr.f32.mxu0 0.0
      %3477 = vmatmul.mubr.f32.gmra.mrb[0].mxu0 %v2825
      %v3478 = vpop.f32.mrb[0].mxu0
      %v3479 = vadd.f32 0.0, %v3478
      %v3480 = vpop.f32.mrb[0].mxu0
      %3481 = vmatprep.mubr.f32.mxu0 0.0
      %3482 = vmatmul.mubr.f32.gmra.mrb[0].mxu0 %v2826
      %v3483 = vpop.f32.mrb[0].mxu0
      %v3484 = vadd.f32 0.0, %v3483
      %v3485 = vpop.f32.mrb[0].mxu0
      %3486 = vmatprep.mubr.f32.mxu0 0.0
      %3487 = vmatmul.mubr.f32.gmra.mrb[0].mxu0 %v2827
      %v3488 = vpop.f32.mrb[0].mxu0
      %v3489 = vadd.f32 0.0, %v3488
      %v3490 = vpop.f32.mrb[0].mxu0
      %3491 = vmatprep.mubr.f32.mxu0 0.0
      %3492 = vmatmul.mubr.f32.gmra.mrb[0].mxu0 %v2828
      %v3493 = vpop.f32.mrb[0].mxu0
      %v3494 = vadd.f32 0.0, %v3493
      %v3495 = vpop.f32.mrb[0].mxu0
      %3496 = vmatprep.mubr.f32.mxu0 0.0
      %3497 = vmatmul.mubr.f32.gmra.mrb[0].mxu0 %v2829
      %v3498 = vpop.f32.mrb[0].mxu0
      %v3499 = vadd.f32 0.0, %v3498
      %v3500 = vpop.f32.mrb[0].mxu0
      %3501 = vmatprep.mubr.f32.mxu0 0.0
      %3502 = vmatmul.mubr.f32.gmra.mrb[0].mxu0 %v2830
      %v3503 = vpop.f32.mrb[0].mxu0
      %v3504 = vadd.f32 0.0, %v3503
      %v3505 = vpop.f32.mrb[0].mxu0
      %3506 = vmatprep.mubr.f32.mxu0 0.0
      %3507 = vmatmul.mubr.f32.gmra.mrb[0].mxu0 %v2831
      %v3508 = vpop.f32.mrb[0].mxu0
      %v3509 = vadd.f32 0.0, %v3508
      %v3510 = vpop.f32.mrb[0].mxu0
      %3511 = vmatprep.mubr.f32.mxu0 0.0
      %3512 = vmatmul.mubr.f32.gmra.mrb[0].mxu0 %v2832
      %v3513 = vpop.f32.mrb[0].mxu0
      %v3514 = vadd.f32 0.0, %v3513
      %v3515 = vpop.f32.mrb[0].mxu0
      %3516 = vmatprep.mubr.f32.mxu0 0.0
      %3517 = vmatmul.mubr.f32.gmra.mrb[0].mxu0 %v2833
      %v3518 = vpop.f32.mrb[0].mxu0
      %v3519 = vadd.f32 0.0, %v3518
      %v3520 = vpop.f32.mrb[0].mxu0
      %3521 = vmatprep.mubr.f32.mxu0 0.0
      %3522 = vmatmul.mubr.f32.gmra.mrb[0].mxu0 %v2834
      %v3523 = vpop.f32.mrb[0].mxu0
      %v3524 = vadd.f32 0.0, %v3523
      %v3525 = vpop.f32.mrb[0].mxu0
      %3526 = vmatprep.mubr.f32.mxu0 0.0
      %3527 = vmatmul.mubr.f32.gmra.mrb[0].mxu0 %v2835
      %v3528 = vpop.f32.mrb[0].mxu0
      %v3529 = vadd.f32 0.0, %v3528
      %v3530 = vpop.f32.mrb[0].mxu0
      %3531 = vmatprep.mubr.f32.mxu0 0.0
      %3532 = vmatmul.mubr.f32.gmra.mrb[0].mxu0 %v2836
      %v3533 = vpop.f32.mrb[0].mxu0
      %v3534 = vadd.f32 0.0, %v3533
      %v3535 = vpop.f32.mrb[0].mxu0
      %3536 = vmatprep.mubr.f32.mxu0 0.0
      %3537 = vmatmul.mubr.f32.gmra.mrb[0].mxu0 %v2837
      %v3538 = vpop.f32.mrb[0].mxu0
      %v3539 = vadd.f32 0.0, %v3538
      %v3540 = vpop.f32.mrb[0].mxu0
      %3541 = vmatprep.mubr.f32.mxu0 0.0
      %3542 = vmatmul.mubr.f32.gmra.mrb[0].mxu0 %v2838
      %v3543 = vpop.f32.mrb[0].mxu0
      %v3544 = vadd.f32 0.0, %v3543
      %v3545 = vpop.f32.mrb[0].mxu0
      %3546 = vmatprep.mubr.f32.mxu0 0.0
      %3547 = vmatmul.mubr.f32.gmra.mrb[0].mxu0 %v2839
      %v3548 = vpop.f32.mrb[0].mxu0
      %v3549 = vadd.f32 0.0, %v3548
      %v3550 = vpop.f32.mrb[0].mxu0
      %3551 = vmatprep.mubr.f32.mxu0 0.0
      %3552 = vmatmul.mubr.f32.gmra.mrb[0].mxu0 %v2840
      %v3553 = vpop.f32.mrb[0].mxu0
      %v3554 = vadd.f32 0.0, %v3553
      %v3555 = vpop.f32.mrb[0].mxu0
      %3556 = vmatprep.mubr.f32.mxu0 0.0
      %3557 = vmatmul.mubr.f32.gmra.mrb[0].mxu0 %v2841
      %v3558 = vpop.f32.mrb[0].mxu0
      %v3559 = vadd.f32 0.0, %v3558
      %v3560 = vpop.f32.mrb[0].mxu0
      %3561 = vmatprep.mubr.f32.mxu0 0.0
      %3562 = vmatmul.mubr.f32.gmra.mrb[0].mxu0 %v2842
      %v3563 = vpop.f32.mrb[0].mxu0
      %v3564 = vadd.f32 0.0, %v3563
      %v3565 = vpop.f32.mrb[0].mxu0
      %3566 = vdwg.mxu0
      %v3662 = vrot.slane %v2937, 7
      %v3663 = vrot.slane %v2938, 7
      %v3664 = vsel %vm1547, %v3662, %v3663
      %v3665 = vrot.slane %v2939, 7
      %v3666 = vsel %vm1547, %v3663, %v3665
      %v3667 = vrot.slane %v2940, 7
      %v3668 = vsel %vm1547, %v3665, %v3667
      %v3669 = vrot.slane %v2941, 7
      %v3670 = vsel %vm1547, %v3667, %v3669
      %v3671 = vrot.slane %v2942, 7
      %v3672 = vsel %vm1547, %v3669, %v3671
      %v3673 = vrot.slane %v2943, 7
      %v3674 = vsel %vm1547, %v3671, %v3673
      %v3675 = vrot.slane %v2944, 7
      %v3676 = vsel %vm1547, %v3673, %v3675
      %v3677 = vrot.slane %v2945, 7
      %v3678 = vsel %vm1547, %v3675, %v3677
      %v3679 = vrot.slane %v2946, 7
      %v3680 = vsel %vm1547, %v3677, %v3679
      %v3681 = vrot.slane %v2947, 7
      %v3682 = vsel %vm1547, %v3679, %v3681
      %v3683 = vrot.slane %v2948, 7
      %v3684 = vsel %vm1547, %v3681, %v3683
      %v3685 = vrot.slane %v2949, 7
      %v3686 = vsel %vm1547, %v3683, %v3685
      %v3687 = vrot.slane %v2950, 7
      %v3688 = vsel %vm1547, %v3685, %v3687
      %v3689 = vrot.slane %v2951, 7
      %v3690 = vsel %vm1547, %v3687, %v3689
      %v3691 = vrot.slane %v2952, 7
      %v3692 = vsel %vm1547, %v3689, %v3691
      %v3693 = vrot.slane %v2953, 7
      %v3694 = vsel %vm1547, %v3691, %v3693
      %v3695 = vrot.slane %v2954, 7
      %v3696 = vsel %vm1547, %v3693, %v3695
      %v3697 = vrot.slane %v2955, 7
      %v3698 = vsel %vm1547, %v3695, %v3697
      %v3699 = vrot.slane %v2956, 7
      %v3700 = vsel %vm1547, %v3697, %v3699
      %v3701 = vrot.slane %v2957, 7
      %v3702 = vsel %vm1547, %v3699, %v3701
      %v3703 = vrot.slane %v2958, 7
      %v3704 = vsel %vm1547, %v3701, %v3703
      %v3705 = vrot.slane %v2959, 7
      %v3706 = vsel %vm1547, %v3703, %v3705
      %v3707 = vrot.slane %v2960, 7
      %v3708 = vsel %vm1547, %v3705, %v3707
      %v3709 = vrot.slane %v2961, 7
      %v3710 = vsel %vm1547, %v3707, %v3709
      %v3711 = vrot.slane %v2962, 7
      %v3712 = vsel %vm1547, %v3709, %v3711
      %v3713 = vrot.slane %v2963, 7
      %v3714 = vsel %vm1547, %v3711, %v3713
      %v3715 = vrot.slane %v2964, 7
      %v3716 = vsel %vm1547, %v3713, %v3715
      %v3717 = vrot.slane %v2965, 7
      %v3718 = vsel %vm1547, %v3715, %v3717
      %v3719 = vrot.slane %v2966, 7
      %v3720 = vsel %vm1547, %v3717, %v3719
      %v3721 = vrot.slane %v2967, 7
      %v3722 = vsel %vm1547, %v3719, %v3721
      %v3723 = vrot.slane %v2968, 7
      %v3724 = vsel %vm1547, %v3721, %v3723
      %v3725 = vrot.slane %v2969, 7
      %v3726 = vsel %vm1547, %v3723, %v3725
      %v3727 = vrot.slane %v2970, 7
      %v3728 = vsel %vm1547, %v3725, %v3727
      %v3729 = vrot.slane %v2971, 7
      %v3730 = vsel %vm1547, %v3727, %v3729
      %v3731 = vrot.slane %v2972, 7
      %v3732 = vsel %vm1547, %v3729, %v3731
      %v3733 = vrot.slane %v2973, 7
      %v3734 = vsel %vm1547, %v3731, %v3733
      %v3735 = vrot.slane %v2974, 7
      %v3736 = vsel %vm1547, %v3733, %v3735
      %v3737 = vrot.slane %v2975, 7
      %v3738 = vsel %vm1547, %v3735, %v3737
      %v3739 = vrot.slane %v2976, 7
      %v3740 = vsel %vm1547, %v3737, %v3739
      %v3741 = vrot.slane %v2977, 7
      %v3742 = vsel %vm1547, %v3739, %v3741
      %v3743 = vrot.slane %v2978, 7
      %v3744 = vsel %vm1547, %v3741, %v3743
      %v3745 = vrot.slane %v2979, 7
      %v3746 = vsel %vm1547, %v3743, %v3745
      %v3747 = vrot.slane %v2980, 7
      %v3748 = vsel %vm1547, %v3745, %v3747
      %v3749 = vrot.slane %v2981, 7
      %v3750 = vsel %vm1547, %v3747, %v3749
      %v3751 = vrot.slane %v2982, 7
      %v3752 = vsel %vm1547, %v3749, %v3751
      %v3753 = vrot.slane %v2983, 7
      %v3754 = vsel %vm1547, %v3751, %v3753
      %v3755 = vrot.slane %v2984, 7
      %v3756 = vsel %vm1547, %v3753, %v3755
      %v3757 = vrot.slane %v2985, 7
      %v3758 = vsel %vm1547, %v3755, %v3757
      %v3759 = vrot.slane %v2986, 7
      %v3760 = vsel %vm1547, %v3757, %v3759
      %v3761 = vrot.slane %v2987, 7
      %v3762 = vsel %vm1547, %v3759, %v3761
      %v3763 = vrot.slane %v2988, 7
      %v3764 = vsel %vm1547, %v3761, %v3763
      %v3765 = vrot.slane %v2989, 7
      %v3766 = vsel %vm1547, %v3763, %v3765
      %v3767 = vrot.slane %v2990, 7
      %v3768 = vsel %vm1547, %v3765, %v3767
      %v3769 = vrot.slane %v2991, 7
      %v3770 = vsel %vm1547, %v3767, %v3769
      %v3771 = vrot.slane %v2992, 7
      %v3772 = vsel %vm1547, %v3769, %v3771
      %v3773 = vrot.slane %v2993, 7
      %v3774 = vsel %vm1547, %v3771, %v3773
      %v3775 = vrot.slane %v2994, 7
      %v3776 = vsel %vm1547, %v3773, %v3775
      %v3777 = vrot.slane %v2995, 7
      %v3778 = vsel %vm1547, %v3775, %v3777
      %v3779 = vrot.slane %v2996, 7
      %v3780 = vsel %vm1547, %v3777, %v3779
      %v3781 = vrot.slane %v2997, 7
      %v3782 = vsel %vm1547, %v3779, %v3781
      %v3783 = vrot.slane %v2998, 7
      %v3784 = vsel %vm1547, %v3781, %v3783
      %v3785 = vrot.slane %v2999, 7
      %v3786 = vsel %vm1547, %v3783, %v3785
      %v3787 = vrot.slane %v3000, 7
      %v3788 = vsel %vm1547, %v3785, %v3787
      %v3789 = vrot.slane %v3001, 7
      %v3790 = vsel %vm1547, %v3787, %v3789
      %v3791 = vrot.slane %v3002, 7
      %v3792 = vsel %vm1547, %v3789, %v3791
      %v3793 = vrot.slane %v3003, 7
      %v3794 = vsel %vm1547, %v3791, %v3793
      %v3795 = vrot.slane %v3004, 7
      %v3796 = vsel %vm1547, %v3793, %v3795
      %v3797 = vrot.slane %v3005, 7
      %v3798 = vsel %vm1547, %v3795, %v3797
      %v3799 = vrot.slane %v3006, 7
      %v3800 = vsel %vm1547, %v3797, %v3799
      %v3801 = vrot.slane %v3007, 7
      %v3802 = vsel %vm1547, %v3799, %v3801
      %v3803 = vrot.slane %v3008, 7
      %v3804 = vsel %vm1547, %v3801, %v3803
      %v3805 = vrot.slane %v3009, 7
      %v3806 = vsel %vm1547, %v3803, %v3805
      %v3807 = vrot.slane %v3010, 7
      %v3808 = vsel %vm1547, %v3805, %v3807
      %v3809 = vrot.slane %v3011, 7
      %v3810 = vsel %vm1547, %v3807, %v3809
      %v3811 = vrot.slane %v3012, 7
      %v3812 = vsel %vm1547, %v3809, %v3811
      %v3813 = vrot.slane %v3013, 7
      %v3814 = vsel %vm1547, %v3811, %v3813
      %v3815 = vrot.slane %v3014, 7
      %v3816 = vsel %vm1547, %v3813, %v3815
      %v3817 = vrot.slane %v3015, 7
      %v3818 = vsel %vm1547, %v3815, %v3817
      %v3819 = vrot.slane %v3016, 7
      %v3820 = vsel %vm1547, %v3817, %v3819
      %v3821 = vrot.slane %v3017, 7
      %v3822 = vsel %vm1547, %v3819, %v3821
      %v3823 = vrot.slane %v3018, 7
      %v3824 = vsel %vm1547, %v3821, %v3823
      %v3825 = vrot.slane %v3019, 7
      %v3826 = vsel %vm1547, %v3823, %v3825
      %v3827 = vrot.slane %v3020, 7
      %v3828 = vsel %vm1547, %v3825, %v3827
      %v3829 = vrot.slane %v3021, 7
      %v3830 = vsel %vm1547, %v3827, %v3829
      %v3831 = vrot.slane %v3022, 7
      %v3832 = vsel %vm1547, %v3829, %v3831
      %v3833 = vrot.slane %v3023, 7
      %v3834 = vsel %vm1547, %v3831, %v3833
      %v3835 = vrot.slane %v3024, 7
      %v3836 = vsel %vm1547, %v3833, %v3835
      %v3837 = vrot.slane %v3025, 7
      %v3838 = vsel %vm1547, %v3835, %v3837
      %v3839 = vrot.slane %v3026, 7
      %v3840 = vsel %vm1547, %v3837, %v3839
      %v3841 = vrot.slane %v3027, 7
      %v3842 = vsel %vm1547, %v3839, %v3841
      %v3843 = vrot.slane %v3028, 7
      %v3844 = vsel %vm1547, %v3841, %v3843
      %v3845 = vrot.slane %v3029, 7
      %v3846 = vsel %vm1547, %v3843, %v3845
      %v3847 = vrot.slane %v3030, 7
      %v3848 = vsel %vm1547, %v3845, %v3847
      %v3849 = vrot.slane %v3031, 7
      %v3850 = vsel %vm1547, %v3847, %v3849
      %3945 = vmatprep.subr.mxu0 0.0
      %3946 = vmatpush1.msra.mxu0 %v564
      %3947 = vmatprep.subr.mxu0 0.0
      %3948 = vmatpush1.msra.mxu0 %v565
      %3949 = vmatprep.subr.mxu0 0.0
      %3950 = vmatpush1.msra.mxu0 %v566
      %3951 = vmatprep.subr.mxu0 0.0
      %3952 = vmatpush1.msra.mxu0 %v567
      %3953 = vmatprep.subr.mxu0 0.0
      %3954 = vmatpush1.msra.mxu0 %v568
      %3955 = vmatprep.subr.mxu0 0.0
      %3956 = vmatpush1.msra.mxu0 %v569
      %3957 = vmatprep.subr.mxu0 0.0
      %3958 = vmatpush1.msra.mxu0 %v570
      %3959 = vmatprep.subr.mxu0 0.0
      %3960 = vmatpush1.msra.mxu0 %v571
      %3961 = vmatprep.subr.mxu0 0.0
      %3962 = vmatpush1.msra.mxu0 %v572
      %3963 = vmatprep.subr.mxu0 0.0
      %3964 = vmatpush1.msra.mxu0 %v573
      %3965 = vmatprep.subr.mxu0 0.0
      %3966 = vmatpush1.msra.mxu0 %v574
      %3967 = vmatprep.subr.mxu0 0.0
      %3968 = vmatpush1.msra.mxu0 %v575
      %3969 = vmatprep.subr.mxu0 0.0
      %3970 = vmatpush1.msra.mxu0 %v576
      %3971 = vmatprep.subr.mxu0 0.0
      %3972 = vmatpush1.msra.mxu0 %v577
      %3973 = vmatprep.subr.mxu0 0.0
      %3974 = vmatpush1.msra.mxu0 %v578
      %3975 = vmatprep.subr.mxu0 0.0
      %3976 = vmatpush1.msra.mxu0 %v579
      %3977 = vmatprep.subr.mxu0 0.0
      %3978 = vmatpush1.msra.mxu0 0.0
      %3979 = vmatprep.subr.mxu0 0.0
      %3980 = vmatpush1.msra.mxu0 0.0
      %3981 = vmatprep.subr.mxu0 0.0
      %3982 = vmatpush1.msra.mxu0 0.0
      %3983 = vmatprep.subr.mxu0 0.0
      %3984 = vmatpush1.msra.mxu0 0.0
      %3985 = vmatprep.subr.mxu0 0.0
      %3986 = vmatpush1.msra.mxu0 0.0
      %3987 = vmatprep.subr.mxu0 0.0
      %3988 = vmatpush1.msra.mxu0 0.0
      %3989 = vmatprep.subr.mxu0 0.0
      %3990 = vmatpush1.msra.mxu0 0.0
      %3991 = vmatprep.subr.mxu0 0.0
      %3992 = vmatpush1.msra.mxu0 0.0
      %3993 = vmatprep.subr.mxu0 0.0
      %3994 = vmatpush1.msra.mxu0 0.0
      %3995 = vmatprep.subr.mxu0 0.0
      %3996 = vmatpush1.msra.mxu0 0.0
      %3997 = vmatprep.subr.mxu0 0.0
      %3998 = vmatpush1.msra.mxu0 0.0
      %3999 = vmatprep.subr.mxu0 0.0
      %4000 = vmatpush1.msra.mxu0 0.0
      %4001 = vmatprep.subr.mxu0 0.0
      %4002 = vmatpush1.msra.mxu0 0.0
      %4003 = vmatprep.subr.mxu0 0.0
      %4004 = vmatpush1.msra.mxu0 0.0
      %4005 = vmatprep.subr.mxu0 0.0
      %4006 = vmatpush1.msra.mxu0 0.0
      %4007 = vmatprep.subr.mxu0 0.0
      %4008 = vmatpush1.msra.mxu0 0.0
      %4009 = vmatprep.mubr.f32.mxu0 0.0
      %4010 = vmatmul.mubr.f32.gmra.mrb[0].mxu0 %v3664
      %v4011 = vpop.f32.mrb[0].mxu0
      %v4012 = vadd.f32 %v3099, %v4011
      %v4013 = vpop.f32.mrb[0].mxu0
      %4014 = vmatprep.mubr.f32.mxu0 0.0
      %4015 = vmatmul.mubr.f32.gmra.mrb[0].mxu0 %v3666
      %v4016 = vpop.f32.mrb[0].mxu0
      %v4017 = vadd.f32 %v3104, %v4016
      %v4018 = vpop.f32.mrb[0].mxu0
      %4019 = vmatprep.mubr.f32.mxu0 0.0
      %4020 = vmatmul.mubr.f32.gmra.mrb[0].mxu0 %v3668
      %v4021 = vpop.f32.mrb[0].mxu0
      %v4022 = vadd.f32 %v3109, %v4021
      %v4023 = vpop.f32.mrb[0].mxu0
      %4024 = vmatprep.mubr.f32.mxu0 0.0
      %4025 = vmatmul.mubr.f32.gmra.mrb[0].mxu0 %v3670
      %v4026 = vpop.f32.mrb[0].mxu0
      %v4027 = vadd.f32 %v3114, %v4026
      %v4028 = vpop.f32.mrb[0].mxu0
      %4029 = vmatprep.mubr.f32.mxu0 0.0
      %4030 = vmatmul.mubr.f32.gmra.mrb[0].mxu0 %v3672
      %v4031 = vpop.f32.mrb[0].mxu0
      %v4032 = vadd.f32 %v3119, %v4031
      %v4033 = vpop.f32.mrb[0].mxu0
      %4034 = vmatprep.mubr.f32.mxu0 0.0
      %4035 = vmatmul.mubr.f32.gmra.mrb[0].mxu0 %v3674
      %v4036 = vpop.f32.mrb[0].mxu0
      %v4037 = vadd.f32 %v3124, %v4036
      %v4038 = vpop.f32.mrb[0].mxu0
      %4039 = vmatprep.mubr.f32.mxu0 0.0
      %4040 = vmatmul.mubr.f32.gmra.mrb[0].mxu0 %v3676
      %v4041 = vpop.f32.mrb[0].mxu0
      %v4042 = vadd.f32 %v3129, %v4041
      %v4043 = vpop.f32.mrb[0].mxu0
      %4044 = vmatprep.mubr.f32.mxu0 0.0
      %4045 = vmatmul.mubr.f32.gmra.mrb[0].mxu0 %v3678
      %v4046 = vpop.f32.mrb[0].mxu0
      %v4047 = vadd.f32 %v3134, %v4046
      %v4048 = vpop.f32.mrb[0].mxu0
      %4049 = vmatprep.mubr.f32.mxu0 0.0
      %4050 = vmatmul.mubr.f32.gmra.mrb[0].mxu0 %v3680
      %v4051 = vpop.f32.mrb[0].mxu0
      %v4052 = vadd.f32 %v3139, %v4051
      %v4053 = vpop.f32.mrb[0].mxu0
      %4054 = vmatprep.mubr.f32.mxu0 0.0
      %4055 = vmatmul.mubr.f32.gmra.mrb[0].mxu0 %v3682
      %v4056 = vpop.f32.mrb[0].mxu0
      %v4057 = vadd.f32 %v3144, %v4056
      %v4058 = vpop.f32.mrb[0].mxu0
      %4059 = vmatprep.mubr.f32.mxu0 0.0
      %4060 = vmatmul.mubr.f32.gmra.mrb[0].mxu0 %v3684
      %v4061 = vpop.f32.mrb[0].mxu0
      %v4062 = vadd.f32 %v3149, %v4061
      %v4063 = vpop.f32.mrb[0].mxu0
      %4064 = vmatprep.mubr.f32.mxu0 0.0
      %4065 = vmatmul.mubr.f32.gmra.mrb[0].mxu0 %v3686
      %v4066 = vpop.f32.mrb[0].mxu0
      %v4067 = vadd.f32 %v3154, %v4066
      %v4068 = vpop.f32.mrb[0].mxu0
      %4069 = vmatprep.mubr.f32.mxu0 0.0
      %4070 = vmatmul.mubr.f32.gmra.mrb[0].mxu0 %v3688
      %v4071 = vpop.f32.mrb[0].mxu0
      %v4072 = vadd.f32 %v3159, %v4071
      %v4073 = vpop.f32.mrb[0].mxu0
      %4074 = vmatprep.mubr.f32.mxu0 0.0
      %4075 = vmatmul.mubr.f32.gmra.mrb[0].mxu0 %v3690
      %v4076 = vpop.f32.mrb[0].mxu0
      %v4077 = vadd.f32 %v3164, %v4076
      %v4078 = vpop.f32.mrb[0].mxu0
      %4079 = vmatprep.mubr.f32.mxu0 0.0
      %4080 = vmatmul.mubr.f32.gmra.mrb[0].mxu0 %v3692
      %v4081 = vpop.f32.mrb[0].mxu0
      %v4082 = vadd.f32 %v3169, %v4081
      %v4083 = vpop.f32.mrb[0].mxu0
      %4084 = vmatprep.mubr.f32.mxu0 0.0
      %4085 = vmatmul.mubr.f32.gmra.mrb[0].mxu0 %v3694
      %v4086 = vpop.f32.mrb[0].mxu0
      %v4087 = vadd.f32 %v3174, %v4086
      %v4088 = vpop.f32.mrb[0].mxu0
      %4089 = vmatprep.mubr.f32.mxu0 0.0
      %4090 = vmatmul.mubr.f32.gmra.mrb[0].mxu0 %v3696
      %v4091 = vpop.f32.mrb[0].mxu0
      %v4092 = vadd.f32 %v3179, %v4091
      %v4093 = vpop.f32.mrb[0].mxu0
      %4094 = vmatprep.mubr.f32.mxu0 0.0
      %4095 = vmatmul.mubr.f32.gmra.mrb[0].mxu0 %v3698
      %v4096 = vpop.f32.mrb[0].mxu0
      %v4097 = vadd.f32 %v3184, %v4096
      %v4098 = vpop.f32.mrb[0].mxu0
      %4099 = vmatprep.mubr.f32.mxu0 0.0
      %4100 = vmatmul.mubr.f32.gmra.mrb[0].mxu0 %v3700
      %v4101 = vpop.f32.mrb[0].mxu0
      %v4102 = vadd.f32 %v3189, %v4101
      %v4103 = vpop.f32.mrb[0].mxu0
      %4104 = vmatprep.mubr.f32.mxu0 0.0
      %4105 = vmatmul.mubr.f32.gmra.mrb[0].mxu0 %v3702
      %v4106 = vpop.f32.mrb[0].mxu0
      %v4107 = vadd.f32 %v3194, %v4106
      %v4108 = vpop.f32.mrb[0].mxu0
      %4109 = vmatprep.mubr.f32.mxu0 0.0
      %4110 = vmatmul.mubr.f32.gmra.mrb[0].mxu0 %v3704
      %v4111 = vpop.f32.mrb[0].mxu0
      %v4112 = vadd.f32 %v3199, %v4111
      %v4113 = vpop.f32.mrb[0].mxu0
      %4114 = vmatprep.mubr.f32.mxu0 0.0
      %4115 = vmatmul.mubr.f32.gmra.mrb[0].mxu0 %v3706
      %v4116 = vpop.f32.mrb[0].mxu0
      %v4117 = vadd.f32 %v3204, %v4116
      %v4118 = vpop.f32.mrb[0].mxu0
      %4119 = vmatprep.mubr.f32.mxu0 0.0
      %4120 = vmatmul.mubr.f32.gmra.mrb[0].mxu0 %v3708
      %v4121 = vpop.f32.mrb[0].mxu0
      %v4122 = vadd.f32 %v3209, %v4121
      %v4123 = vpop.f32.mrb[0].mxu0
      %4124 = vmatprep.mubr.f32.mxu0 0.0
      %4125 = vmatmul.mubr.f32.gmra.mrb[0].mxu0 %v3710
      %v4126 = vpop.f32.mrb[0].mxu0
      %v4127 = vadd.f32 %v3214, %v4126
      %v4128 = vpop.f32.mrb[0].mxu0
      %4129 = vmatprep.mubr.f32.mxu0 0.0
      %4130 = vmatmul.mubr.f32.gmra.mrb[0].mxu0 %v3712
      %v4131 = vpop.f32.mrb[0].mxu0
      %v4132 = vadd.f32 %v3219, %v4131
      %v4133 = vpop.f32.mrb[0].mxu0
      %4134 = vmatprep.mubr.f32.mxu0 0.0
      %4135 = vmatmul.mubr.f32.gmra.mrb[0].mxu0 %v3714
      %v4136 = vpop.f32.mrb[0].mxu0
      %v4137 = vadd.f32 %v3224, %v4136
      %v4138 = vpop.f32.mrb[0].mxu0
      %4139 = vmatprep.mubr.f32.mxu0 0.0
      %4140 = vmatmul.mubr.f32.gmra.mrb[0].mxu0 %v3716
      %v4141 = vpop.f32.mrb[0].mxu0
      %v4142 = vadd.f32 %v3229, %v4141
      %v4143 = vpop.f32.mrb[0].mxu0
      %4144 = vmatprep.mubr.f32.mxu0 0.0
      %4145 = vmatmul.mubr.f32.gmra.mrb[0].mxu0 %v3718
      %v4146 = vpop.f32.mrb[0].mxu0
      %v4147 = vadd.f32 %v3234, %v4146
      %v4148 = vpop.f32.mrb[0].mxu0
      %4149 = vmatprep.mubr.f32.mxu0 0.0
      %4150 = vmatmul.mubr.f32.gmra.mrb[0].mxu0 %v3720
      %v4151 = vpop.f32.mrb[0].mxu0
      %v4152 = vadd.f32 %v3239, %v4151
      %v4153 = vpop.f32.mrb[0].mxu0
      %4154 = vmatprep.mubr.f32.mxu0 0.0
      %4155 = vmatmul.mubr.f32.gmra.mrb[0].mxu0 %v3722
      %v4156 = vpop.f32.mrb[0].mxu0
      %v4157 = vadd.f32 %v3244, %v4156
      %v4158 = vpop.f32.mrb[0].mxu0
      %4159 = vmatprep.mubr.f32.mxu0 0.0
      %4160 = vmatmul.mubr.f32.gmra.mrb[0].mxu0 %v3724
      %v4161 = vpop.f32.mrb[0].mxu0
      %v4162 = vadd.f32 %v3249, %v4161
      %v4163 = vpop.f32.mrb[0].mxu0
      %4164 = vmatprep.mubr.f32.mxu0 0.0
      %4165 = vmatmul.mubr.f32.gmra.mrb[0].mxu0 %v3726
      %v4166 = vpop.f32.mrb[0].mxu0
      %v4167 = vadd.f32 %v3254, %v4166
      %v4168 = vpop.f32.mrb[0].mxu0
      %4169 = vmatprep.mubr.f32.mxu0 0.0
      %4170 = vmatmul.mubr.f32.gmra.mrb[0].mxu0 %v3728
      %v4171 = vpop.f32.mrb[0].mxu0
      %v4172 = vadd.f32 %v3259, %v4171
      %v4173 = vpop.f32.mrb[0].mxu0
      %4174 = vmatprep.mubr.f32.mxu0 0.0
      %4175 = vmatmul.mubr.f32.gmra.mrb[0].mxu0 %v3730
      %v4176 = vpop.f32.mrb[0].mxu0
      %v4177 = vadd.f32 %v3264, %v4176
      %v4178 = vpop.f32.mrb[0].mxu0
      %4179 = vmatprep.mubr.f32.mxu0 0.0
      %4180 = vmatmul.mubr.f32.gmra.mrb[0].mxu0 %v3732
      %v4181 = vpop.f32.mrb[0].mxu0
      %v4182 = vadd.f32 %v3269, %v4181
      %v4183 = vpop.f32.mrb[0].mxu0
      %4184 = vmatprep.mubr.f32.mxu0 0.0
      %4185 = vmatmul.mubr.f32.gmra.mrb[0].mxu0 %v3734
      %v4186 = vpop.f32.mrb[0].mxu0
      %v4187 = vadd.f32 %v3274, %v4186
      %v4188 = vpop.f32.mrb[0].mxu0
      %4189 = vmatprep.mubr.f32.mxu0 0.0
      %4190 = vmatmul.mubr.f32.gmra.mrb[0].mxu0 %v3736
      %v4191 = vpop.f32.mrb[0].mxu0
      %v4192 = vadd.f32 %v3279, %v4191
      %v4193 = vpop.f32.mrb[0].mxu0
      %4194 = vmatprep.mubr.f32.mxu0 0.0
      %4195 = vmatmul.mubr.f32.gmra.mrb[0].mxu0 %v3738
      %v4196 = vpop.f32.mrb[0].mxu0
      %v4197 = vadd.f32 %v3284, %v4196
      %v4198 = vpop.f32.mrb[0].mxu0
      %4199 = vmatprep.mubr.f32.mxu0 0.0
      %4200 = vmatmul.mubr.f32.gmra.mrb[0].mxu0 %v3740
      %v4201 = vpop.f32.mrb[0].mxu0
      %v4202 = vadd.f32 %v3289, %v4201
      %v4203 = vpop.f32.mrb[0].mxu0
      %4204 = vmatprep.mubr.f32.mxu0 0.0
      %4205 = vmatmul.mubr.f32.gmra.mrb[0].mxu0 %v3742
      %v4206 = vpop.f32.mrb[0].mxu0
      %v4207 = vadd.f32 %v3294, %v4206
      %v4208 = vpop.f32.mrb[0].mxu0
      %4209 = vmatprep.mubr.f32.mxu0 0.0
      %4210 = vmatmul.mubr.f32.gmra.mrb[0].mxu0 %v3744
      %v4211 = vpop.f32.mrb[0].mxu0
      %v4212 = vadd.f32 %v3299, %v4211
      %v4213 = vpop.f32.mrb[0].mxu0
      %4214 = vmatprep.mubr.f32.mxu0 0.0
      %4215 = vmatmul.mubr.f32.gmra.mrb[0].mxu0 %v3746
      %v4216 = vpop.f32.mrb[0].mxu0
      %v4217 = vadd.f32 %v3304, %v4216
      %v4218 = vpop.f32.mrb[0].mxu0
      %4219 = vmatprep.mubr.f32.mxu0 0.0
      %4220 = vmatmul.mubr.f32.gmra.mrb[0].mxu0 %v3748
      %v4221 = vpop.f32.mrb[0].mxu0
      %v4222 = vadd.f32 %v3309, %v4221
      %v4223 = vpop.f32.mrb[0].mxu0
      %4224 = vmatprep.mubr.f32.mxu0 0.0
      %4225 = vmatmul.mubr.f32.gmra.mrb[0].mxu0 %v3750
      %v4226 = vpop.f32.mrb[0].mxu0
      %v4227 = vadd.f32 %v3314, %v4226
      %v4228 = vpop.f32.mrb[0].mxu0
      %4229 = vmatprep.mubr.f32.mxu0 0.0
      %4230 = vmatmul.mubr.f32.gmra.mrb[0].mxu0 %v3752
      %v4231 = vpop.f32.mrb[0].mxu0
      %v4232 = vadd.f32 %v3319, %v4231
      %v4233 = vpop.f32.mrb[0].mxu0
      %4234 = vmatprep.mubr.f32.mxu0 0.0
      %4235 = vmatmul.mubr.f32.gmra.mrb[0].mxu0 %v3754
      %v4236 = vpop.f32.mrb[0].mxu0
      %v4237 = vadd.f32 %v3324, %v4236
      %v4238 = vpop.f32.mrb[0].mxu0
      %4239 = vmatprep.mubr.f32.mxu0 0.0
      %4240 = vmatmul.mubr.f32.gmra.mrb[0].mxu0 %v3756
      %v4241 = vpop.f32.mrb[0].mxu0
      %v4242 = vadd.f32 %v3329, %v4241
      %v4243 = vpop.f32.mrb[0].mxu0
      %4244 = vmatprep.mubr.f32.mxu0 0.0
      %4245 = vmatmul.mubr.f32.gmra.mrb[0].mxu0 %v3758
      %v4246 = vpop.f32.mrb[0].mxu0
      %v4247 = vadd.f32 %v3334, %v4246
      %v4248 = vpop.f32.mrb[0].mxu0
      %4249 = vmatprep.mubr.f32.mxu0 0.0
      %4250 = vmatmul.mubr.f32.gmra.mrb[0].mxu0 %v3760
      %v4251 = vpop.f32.mrb[0].mxu0
      %v4252 = vadd.f32 %v3339, %v4251
      %v4253 = vpop.f32.mrb[0].mxu0
      %4254 = vmatprep.mubr.f32.mxu0 0.0
      %4255 = vmatmul.mubr.f32.gmra.mrb[0].mxu0 %v3762
      %v4256 = vpop.f32.mrb[0].mxu0
      %v4257 = vadd.f32 %v3344, %v4256
      %v4258 = vpop.f32.mrb[0].mxu0
      %4259 = vmatprep.mubr.f32.mxu0 0.0
      %4260 = vmatmul.mubr.f32.gmra.mrb[0].mxu0 %v3764
      %v4261 = vpop.f32.mrb[0].mxu0
      %v4262 = vadd.f32 %v3349, %v4261
      %v4263 = vpop.f32.mrb[0].mxu0
      %4264 = vmatprep.mubr.f32.mxu0 0.0
      %4265 = vmatmul.mubr.f32.gmra.mrb[0].mxu0 %v3766
      %v4266 = vpop.f32.mrb[0].mxu0
      %v4267 = vadd.f32 %v3354, %v4266
      %v4268 = vpop.f32.mrb[0].mxu0
      %4269 = vmatprep.mubr.f32.mxu0 0.0
      %4270 = vmatmul.mubr.f32.gmra.mrb[0].mxu0 %v3768
      %v4271 = vpop.f32.mrb[0].mxu0
      %v4272 = vadd.f32 %v3359, %v4271
      %v4273 = vpop.f32.mrb[0].mxu0
      %4274 = vmatprep.mubr.f32.mxu0 0.0
      %4275 = vmatmul.mubr.f32.gmra.mrb[0].mxu0 %v3770
      %v4276 = vpop.f32.mrb[0].mxu0
      %v4277 = vadd.f32 %v3364, %v4276
      %v4278 = vpop.f32.mrb[0].mxu0
      %4279 = vmatprep.mubr.f32.mxu0 0.0
      %4280 = vmatmul.mubr.f32.gmra.mrb[0].mxu0 %v3772
      %v4281 = vpop.f32.mrb[0].mxu0
      %v4282 = vadd.f32 %v3369, %v4281
      %v4283 = vpop.f32.mrb[0].mxu0
      %4284 = vmatprep.mubr.f32.mxu0 0.0
      %4285 = vmatmul.mubr.f32.gmra.mrb[0].mxu0 %v3774
      %v4286 = vpop.f32.mrb[0].mxu0
      %v4287 = vadd.f32 %v3374, %v4286
      %v4288 = vpop.f32.mrb[0].mxu0
      %4289 = vmatprep.mubr.f32.mxu0 0.0
      %4290 = vmatmul.mubr.f32.gmra.mrb[0].mxu0 %v3776
      %v4291 = vpop.f32.mrb[0].mxu0
      %v4292 = vadd.f32 %v3379, %v4291
      %v4293 = vpop.f32.mrb[0].mxu0
      %4294 = vmatprep.mubr.f32.mxu0 0.0
      %4295 = vmatmul.mubr.f32.gmra.mrb[0].mxu0 %v3778
      %v4296 = vpop.f32.mrb[0].mxu0
      %v4297 = vadd.f32 %v3384, %v4296
      %v4298 = vpop.f32.mrb[0].mxu0
      %4299 = vmatprep.mubr.f32.mxu0 0.0
      %4300 = vmatmul.mubr.f32.gmra.mrb[0].mxu0 %v3780
      %v4301 = vpop.f32.mrb[0].mxu0
      %v4302 = vadd.f32 %v3389, %v4301
      %v4303 = vpop.f32.mrb[0].mxu0
      %4304 = vmatprep.mubr.f32.mxu0 0.0
      %4305 = vmatmul.mubr.f32.gmra.mrb[0].mxu0 %v3782
      %v4306 = vpop.f32.mrb[0].mxu0
      %v4307 = vadd.f32 %v3394, %v4306
      %v4308 = vpop.f32.mrb[0].mxu0
      %4309 = vmatprep.mubr.f32.mxu0 0.0
      %4310 = vmatmul.mubr.f32.gmra.mrb[0].mxu0 %v3784
      %v4311 = vpop.f32.mrb[0].mxu0
      %v4312 = vadd.f32 %v3399, %v4311
      %v4313 = vpop.f32.mrb[0].mxu0
      %4314 = vmatprep.mubr.f32.mxu0 0.0
      %4315 = vmatmul.mubr.f32.gmra.mrb[0].mxu0 %v3786
      %v4316 = vpop.f32.mrb[0].mxu0
      %v4317 = vadd.f32 %v3404, %v4316
      %v4318 = vpop.f32.mrb[0].mxu0
      %4319 = vmatprep.mubr.f32.mxu0 0.0
      %4320 = vmatmul.mubr.f32.gmra.mrb[0].mxu0 %v3788
      %v4321 = vpop.f32.mrb[0].mxu0
      %v4322 = vadd.f32 %v3409, %v4321
      %v4323 = vpop.f32.mrb[0].mxu0
      %4324 = vmatprep.mubr.f32.mxu0 0.0
      %4325 = vmatmul.mubr.f32.gmra.mrb[0].mxu0 %v3790
      %v4326 = vpop.f32.mrb[0].mxu0
      %v4327 = vadd.f32 %v3414, %v4326
      %v4328 = vpop.f32.mrb[0].mxu0
      %4329 = vmatprep.mubr.f32.mxu0 0.0
      %4330 = vmatmul.mubr.f32.gmra.mrb[0].mxu0 %v3792
      %v4331 = vpop.f32.mrb[0].mxu0
      %v4332 = vadd.f32 %v3419, %v4331
      %v4333 = vpop.f32.mrb[0].mxu0
      %4334 = vmatprep.mubr.f32.mxu0 0.0
      %4335 = vmatmul.mubr.f32.gmra.mrb[0].mxu0 %v3794
      %v4336 = vpop.f32.mrb[0].mxu0
      %v4337 = vadd.f32 %v3424, %v4336
      %v4338 = vpop.f32.mrb[0].mxu0
      %4339 = vmatprep.mubr.f32.mxu0 0.0
      %4340 = vmatmul.mubr.f32.gmra.mrb[0].mxu0 %v3796
      %v4341 = vpop.f32.mrb[0].mxu0
      %v4342 = vadd.f32 %v3429, %v4341
      %v4343 = vpop.f32.mrb[0].mxu0
      %4344 = vmatprep.mubr.f32.mxu0 0.0
      %4345 = vmatmul.mubr.f32.gmra.mrb[0].mxu0 %v3798
      %v4346 = vpop.f32.mrb[0].mxu0
      %v4347 = vadd.f32 %v3434, %v4346
      %v4348 = vpop.f32.mrb[0].mxu0
      %4349 = vmatprep.mubr.f32.mxu0 0.0
      %4350 = vmatmul.mubr.f32.gmra.mrb[0].mxu0 %v3800
      %v4351 = vpop.f32.mrb[0].mxu0
      %v4352 = vadd.f32 %v3439, %v4351
      %v4353 = vpop.f32.mrb[0].mxu0
      %4354 = vmatprep.mubr.f32.mxu0 0.0
      %4355 = vmatmul.mubr.f32.gmra.mrb[0].mxu0 %v3802
      %v4356 = vpop.f32.mrb[0].mxu0
      %v4357 = vadd.f32 %v3444, %v4356
      %v4358 = vpop.f32.mrb[0].mxu0
      %4359 = vmatprep.mubr.f32.mxu0 0.0
      %4360 = vmatmul.mubr.f32.gmra.mrb[0].mxu0 %v3804
      %v4361 = vpop.f32.mrb[0].mxu0
      %v4362 = vadd.f32 %v3449, %v4361
      %v4363 = vpop.f32.mrb[0].mxu0
      %4364 = vmatprep.mubr.f32.mxu0 0.0
      %4365 = vmatmul.mubr.f32.gmra.mrb[0].mxu0 %v3806
      %v4366 = vpop.f32.mrb[0].mxu0
      %v4367 = vadd.f32 %v3454, %v4366
      %v4368 = vpop.f32.mrb[0].mxu0
      %4369 = vmatprep.mubr.f32.mxu0 0.0
      %4370 = vmatmul.mubr.f32.gmra.mrb[0].mxu0 %v3808
      %v4371 = vpop.f32.mrb[0].mxu0
      %v4372 = vadd.f32 %v3459, %v4371
      %v4373 = vpop.f32.mrb[0].mxu0
      %4374 = vmatprep.mubr.f32.mxu0 0.0
      %4375 = vmatmul.mubr.f32.gmra.mrb[0].mxu0 %v3810
      %v4376 = vpop.f32.mrb[0].mxu0
      %v4377 = vadd.f32 %v3464, %v4376
      %v4378 = vpop.f32.mrb[0].mxu0
      %4379 = vmatprep.mubr.f32.mxu0 0.0
      %4380 = vmatmul.mubr.f32.gmra.mrb[0].mxu0 %v3812
      %v4381 = vpop.f32.mrb[0].mxu0
      %v4382 = vadd.f32 %v3469, %v4381
      %v4383 = vpop.f32.mrb[0].mxu0
      %4384 = vmatprep.mubr.f32.mxu0 0.0
      %4385 = vmatmul.mubr.f32.gmra.mrb[0].mxu0 %v3814
      %v4386 = vpop.f32.mrb[0].mxu0
      %v4387 = vadd.f32 %v3474, %v4386
      %v4388 = vpop.f32.mrb[0].mxu0
      %4389 = vmatprep.mubr.f32.mxu0 0.0
      %4390 = vmatmul.mubr.f32.gmra.mrb[0].mxu0 %v3816
      %v4391 = vpop.f32.mrb[0].mxu0
      %v4392 = vadd.f32 %v3479, %v4391
      %v4393 = vpop.f32.mrb[0].mxu0
      %4394 = vmatprep.mubr.f32.mxu0 0.0
      %4395 = vmatmul.mubr.f32.gmra.mrb[0].mxu0 %v3818
      %v4396 = vpop.f32.mrb[0].mxu0
      %v4397 = vadd.f32 %v3484, %v4396
      %v4398 = vpop.f32.mrb[0].mxu0
      %4399 = vmatprep.mubr.f32.mxu0 0.0
      %4400 = vmatmul.mubr.f32.gmra.mrb[0].mxu0 %v3820
      %v4401 = vpop.f32.mrb[0].mxu0
      %v4402 = vadd.f32 %v3489, %v4401
      %v4403 = vpop.f32.mrb[0].mxu0
      %4404 = vmatprep.mubr.f32.mxu0 0.0
      %4405 = vmatmul.mubr.f32.gmra.mrb[0].mxu0 %v3822
      %v4406 = vpop.f32.mrb[0].mxu0
      %v4407 = vadd.f32 %v3494, %v4406
      %v4408 = vpop.f32.mrb[0].mxu0
      %4409 = vmatprep.mubr.f32.mxu0 0.0
      %4410 = vmatmul.mubr.f32.gmra.mrb[0].mxu0 %v3824
      %v4411 = vpop.f32.mrb[0].mxu0
      %v4412 = vadd.f32 %v3499, %v4411
      %v4413 = vpop.f32.mrb[0].mxu0
      %4414 = vmatprep.mubr.f32.mxu0 0.0
      %4415 = vmatmul.mubr.f32.gmra.mrb[0].mxu0 %v3826
      %v4416 = vpop.f32.mrb[0].mxu0
      %v4417 = vadd.f32 %v3504, %v4416
      %v4418 = vpop.f32.mrb[0].mxu0
      %4419 = vmatprep.mubr.f32.mxu0 0.0
      %4420 = vmatmul.mubr.f32.gmra.mrb[0].mxu0 %v3828
      %v4421 = vpop.f32.mrb[0].mxu0
      %v4422 = vadd.f32 %v3509, %v4421
      %v4423 = vpop.f32.mrb[0].mxu0
      %4424 = vmatprep.mubr.f32.mxu0 0.0
      %4425 = vmatmul.mubr.f32.gmra.mrb[0].mxu0 %v3830
      %v4426 = vpop.f32.mrb[0].mxu0
      %v4427 = vadd.f32 %v3514, %v4426
      %v4428 = vpop.f32.mrb[0].mxu0
      %4429 = vmatprep.mubr.f32.mxu0 0.0
      %4430 = vmatmul.mubr.f32.gmra.mrb[0].mxu0 %v3832
      %v4431 = vpop.f32.mrb[0].mxu0
      %v4432 = vadd.f32 %v3519, %v4431
      %v4433 = vpop.f32.mrb[0].mxu0
      %4434 = vmatprep.mubr.f32.mxu0 0.0
      %4435 = vmatmul.mubr.f32.gmra.mrb[0].mxu0 %v3834
      %v4436 = vpop.f32.mrb[0].mxu0
      %v4437 = vadd.f32 %v3524, %v4436
      %v4438 = vpop.f32.mrb[0].mxu0
      %4439 = vmatprep.mubr.f32.mxu0 0.0
      %4440 = vmatmul.mubr.f32.gmra.mrb[0].mxu0 %v3836
      %v4441 = vpop.f32.mrb[0].mxu0
      %v4442 = vadd.f32 %v3529, %v4441
      %v4443 = vpop.f32.mrb[0].mxu0
      %4444 = vmatprep.mubr.f32.mxu0 0.0
      %4445 = vmatmul.mubr.f32.gmra.mrb[0].mxu0 %v3838
      %v4446 = vpop.f32.mrb[0].mxu0
      %v4447 = vadd.f32 %v3534, %v4446
      %v4448 = vpop.f32.mrb[0].mxu0
      %4449 = vmatprep.mubr.f32.mxu0 0.0
      %4450 = vmatmul.mubr.f32.gmra.mrb[0].mxu0 %v3840
      %v4451 = vpop.f32.mrb[0].mxu0
      %v4452 = vadd.f32 %v3539, %v4451
      %v4453 = vpop.f32.mrb[0].mxu0
      %4454 = vmatprep.mubr.f32.mxu0 0.0
      %4455 = vmatmul.mubr.f32.gmra.mrb[0].mxu0 %v3842
      %v4456 = vpop.f32.mrb[0].mxu0
      %v4457 = vadd.f32 %v3544, %v4456
      %v4458 = vpop.f32.mrb[0].mxu0
      %4459 = vmatprep.mubr.f32.mxu0 0.0
      %4460 = vmatmul.mubr.f32.gmra.mrb[0].mxu0 %v3844
      %v4461 = vpop.f32.mrb[0].mxu0
      %v4462 = vadd.f32 %v3549, %v4461
      %v4463 = vpop.f32.mrb[0].mxu0
      %4464 = vmatprep.mubr.f32.mxu0 0.0
      %4465 = vmatmul.mubr.f32.gmra.mrb[0].mxu0 %v3846
      %v4466 = vpop.f32.mrb[0].mxu0
      %v4467 = vadd.f32 %v3554, %v4466
      %v4468 = vpop.f32.mrb[0].mxu0
      %4469 = vmatprep.mubr.f32.mxu0 0.0
      %4470 = vmatmul.mubr.f32.gmra.mrb[0].mxu0 %v3848
      %v4471 = vpop.f32.mrb[0].mxu0
      %v4472 = vadd.f32 %v3559, %v4471
      %v4473 = vpop.f32.mrb[0].mxu0
      %4474 = vmatprep.mubr.f32.mxu0 0.0
      %4475 = vmatmul.mubr.f32.gmra.mrb[0].mxu0 %v3850
      %v4476 = vpop.f32.mrb[0].mxu0
      %v4477 = vadd.f32 %v3564, %v4476
      %v4478 = vpop.f32.mrb[0].mxu0
      %4479 = vdwg.mxu0
      %v4481 = vlaneseq
      %v4482 = vshrl.u32 %v4481, 7
      %v4483 = vsub.s32 0, %v4482
      %v4484 = vrot.slane %v596, %v4483
      %v4486 = vadd.f32 %v4012, %v4484
      %v4487 = vadd.f32 %v4017, %v4484
      %v4488 = vadd.f32 %v4022, %v4484
      %v4489 = vadd.f32 %v4027, %v4484
      %v4490 = vadd.f32 %v4032, %v4484
      %v4491 = vadd.f32 %v4037, %v4484
      %v4492 = vadd.f32 %v4042, %v4484
      %v4493 = vadd.f32 %v4047, %v4484
      %v4494 = vadd.f32 %v4052, %v4484
      %v4495 = vadd.f32 %v4057, %v4484
      %v4496 = vadd.f32 %v4062, %v4484
      %v4497 = vadd.f32 %v4067, %v4484
      %v4498 = vadd.f32 %v4072, %v4484
      %v4499 = vadd.f32 %v4077, %v4484
      %v4500 = vadd.f32 %v4082, %v4484
      %v4501 = vadd.f32 %v4087, %v4484
      %v4502 = vadd.f32 %v4092, %v4484
      %v4503 = vadd.f32 %v4097, %v4484
      %v4504 = vadd.f32 %v4102, %v4484
      %v4505 = vadd.f32 %v4107, %v4484
      %v4506 = vadd.f32 %v4112, %v4484
      %v4507 = vadd.f32 %v4117, %v4484
      %v4508 = vadd.f32 %v4122, %v4484
      %v4509 = vadd.f32 %v4127, %v4484
      %v4510 = vadd.f32 %v4132, %v4484
      %v4511 = vadd.f32 %v4137, %v4484
      %v4512 = vadd.f32 %v4142, %v4484
      %v4513 = vadd.f32 %v4147, %v4484
      %v4514 = vadd.f32 %v4152, %v4484
      %v4515 = vadd.f32 %v4157, %v4484
      %v4516 = vadd.f32 %v4162, %v4484
      %v4517 = vadd.f32 %v4167, %v4484
      %v4518 = vadd.f32 %v4172, %v4484
      %v4519 = vadd.f32 %v4177, %v4484
      %v4520 = vadd.f32 %v4182, %v4484
      %v4521 = vadd.f32 %v4187, %v4484
      %v4522 = vadd.f32 %v4192, %v4484
      %v4523 = vadd.f32 %v4197, %v4484
      %v4524 = vadd.f32 %v4202, %v4484
      %v4525 = vadd.f32 %v4207, %v4484
      %v4526 = vadd.f32 %v4212, %v4484
      %v4527 = vadd.f32 %v4217, %v4484
      %v4528 = vadd.f32 %v4222, %v4484
      %v4529 = vadd.f32 %v4227, %v4484
      %v4530 = vadd.f32 %v4232, %v4484
      %v4531 = vadd.f32 %v4237, %v4484
      %v4532 = vadd.f32 %v4242, %v4484
      %v4533 = vadd.f32 %v4247, %v4484
      %v4534 = vadd.f32 %v4252, %v4484
      %v4535 = vadd.f32 %v4257, %v4484
      %v4536 = vadd.f32 %v4262, %v4484
      %v4537 = vadd.f32 %v4267, %v4484
      %v4538 = vadd.f32 %v4272, %v4484
      %v4539 = vadd.f32 %v4277, %v4484
      %v4540 = vadd.f32 %v4282, %v4484
      %v4541 = vadd.f32 %v4287, %v4484
      %v4542 = vadd.f32 %v4292, %v4484
      %v4543 = vadd.f32 %v4297, %v4484
      %v4544 = vadd.f32 %v4302, %v4484
      %v4545 = vadd.f32 %v4307, %v4484
      %v4546 = vadd.f32 %v4312, %v4484
      %v4547 = vadd.f32 %v4317, %v4484
      %v4548 = vadd.f32 %v4322, %v4484
      %v4549 = vadd.f32 %v4327, %v4484
      %v4550 = vadd.f32 %v4332, %v4484
      %v4551 = vadd.f32 %v4337, %v4484
      %v4552 = vadd.f32 %v4342, %v4484
      %v4553 = vadd.f32 %v4347, %v4484
      %v4554 = vadd.f32 %v4352, %v4484
      %v4555 = vadd.f32 %v4357, %v4484
      %v4556 = vadd.f32 %v4362, %v4484
      %v4557 = vadd.f32 %v4367, %v4484
      %v4558 = vadd.f32 %v4372, %v4484
      %v4559 = vadd.f32 %v4377, %v4484
      %v4560 = vadd.f32 %v4382, %v4484
      %v4561 = vadd.f32 %v4387, %v4484
      %v4562 = vadd.f32 %v4392, %v4484
      %v4563 = vadd.f32 %v4397, %v4484
      %v4564 = vadd.f32 %v4402, %v4484
      %v4565 = vadd.f32 %v4407, %v4484
      %v4566 = vadd.f32 %v4412, %v4484
      %v4567 = vadd.f32 %v4417, %v4484
      %v4568 = vadd.f32 %v4422, %v4484
      %v4569 = vadd.f32 %v4427, %v4484
      %v4570 = vadd.f32 %v4432, %v4484
      %v4571 = vadd.f32 %v4437, %v4484
      %v4572 = vadd.f32 %v4442, %v4484
      %v4573 = vadd.f32 %v4447, %v4484
      %v4574 = vadd.f32 %v4452, %v4484
      %v4575 = vadd.f32 %v4457, %v4484
      %v4576 = vadd.f32 %v4462, %v4484
      %v4577 = vadd.f32 %v4467, %v4484
      %v4578 = vadd.f32 %v4472, %v4484
      %v4579 = vadd.f32 %v4477, %v4484
      %v4580 = vmax.f32 %v4486, 0.0
      %v4581 = vmax.f32 %v4487, 0.0
      %v4582 = vmax.f32 %v4488, 0.0
      %v4583 = vmax.f32 %v4489, 0.0
      %v4584 = vmax.f32 %v4490, 0.0
      %v4585 = vmax.f32 %v4491, 0.0
      %v4586 = vmax.f32 %v4492, 0.0
      %v4587 = vmax.f32 %v4493, 0.0
      %v4588 = vmax.f32 %v4494, 0.0
      %v4589 = vmax.f32 %v4495, 0.0
      %v4590 = vmax.f32 %v4496, 0.0
      %v4591 = vmax.f32 %v4497, 0.0
      %v4592 = vmax.f32 %v4498, 0.0
      %v4593 = vmax.f32 %v4499, 0.0
      %v4594 = vmax.f32 %v4500, 0.0
      %v4595 = vmax.f32 %v4501, 0.0
      %v4596 = vmax.f32 %v4502, 0.0
      %v4597 = vmax.f32 %v4503, 0.0
      %v4598 = vmax.f32 %v4504, 0.0
      %v4599 = vmax.f32 %v4505, 0.0
      %v4600 = vmax.f32 %v4506, 0.0
      %v4601 = vmax.f32 %v4507, 0.0
      %v4602 = vmax.f32 %v4508, 0.0
      %v4603 = vmax.f32 %v4509, 0.0
      %v4604 = vmax.f32 %v4510, 0.0
      %v4605 = vmax.f32 %v4511, 0.0
      %v4606 = vmax.f32 %v4512, 0.0
      %v4607 = vmax.f32 %v4513, 0.0
      %v4608 = vmax.f32 %v4514, 0.0
      %v4609 = vmax.f32 %v4515, 0.0
      %v4610 = vmax.f32 %v4516, 0.0
      %v4611 = vmax.f32 %v4517, 0.0
      %v4612 = vmax.f32 %v4518, 0.0
      %v4613 = vmax.f32 %v4519, 0.0
      %v4614 = vmax.f32 %v4520, 0.0
      %v4615 = vmax.f32 %v4521, 0.0
      %v4616 = vmax.f32 %v4522, 0.0
      %v4617 = vmax.f32 %v4523, 0.0
      %v4618 = vmax.f32 %v4524, 0.0
      %v4619 = vmax.f32 %v4525, 0.0
      %v4620 = vmax.f32 %v4526, 0.0
      %v4621 = vmax.f32 %v4527, 0.0
      %v4622 = vmax.f32 %v4528, 0.0
      %v4623 = vmax.f32 %v4529, 0.0
      %v4624 = vmax.f32 %v4530, 0.0
      %v4625 = vmax.f32 %v4531, 0.0
      %v4626 = vmax.f32 %v4532, 0.0
      %v4627 = vmax.f32 %v4533, 0.0
      %v4628 = vmax.f32 %v4534, 0.0
      %v4629 = vmax.f32 %v4535, 0.0
      %v4630 = vmax.f32 %v4536, 0.0
      %v4631 = vmax.f32 %v4537, 0.0
      %v4632 = vmax.f32 %v4538, 0.0
      %v4633 = vmax.f32 %v4539, 0.0
      %v4634 = vmax.f32 %v4540, 0.0
      %v4635 = vmax.f32 %v4541, 0.0
      %v4636 = vmax.f32 %v4542, 0.0
      %v4637 = vmax.f32 %v4543, 0.0
      %v4638 = vmax.f32 %v4544, 0.0
      %v4639 = vmax.f32 %v4545, 0.0
      %v4640 = vmax.f32 %v4546, 0.0
      %v4641 = vmax.f32 %v4547, 0.0
      %v4642 = vmax.f32 %v4548, 0.0
      %v4643 = vmax.f32 %v4549, 0.0
      %v4644 = vmax.f32 %v4550, 0.0
      %v4645 = vmax.f32 %v4551, 0.0
      %v4646 = vmax.f32 %v4552, 0.0
      %v4647 = vmax.f32 %v4553, 0.0
      %v4648 = vmax.f32 %v4554, 0.0
      %v4649 = vmax.f32 %v4555, 0.0
      %v4650 = vmax.f32 %v4556, 0.0
      %v4651 = vmax.f32 %v4557, 0.0
      %v4652 = vmax.f32 %v4558, 0.0
      %v4653 = vmax.f32 %v4559, 0.0
      %v4654 = vmax.f32 %v4560, 0.0
      %v4655 = vmax.f32 %v4561, 0.0
      %v4656 = vmax.f32 %v4562, 0.0
      %v4657 = vmax.f32 %v4563, 0.0
      %v4658 = vmax.f32 %v4564, 0.0
      %v4659 = vmax.f32 %v4565, 0.0
      %v4660 = vmax.f32 %v4566, 0.0
      %v4661 = vmax.f32 %v4567, 0.0
      %v4662 = vmax.f32 %v4568, 0.0
      %v4663 = vmax.f32 %v4569, 0.0
      %v4664 = vmax.f32 %v4570, 0.0
      %v4665 = vmax.f32 %v4571, 0.0
      %v4666 = vmax.f32 %v4572, 0.0
      %v4667 = vmax.f32 %v4573, 0.0
      %v4668 = vmax.f32 %v4574, 0.0
      %v4669 = vmax.f32 %v4575, 0.0
      %v4670 = vmax.f32 %v4576, 0.0
      %v4671 = vmax.f32 %v4577, 0.0
      %v4672 = vmax.f32 %v4578, 0.0
      %v4673 = vmax.f32 %v4579, 0.0
      %v4675 = vlaneseq
      %v4676 = vshrl.u32 %v4675, 7
      %v4677 = vsub.s32 0, %v4676
      %v4678 = vrot.slane %v629, %v4677
      %4680 = vmatprep.subr.mxu0 0.0
      %4681 = vmatpush1.msra.mxu0 %v597
      %4682 = vmatprep.subr.mxu0 0.0
      %4683 = vmatpush1.msra.mxu0 %v598
      %4684 = vmatprep.subr.mxu0 0.0
      %4685 = vmatpush1.msra.mxu0 %v599
      %4686 = vmatprep.subr.mxu0 0.0
      %4687 = vmatpush1.msra.mxu0 %v600
      %4688 = vmatprep.subr.mxu0 0.0
      %4689 = vmatpush1.msra.mxu0 %v601
      %4690 = vmatprep.subr.mxu0 0.0
      %4691 = vmatpush1.msra.mxu0 %v602
      %4692 = vmatprep.subr.mxu0 0.0
      %4693 = vmatpush1.msra.mxu0 %v603
      %4694 = vmatprep.subr.mxu0 0.0
      %4695 = vmatpush1.msra.mxu0 %v604
      %4696 = vmatprep.subr.mxu0 0.0
      %4697 = vmatpush1.msra.mxu0 %v605
      %4698 = vmatprep.subr.mxu0 0.0
      %4699 = vmatpush1.msra.mxu0 %v606
      %4700 = vmatprep.subr.mxu0 0.0
      %4701 = vmatpush1.msra.mxu0 %v607
      %4702 = vmatprep.subr.mxu0 0.0
      %4703 = vmatpush1.msra.mxu0 %v608
      %4704 = vmatprep.subr.mxu0 0.0
      %4705 = vmatpush1.msra.mxu0 %v609
      %4706 = vmatprep.subr.mxu0 0.0
      %4707 = vmatpush1.msra.mxu0 %v610
      %4708 = vmatprep.subr.mxu0 0.0
      %4709 = vmatpush1.msra.mxu0 %v611
      %4710 = vmatprep.subr.mxu0 0.0
      %4711 = vmatpush1.msra.mxu0 %v612
      %4712 = vmatprep.subr.mxu0 0.0
      %4713 = vmatpush1.msra.mxu0 %v613
      %4714 = vmatprep.subr.mxu0 0.0
      %4715 = vmatpush1.msra.mxu0 %v614
      %4716 = vmatprep.subr.mxu0 0.0
      %4717 = vmatpush1.msra.mxu0 %v615
      %4718 = vmatprep.subr.mxu0 0.0
      %4719 = vmatpush1.msra.mxu0 %v616
      %4720 = vmatprep.subr.mxu0 0.0
      %4721 = vmatpush1.msra.mxu0 %v617
      %4722 = vmatprep.subr.mxu0 0.0
      %4723 = vmatpush1.msra.mxu0 %v618
      %4724 = vmatprep.subr.mxu0 0.0
      %4725 = vmatpush1.msra.mxu0 %v619
      %4726 = vmatprep.subr.mxu0 0.0
      %4727 = vmatpush1.msra.mxu0 %v620
      %4728 = vmatprep.subr.mxu0 0.0
      %4729 = vmatpush1.msra.mxu0 %v621
      %4730 = vmatprep.subr.mxu0 0.0
      %4731 = vmatpush1.msra.mxu0 %v622
      %4732 = vmatprep.subr.mxu0 0.0
      %4733 = vmatpush1.msra.mxu0 %v623
      %4734 = vmatprep.subr.mxu0 0.0
      %4735 = vmatpush1.msra.mxu0 %v624
      %4736 = vmatprep.subr.mxu0 0.0
      %4737 = vmatpush1.msra.mxu0 %v625
      %4738 = vmatprep.subr.mxu0 0.0
      %4739 = vmatpush1.msra.mxu0 %v626
      %4740 = vmatprep.subr.mxu0 0.0
      %4741 = vmatpush1.msra.mxu0 %v627
      %4742 = vmatprep.subr.mxu0 0.0
      %4743 = vmatpush1.msra.mxu0 %v628
      %4744 = vmatprep.mubr.f32.mxu0 %v633
      %4745 = vmatmul.mubr.f32.gmra.mrb[0].mxu0 %v632
      %v4746 = vpop.f32.mrb[0].mxu0
      %v4747 = vadd.f32 %v4678, %v4746
      %v4748 = vpop.f32.mrb[0].mxu0
      %4749 = vmatprep.mubr.f32.mxu0 %v635
      %4750 = vmatmul.mubr.f32.gmra.mrb[0].mxu0 %v634
      %v4751 = vpop.f32.mrb[0].mxu0
      %v4752 = vadd.f32 %v4678, %v4751
      %v4753 = vpop.f32.mrb[0].mxu0
      %4754 = vmatprep.mubr.f32.mxu0 %v637
      %4755 = vmatmul.mubr.f32.gmra.mrb[0].mxu0 %v636
      %v4756 = vpop.f32.mrb[0].mxu0
      %v4757 = vadd.f32 %v4678, %v4756
      %v4758 = vpop.f32.mrb[0].mxu0
      %4759 = vmatprep.mubr.f32.mxu0 %v639
      %4760 = vmatmul.mubr.f32.gmra.mrb[0].mxu0 %v638
      %v4761 = vpop.f32.mrb[0].mxu0
      %v4762 = vadd.f32 %v4678, %v4761
      %v4763 = vpop.f32.mrb[0].mxu0
      %4764 = vmatprep.mubr.f32.mxu0 %v641
      %4765 = vmatmul.mubr.f32.gmra.mrb[0].mxu0 %v640
      %v4766 = vpop.f32.mrb[0].mxu0
      %v4767 = vadd.f32 %v4678, %v4766
      %v4768 = vpop.f32.mrb[0].mxu0
      %4769 = vmatprep.mubr.f32.mxu0 %v643
      %4770 = vmatmul.mubr.f32.gmra.mrb[0].mxu0 %v642
      %v4771 = vpop.f32.mrb[0].mxu0
      %v4772 = vadd.f32 %v4678, %v4771
      %v4773 = vpop.f32.mrb[0].mxu0
      %4774 = vmatprep.mubr.f32.mxu0 %v645
      %4775 = vmatmul.mubr.f32.gmra.mrb[0].mxu0 %v644
      %v4776 = vpop.f32.mrb[0].mxu0
      %v4777 = vadd.f32 %v4678, %v4776
      %v4778 = vpop.f32.mrb[0].mxu0
      %4779 = vmatprep.mubr.f32.mxu0 %v647
      %4780 = vmatmul.mubr.f32.gmra.mrb[0].mxu0 %v646
      %v4781 = vpop.f32.mrb[0].mxu0
      %v4782 = vadd.f32 %v4678, %v4781
      %v4783 = vpop.f32.mrb[0].mxu0
      %4784 = vmatprep.mubr.f32.mxu0 %v649
      %4785 = vmatmul.mubr.f32.gmra.mrb[0].mxu0 %v648
      %v4786 = vpop.f32.mrb[0].mxu0
      %v4787 = vadd.f32 %v4678, %v4786
      %v4788 = vpop.f32.mrb[0].mxu0
      %4789 = vmatprep.mubr.f32.mxu0 %v651
      %4790 = vmatmul.mubr.f32.gmra.mrb[0].mxu0 %v650
      %v4791 = vpop.f32.mrb[0].mxu0
      %v4792 = vadd.f32 %v4678, %v4791
      %v4793 = vpop.f32.mrb[0].mxu0
      %4794 = vmatprep.mubr.f32.mxu0 %v653
      %4795 = vmatmul.mubr.f32.gmra.mrb[0].mxu0 %v652
      %v4796 = vpop.f32.mrb[0].mxu0
      %v4797 = vadd.f32 %v4678, %v4796
      %v4798 = vpop.f32.mrb[0].mxu0
      %4799 = vmatprep.mubr.f32.mxu0 %v655
      %4800 = vmatmul.mubr.f32.gmra.mrb[0].mxu0 %v654
      %v4801 = vpop.f32.mrb[0].mxu0
      %v4802 = vadd.f32 %v4678, %v4801
      %v4803 = vpop.f32.mrb[0].mxu0
      %4804 = vmatprep.mubr.f32.mxu0 %v657
      %4805 = vmatmul.mubr.f32.gmra.mrb[0].mxu0 %v656
      %v4806 = vpop.f32.mrb[0].mxu0
      %v4807 = vadd.f32 %v4678, %v4806
      %v4808 = vpop.f32.mrb[0].mxu0
      %4809 = vmatprep.mubr.f32.mxu0 %v659
      %4810 = vmatmul.mubr.f32.gmra.mrb[0].mxu0 %v658
      %v4811 = vpop.f32.mrb[0].mxu0
      %v4812 = vadd.f32 %v4678, %v4811
      %v4813 = vpop.f32.mrb[0].mxu0
      %4814 = vmatprep.mubr.f32.mxu0 %v661
      %4815 = vmatmul.mubr.f32.gmra.mrb[0].mxu0 %v660
      %v4816 = vpop.f32.mrb[0].mxu0
      %v4817 = vadd.f32 %v4678, %v4816
      %v4818 = vpop.f32.mrb[0].mxu0
      %4819 = vmatprep.mubr.f32.mxu0 %v663
      %4820 = vmatmul.mubr.f32.gmra.mrb[0].mxu0 %v662
      %v4821 = vpop.f32.mrb[0].mxu0
      %v4822 = vadd.f32 %v4678, %v4821
      %v4823 = vpop.f32.mrb[0].mxu0
      %4824 = vmatprep.mubr.f32.mxu0 %v665
      %4825 = vmatmul.mubr.f32.gmra.mrb[0].mxu0 %v664
      %v4826 = vpop.f32.mrb[0].mxu0
      %v4827 = vadd.f32 %v4678, %v4826
      %v4828 = vpop.f32.mrb[0].mxu0
      %4829 = vmatprep.mubr.f32.mxu0 %v667
      %4830 = vmatmul.mubr.f32.gmra.mrb[0].mxu0 %v666
      %v4831 = vpop.f32.mrb[0].mxu0
      %v4832 = vadd.f32 %v4678, %v4831
      %v4833 = vpop.f32.mrb[0].mxu0
      %4834 = vmatprep.mubr.f32.mxu0 %v669
      %4835 = vmatmul.mubr.f32.gmra.mrb[0].mxu0 %v668
      %v4836 = vpop.f32.mrb[0].mxu0
      %v4837 = vadd.f32 %v4678, %v4836
      %v4838 = vpop.f32.mrb[0].mxu0
      %4839 = vmatprep.mubr.f32.mxu0 %v671
      %4840 = vmatmul.mubr.f32.gmra.mrb[0].mxu0 %v670
      %v4841 = vpop.f32.mrb[0].mxu0
      %v4842 = vadd.f32 %v4678, %v4841
      %v4843 = vpop.f32.mrb[0].mxu0
      %4844 = vmatprep.mubr.f32.mxu0 %v673
      %4845 = vmatmul.mubr.f32.gmra.mrb[0].mxu0 %v672
      %v4846 = vpop.f32.mrb[0].mxu0
      %v4847 = vadd.f32 %v4678, %v4846
      %v4848 = vpop.f32.mrb[0].mxu0
      %4849 = vmatprep.mubr.f32.mxu0 %v675
      %4850 = vmatmul.mubr.f32.gmra.mrb[0].mxu0 %v674
      %v4851 = vpop.f32.mrb[0].mxu0
      %v4852 = vadd.f32 %v4678, %v4851
      %v4853 = vpop.f32.mrb[0].mxu0
      %4854 = vmatprep.mubr.f32.mxu0 %v677
      %4855 = vmatmul.mubr.f32.gmra.mrb[0].mxu0 %v676
      %v4856 = vpop.f32.mrb[0].mxu0
      %v4857 = vadd.f32 %v4678, %v4856
      %v4858 = vpop.f32.mrb[0].mxu0
      %4859 = vmatprep.mubr.f32.mxu0 %v679
      %4860 = vmatmul.mubr.f32.gmra.mrb[0].mxu0 %v678
      %v4861 = vpop.f32.mrb[0].mxu0
      %v4862 = vadd.f32 %v4678, %v4861
      %v4863 = vpop.f32.mrb[0].mxu0
      %4864 = vmatprep.mubr.f32.mxu0 %v681
      %4865 = vmatmul.mubr.f32.gmra.mrb[0].mxu0 %v680
      %v4866 = vpop.f32.mrb[0].mxu0
      %v4867 = vadd.f32 %v4678, %v4866
      %v4868 = vpop.f32.mrb[0].mxu0
      %4869 = vmatprep.mubr.f32.mxu0 %v683
      %4870 = vmatmul.mubr.f32.gmra.mrb[0].mxu0 %v682
      %v4871 = vpop.f32.mrb[0].mxu0
      %v4872 = vadd.f32 %v4678, %v4871
      %v4873 = vpop.f32.mrb[0].mxu0
      %4874 = vmatprep.mubr.f32.mxu0 %v685
      %4875 = vmatmul.mubr.f32.gmra.mrb[0].mxu0 %v684
      %v4876 = vpop.f32.mrb[0].mxu0
      %v4877 = vadd.f32 %v4678, %v4876
      %v4878 = vpop.f32.mrb[0].mxu0
      %4879 = vmatprep.mubr.f32.mxu0 %v687
      %4880 = vmatmul.mubr.f32.gmra.mrb[0].mxu0 %v686
      %v4881 = vpop.f32.mrb[0].mxu0
      %v4882 = vadd.f32 %v4678, %v4881
      %v4883 = vpop.f32.mrb[0].mxu0
      %4884 = vmatprep.mubr.f32.mxu0 %v689
      %4885 = vmatmul.mubr.f32.gmra.mrb[0].mxu0 %v688
      %v4886 = vpop.f32.mrb[0].mxu0
      %v4887 = vadd.f32 %v4678, %v4886
      %v4888 = vpop.f32.mrb[0].mxu0
      %4889 = vmatprep.mubr.f32.mxu0 %v691
      %4890 = vmatmul.mubr.f32.gmra.mrb[0].mxu0 %v690
      %v4891 = vpop.f32.mrb[0].mxu0
      %v4892 = vadd.f32 %v4678, %v4891
      %v4893 = vpop.f32.mrb[0].mxu0
      %4894 = vmatprep.mubr.f32.mxu0 %v693
      %4895 = vmatmul.mubr.f32.gmra.mrb[0].mxu0 %v692
      %v4896 = vpop.f32.mrb[0].mxu0
      %v4897 = vadd.f32 %v4678, %v4896
      %v4898 = vpop.f32.mrb[0].mxu0
      %4899 = vmatprep.mubr.f32.mxu0 %v695
      %4900 = vmatmul.mubr.f32.gmra.mrb[0].mxu0 %v694
      %v4901 = vpop.f32.mrb[0].mxu0
      %v4902 = vadd.f32 %v4678, %v4901
      %v4903 = vpop.f32.mrb[0].mxu0
      %4904 = vmatprep.mubr.f32.mxu0 %v697
      %4905 = vmatmul.mubr.f32.gmra.mrb[0].mxu0 %v696
      %v4906 = vpop.f32.mrb[0].mxu0
      %v4907 = vadd.f32 %v4678, %v4906
      %v4908 = vpop.f32.mrb[0].mxu0
      %4909 = vmatprep.mubr.f32.mxu0 %v699
      %4910 = vmatmul.mubr.f32.gmra.mrb[0].mxu0 %v698
      %v4911 = vpop.f32.mrb[0].mxu0
      %v4912 = vadd.f32 %v4678, %v4911
      %v4913 = vpop.f32.mrb[0].mxu0
      %4914 = vmatprep.mubr.f32.mxu0 %v701
      %4915 = vmatmul.mubr.f32.gmra.mrb[0].mxu0 %v700
      %v4916 = vpop.f32.mrb[0].mxu0
      %v4917 = vadd.f32 %v4678, %v4916
      %v4918 = vpop.f32.mrb[0].mxu0
      %4919 = vmatprep.mubr.f32.mxu0 %v703
      %4920 = vmatmul.mubr.f32.gmra.mrb[0].mxu0 %v702
      %v4921 = vpop.f32.mrb[0].mxu0
      %v4922 = vadd.f32 %v4678, %v4921
      %v4923 = vpop.f32.mrb[0].mxu0
      %4924 = vmatprep.mubr.f32.mxu0 %v705
      %4925 = vmatmul.mubr.f32.gmra.mrb[0].mxu0 %v704
      %v4926 = vpop.f32.mrb[0].mxu0
      %v4927 = vadd.f32 %v4678, %v4926
      %v4928 = vpop.f32.mrb[0].mxu0
      %4929 = vmatprep.mubr.f32.mxu0 %v707
      %4930 = vmatmul.mubr.f32.gmra.mrb[0].mxu0 %v706
      %v4931 = vpop.f32.mrb[0].mxu0
      %v4932 = vadd.f32 %v4678, %v4931
      %v4933 = vpop.f32.mrb[0].mxu0
      %4934 = vmatprep.mubr.f32.mxu0 %v709
      %4935 = vmatmul.mubr.f32.gmra.mrb[0].mxu0 %v708
      %v4936 = vpop.f32.mrb[0].mxu0
      %v4937 = vadd.f32 %v4678, %v4936
      %v4938 = vpop.f32.mrb[0].mxu0
      %4939 = vmatprep.mubr.f32.mxu0 %v711
      %4940 = vmatmul.mubr.f32.gmra.mrb[0].mxu0 %v710
      %v4941 = vpop.f32.mrb[0].mxu0
      %v4942 = vadd.f32 %v4678, %v4941
      %v4943 = vpop.f32.mrb[0].mxu0
      %4944 = vmatprep.mubr.f32.mxu0 %v713
      %4945 = vmatmul.mubr.f32.gmra.mrb[0].mxu0 %v712
      %v4946 = vpop.f32.mrb[0].mxu0
      %v4947 = vadd.f32 %v4678, %v4946
      %v4948 = vpop.f32.mrb[0].mxu0
      %4949 = vmatprep.mubr.f32.mxu0 %v715
      %4950 = vmatmul.mubr.f32.gmra.mrb[0].mxu0 %v714
      %v4951 = vpop.f32.mrb[0].mxu0
      %v4952 = vadd.f32 %v4678, %v4951
      %v4953 = vpop.f32.mrb[0].mxu0
      %4954 = vmatprep.mubr.f32.mxu0 %v717
      %4955 = vmatmul.mubr.f32.gmra.mrb[0].mxu0 %v716
      %v4956 = vpop.f32.mrb[0].mxu0
      %v4957 = vadd.f32 %v4678, %v4956
      %v4958 = vpop.f32.mrb[0].mxu0
      %4959 = vmatprep.mubr.f32.mxu0 %v719
      %4960 = vmatmul.mubr.f32.gmra.mrb[0].mxu0 %v718
      %v4961 = vpop.f32.mrb[0].mxu0
      %v4962 = vadd.f32 %v4678, %v4961
      %v4963 = vpop.f32.mrb[0].mxu0
      %4964 = vmatprep.mubr.f32.mxu0 %v721
      %4965 = vmatmul.mubr.f32.gmra.mrb[0].mxu0 %v720
      %v4966 = vpop.f32.mrb[0].mxu0
      %v4967 = vadd.f32 %v4678, %v4966
      %v4968 = vpop.f32.mrb[0].mxu0
      %4969 = vmatprep.mubr.f32.mxu0 %v723
      %4970 = vmatmul.mubr.f32.gmra.mrb[0].mxu0 %v722
      %v4971 = vpop.f32.mrb[0].mxu0
      %v4972 = vadd.f32 %v4678, %v4971
      %v4973 = vpop.f32.mrb[0].mxu0
      %4974 = vmatprep.mubr.f32.mxu0 %v725
      %4975 = vmatmul.mubr.f32.gmra.mrb[0].mxu0 %v724
      %v4976 = vpop.f32.mrb[0].mxu0
      %v4977 = vadd.f32 %v4678, %v4976
      %v4978 = vpop.f32.mrb[0].mxu0
      %4979 = vmatprep.mubr.f32.mxu0 %v727
      %4980 = vmatmul.mubr.f32.gmra.mrb[0].mxu0 %v726
      %v4981 = vpop.f32.mrb[0].mxu0
      %v4982 = vadd.f32 %v4678, %v4981
      %v4983 = vpop.f32.mrb[0].mxu0
      %4984 = vmatprep.mubr.f32.mxu0 %v729
      %4985 = vmatmul.mubr.f32.gmra.mrb[0].mxu0 %v728
      %v4986 = vpop.f32.mrb[0].mxu0
      %v4987 = vadd.f32 %v4678, %v4986
      %v4988 = vpop.f32.mrb[0].mxu0
      %4989 = vmatprep.mubr.f32.mxu0 %v731
      %4990 = vmatmul.mubr.f32.gmra.mrb[0].mxu0 %v730
      %v4991 = vpop.f32.mrb[0].mxu0
      %v4992 = vadd.f32 %v4678, %v4991
      %v4993 = vpop.f32.mrb[0].mxu0
      %4994 = vmatprep.mubr.f32.mxu0 %v733
      %4995 = vmatmul.mubr.f32.gmra.mrb[0].mxu0 %v732
      %v4996 = vpop.f32.mrb[0].mxu0
      %v4997 = vadd.f32 %v4678, %v4996
      %v4998 = vpop.f32.mrb[0].mxu0
      %4999 = vmatprep.mubr.f32.mxu0 %v735
      %5000 = vmatmul.mubr.f32.gmra.mrb[0].mxu0 %v734
      %v5001 = vpop.f32.mrb[0].mxu0
      %v5002 = vadd.f32 %v4678, %v5001
      %v5003 = vpop.f32.mrb[0].mxu0
      %5004 = vmatprep.mubr.f32.mxu0 %v737
      %5005 = vmatmul.mubr.f32.gmra.mrb[0].mxu0 %v736
      %v5006 = vpop.f32.mrb[0].mxu0
      %v5007 = vadd.f32 %v4678, %v5006
      %v5008 = vpop.f32.mrb[0].mxu0
      %5009 = vmatprep.mubr.f32.mxu0 %v739
      %5010 = vmatmul.mubr.f32.gmra.mrb[0].mxu0 %v738
      %v5011 = vpop.f32.mrb[0].mxu0
      %v5012 = vadd.f32 %v4678, %v5011
      %v5013 = vpop.f32.mrb[0].mxu0
      %5014 = vmatprep.mubr.f32.mxu0 %v741
      %5015 = vmatmul.mubr.f32.gmra.mrb[0].mxu0 %v740
      %v5016 = vpop.f32.mrb[0].mxu0
      %v5017 = vadd.f32 %v4678, %v5016
      %v5018 = vpop.f32.mrb[0].mxu0
      %5019 = vmatprep.mubr.f32.mxu0 %v743
      %5020 = vmatmul.mubr.f32.gmra.mrb[0].mxu0 %v742
      %v5021 = vpop.f32.mrb[0].mxu0
      %v5022 = vadd.f32 %v4678, %v5021
      %v5023 = vpop.f32.mrb[0].mxu0
      %5024 = vmatprep.mubr.f32.mxu0 %v745
      %5025 = vmatmul.mubr.f32.gmra.mrb[0].mxu0 %v744
      %v5026 = vpop.f32.mrb[0].mxu0
      %v5027 = vadd.f32 %v4678, %v5026
      %v5028 = vpop.f32.mrb[0].mxu0
      %5029 = vmatprep.mubr.f32.mxu0 %v747
      %5030 = vmatmul.mubr.f32.gmra.mrb[0].mxu0 %v746
      %v5031 = vpop.f32.mrb[0].mxu0
      %v5032 = vadd.f32 %v4678, %v5031
      %v5033 = vpop.f32.mrb[0].mxu0
      %5034 = vmatprep.mubr.f32.mxu0 %v749
      %5035 = vmatmul.mubr.f32.gmra.mrb[0].mxu0 %v748
      %v5036 = vpop.f32.mrb[0].mxu0
      %v5037 = vadd.f32 %v4678, %v5036
      %v5038 = vpop.f32.mrb[0].mxu0
      %5039 = vmatprep.mubr.f32.mxu0 %v751
      %5040 = vmatmul.mubr.f32.gmra.mrb[0].mxu0 %v750
      %v5041 = vpop.f32.mrb[0].mxu0
      %v5042 = vadd.f32 %v4678, %v5041
      %v5043 = vpop.f32.mrb[0].mxu0
      %5044 = vmatprep.mubr.f32.mxu0 %v753
      %5045 = vmatmul.mubr.f32.gmra.mrb[0].mxu0 %v752
      %v5046 = vpop.f32.mrb[0].mxu0
      %v5047 = vadd.f32 %v4678, %v5046
      %v5048 = vpop.f32.mrb[0].mxu0
      %5049 = vmatprep.mubr.f32.mxu0 %v755
      %5050 = vmatmul.mubr.f32.gmra.mrb[0].mxu0 %v754
      %v5051 = vpop.f32.mrb[0].mxu0
      %v5052 = vadd.f32 %v4678, %v5051
      %v5053 = vpop.f32.mrb[0].mxu0
      %5054 = vmatprep.mubr.f32.mxu0 %v757
      %5055 = vmatmul.mubr.f32.gmra.mrb[0].mxu0 %v756
      %v5056 = vpop.f32.mrb[0].mxu0
      %v5057 = vadd.f32 %v4678, %v5056
      %v5058 = vpop.f32.mrb[0].mxu0
      %5059 = vmatprep.mubr.f32.mxu0 %v759
      %5060 = vmatmul.mubr.f32.gmra.mrb[0].mxu0 %v758
      %v5061 = vpop.f32.mrb[0].mxu0
      %v5062 = vadd.f32 %v4678, %v5061
      %v5063 = vpop.f32.mrb[0].mxu0
      %5064 = vmatprep.mubr.f32.mxu0 %v761
      %5065 = vmatmul.mubr.f32.gmra.mrb[0].mxu0 %v760
      %v5066 = vpop.f32.mrb[0].mxu0
      %v5067 = vadd.f32 %v4678, %v5066
      %v5068 = vpop.f32.mrb[0].mxu0
      %5069 = vmatprep.mubr.f32.mxu0 %v763
      %5070 = vmatmul.mubr.f32.gmra.mrb[0].mxu0 %v762
      %v5071 = vpop.f32.mrb[0].mxu0
      %v5072 = vadd.f32 %v4678, %v5071
      %v5073 = vpop.f32.mrb[0].mxu0
      %5074 = vmatprep.mubr.f32.mxu0 %v765
      %5075 = vmatmul.mubr.f32.gmra.mrb[0].mxu0 %v764
      %v5076 = vpop.f32.mrb[0].mxu0
      %v5077 = vadd.f32 %v4678, %v5076
      %v5078 = vpop.f32.mrb[0].mxu0
      %5079 = vmatprep.mubr.f32.mxu0 %v767
      %5080 = vmatmul.mubr.f32.gmra.mrb[0].mxu0 %v766
      %v5081 = vpop.f32.mrb[0].mxu0
      %v5082 = vadd.f32 %v4678, %v5081
      %v5083 = vpop.f32.mrb[0].mxu0
      %5084 = vmatprep.mubr.f32.mxu0 %v769
      %5085 = vmatmul.mubr.f32.gmra.mrb[0].mxu0 %v768
      %v5086 = vpop.f32.mrb[0].mxu0
      %v5087 = vadd.f32 %v4678, %v5086
      %v5088 = vpop.f32.mrb[0].mxu0
      %5089 = vmatprep.mubr.f32.mxu0 %v771
      %5090 = vmatmul.mubr.f32.gmra.mrb[0].mxu0 %v770
      %v5091 = vpop.f32.mrb[0].mxu0
      %v5092 = vadd.f32 %v4678, %v5091
      %v5093 = vpop.f32.mrb[0].mxu0
      %5094 = vmatprep.mubr.f32.mxu0 %v773
      %5095 = vmatmul.mubr.f32.gmra.mrb[0].mxu0 %v772
      %v5096 = vpop.f32.mrb[0].mxu0
      %v5097 = vadd.f32 %v4678, %v5096
      %v5098 = vpop.f32.mrb[0].mxu0
      %5099 = vmatprep.mubr.f32.mxu0 %v775
      %5100 = vmatmul.mubr.f32.gmra.mrb[0].mxu0 %v774
      %v5101 = vpop.f32.mrb[0].mxu0
      %v5102 = vadd.f32 %v4678, %v5101
      %v5103 = vpop.f32.mrb[0].mxu0
      %5104 = vmatprep.mubr.f32.mxu0 %v777
      %5105 = vmatmul.mubr.f32.gmra.mrb[0].mxu0 %v776
      %v5106 = vpop.f32.mrb[0].mxu0
      %v5107 = vadd.f32 %v4678, %v5106
      %v5108 = vpop.f32.mrb[0].mxu0
      %5109 = vmatprep.mubr.f32.mxu0 %v779
      %5110 = vmatmul.mubr.f32.gmra.mrb[0].mxu0 %v778
      %v5111 = vpop.f32.mrb[0].mxu0
      %v5112 = vadd.f32 %v4678, %v5111
      %v5113 = vpop.f32.mrb[0].mxu0
      %5114 = vmatprep.mubr.f32.mxu0 %v781
      %5115 = vmatmul.mubr.f32.gmra.mrb[0].mxu0 %v780
      %v5116 = vpop.f32.mrb[0].mxu0
      %v5117 = vadd.f32 %v4678, %v5116
      %v5118 = vpop.f32.mrb[0].mxu0
      %5119 = vmatprep.mubr.f32.mxu0 %v783
      %5120 = vmatmul.mubr.f32.gmra.mrb[0].mxu0 %v782
      %v5121 = vpop.f32.mrb[0].mxu0
      %v5122 = vadd.f32 %v4678, %v5121
      %v5123 = vpop.f32.mrb[0].mxu0
      %5124 = vmatprep.mubr.f32.mxu0 %v785
      %5125 = vmatmul.mubr.f32.gmra.mrb[0].mxu0 %v784
      %v5126 = vpop.f32.mrb[0].mxu0
      %v5127 = vadd.f32 %v4678, %v5126
      %v5128 = vpop.f32.mrb[0].mxu0
      %5129 = vmatprep.mubr.f32.mxu0 %v787
      %5130 = vmatmul.mubr.f32.gmra.mrb[0].mxu0 %v786
      %v5131 = vpop.f32.mrb[0].mxu0
      %v5132 = vadd.f32 %v4678, %v5131
      %v5133 = vpop.f32.mrb[0].mxu0
      %5134 = vmatprep.mubr.f32.mxu0 %v789
      %5135 = vmatmul.mubr.f32.gmra.mrb[0].mxu0 %v788
      %v5136 = vpop.f32.mrb[0].mxu0
      %v5137 = vadd.f32 %v4678, %v5136
      %v5138 = vpop.f32.mrb[0].mxu0
      %5139 = vmatprep.mubr.f32.mxu0 %v791
      %5140 = vmatmul.mubr.f32.gmra.mrb[0].mxu0 %v790
      %v5141 = vpop.f32.mrb[0].mxu0
      %v5142 = vadd.f32 %v4678, %v5141
      %v5143 = vpop.f32.mrb[0].mxu0
      %5144 = vmatprep.mubr.f32.mxu0 %v793
      %5145 = vmatmul.mubr.f32.gmra.mrb[0].mxu0 %v792
      %v5146 = vpop.f32.mrb[0].mxu0
      %v5147 = vadd.f32 %v4678, %v5146
      %v5148 = vpop.f32.mrb[0].mxu0
      %5149 = vmatprep.mubr.f32.mxu0 %v795
      %5150 = vmatmul.mubr.f32.gmra.mrb[0].mxu0 %v794
      %v5151 = vpop.f32.mrb[0].mxu0
      %v5152 = vadd.f32 %v4678, %v5151
      %v5153 = vpop.f32.mrb[0].mxu0
      %5154 = vmatprep.mubr.f32.mxu0 %v797
      %5155 = vmatmul.mubr.f32.gmra.mrb[0].mxu0 %v796
      %v5156 = vpop.f32.mrb[0].mxu0
      %v5157 = vadd.f32 %v4678, %v5156
      %v5158 = vpop.f32.mrb[0].mxu0
      %5159 = vmatprep.mubr.f32.mxu0 %v799
      %5160 = vmatmul.mubr.f32.gmra.mrb[0].mxu0 %v798
      %v5161 = vpop.f32.mrb[0].mxu0
      %v5162 = vadd.f32 %v4678, %v5161
      %v5163 = vpop.f32.mrb[0].mxu0
      %5164 = vmatprep.mubr.f32.mxu0 %v801
      %5165 = vmatmul.mubr.f32.gmra.mrb[0].mxu0 %v800
      %v5166 = vpop.f32.mrb[0].mxu0
      %v5167 = vadd.f32 %v4678, %v5166
      %v5168 = vpop.f32.mrb[0].mxu0
      %5169 = vmatprep.mubr.f32.mxu0 %v803
      %5170 = vmatmul.mubr.f32.gmra.mrb[0].mxu0 %v802
      %v5171 = vpop.f32.mrb[0].mxu0
      %v5172 = vadd.f32 %v4678, %v5171
      %v5173 = vpop.f32.mrb[0].mxu0
      %5174 = vmatprep.mubr.f32.mxu0 %v805
      %5175 = vmatmul.mubr.f32.gmra.mrb[0].mxu0 %v804
      %v5176 = vpop.f32.mrb[0].mxu0
      %v5177 = vadd.f32 %v4678, %v5176
      %v5178 = vpop.f32.mrb[0].mxu0
      %5179 = vmatprep.mubr.f32.mxu0 %v807
      %5180 = vmatmul.mubr.f32.gmra.mrb[0].mxu0 %v806
      %v5181 = vpop.f32.mrb[0].mxu0
      %v5182 = vadd.f32 %v4678, %v5181
      %v5183 = vpop.f32.mrb[0].mxu0
      %5184 = vmatprep.mubr.f32.mxu0 %v809
      %5185 = vmatmul.mubr.f32.gmra.mrb[0].mxu0 %v808
      %v5186 = vpop.f32.mrb[0].mxu0
      %v5187 = vadd.f32 %v4678, %v5186
      %v5188 = vpop.f32.mrb[0].mxu0
      %5189 = vmatprep.mubr.f32.mxu0 %v811
      %5190 = vmatmul.mubr.f32.gmra.mrb[0].mxu0 %v810
      %v5191 = vpop.f32.mrb[0].mxu0
      %v5192 = vadd.f32 %v4678, %v5191
      %v5193 = vpop.f32.mrb[0].mxu0
      %5194 = vmatprep.mubr.f32.mxu0 %v813
      %5195 = vmatmul.mubr.f32.gmra.mrb[0].mxu0 %v812
      %v5196 = vpop.f32.mrb[0].mxu0
      %v5197 = vadd.f32 %v4678, %v5196
      %v5198 = vpop.f32.mrb[0].mxu0
      %5199 = vmatprep.mubr.f32.mxu0 %v815
      %5200 = vmatmul.mubr.f32.gmra.mrb[0].mxu0 %v814
      %v5201 = vpop.f32.mrb[0].mxu0
      %v5202 = vadd.f32 %v4678, %v5201
      %v5203 = vpop.f32.mrb[0].mxu0
      %5204 = vmatprep.mubr.f32.mxu0 %v817
      %5205 = vmatmul.mubr.f32.gmra.mrb[0].mxu0 %v816
      %v5206 = vpop.f32.mrb[0].mxu0
      %v5207 = vadd.f32 %v4678, %v5206
      %v5208 = vpop.f32.mrb[0].mxu0
      %5209 = vmatprep.mubr.f32.mxu0 %v821
      %5210 = vmatmul.mubr.f32.gmra.mrb[0].mxu0 %v820
      %v5211 = vpop.f32.mrb[0].mxu0
      %v5212 = vadd.f32 %v4678, %v5211
      %v5213 = vpop.f32.mrb[0].mxu0
      %5214 = vdwg.mxu0
      %v5215 = vadd.f32 %v4580, %v4747
      %v5216 = vadd.f32 %v4581, %v4752
      %v5217 = vadd.f32 %v4582, %v4757
      %v5218 = vadd.f32 %v4583, %v4762
      %v5219 = vadd.f32 %v4584, %v4767
      %v5220 = vadd.f32 %v4585, %v4772
      %v5221 = vadd.f32 %v4586, %v4777
      %v5222 = vadd.f32 %v4587, %v4782
      %v5223 = vadd.f32 %v4588, %v4787
      %v5224 = vadd.f32 %v4589, %v4792
      %v5225 = vadd.f32 %v4590, %v4797
      %v5226 = vadd.f32 %v4591, %v4802
      %v5227 = vadd.f32 %v4592, %v4807
      %v5228 = vadd.f32 %v4593, %v4812
      %v5229 = vadd.f32 %v4594, %v4817
      %v5230 = vadd.f32 %v4595, %v4822
      %v5231 = vadd.f32 %v4596, %v4827
      %v5232 = vadd.f32 %v4597, %v4832
      %v5233 = vadd.f32 %v4598, %v4837
      %v5234 = vadd.f32 %v4599, %v4842
      %v5235 = vadd.f32 %v4600, %v4847
      %v5236 = vadd.f32 %v4601, %v4852
      %v5237 = vadd.f32 %v4602, %v4857
      %v5238 = vadd.f32 %v4603, %v4862
      %v5239 = vadd.f32 %v4604, %v4867
      %v5240 = vadd.f32 %v4605, %v4872
      %v5241 = vadd.f32 %v4606, %v4877
      %v5242 = vadd.f32 %v4607, %v4882
      %v5243 = vadd.f32 %v4608, %v4887
      %v5244 = vadd.f32 %v4609, %v4892
      %v5245 = vadd.f32 %v4610, %v4897
      %v5246 = vadd.f32 %v4611, %v4902
      %v5247 = vadd.f32 %v4612, %v4907
      %v5248 = vadd.f32 %v4613, %v4912
      %v5249 = vadd.f32 %v4614, %v4917
      %v5250 = vadd.f32 %v4615, %v4922
      %v5251 = vadd.f32 %v4616, %v4927
      %v5252 = vadd.f32 %v4617, %v4932
      %v5253 = vadd.f32 %v4618, %v4937
      %v5254 = vadd.f32 %v4619, %v4942
      %v5255 = vadd.f32 %v4620, %v4947
      %v5256 = vadd.f32 %v4621, %v4952
      %v5257 = vadd.f32 %v4622, %v4957
      %v5258 = vadd.f32 %v4623, %v4962
      %v5259 = vadd.f32 %v4624, %v4967
      %v5260 = vadd.f32 %v4625, %v4972
      %v5261 = vadd.f32 %v4626, %v4977
      %v5262 = vadd.f32 %v4627, %v4982
      %v5263 = vadd.f32 %v4628, %v4987
      %v5264 = vadd.f32 %v4629, %v4992
      %v5265 = vadd.f32 %v4630, %v4997
      %v5266 = vadd.f32 %v4631, %v5002
      %v5267 = vadd.f32 %v4632, %v5007
      %v5268 = vadd.f32 %v4633, %v5012
      %v5269 = vadd.f32 %v4634, %v5017
      %v5270 = vadd.f32 %v4635, %v5022
      %v5271 = vadd.f32 %v4636, %v5027
      %v5272 = vadd.f32 %v4637, %v5032
      %v5273 = vadd.f32 %v4638, %v5037
      %v5274 = vadd.f32 %v4639, %v5042
      %v5275 = vadd.f32 %v4640, %v5047
      %v5276 = vadd.f32 %v4641, %v5052
      %v5277 = vadd.f32 %v4642, %v5057
      %v5278 = vadd.f32 %v4643, %v5062
      %v5279 = vadd.f32 %v4644, %v5067
      %v5280 = vadd.f32 %v4645, %v5072
      %v5281 = vadd.f32 %v4646, %v5077
      %v5282 = vadd.f32 %v4647, %v5082
      %v5283 = vadd.f32 %v4648, %v5087
      %v5284 = vadd.f32 %v4649, %v5092
      %v5285 = vadd.f32 %v4650, %v5097
      %v5286 = vadd.f32 %v4651, %v5102
      %v5287 = vadd.f32 %v4652, %v5107
      %v5288 = vadd.f32 %v4653, %v5112
      %v5289 = vadd.f32 %v4654, %v5117
      %v5290 = vadd.f32 %v4655, %v5122
      %v5291 = vadd.f32 %v4656, %v5127
      %v5292 = vadd.f32 %v4657, %v5132
      %v5293 = vadd.f32 %v4658, %v5137
      %v5294 = vadd.f32 %v4659, %v5142
      %v5295 = vadd.f32 %v4660, %v5147
      %v5296 = vadd.f32 %v4661, %v5152
      %v5297 = vadd.f32 %v4662, %v5157
      %v5298 = vadd.f32 %v4663, %v5162
      %v5299 = vadd.f32 %v4664, %v5167
      %v5300 = vadd.f32 %v4665, %v5172
      %v5301 = vadd.f32 %v4666, %v5177
      %v5302 = vadd.f32 %v4667, %v5182
      %v5303 = vadd.f32 %v4668, %v5187
      %v5304 = vadd.f32 %v4669, %v5192
      %v5305 = vadd.f32 %v4670, %v5197
      %v5306 = vadd.f32 %v4671, %v5202
      %v5307 = vadd.f32 %v4672, %v5207
      %v5308 = vadd.f32 %v4673, %v5212
      %v5309 = vmax.f32 %v5215, 0.0
      %v5310 = vmax.f32 %v5216, 0.0
      %v5311 = vmax.f32 %v5217, 0.0
      %v5312 = vmax.f32 %v5218, 0.0
      %v5313 = vmax.f32 %v5219, 0.0
      %v5314 = vmax.f32 %v5220, 0.0
      %v5315 = vmax.f32 %v5221, 0.0
      %v5316 = vmax.f32 %v5222, 0.0
      %v5317 = vmax.f32 %v5223, 0.0
      %v5318 = vmax.f32 %v5224, 0.0
      %v5319 = vmax.f32 %v5225, 0.0
      %v5320 = vmax.f32 %v5226, 0.0
      %v5321 = vmax.f32 %v5227, 0.0
      %v5322 = vmax.f32 %v5228, 0.0
      %v5323 = vmax.f32 %v5229, 0.0
      %v5324 = vmax.f32 %v5230, 0.0
      %v5325 = vmax.f32 %v5231, 0.0
      %v5326 = vmax.f32 %v5232, 0.0
      %v5327 = vmax.f32 %v5233, 0.0
      %v5328 = vmax.f32 %v5234, 0.0
      %v5329 = vmax.f32 %v5235, 0.0
      %v5330 = vmax.f32 %v5236, 0.0
      %v5331 = vmax.f32 %v5237, 0.0
      %v5332 = vmax.f32 %v5238, 0.0
      %v5333 = vmax.f32 %v5239, 0.0
      %v5334 = vmax.f32 %v5240, 0.0
      %v5335 = vmax.f32 %v5241, 0.0
      %v5336 = vmax.f32 %v5242, 0.0
      %v5337 = vmax.f32 %v5243, 0.0
      %v5338 = vmax.f32 %v5244, 0.0
      %v5339 = vmax.f32 %v5245, 0.0
      %v5340 = vmax.f32 %v5246, 0.0
      %v5341 = vmax.f32 %v5247, 0.0
      %v5342 = vmax.f32 %v5248, 0.0
      %v5343 = vmax.f32 %v5249, 0.0
      %v5344 = vmax.f32 %v5250, 0.0
      %v5345 = vmax.f32 %v5251, 0.0
      %v5346 = vmax.f32 %v5252, 0.0
      %v5347 = vmax.f32 %v5253, 0.0
      %v5348 = vmax.f32 %v5254, 0.0
      %v5349 = vmax.f32 %v5255, 0.0
      %v5350 = vmax.f32 %v5256, 0.0
      %v5351 = vmax.f32 %v5257, 0.0
      %v5352 = vmax.f32 %v5258, 0.0
      %v5353 = vmax.f32 %v5259, 0.0
      %v5354 = vmax.f32 %v5260, 0.0
      %v5355 = vmax.f32 %v5261, 0.0
      %v5356 = vmax.f32 %v5262, 0.0
      %v5357 = vmax.f32 %v5263, 0.0
      %v5358 = vmax.f32 %v5264, 0.0
      %v5359 = vmax.f32 %v5265, 0.0
      %v5360 = vmax.f32 %v5266, 0.0
      %v5361 = vmax.f32 %v5267, 0.0
      %v5362 = vmax.f32 %v5268, 0.0
      %v5363 = vmax.f32 %v5269, 0.0
      %v5364 = vmax.f32 %v5270, 0.0
      %v5365 = vmax.f32 %v5271, 0.0
      %v5366 = vmax.f32 %v5272, 0.0
      %v5367 = vmax.f32 %v5273, 0.0
      %v5368 = vmax.f32 %v5274, 0.0
      %v5369 = vmax.f32 %v5275, 0.0
      %v5370 = vmax.f32 %v5276, 0.0
      %v5371 = vmax.f32 %v5277, 0.0
      %v5372 = vmax.f32 %v5278, 0.0
      %v5373 = vmax.f32 %v5279, 0.0
      %v5374 = vmax.f32 %v5280, 0.0
      %v5375 = vmax.f32 %v5281, 0.0
      %v5376 = vmax.f32 %v5282, 0.0
      %v5377 = vmax.f32 %v5283, 0.0
      %v5378 = vmax.f32 %v5284, 0.0
      %v5379 = vmax.f32 %v5285, 0.0
      %v5380 = vmax.f32 %v5286, 0.0
      %v5381 = vmax.f32 %v5287, 0.0
      %v5382 = vmax.f32 %v5288, 0.0
      %v5383 = vmax.f32 %v5289, 0.0
      %v5384 = vmax.f32 %v5290, 0.0
      %v5385 = vmax.f32 %v5291, 0.0
      %v5386 = vmax.f32 %v5292, 0.0
      %v5387 = vmax.f32 %v5293, 0.0
      %v5388 = vmax.f32 %v5294, 0.0
      %v5389 = vmax.f32 %v5295, 0.0
      %v5390 = vmax.f32 %v5296, 0.0
      %v5391 = vmax.f32 %v5297, 0.0
      %v5392 = vmax.f32 %v5298, 0.0
      %v5393 = vmax.f32 %v5299, 0.0
      %v5394 = vmax.f32 %v5300, 0.0
      %v5395 = vmax.f32 %v5301, 0.0
      %v5396 = vmax.f32 %v5302, 0.0
      %v5397 = vmax.f32 %v5303, 0.0
      %v5398 = vmax.f32 %v5304, 0.0
      %v5399 = vmax.f32 %v5305, 0.0
      %v5400 = vmax.f32 %v5306, 0.0
      %v5401 = vmax.f32 %v5307, 0.0
      %v5402 = vmax.f32 %v5308, 0.0
      %5403 = vst [vmem:[#allocation2 + $0x10] sm:$0xff] %v5309
      %5404 = vst [vmem:[#allocation2 + $0x20] sm:$0xff] %v5310
      %5405 = vst [vmem:[#allocation2 + $0x30] sm:$0xff] %v5311
      %5406 = vst [vmem:[#allocation2 + $0x40] sm:$0xff] %v5312
      %5407 = vst [vmem:[#allocation2 + $0x50] sm:$0xff] %v5313
      %5408 = vst [vmem:[#allocation2 + $0x60] sm:$0xff] %v5314
      %5409 = vst [vmem:[#allocation2 + $0x70] sm:$0xff] %v5315
      %5410 = vst [vmem:[#allocation2 + $0x80] sm:$0xff] %v5316
      %5411 = vst [vmem:[#allocation2 + $0x90] sm:$0xff] %v5317
      %5412 = vst [vmem:[#allocation2 + $0xa0] sm:$0xff] %v5318
      %5413 = vst [vmem:[#allocation2 + $0xb0] sm:$0xff] %v5319
      %5414 = vst [vmem:[#allocation2 + $0xc0] sm:$0xff] %v5320
      %5415 = vst [vmem:[#allocation2 + $0xd0] sm:$0xff] %v5321
      %5416 = vst [vmem:[#allocation2 + $0xe0] sm:$0xff] %v5322
      %5417 = vst [vmem:[#allocation2 + $0xf0] sm:$0xff] %v5323
      %5418 = vst [vmem:[#allocation2 + $0x100] sm:$0xff] %v5324
      %5419 = vst [vmem:[#allocation2 + $0x110] sm:$0xff] %v5325
      %5420 = vst [vmem:[#allocation2 + $0x120] sm:$0xff] %v5326
      %5421 = vst [vmem:[#allocation2 + $0x130] sm:$0xff] %v5327
      %5422 = vst [vmem:[#allocation2 + $0x140] sm:$0xff] %v5328
      %5423 = vst [vmem:[#allocation2 + $0x150] sm:$0xff] %v5329
      %5424 = vst [vmem:[#allocation2 + $0x160] sm:$0xff] %v5330
      %5425 = vst [vmem:[#allocation2 + $0x170] sm:$0xff] %v5331
      %5426 = vst [vmem:[#allocation2 + $0x180] sm:$0xff] %v5332
      %5427 = vst [vmem:[#allocation2 + $0x190] sm:$0xff] %v5333
      %5428 = vst [vmem:[#allocation2 + $0x1a0] sm:$0xff] %v5334
      %5429 = vst [vmem:[#allocation2 + $0x1b0] sm:$0xff] %v5335
      %5430 = vst [vmem:[#allocation2 + $0x1c0] sm:$0xff] %v5336
      %5431 = vst [vmem:[#allocation2 + $0x1d0] sm:$0xff] %v5337
      %5432 = vst [vmem:[#allocation2 + $0x1e0] sm:$0xff] %v5338
      %5433 = vst [vmem:[#allocation2 + $0x1f0] sm:$0xff] %v5339
      %5434 = vst [vmem:[#allocation2 + $0x200] sm:$0xff] %v5340
      %5435 = vst [vmem:[#allocation2 + $0x210] sm:$0xff] %v5341
      %5436 = vst [vmem:[#allocation2 + $0x220] sm:$0xff] %v5342
      %5437 = vst [vmem:[#allocation2 + $0x230] sm:$0xff] %v5343
      %5438 = vst [vmem:[#allocation2 + $0x240] sm:$0xff] %v5344
      %5439 = vst [vmem:[#allocation2 + $0x250] sm:$0xff] %v5345
      %5440 = vst [vmem:[#allocation2 + $0x260] sm:$0xff] %v5346
      %5441 = vst [vmem:[#allocation2 + $0x270] sm:$0xff] %v5347
      %5442 = vst [vmem:[#allocation2 + $0x280] sm:$0xff] %v5348
      %5443 = vst [vmem:[#allocation2 + $0x290] sm:$0xff] %v5349
      %5444 = vst [vmem:[#allocation2 + $0x2a0] sm:$0xff] %v5350
      %5445 = vst [vmem:[#allocation2 + $0x2b0] sm:$0xff] %v5351
      %5446 = vst [vmem:[#allocation2 + $0x2c0] sm:$0xff] %v5352
      %5447 = vst [vmem:[#allocation2 + $0x2d0] sm:$0xff] %v5353
      %5448 = vst [vmem:[#allocation2 + $0x2e0] sm:$0xff] %v5354
      %5449 = vst [vmem:[#allocation2 + $0x2f0] sm:$0xff] %v5355
      %5450 = vst [vmem:[#allocation2 + $0x300] sm:$0xff] %v5356
      %5451 = vst [vmem:[#allocation2 + $0x310] sm:$0xff] %v5357
      %5452 = vst [vmem:[#allocation2 + $0x320] sm:$0xff] %v5358
      %5453 = vst [vmem:[#allocation2 + $0x330] sm:$0xff] %v5359
      %5454 = vst [vmem:[#allocation2 + $0x340] sm:$0xff] %v5360
      %5455 = vst [vmem:[#allocation2 + $0x350] sm:$0xff] %v5361
      %5456 = vst [vmem:[#allocation2 + $0x360] sm:$0xff] %v5362
      %5457 = vst [vmem:[#allocation2 + $0x370] sm:$0xff] %v5363
      %5458 = vst [vmem:[#allocation2 + $0x380] sm:$0xff] %v5364
      %5459 = vst [vmem:[#allocation2 + $0x390] sm:$0xff] %v5365
      %5460 = vst [vmem:[#allocation2 + $0x3a0] sm:$0xff] %v5366
      %5461 = vst [vmem:[#allocation2 + $0x3b0] sm:$0xff] %v5367
      %5462 = vst [vmem:[#allocation2 + $0x3c0] sm:$0xff] %v5368
      %5463 = vst [vmem:[#allocation2 + $0x3d0] sm:$0xff] %v5369
      %5464 = vst [vmem:[#allocation2 + $0x3e0] sm:$0xff] %v5370
      %5465 = vst [vmem:[#allocation2 + $0x3f0] sm:$0xff] %v5371
      %5466 = vst [vmem:[#allocation2 + $0x400] sm:$0xff] %v5372
      %5467 = vst [vmem:[#allocation2 + $0x410] sm:$0xff] %v5373
      %5468 = vst [vmem:[#allocation2 + $0x420] sm:$0xff] %v5374
      %5469 = vst [vmem:[#allocation2 + $0x430] sm:$0xff] %v5375
      %5470 = vst [vmem:[#allocation2 + $0x440] sm:$0xff] %v5376
      %5471 = vst [vmem:[#allocation2 + $0x450] sm:$0xff] %v5377
      %5472 = vst [vmem:[#allocation2 + $0x460] sm:$0xff] %v5378
      %5473 = vst [vmem:[#allocation2 + $0x470] sm:$0xff] %v5379
      %5474 = vst [vmem:[#allocation2 + $0x480] sm:$0xff] %v5380
      %5475 = vst [vmem:[#allocation2 + $0x490] sm:$0xff] %v5381
      %5476 = vst [vmem:[#allocation2 + $0x4a0] sm:$0xff] %v5382
      %5477 = vst [vmem:[#allocation2 + $0x4b0] sm:$0xff] %v5383
      %5478 = vst [vmem:[#allocation2 + $0x4c0] sm:$0xff] %v5384
      %5479 = vst [vmem:[#allocation2 + $0x4d0] sm:$0xff] %v5385
      %5480 = vst [vmem:[#allocation2 + $0x4e0] sm:$0xff] %v5386
      %5481 = vst [vmem:[#allocation2 + $0x4f0] sm:$0xff] %v5387
      %5482 = vst [vmem:[#allocation2 + $0x500] sm:$0xff] %v5388
      %5483 = vst [vmem:[#allocation2 + $0x510] sm:$0xff] %v5389
      %5484 = vst [vmem:[#allocation2 + $0x520] sm:$0xff] %v5390
      %5485 = vst [vmem:[#allocation2 + $0x530] sm:$0xff] %v5391
      %5486 = vst [vmem:[#allocation2 + $0x540] sm:$0xff] %v5392
      %5487 = vst [vmem:[#allocation2 + $0x550] sm:$0xff] %v5393
      %5488 = vst [vmem:[#allocation2 + $0x560] sm:$0xff] %v5394
      %5489 = vst [vmem:[#allocation2 + $0x570] sm:$0xff] %v5395
      %5490 = vst [vmem:[#allocation2 + $0x580] sm:$0xff] %v5396
      %5491 = vst [vmem:[#allocation2 + $0x590] sm:$0xff] %v5397
      %5492 = vst [vmem:[#allocation2 + $0x5a0] sm:$0xff] %v5398
      %5493 = vst [vmem:[#allocation2 + $0x5b0] sm:$0xff] %v5399
      %5494 = vst [vmem:[#allocation2 + $0x5c0] sm:$0xff] %v5400
      %5495 = vst [vmem:[#allocation2 + $0x5d0] sm:$0xff] %v5401
      %5496 = vst [vmem:[#allocation2 + $0x5e0] sm:$0xff] %v5402
      %v5497 = vld [vmem:[%s9] sm:$0xff]
      %v5498 = vld [vmem:[%s9 + $0x8] sm:$0xff]
      %v5499 = vld [vmem:[%s9 + $0x10] sm:$0xff]
      %v5500 = vld [vmem:[%s9 + $0x18] sm:$0xff]
      %v5501 = vld [vmem:[%s9 + $0x20] sm:$0xff]
      %v5502 = vld [vmem:[%s9 + $0x28] sm:$0xff]
      %v5503 = vld [vmem:[%s9 + $0x30] sm:$0xff]
      %v5504 = vld [vmem:[%s9 + $0x38] sm:$0xff]
      %v5505 = vld [vmem:[%s9 + $0x40] sm:$0xff]
      %v5506 = vld [vmem:[%s9 + $0x48] sm:$0xff]
      %v5507 = vld [vmem:[%s9 + $0x50] sm:$0xff]
      %v5508 = vld [vmem:[%s9 + $0x58] sm:$0xff]
      %v5509 = vld [vmem:[%s9 + $0x60] sm:$0xff]
      %v5510 = vld [vmem:[%s9 + $0x68] sm:$0xff]
      %v5511 = vld [vmem:[%s9 + $0x70] sm:$0xff]
      %v5512 = vld [vmem:[%s9 + $0x78] sm:$0xff]
      %v5513 = vld [vmem:[%s10] sm:$0xff]
      %v5514 = vld [vmem:[%s10 + $0x8] sm:$0xff]
      %v5515 = vld [vmem:[%s10 + $0x10] sm:$0xff]
      %v5516 = vld [vmem:[%s10 + $0x18] sm:$0xff]
      %v5517 = vld [vmem:[%s10 + $0x20] sm:$0xff]
      %v5518 = vld [vmem:[%s10 + $0x28] sm:$0xff]
      %v5519 = vld [vmem:[%s10 + $0x30] sm:$0xff]
      %v5520 = vld [vmem:[%s10 + $0x38] sm:$0xff]
      %v5521 = vld [vmem:[%s10 + $0x40] sm:$0xff]
      %v5522 = vld [vmem:[%s10 + $0x48] sm:$0xff]
      %v5523 = vld [vmem:[%s10 + $0x50] sm:$0xff]
      %v5524 = vld [vmem:[%s10 + $0x58] sm:$0xff]
      %v5525 = vld [vmem:[%s10 + $0x60] sm:$0xff]
      %v5526 = vld [vmem:[%s10 + $0x68] sm:$0xff]
      %v5527 = vld [vmem:[%s10 + $0x70] sm:$0xff]
      %v5528 = vld [vmem:[%s10 + $0x78] sm:$0xff]
      %v5529 = vld [vmem:[%s11] sm:$0x1]
      %v5530 = vld [vmem:[%s12] sm:$0xff]
      %v5531 = vld [vmem:[%s12 + $0x8] sm:$0xff]
      %v5532 = vld [vmem:[%s12 + $0x10] sm:$0xff]
      %v5533 = vld [vmem:[%s12 + $0x18] sm:$0xff]
      %v5534 = vld [vmem:[%s12 + $0x20] sm:$0xff]
      %v5535 = vld [vmem:[%s12 + $0x28] sm:$0xff]
      %v5536 = vld [vmem:[%s12 + $0x30] sm:$0xff]
      %v5537 = vld [vmem:[%s12 + $0x38] sm:$0xff]
      %v5538 = vld [vmem:[%s12 + $0x40] sm:$0xff]
      %v5539 = vld [vmem:[%s12 + $0x48] sm:$0xff]
      %v5540 = vld [vmem:[%s12 + $0x50] sm:$0xff]
      %v5541 = vld [vmem:[%s12 + $0x58] sm:$0xff]
      %v5542 = vld [vmem:[%s12 + $0x60] sm:$0xff]
      %v5543 = vld [vmem:[%s12 + $0x68] sm:$0xff]
      %v5544 = vld [vmem:[%s12 + $0x70] sm:$0xff]
      %v5545 = vld [vmem:[%s12 + $0x78] sm:$0xff]
      %v5546 = vld [vmem:[%s13] sm:$0xff]
      %v5547 = vld [vmem:[%s13 + $0x8] sm:$0xff]
      %v5548 = vld [vmem:[%s13 + $0x10] sm:$0xff]
      %v5549 = vld [vmem:[%s13 + $0x18] sm:$0xff]
      %v5550 = vld [vmem:[%s13 + $0x20] sm:$0xff]
      %v5551 = vld [vmem:[%s13 + $0x28] sm:$0xff]
      %v5552 = vld [vmem:[%s13 + $0x30] sm:$0xff]
      %v5553 = vld [vmem:[%s13 + $0x38] sm:$0xff]
      %v5554 = vld [vmem:[%s13 + $0x40] sm:$0xff]
      %v5555 = vld [vmem:[%s13 + $0x48] sm:$0xff]
      %v5556 = vld [vmem:[%s13 + $0x50] sm:$0xff]
      %v5557 = vld [vmem:[%s13 + $0x58] sm:$0xff]
      %v5558 = vld [vmem:[%s13 + $0x60] sm:$0xff]
      %v5559 = vld [vmem:[%s13 + $0x68] sm:$0xff]
      %v5560 = vld [vmem:[%s13 + $0x70] sm:$0xff]
      %v5561 = vld [vmem:[%s13 + $0x78] sm:$0xff]
      %v5562 = vld [vmem:[%s14] sm:$0x1]
      %v5563 = vld [vmem:[#allocation2] sm:$0xc0]
      %v5564 = vld [vmem:[#allocation2 + $0x10] sm:$0xff]
      %v5565 = vld [vmem:[#allocation2 + $0x20] sm:$0xff]
      %v5566 = vld [vmem:[#allocation2 + $0x30] sm:$0xff]
      %v5567 = vld [vmem:[#allocation2 + $0x40] sm:$0xff]
      %v5568 = vld [vmem:[#allocation2 + $0x50] sm:$0xff]
      %v5569 = vld [vmem:[#allocation2 + $0x60] sm:$0xff]
      %v5570 = vld [vmem:[#allocation2 + $0x70] sm:$0xff]
      %v5571 = vld [vmem:[#allocation2 + $0x80] sm:$0xff]
      %v5572 = vld [vmem:[#allocation2 + $0x90] sm:$0xff]
      %v5573 = vld [vmem:[#allocation2 + $0xa0] sm:$0xff]
      %v5574 = vld [vmem:[#allocation2 + $0xb0] sm:$0xff]
      %v5575 = vld [vmem:[#allocation2 + $0xc0] sm:$0xff]
      %v5576 = vld [vmem:[#allocation2 + $0xd0] sm:$0xff]
      %v5577 = vld [vmem:[#allocation2 + $0xe0] sm:$0xff]
      %v5578 = vld [vmem:[#allocation2 + $0xf0] sm:$0xff]
      %v5579 = vld [vmem:[#allocation2 + $0x100] sm:$0xff]
      %v5580 = vld [vmem:[#allocation2 + $0x110] sm:$0xff]
      %v5581 = vld [vmem:[#allocation2 + $0x120] sm:$0xff]
      %v5582 = vld [vmem:[#allocation2 + $0x130] sm:$0xff]
      %v5583 = vld [vmem:[#allocation2 + $0x140] sm:$0xff]
      %v5584 = vld [vmem:[#allocation2 + $0x150] sm:$0xff]
      %v5585 = vld [vmem:[#allocation2 + $0x160] sm:$0xff]
      %v5586 = vld [vmem:[#allocation2 + $0x170] sm:$0xff]
      %v5587 = vld [vmem:[#allocation2 + $0x180] sm:$0xff]
      %v5588 = vld [vmem:[#allocation2 + $0x190] sm:$0xff]
      %v5589 = vld [vmem:[#allocation2 + $0x1a0] sm:$0xff]
      %v5590 = vld [vmem:[#allocation2 + $0x1b0] sm:$0xff]
      %v5591 = vld [vmem:[#allocation2 + $0x1c0] sm:$0xff]
      %v5592 = vld [vmem:[#allocation2 + $0x1d0] sm:$0xff]
      %v5593 = vld [vmem:[#allocation2 + $0x1e0] sm:$0xff]
      %v5594 = vld [vmem:[#allocation2 + $0x1f0] sm:$0xff]
      %v5595 = vld [vmem:[#allocation2 + $0x200] sm:$0xff]
      %v5596 = vld [vmem:[#allocation2 + $0x210] sm:$0xff]
      %v5597 = vld [vmem:[#allocation2 + $0x220] sm:$0xff]
      %v5598 = vld [vmem:[#allocation2 + $0x230] sm:$0xff]
      %v5599 = vld [vmem:[#allocation2 + $0x240] sm:$0xff]
      %v5600 = vld [vmem:[#allocation2 + $0x250] sm:$0xff]
      %v5601 = vld [vmem:[#allocation2 + $0x260] sm:$0xff]
      %v5602 = vld [vmem:[#allocation2 + $0x270] sm:$0xff]
      %v5603 = vld [vmem:[#allocation2 + $0x280] sm:$0xff]
      %v5604 = vld [vmem:[#allocation2 + $0x290] sm:$0xff]
      %v5605 = vld [vmem:[#allocation2 + $0x2a0] sm:$0xff]
      %v5606 = vld [vmem:[#allocation2 + $0x2b0] sm:$0xff]
      %v5607 = vld [vmem:[#allocation2 + $0x2c0] sm:$0xff]
      %v5608 = vld [vmem:[#allocation2 + $0x2d0] sm:$0xff]
      %v5609 = vld [vmem:[#allocation2 + $0x2e0] sm:$0xff]
      %v5610 = vld [vmem:[#allocation2 + $0x2f0] sm:$0xff]
      %v5611 = vld [vmem:[#allocation2 + $0x300] sm:$0xff]
      %v5612 = vld [vmem:[#allocation2 + $0x310] sm:$0xff]
      %v5613 = vld [vmem:[#allocation2 + $0x320] sm:$0xff]
      %v5614 = vld [vmem:[#allocation2 + $0x330] sm:$0xff]
      %v5615 = vld [vmem:[#allocation2 + $0x340] sm:$0xff]
      %v5616 = vld [vmem:[#allocation2 + $0x350] sm:$0xff]
      %v5617 = vld [vmem:[#allocation2 + $0x360] sm:$0xff]
      %v5618 = vld [vmem:[#allocation2 + $0x370] sm:$0xff]
      %v5619 = vld [vmem:[#allocation2 + $0x380] sm:$0xff]
      %v5620 = vld [vmem:[#allocation2 + $0x390] sm:$0xff]
      %v5621 = vld [vmem:[#allocation2 + $0x3a0] sm:$0xff]
      %v5622 = vld [vmem:[#allocation2 + $0x3b0] sm:$0xff]
      %v5623 = vld [vmem:[#allocation2 + $0x3c0] sm:$0xff]
      %v5624 = vld [vmem:[#allocation2 + $0x3d0] sm:$0xff]
      %v5625 = vld [vmem:[#allocation2 + $0x3e0] sm:$0xff]
      %v5626 = vld [vmem:[#allocation2 + $0x3f0] sm:$0xff]
      %v5627 = vld [vmem:[#allocation2 + $0x400] sm:$0xff]
      %v5628 = vld [vmem:[#allocation2 + $0x410] sm:$0xff]
      %v5629 = vld [vmem:[#allocation2 + $0x420] sm:$0xff]
      %v5630 = vld [vmem:[#allocation2 + $0x430] sm:$0xff]
      %v5631 = vld [vmem:[#allocation2 + $0x440] sm:$0xff]
      %v5632 = vld [vmem:[#allocation2 + $0x450] sm:$0xff]
      %v5633 = vld [vmem:[#allocation2 + $0x460] sm:$0xff]
      %v5634 = vld [vmem:[#allocation2 + $0x470] sm:$0xff]
      %v5635 = vld [vmem:[#allocation2 + $0x480] sm:$0xff]
      %v5636 = vld [vmem:[#allocation2 + $0x490] sm:$0xff]
      %v5637 = vld [vmem:[#allocation2 + $0x4a0] sm:$0xff]
      %v5638 = vld [vmem:[#allocation2 + $0x4b0] sm:$0xff]
      %v5639 = vld [vmem:[#allocation2 + $0x4c0] sm:$0xff]
      %v5640 = vld [vmem:[#allocation2 + $0x4d0] sm:$0xff]
      %v5641 = vld [vmem:[#allocation2 + $0x4e0] sm:$0xff]
      %v5642 = vld [vmem:[#allocation2 + $0x4f0] sm:$0xff]
      %v5643 = vld [vmem:[#allocation2 + $0x500] sm:$0xff]
      %v5644 = vld [vmem:[#allocation2 + $0x510] sm:$0xff]
      %v5645 = vld [vmem:[#allocation2 + $0x520] sm:$0xff]
      %v5646 = vld [vmem:[#allocation2 + $0x530] sm:$0xff]
      %v5647 = vld [vmem:[#allocation2 + $0x540] sm:$0xff]
      %v5648 = vld [vmem:[#allocation2 + $0x550] sm:$0xff]
      %v5649 = vld [vmem:[#allocation2 + $0x560] sm:$0xff]
      %v5650 = vld [vmem:[#allocation2 + $0x570] sm:$0xff]
      %v5651 = vld [vmem:[#allocation2 + $0x580] sm:$0xff]
      %v5652 = vld [vmem:[#allocation2 + $0x590] sm:$0xff]
      %v5653 = vld [vmem:[#allocation2 + $0x5a0] sm:$0xff]
      %v5654 = vld [vmem:[#allocation2 + $0x5b0] sm:$0xff]
      %v5655 = vld [vmem:[#allocation2 + $0x5c0] sm:$0xff]
      %v5656 = vld [vmem:[#allocation2 + $0x5d0] sm:$0xff]
      %v5657 = vld [vmem:[#allocation2 + $0x5e0] sm:$0x3f]
      %v5658 = vld [vmem:[#allocation2 + $0x5e0] sm:$0xff]
      %5659 = vmatprep.subr.mxu0 0.0
      %5660 = vmatpush1.msra.mxu0 %v5513
      %5661 = vmatprep.subr.mxu0 0.0
      %5662 = vmatpush1.msra.mxu0 %v5514
      %5663 = vmatprep.subr.mxu0 0.0
      %5664 = vmatpush1.msra.mxu0 %v5515
      %5665 = vmatprep.subr.mxu0 0.0
      %5666 = vmatpush1.msra.mxu0 %v5516
      %5667 = vmatprep.subr.mxu0 0.0
      %5668 = vmatpush1.msra.mxu0 %v5517
      %5669 = vmatprep.subr.mxu0 0.0
      %5670 = vmatpush1.msra.mxu0 %v5518
      %5671 = vmatprep.subr.mxu0 0.0
      %5672 = vmatpush1.msra.mxu0 %v5519
      %5673 = vmatprep.subr.mxu0 0.0
      %5674 = vmatpush1.msra.mxu0 %v5520
      %5675 = vmatprep.subr.mxu0 0.0
      %5676 = vmatpush1.msra.mxu0 %v5521
      %5677 = vmatprep.subr.mxu0 0.0
      %5678 = vmatpush1.msra.mxu0 %v5522
      %5679 = vmatprep.subr.mxu0 0.0
      %5680 = vmatpush1.msra.mxu0 %v5523
      %5681 = vmatprep.subr.mxu0 0.0
      %5682 = vmatpush1.msra.mxu0 %v5524
      %5683 = vmatprep.subr.mxu0 0.0
      %5684 = vmatpush1.msra.mxu0 %v5525
      %5685 = vmatprep.subr.mxu0 0.0
      %5686 = vmatpush1.msra.mxu0 %v5526
      %5687 = vmatprep.subr.mxu0 0.0
      %5688 = vmatpush1.msra.mxu0 %v5527
      %5689 = vmatprep.subr.mxu0 0.0
      %5690 = vmatpush1.msra.mxu0 %v5528
      %5691 = vmatprep.subr.mxu0 0.0
      %5692 = vmatpush1.msra.mxu0 0.0
      %5693 = vmatprep.subr.mxu0 0.0
      %5694 = vmatpush1.msra.mxu0 0.0
      %5695 = vmatprep.subr.mxu0 0.0
      %5696 = vmatpush1.msra.mxu0 0.0
      %5697 = vmatprep.subr.mxu0 0.0
      %5698 = vmatpush1.msra.mxu0 0.0
      %5699 = vmatprep.subr.mxu0 0.0
      %5700 = vmatpush1.msra.mxu0 0.0
      %5701 = vmatprep.subr.mxu0 0.0
      %5702 = vmatpush1.msra.mxu0 0.0
      %5703 = vmatprep.subr.mxu0 0.0
      %5704 = vmatpush1.msra.mxu0 0.0
      %5705 = vmatprep.subr.mxu0 0.0
      %5706 = vmatpush1.msra.mxu0 0.0
      %5707 = vmatprep.subr.mxu0 0.0
      %5708 = vmatpush1.msra.mxu0 0.0
      %5709 = vmatprep.subr.mxu0 0.0
      %5710 = vmatpush1.msra.mxu0 0.0
      %5711 = vmatprep.subr.mxu0 0.0
      %5712 = vmatpush1.msra.mxu0 0.0
      %5713 = vmatprep.subr.mxu0 0.0
      %5714 = vmatpush1.msra.mxu0 0.0
      %5715 = vmatprep.subr.mxu0 0.0
      %5716 = vmatpush1.msra.mxu0 0.0
      %5717 = vmatprep.subr.mxu0 0.0
      %5718 = vmatpush1.msra.mxu0 0.0
      %5719 = vmatprep.subr.mxu0 0.0
      %5720 = vmatpush1.msra.mxu0 0.0
      %5721 = vmatprep.subr.mxu0 0.0
      %5722 = vmatpush1.msra.mxu0 0.0
      %5723 = vmatprep.mubr.f32.mxu0 0.0
      %5724 = vmatmul.mubr.f32.gmra.mrb[0].mxu0 %v5564
      %v5725 = vpop.f32.mrb[0].mxu0
      %v5726 = vadd.f32 0.0, %v5725
      %v5727 = vpop.f32.mrb[0].mxu0
      %5728 = vmatprep.mubr.f32.mxu0 0.0
      %5729 = vmatmul.mubr.f32.gmra.mrb[0].mxu0 %v5565
      %v5730 = vpop.f32.mrb[0].mxu0
      %v5731 = vadd.f32 0.0, %v5730
      %v5732 = vpop.f32.mrb[0].mxu0
      %5733 = vmatprep.mubr.f32.mxu0 0.0
      %5734 = vmatmul.mubr.f32.gmra.mrb[0].mxu0 %v5566
      %v5735 = vpop.f32.mrb[0].mxu0
      %v5736 = vadd.f32 0.0, %v5735
      %v5737 = vpop.f32.mrb[0].mxu0
      %5738 = vmatprep.mubr.f32.mxu0 0.0
      %5739 = vmatmul.mubr.f32.gmra.mrb[0].mxu0 %v5567
      %v5740 = vpop.f32.mrb[0].mxu0
      %v5741 = vadd.f32 0.0, %v5740
      %v5742 = vpop.f32.mrb[0].mxu0
      %5743 = vmatprep.mubr.f32.mxu0 0.0
      %5744 = vmatmul.mubr.f32.gmra.mrb[0].mxu0 %v5568
      %v5745 = vpop.f32.mrb[0].mxu0
      %v5746 = vadd.f32 0.0, %v5745
      %v5747 = vpop.f32.mrb[0].mxu0
      %5748 = vmatprep.mubr.f32.mxu0 0.0
      %5749 = vmatmul.mubr.f32.gmra.mrb[0].mxu0 %v5569
      %v5750 = vpop.f32.mrb[0].mxu0
      %v5751 = vadd.f32 0.0, %v5750
      %v5752 = vpop.f32.mrb[0].mxu0
      %5753 = vmatprep.mubr.f32.mxu0 0.0
      %5754 = vmatmul.mubr.f32.gmra.mrb[0].mxu0 %v5570
      %v5755 = vpop.f32.mrb[0].mxu0
      %v5756 = vadd.f32 0.0, %v5755
      %v5757 = vpop.f32.mrb[0].mxu0
      %5758 = vmatprep.mubr.f32.mxu0 0.0
      %5759 = vmatmul.mubr.f32.gmra.mrb[0].mxu0 %v5571
      %v5760 = vpop.f32.mrb[0].mxu0
      %v5761 = vadd.f32 0.0, %v5760
      %v5762 = vpop.f32.mrb[0].mxu0
      %5763 = vmatprep.mubr.f32.mxu0 0.0
      %5764 = vmatmul.mubr.f32.gmra.mrb[0].mxu0 %v5572
      %v5765 = vpop.f32.mrb[0].mxu0
      %v5766 = vadd.f32 0.0, %v5765
      %v5767 = vpop.f32.mrb[0].mxu0
      %5768 = vmatprep.mubr.f32.mxu0 0.0
      %5769 = vmatmul.mubr.f32.gmra.mrb[0].mxu0 %v5573
      %v5770 = vpop.f32.mrb[0].mxu0
      %v5771 = vadd.f32 0.0, %v5770
      %v5772 = vpop.f32.mrb[0].mxu0
      %5773 = vmatprep.mubr.f32.mxu0 0.0
      %5774 = vmatmul.mubr.f32.gmra.mrb[0].mxu0 %v5574
      %v5775 = vpop.f32.mrb[0].mxu0
      %v5776 = vadd.f32 0.0, %v5775
      %v5777 = vpop.f32.mrb[0].mxu0
      %5778 = vmatprep.mubr.f32.mxu0 0.0
      %5779 = vmatmul.mubr.f32.gmra.mrb[0].mxu0 %v5575
      %v5780 = vpop.f32.mrb[0].mxu0
      %v5781 = vadd.f32 0.0, %v5780
      %v5782 = vpop.f32.mrb[0].mxu0
      %5783 = vmatprep.mubr.f32.mxu0 0.0
      %5784 = vmatmul.mubr.f32.gmra.mrb[0].mxu0 %v5576
      %v5785 = vpop.f32.mrb[0].mxu0
      %v5786 = vadd.f32 0.0, %v5785
      %v5787 = vpop.f32.mrb[0].mxu0
      %5788 = vmatprep.mubr.f32.mxu0 0.0
      %5789 = vmatmul.mubr.f32.gmra.mrb[0].mxu0 %v5577
      %v5790 = vpop.f32.mrb[0].mxu0
      %v5791 = vadd.f32 0.0, %v5790
      %v5792 = vpop.f32.mrb[0].mxu0
      %5793 = vmatprep.mubr.f32.mxu0 0.0
      %5794 = vmatmul.mubr.f32.gmra.mrb[0].mxu0 %v5578
      %v5795 = vpop.f32.mrb[0].mxu0
      %v5796 = vadd.f32 0.0, %v5795
      %v5797 = vpop.f32.mrb[0].mxu0
      %5798 = vmatprep.mubr.f32.mxu0 0.0
      %5799 = vmatmul.mubr.f32.gmra.mrb[0].mxu0 %v5579
      %v5800 = vpop.f32.mrb[0].mxu0
      %v5801 = vadd.f32 0.0, %v5800
      %v5802 = vpop.f32.mrb[0].mxu0
      %5803 = vmatprep.mubr.f32.mxu0 0.0
      %5804 = vmatmul.mubr.f32.gmra.mrb[0].mxu0 %v5580
      %v5805 = vpop.f32.mrb[0].mxu0
      %v5806 = vadd.f32 0.0, %v5805
      %v5807 = vpop.f32.mrb[0].mxu0
      %5808 = vmatprep.mubr.f32.mxu0 0.0
      %5809 = vmatmul.mubr.f32.gmra.mrb[0].mxu0 %v5581
      %v5810 = vpop.f32.mrb[0].mxu0
      %v5811 = vadd.f32 0.0, %v5810
      %v5812 = vpop.f32.mrb[0].mxu0
      %5813 = vmatprep.mubr.f32.mxu0 0.0
      %5814 = vmatmul.mubr.f32.gmra.mrb[0].mxu0 %v5582
      %v5815 = vpop.f32.mrb[0].mxu0
      %v5816 = vadd.f32 0.0, %v5815
      %v5817 = vpop.f32.mrb[0].mxu0
      %5818 = vmatprep.mubr.f32.mxu0 0.0
      %5819 = vmatmul.mubr.f32.gmra.mrb[0].mxu0 %v5583
      %v5820 = vpop.f32.mrb[0].mxu0
      %v5821 = vadd.f32 0.0, %v5820
      %v5822 = vpop.f32.mrb[0].mxu0
      %5823 = vmatprep.mubr.f32.mxu0 0.0
      %5824 = vmatmul.mubr.f32.gmra.mrb[0].mxu0 %v5584
      %v5825 = vpop.f32.mrb[0].mxu0
      %v5826 = vadd.f32 0.0, %v5825
      %v5827 = vpop.f32.mrb[0].mxu0
      %5828 = vmatprep.mubr.f32.mxu0 0.0
      %5829 = vmatmul.mubr.f32.gmra.mrb[0].mxu0 %v5585
      %v5830 = vpop.f32.mrb[0].mxu0
      %v5831 = vadd.f32 0.0, %v5830
      %v5832 = vpop.f32.mrb[0].mxu0
      %5833 = vmatprep.mubr.f32.mxu0 0.0
      %5834 = vmatmul.mubr.f32.gmra.mrb[0].mxu0 %v5586
      %v5835 = vpop.f32.mrb[0].mxu0
      %v5836 = vadd.f32 0.0, %v5835
      %v5837 = vpop.f32.mrb[0].mxu0
      %5838 = vmatprep.mubr.f32.mxu0 0.0
      %5839 = vmatmul.mubr.f32.gmra.mrb[0].mxu0 %v5587
      %v5840 = vpop.f32.mrb[0].mxu0
      %v5841 = vadd.f32 0.0, %v5840
      %v5842 = vpop.f32.mrb[0].mxu0
      %5843 = vmatprep.mubr.f32.mxu0 0.0
      %5844 = vmatmul.mubr.f32.gmra.mrb[0].mxu0 %v5588
      %v5845 = vpop.f32.mrb[0].mxu0
      %v5846 = vadd.f32 0.0, %v5845
      %v5847 = vpop.f32.mrb[0].mxu0
      %5848 = vmatprep.mubr.f32.mxu0 0.0
      %5849 = vmatmul.mubr.f32.gmra.mrb[0].mxu0 %v5589
      %v5850 = vpop.f32.mrb[0].mxu0
      %v5851 = vadd.f32 0.0, %v5850
      %v5852 = vpop.f32.mrb[0].mxu0
      %5853 = vmatprep.mubr.f32.mxu0 0.0
      %5854 = vmatmul.mubr.f32.gmra.mrb[0].mxu0 %v5590
      %v5855 = vpop.f32.mrb[0].mxu0
      %v5856 = vadd.f32 0.0, %v5855
      %v5857 = vpop.f32.mrb[0].mxu0
      %5858 = vmatprep.mubr.f32.mxu0 0.0
      %5859 = vmatmul.mubr.f32.gmra.mrb[0].mxu0 %v5591
      %v5860 = vpop.f32.mrb[0].mxu0
      %v5861 = vadd.f32 0.0, %v5860
      %v5862 = vpop.f32.mrb[0].mxu0
      %5863 = vmatprep.mubr.f32.mxu0 0.0
      %5864 = vmatmul.mubr.f32.gmra.mrb[0].mxu0 %v5592
      %v5865 = vpop.f32.mrb[0].mxu0
      %v5866 = vadd.f32 0.0, %v5865
      %v5867 = vpop.f32.mrb[0].mxu0
      %5868 = vmatprep.mubr.f32.mxu0 0.0
      %5869 = vmatmul.mubr.f32.gmra.mrb[0].mxu0 %v5593
      %v5870 = vpop.f32.mrb[0].mxu0
      %v5871 = vadd.f32 0.0, %v5870
      %v5872 = vpop.f32.mrb[0].mxu0
      %5873 = vmatprep.mubr.f32.mxu0 0.0
      %5874 = vmatmul.mubr.f32.gmra.mrb[0].mxu0 %v5594
      %v5875 = vpop.f32.mrb[0].mxu0
      %v5876 = vadd.f32 0.0, %v5875
      %v5877 = vpop.f32.mrb[0].mxu0
      %5878 = vmatprep.mubr.f32.mxu0 0.0
      %5879 = vmatmul.mubr.f32.gmra.mrb[0].mxu0 %v5595
      %v5880 = vpop.f32.mrb[0].mxu0
      %v5881 = vadd.f32 0.0, %v5880
      %v5882 = vpop.f32.mrb[0].mxu0
      %5883 = vmatprep.mubr.f32.mxu0 0.0
      %5884 = vmatmul.mubr.f32.gmra.mrb[0].mxu0 %v5596
      %v5885 = vpop.f32.mrb[0].mxu0
      %v5886 = vadd.f32 0.0, %v5885
      %v5887 = vpop.f32.mrb[0].mxu0
      %5888 = vmatprep.mubr.f32.mxu0 0.0
      %5889 = vmatmul.mubr.f32.gmra.mrb[0].mxu0 %v5597
      %v5890 = vpop.f32.mrb[0].mxu0
      %v5891 = vadd.f32 0.0, %v5890
      %v5892 = vpop.f32.mrb[0].mxu0
      %5893 = vmatprep.mubr.f32.mxu0 0.0
      %5894 = vmatmul.mubr.f32.gmra.mrb[0].mxu0 %v5598
      %v5895 = vpop.f32.mrb[0].mxu0
      %v5896 = vadd.f32 0.0, %v5895
      %v5897 = vpop.f32.mrb[0].mxu0
      %5898 = vmatprep.mubr.f32.mxu0 0.0
      %5899 = vmatmul.mubr.f32.gmra.mrb[0].mxu0 %v5599
      %v5900 = vpop.f32.mrb[0].mxu0
      %v5901 = vadd.f32 0.0, %v5900
      %v5902 = vpop.f32.mrb[0].mxu0
      %5903 = vmatprep.mubr.f32.mxu0 0.0
      %5904 = vmatmul.mubr.f32.gmra.mrb[0].mxu0 %v5600
      %v5905 = vpop.f32.mrb[0].mxu0
      %v5906 = vadd.f32 0.0, %v5905
      %v5907 = vpop.f32.mrb[0].mxu0
      %5908 = vmatprep.mubr.f32.mxu0 0.0
      %5909 = vmatmul.mubr.f32.gmra.mrb[0].mxu0 %v5601
      %v5910 = vpop.f32.mrb[0].mxu0
      %v5911 = vadd.f32 0.0, %v5910
      %v5912 = vpop.f32.mrb[0].mxu0
      %5913 = vmatprep.mubr.f32.mxu0 0.0
      %5914 = vmatmul.mubr.f32.gmra.mrb[0].mxu0 %v5602
      %v5915 = vpop.f32.mrb[0].mxu0
      %v5916 = vadd.f32 0.0, %v5915
      %v5917 = vpop.f32.mrb[0].mxu0
      %5918 = vmatprep.mubr.f32.mxu0 0.0
      %5919 = vmatmul.mubr.f32.gmra.mrb[0].mxu0 %v5603
      %v5920 = vpop.f32.mrb[0].mxu0
      %v5921 = vadd.f32 0.0, %v5920
      %v5922 = vpop.f32.mrb[0].mxu0
      %5923 = vmatprep.mubr.f32.mxu0 0.0
      %5924 = vmatmul.mubr.f32.gmra.mrb[0].mxu0 %v5604
      %v5925 = vpop.f32.mrb[0].mxu0
      %v5926 = vadd.f32 0.0, %v5925
      %v5927 = vpop.f32.mrb[0].mxu0
      %5928 = vmatprep.mubr.f32.mxu0 0.0
      %5929 = vmatmul.mubr.f32.gmra.mrb[0].mxu0 %v5605
      %v5930 = vpop.f32.mrb[0].mxu0
      %v5931 = vadd.f32 0.0, %v5930
      %v5932 = vpop.f32.mrb[0].mxu0
      %5933 = vmatprep.mubr.f32.mxu0 0.0
      %5934 = vmatmul.mubr.f32.gmra.mrb[0].mxu0 %v5606
      %v5935 = vpop.f32.mrb[0].mxu0
      %v5936 = vadd.f32 0.0, %v5935
      %v5937 = vpop.f32.mrb[0].mxu0
      %5938 = vmatprep.mubr.f32.mxu0 0.0
      %5939 = vmatmul.mubr.f32.gmra.mrb[0].mxu0 %v5607
      %v5940 = vpop.f32.mrb[0].mxu0
      %v5941 = vadd.f32 0.0, %v5940
      %v5942 = vpop.f32.mrb[0].mxu0
      %5943 = vmatprep.mubr.f32.mxu0 0.0
      %5944 = vmatmul.mubr.f32.gmra.mrb[0].mxu0 %v5608
      %v5945 = vpop.f32.mrb[0].mxu0
      %v5946 = vadd.f32 0.0, %v5945
      %v5947 = vpop.f32.mrb[0].mxu0
      %5948 = vmatprep.mubr.f32.mxu0 0.0
      %5949 = vmatmul.mubr.f32.gmra.mrb[0].mxu0 %v5609
      %v5950 = vpop.f32.mrb[0].mxu0
      %v5951 = vadd.f32 0.0, %v5950
      %v5952 = vpop.f32.mrb[0].mxu0
      %5953 = vmatprep.mubr.f32.mxu0 0.0
      %5954 = vmatmul.mubr.f32.gmra.mrb[0].mxu0 %v5610
      %v5955 = vpop.f32.mrb[0].mxu0
      %v5956 = vadd.f32 0.0, %v5955
      %v5957 = vpop.f32.mrb[0].mxu0
      %5958 = vmatprep.mubr.f32.mxu0 0.0
      %5959 = vmatmul.mubr.f32.gmra.mrb[0].mxu0 %v5611
      %v5960 = vpop.f32.mrb[0].mxu0
      %v5961 = vadd.f32 0.0, %v5960
      %v5962 = vpop.f32.mrb[0].mxu0
      %5963 = vmatprep.mubr.f32.mxu0 0.0
      %5964 = vmatmul.mubr.f32.gmra.mrb[0].mxu0 %v5612
      %v5965 = vpop.f32.mrb[0].mxu0
      %v5966 = vadd.f32 0.0, %v5965
      %v5967 = vpop.f32.mrb[0].mxu0
      %5968 = vmatprep.mubr.f32.mxu0 0.0
      %5969 = vmatmul.mubr.f32.gmra.mrb[0].mxu0 %v5613
      %v5970 = vpop.f32.mrb[0].mxu0
      %v5971 = vadd.f32 0.0, %v5970
      %v5972 = vpop.f32.mrb[0].mxu0
      %5973 = vmatprep.mubr.f32.mxu0 0.0
      %5974 = vmatmul.mubr.f32.gmra.mrb[0].mxu0 %v5614
      %v5975 = vpop.f32.mrb[0].mxu0
      %v5976 = vadd.f32 0.0, %v5975
      %v5977 = vpop.f32.mrb[0].mxu0
      %5978 = vmatprep.mubr.f32.mxu0 0.0
      %5979 = vmatmul.mubr.f32.gmra.mrb[0].mxu0 %v5615
      %v5980 = vpop.f32.mrb[0].mxu0
      %v5981 = vadd.f32 0.0, %v5980
      %v5982 = vpop.f32.mrb[0].mxu0
      %5983 = vmatprep.mubr.f32.mxu0 0.0
      %5984 = vmatmul.mubr.f32.gmra.mrb[0].mxu0 %v5616
      %v5985 = vpop.f32.mrb[0].mxu0
      %v5986 = vadd.f32 0.0, %v5985
      %v5987 = vpop.f32.mrb[0].mxu0
      %5988 = vmatprep.mubr.f32.mxu0 0.0
      %5989 = vmatmul.mubr.f32.gmra.mrb[0].mxu0 %v5617
      %v5990 = vpop.f32.mrb[0].mxu0
      %v5991 = vadd.f32 0.0, %v5990
      %v5992 = vpop.f32.mrb[0].mxu0
      %5993 = vmatprep.mubr.f32.mxu0 0.0
      %5994 = vmatmul.mubr.f32.gmra.mrb[0].mxu0 %v5618
      %v5995 = vpop.f32.mrb[0].mxu0
      %v5996 = vadd.f32 0.0, %v5995
      %v5997 = vpop.f32.mrb[0].mxu0
      %5998 = vmatprep.mubr.f32.mxu0 0.0
      %5999 = vmatmul.mubr.f32.gmra.mrb[0].mxu0 %v5619
      %v6000 = vpop.f32.mrb[0].mxu0
      %v6001 = vadd.f32 0.0, %v6000
      %v6002 = vpop.f32.mrb[0].mxu0
      %6003 = vmatprep.mubr.f32.mxu0 0.0
      %6004 = vmatmul.mubr.f32.gmra.mrb[0].mxu0 %v5620
      %v6005 = vpop.f32.mrb[0].mxu0
      %v6006 = vadd.f32 0.0, %v6005
      %v6007 = vpop.f32.mrb[0].mxu0
      %6008 = vmatprep.mubr.f32.mxu0 0.0
      %6009 = vmatmul.mubr.f32.gmra.mrb[0].mxu0 %v5621
      %v6010 = vpop.f32.mrb[0].mxu0
      %v6011 = vadd.f32 0.0, %v6010
      %v6012 = vpop.f32.mrb[0].mxu0
      %6013 = vmatprep.mubr.f32.mxu0 0.0
      %6014 = vmatmul.mubr.f32.gmra.mrb[0].mxu0 %v5622
      %v6015 = vpop.f32.mrb[0].mxu0
      %v6016 = vadd.f32 0.0, %v6015
      %v6017 = vpop.f32.mrb[0].mxu0
      %6018 = vmatprep.mubr.f32.mxu0 0.0
      %6019 = vmatmul.mubr.f32.gmra.mrb[0].mxu0 %v5623
      %v6020 = vpop.f32.mrb[0].mxu0
      %v6021 = vadd.f32 0.0, %v6020
      %v6022 = vpop.f32.mrb[0].mxu0
      %6023 = vmatprep.mubr.f32.mxu0 0.0
      %6024 = vmatmul.mubr.f32.gmra.mrb[0].mxu0 %v5624
      %v6025 = vpop.f32.mrb[0].mxu0
      %v6026 = vadd.f32 0.0, %v6025
      %v6027 = vpop.f32.mrb[0].mxu0
      %6028 = vmatprep.mubr.f32.mxu0 0.0
      %6029 = vmatmul.mubr.f32.gmra.mrb[0].mxu0 %v5625
      %v6030 = vpop.f32.mrb[0].mxu0
      %v6031 = vadd.f32 0.0, %v6030
      %v6032 = vpop.f32.mrb[0].mxu0
      %6033 = vmatprep.mubr.f32.mxu0 0.0
      %6034 = vmatmul.mubr.f32.gmra.mrb[0].mxu0 %v5626
      %v6035 = vpop.f32.mrb[0].mxu0
      %v6036 = vadd.f32 0.0, %v6035
      %v6037 = vpop.f32.mrb[0].mxu0
      %6038 = vmatprep.mubr.f32.mxu0 0.0
      %6039 = vmatmul.mubr.f32.gmra.mrb[0].mxu0 %v5627
      %v6040 = vpop.f32.mrb[0].mxu0
      %v6041 = vadd.f32 0.0, %v6040
      %v6042 = vpop.f32.mrb[0].mxu0
      %6043 = vmatprep.mubr.f32.mxu0 0.0
      %6044 = vmatmul.mubr.f32.gmra.mrb[0].mxu0 %v5628
      %v6045 = vpop.f32.mrb[0].mxu0
      %v6046 = vadd.f32 0.0, %v6045
      %v6047 = vpop.f32.mrb[0].mxu0
      %6048 = vmatprep.mubr.f32.mxu0 0.0
      %6049 = vmatmul.mubr.f32.gmra.mrb[0].mxu0 %v5629
      %v6050 = vpop.f32.mrb[0].mxu0
      %v6051 = vadd.f32 0.0, %v6050
      %v6052 = vpop.f32.mrb[0].mxu0
      %6053 = vmatprep.mubr.f32.mxu0 0.0
      %6054 = vmatmul.mubr.f32.gmra.mrb[0].mxu0 %v5630
      %v6055 = vpop.f32.mrb[0].mxu0
      %v6056 = vadd.f32 0.0, %v6055
      %v6057 = vpop.f32.mrb[0].mxu0
      %6058 = vmatprep.mubr.f32.mxu0 0.0
      %6059 = vmatmul.mubr.f32.gmra.mrb[0].mxu0 %v5631
      %v6060 = vpop.f32.mrb[0].mxu0
      %v6061 = vadd.f32 0.0, %v6060
      %v6062 = vpop.f32.mrb[0].mxu0
      %6063 = vmatprep.mubr.f32.mxu0 0.0
      %6064 = vmatmul.mubr.f32.gmra.mrb[0].mxu0 %v5632
      %v6065 = vpop.f32.mrb[0].mxu0
      %v6066 = vadd.f32 0.0, %v6065
      %v6067 = vpop.f32.mrb[0].mxu0
      %6068 = vmatprep.mubr.f32.mxu0 0.0
      %6069 = vmatmul.mubr.f32.gmra.mrb[0].mxu0 %v5633
      %v6070 = vpop.f32.mrb[0].mxu0
      %v6071 = vadd.f32 0.0, %v6070
      %v6072 = vpop.f32.mrb[0].mxu0
      %6073 = vmatprep.mubr.f32.mxu0 0.0
      %6074 = vmatmul.mubr.f32.gmra.mrb[0].mxu0 %v5634
      %v6075 = vpop.f32.mrb[0].mxu0
      %v6076 = vadd.f32 0.0, %v6075
      %v6077 = vpop.f32.mrb[0].mxu0
      %6078 = vmatprep.mubr.f32.mxu0 0.0
      %6079 = vmatmul.mubr.f32.gmra.mrb[0].mxu0 %v5635
      %v6080 = vpop.f32.mrb[0].mxu0
      %v6081 = vadd.f32 0.0, %v6080
      %v6082 = vpop.f32.mrb[0].mxu0
      %6083 = vmatprep.mubr.f32.mxu0 0.0
      %6084 = vmatmul.mubr.f32.gmra.mrb[0].mxu0 %v5636
      %v6085 = vpop.f32.mrb[0].mxu0
      %v6086 = vadd.f32 0.0, %v6085
      %v6087 = vpop.f32.mrb[0].mxu0
      %6088 = vmatprep.mubr.f32.mxu0 0.0
      %6089 = vmatmul.mubr.f32.gmra.mrb[0].mxu0 %v5637
      %v6090 = vpop.f32.mrb[0].mxu0
      %v6091 = vadd.f32 0.0, %v6090
      %v6092 = vpop.f32.mrb[0].mxu0
      %6093 = vmatprep.mubr.f32.mxu0 0.0
      %6094 = vmatmul.mubr.f32.gmra.mrb[0].mxu0 %v5638
      %v6095 = vpop.f32.mrb[0].mxu0
      %v6096 = vadd.f32 0.0, %v6095
      %v6097 = vpop.f32.mrb[0].mxu0
      %6098 = vmatprep.mubr.f32.mxu0 0.0
      %6099 = vmatmul.mubr.f32.gmra.mrb[0].mxu0 %v5639
      %v6100 = vpop.f32.mrb[0].mxu0
      %v6101 = vadd.f32 0.0, %v6100
      %v6102 = vpop.f32.mrb[0].mxu0
      %6103 = vmatprep.mubr.f32.mxu0 0.0
      %6104 = vmatmul.mubr.f32.gmra.mrb[0].mxu0 %v5640
      %v6105 = vpop.f32.mrb[0].mxu0
      %v6106 = vadd.f32 0.0, %v6105
      %v6107 = vpop.f32.mrb[0].mxu0
      %6108 = vmatprep.mubr.f32.mxu0 0.0
      %6109 = vmatmul.mubr.f32.gmra.mrb[0].mxu0 %v5641
      %v6110 = vpop.f32.mrb[0].mxu0
      %v6111 = vadd.f32 0.0, %v6110
      %v6112 = vpop.f32.mrb[0].mxu0
      %6113 = vmatprep.mubr.f32.mxu0 0.0
      %6114 = vmatmul.mubr.f32.gmra.mrb[0].mxu0 %v5642
      %v6115 = vpop.f32.mrb[0].mxu0
      %v6116 = vadd.f32 0.0, %v6115
      %v6117 = vpop.f32.mrb[0].mxu0
      %6118 = vmatprep.mubr.f32.mxu0 0.0
      %6119 = vmatmul.mubr.f32.gmra.mrb[0].mxu0 %v5643
      %v6120 = vpop.f32.mrb[0].mxu0
      %v6121 = vadd.f32 0.0, %v6120
      %v6122 = vpop.f32.mrb[0].mxu0
      %6123 = vmatprep.mubr.f32.mxu0 0.0
      %6124 = vmatmul.mubr.f32.gmra.mrb[0].mxu0 %v5644
      %v6125 = vpop.f32.mrb[0].mxu0
      %v6126 = vadd.f32 0.0, %v6125
      %v6127 = vpop.f32.mrb[0].mxu0
      %6128 = vmatprep.mubr.f32.mxu0 0.0
      %6129 = vmatmul.mubr.f32.gmra.mrb[0].mxu0 %v5645
      %v6130 = vpop.f32.mrb[0].mxu0
      %v6131 = vadd.f32 0.0, %v6130
      %v6132 = vpop.f32.mrb[0].mxu0
      %6133 = vmatprep.mubr.f32.mxu0 0.0
      %6134 = vmatmul.mubr.f32.gmra.mrb[0].mxu0 %v5646
      %v6135 = vpop.f32.mrb[0].mxu0
      %v6136 = vadd.f32 0.0, %v6135
      %v6137 = vpop.f32.mrb[0].mxu0
      %6138 = vmatprep.mubr.f32.mxu0 0.0
      %6139 = vmatmul.mubr.f32.gmra.mrb[0].mxu0 %v5647
      %v6140 = vpop.f32.mrb[0].mxu0
      %v6141 = vadd.f32 0.0, %v6140
      %v6142 = vpop.f32.mrb[0].mxu0
      %6143 = vmatprep.mubr.f32.mxu0 0.0
      %6144 = vmatmul.mubr.f32.gmra.mrb[0].mxu0 %v5648
      %v6145 = vpop.f32.mrb[0].mxu0
      %v6146 = vadd.f32 0.0, %v6145
      %v6147 = vpop.f32.mrb[0].mxu0
      %6148 = vmatprep.mubr.f32.mxu0 0.0
      %6149 = vmatmul.mubr.f32.gmra.mrb[0].mxu0 %v5649
      %v6150 = vpop.f32.mrb[0].mxu0
      %v6151 = vadd.f32 0.0, %v6150
      %v6152 = vpop.f32.mrb[0].mxu0
      %6153 = vmatprep.mubr.f32.mxu0 0.0
      %6154 = vmatmul.mubr.f32.gmra.mrb[0].mxu0 %v5650
      %v6155 = vpop.f32.mrb[0].mxu0
      %v6156 = vadd.f32 0.0, %v6155
      %v6157 = vpop.f32.mrb[0].mxu0
      %6158 = vmatprep.mubr.f32.mxu0 0.0
      %6159 = vmatmul.mubr.f32.gmra.mrb[0].mxu0 %v5651
      %v6160 = vpop.f32.mrb[0].mxu0
      %v6161 = vadd.f32 0.0, %v6160
      %v6162 = vpop.f32.mrb[0].mxu0
      %6163 = vmatprep.mubr.f32.mxu0 0.0
      %6164 = vmatmul.mubr.f32.gmra.mrb[0].mxu0 %v5652
      %v6165 = vpop.f32.mrb[0].mxu0
      %v6166 = vadd.f32 0.0, %v6165
      %v6167 = vpop.f32.mrb[0].mxu0
      %6168 = vmatprep.mubr.f32.mxu0 0.0
      %6169 = vmatmul.mubr.f32.gmra.mrb[0].mxu0 %v5653
      %v6170 = vpop.f32.mrb[0].mxu0
      %v6171 = vadd.f32 0.0, %v6170
      %v6172 = vpop.f32.mrb[0].mxu0
      %6173 = vmatprep.mubr.f32.mxu0 0.0
      %6174 = vmatmul.mubr.f32.gmra.mrb[0].mxu0 %v5654
      %v6175 = vpop.f32.mrb[0].mxu0
      %v6176 = vadd.f32 0.0, %v6175
      %v6177 = vpop.f32.mrb[0].mxu0
      %6178 = vmatprep.mubr.f32.mxu0 0.0
      %6179 = vmatmul.mubr.f32.gmra.mrb[0].mxu0 %v5655
      %v6180 = vpop.f32.mrb[0].mxu0
      %v6181 = vadd.f32 0.0, %v6180
      %v6182 = vpop.f32.mrb[0].mxu0
      %6183 = vmatprep.mubr.f32.mxu0 0.0
      %6184 = vmatmul.mubr.f32.gmra.mrb[0].mxu0 %v5656
      %v6185 = vpop.f32.mrb[0].mxu0
      %v6186 = vadd.f32 0.0, %v6185
      %v6187 = vpop.f32.mrb[0].mxu0
      %6188 = vmatprep.mubr.f32.mxu0 0.0
      %6189 = vmatmul.mubr.f32.gmra.mrb[0].mxu0 %v5658
      %v6190 = vpop.f32.mrb[0].mxu0
      %v6191 = vadd.f32 0.0, %v6190
      %v6192 = vpop.f32.mrb[0].mxu0
      %6193 = vdwg.mxu0
      %vm6289 = vcmask 1041408
      %v6290 = vrot.slane %v5563, 6
      %v6291 = vrot.slane %v5564, 6
      %v6292 = vsel %vm6289, %v6290, %v6291
      %v6293 = vrot.slane %v5565, 6
      %v6294 = vsel %vm6289, %v6291, %v6293
      %v6295 = vrot.slane %v5566, 6
      %v6296 = vsel %vm6289, %v6293, %v6295
      %v6297 = vrot.slane %v5567, 6
      %v6298 = vsel %vm6289, %v6295, %v6297
      %v6299 = vrot.slane %v5568, 6
      %v6300 = vsel %vm6289, %v6297, %v6299
      %v6301 = vrot.slane %v5569, 6
      %v6302 = vsel %vm6289, %v6299, %v6301
      %v6303 = vrot.slane %v5570, 6
      %v6304 = vsel %vm6289, %v6301, %v6303
      %v6305 = vrot.slane %v5571, 6
      %v6306 = vsel %vm6289, %v6303, %v6305
      %v6307 = vrot.slane %v5572, 6
      %v6308 = vsel %vm6289, %v6305, %v6307
      %v6309 = vrot.slane %v5573, 6
      %v6310 = vsel %vm6289, %v6307, %v6309
      %v6311 = vrot.slane %v5574, 6
      %v6312 = vsel %vm6289, %v6309, %v6311
      %v6313 = vrot.slane %v5575, 6
      %v6314 = vsel %vm6289, %v6311, %v6313
      %v6315 = vrot.slane %v5576, 6
      %v6316 = vsel %vm6289, %v6313, %v6315
      %v6317 = vrot.slane %v5577, 6
      %v6318 = vsel %vm6289, %v6315, %v6317
      %v6319 = vrot.slane %v5578, 6
      %v6320 = vsel %vm6289, %v6317, %v6319
      %v6321 = vrot.slane %v5579, 6
      %v6322 = vsel %vm6289, %v6319, %v6321
      %v6323 = vrot.slane %v5580, 6
      %v6324 = vsel %vm6289, %v6321, %v6323
      %v6325 = vrot.slane %v5581, 6
      %v6326 = vsel %vm6289, %v6323, %v6325
      %v6327 = vrot.slane %v5582, 6
      %v6328 = vsel %vm6289, %v6325, %v6327
      %v6329 = vrot.slane %v5583, 6
      %v6330 = vsel %vm6289, %v6327, %v6329
      %v6331 = vrot.slane %v5584, 6
      %v6332 = vsel %vm6289, %v6329, %v6331
      %v6333 = vrot.slane %v5585, 6
      %v6334 = vsel %vm6289, %v6331, %v6333
      %v6335 = vrot.slane %v5586, 6
      %v6336 = vsel %vm6289, %v6333, %v6335
      %v6337 = vrot.slane %v5587, 6
      %v6338 = vsel %vm6289, %v6335, %v6337
      %v6339 = vrot.slane %v5588, 6
      %v6340 = vsel %vm6289, %v6337, %v6339
      %v6341 = vrot.slane %v5589, 6
      %v6342 = vsel %vm6289, %v6339, %v6341
      %v6343 = vrot.slane %v5590, 6
      %v6344 = vsel %vm6289, %v6341, %v6343
      %v6345 = vrot.slane %v5591, 6
      %v6346 = vsel %vm6289, %v6343, %v6345
      %v6347 = vrot.slane %v5592, 6
      %v6348 = vsel %vm6289, %v6345, %v6347
      %v6349 = vrot.slane %v5593, 6
      %v6350 = vsel %vm6289, %v6347, %v6349
      %v6351 = vrot.slane %v5594, 6
      %v6352 = vsel %vm6289, %v6349, %v6351
      %v6353 = vrot.slane %v5595, 6
      %v6354 = vsel %vm6289, %v6351, %v6353
      %v6355 = vrot.slane %v5596, 6
      %v6356 = vsel %vm6289, %v6353, %v6355
      %v6357 = vrot.slane %v5597, 6
      %v6358 = vsel %vm6289, %v6355, %v6357
      %v6359 = vrot.slane %v5598, 6
      %v6360 = vsel %vm6289, %v6357, %v6359
      %v6361 = vrot.slane %v5599, 6
      %v6362 = vsel %vm6289, %v6359, %v6361
      %v6363 = vrot.slane %v5600, 6
      %v6364 = vsel %vm6289, %v6361, %v6363
      %v6365 = vrot.slane %v5601, 6
      %v6366 = vsel %vm6289, %v6363, %v6365
      %v6367 = vrot.slane %v5602, 6
      %v6368 = vsel %vm6289, %v6365, %v6367
      %v6369 = vrot.slane %v5603, 6
      %v6370 = vsel %vm6289, %v6367, %v6369
      %v6371 = vrot.slane %v5604, 6
      %v6372 = vsel %vm6289, %v6369, %v6371
      %v6373 = vrot.slane %v5605, 6
      %v6374 = vsel %vm6289, %v6371, %v6373
      %v6375 = vrot.slane %v5606, 6
      %v6376 = vsel %vm6289, %v6373, %v6375
      %v6377 = vrot.slane %v5607, 6
      %v6378 = vsel %vm6289, %v6375, %v6377
      %v6379 = vrot.slane %v5608, 6
      %v6380 = vsel %vm6289, %v6377, %v6379
      %v6381 = vrot.slane %v5609, 6
      %v6382 = vsel %vm6289, %v6379, %v6381
      %v6383 = vrot.slane %v5610, 6
      %v6384 = vsel %vm6289, %v6381, %v6383
      %v6385 = vrot.slane %v5611, 6
      %v6386 = vsel %vm6289, %v6383, %v6385
      %v6387 = vrot.slane %v5612, 6
      %v6388 = vsel %vm6289, %v6385, %v6387
      %v6389 = vrot.slane %v5613, 6
      %v6390 = vsel %vm6289, %v6387, %v6389
      %v6391 = vrot.slane %v5614, 6
      %v6392 = vsel %vm6289, %v6389, %v6391
      %v6393 = vrot.slane %v5615, 6
      %v6394 = vsel %vm6289, %v6391, %v6393
      %v6395 = vrot.slane %v5616, 6
      %v6396 = vsel %vm6289, %v6393, %v6395
      %v6397 = vrot.slane %v5617, 6
      %v6398 = vsel %vm6289, %v6395, %v6397
      %v6399 = vrot.slane %v5618, 6
      %v6400 = vsel %vm6289, %v6397, %v6399
      %v6401 = vrot.slane %v5619, 6
      %v6402 = vsel %vm6289, %v6399, %v6401
      %v6403 = vrot.slane %v5620, 6
      %v6404 = vsel %vm6289, %v6401, %v6403
      %v6405 = vrot.slane %v5621, 6
      %v6406 = vsel %vm6289, %v6403, %v6405
      %v6407 = vrot.slane %v5622, 6
      %v6408 = vsel %vm6289, %v6405, %v6407
      %v6409 = vrot.slane %v5623, 6
      %v6410 = vsel %vm6289, %v6407, %v6409
      %v6411 = vrot.slane %v5624, 6
      %v6412 = vsel %vm6289, %v6409, %v6411
      %v6413 = vrot.slane %v5625, 6
      %v6414 = vsel %vm6289, %v6411, %v6413
      %v6415 = vrot.slane %v5626, 6
      %v6416 = vsel %vm6289, %v6413, %v6415
      %v6417 = vrot.slane %v5627, 6
      %v6418 = vsel %vm6289, %v6415, %v6417
      %v6419 = vrot.slane %v5628, 6
      %v6420 = vsel %vm6289, %v6417, %v6419
      %v6421 = vrot.slane %v5629, 6
      %v6422 = vsel %vm6289, %v6419, %v6421
      %v6423 = vrot.slane %v5630, 6
      %v6424 = vsel %vm6289, %v6421, %v6423
      %v6425 = vrot.slane %v5631, 6
      %v6426 = vsel %vm6289, %v6423, %v6425
      %v6427 = vrot.slane %v5632, 6
      %v6428 = vsel %vm6289, %v6425, %v6427
      %v6429 = vrot.slane %v5633, 6
      %v6430 = vsel %vm6289, %v6427, %v6429
      %v6431 = vrot.slane %v5634, 6
      %v6432 = vsel %vm6289, %v6429, %v6431
      %v6433 = vrot.slane %v5635, 6
      %v6434 = vsel %vm6289, %v6431, %v6433
      %v6435 = vrot.slane %v5636, 6
      %v6436 = vsel %vm6289, %v6433, %v6435
      %v6437 = vrot.slane %v5637, 6
      %v6438 = vsel %vm6289, %v6435, %v6437
      %v6439 = vrot.slane %v5638, 6
      %v6440 = vsel %vm6289, %v6437, %v6439
      %v6441 = vrot.slane %v5639, 6
      %v6442 = vsel %vm6289, %v6439, %v6441
      %v6443 = vrot.slane %v5640, 6
      %v6444 = vsel %vm6289, %v6441, %v6443
      %v6445 = vrot.slane %v5641, 6
      %v6446 = vsel %vm6289, %v6443, %v6445
      %v6447 = vrot.slane %v5642, 6
      %v6448 = vsel %vm6289, %v6445, %v6447
      %v6449 = vrot.slane %v5643, 6
      %v6450 = vsel %vm6289, %v6447, %v6449
      %v6451 = vrot.slane %v5644, 6
      %v6452 = vsel %vm6289, %v6449, %v6451
      %v6453 = vrot.slane %v5645, 6
      %v6454 = vsel %vm6289, %v6451, %v6453
      %v6455 = vrot.slane %v5646, 6
      %v6456 = vsel %vm6289, %v6453, %v6455
      %v6457 = vrot.slane %v5647, 6
      %v6458 = vsel %vm6289, %v6455, %v6457
      %v6459 = vrot.slane %v5648, 6
      %v6460 = vsel %vm6289, %v6457, %v6459
      %v6461 = vrot.slane %v5649, 6
      %v6462 = vsel %vm6289, %v6459, %v6461
      %v6463 = vrot.slane %v5650, 6
      %v6464 = vsel %vm6289, %v6461, %v6463
      %v6465 = vrot.slane %v5651, 6
      %v6466 = vsel %vm6289, %v6463, %v6465
      %v6467 = vrot.slane %v5652, 6
      %v6468 = vsel %vm6289, %v6465, %v6467
      %v6469 = vrot.slane %v5653, 6
      %v6470 = vsel %vm6289, %v6467, %v6469
      %v6471 = vrot.slane %v5654, 6
      %v6472 = vsel %vm6289, %v6469, %v6471
      %v6473 = vrot.slane %v5655, 6
      %v6474 = vsel %vm6289, %v6471, %v6473
      %v6475 = vrot.slane %v5656, 6
      %v6476 = vsel %vm6289, %v6473, %v6475
      %v6477 = vrot.slane %v5657, 6
      %v6478 = vsel %vm6289, %v6475, %v6477
      %6573 = vmatprep.subr.mxu0 0.0
      %6574 = vmatpush1.msra.mxu0 %v5497
      %6575 = vmatprep.subr.mxu0 0.0
      %6576 = vmatpush1.msra.mxu0 %v5498
      %6577 = vmatprep.subr.mxu0 0.0
      %6578 = vmatpush1.msra.mxu0 %v5499
      %6579 = vmatprep.subr.mxu0 0.0
      %6580 = vmatpush1.msra.mxu0 %v5500
      %6581 = vmatprep.subr.mxu0 0.0
      %6582 = vmatpush1.msra.mxu0 %v5501
      %6583 = vmatprep.subr.mxu0 0.0
      %6584 = vmatpush1.msra.mxu0 %v5502
      %6585 = vmatprep.subr.mxu0 0.0
      %6586 = vmatpush1.msra.mxu0 %v5503
      %6587 = vmatprep.subr.mxu0 0.0
      %6588 = vmatpush1.msra.mxu0 %v5504
      %6589 = vmatprep.subr.mxu0 0.0
      %6590 = vmatpush1.msra.mxu0 %v5505
      %6591 = vmatprep.subr.mxu0 0.0
      %6592 = vmatpush1.msra.mxu0 %v5506
      %6593 = vmatprep.subr.mxu0 0.0
      %6594 = vmatpush1.msra.mxu0 %v5507
      %6595 = vmatprep.subr.mxu0 0.0
      %6596 = vmatpush1.msra.mxu0 %v5508
      %6597 = vmatprep.subr.mxu0 0.0
      %6598 = vmatpush1.msra.mxu0 %v5509
      %6599 = vmatprep.subr.mxu0 0.0
      %6600 = vmatpush1.msra.mxu0 %v5510
      %6601 = vmatprep.subr.mxu0 0.0
      %6602 = vmatpush1.msra.mxu0 %v5511
      %6603 = vmatprep.subr.mxu0 0.0
      %6604 = vmatpush1.msra.mxu0 %v5512
      %6605 = vmatprep.subr.mxu0 0.0
      %6606 = vmatpush1.msra.mxu0 0.0
      %6607 = vmatprep.subr.mxu0 0.0
      %6608 = vmatpush1.msra.mxu0 0.0
      %6609 = vmatprep.subr.mxu0 0.0
      %6610 = vmatpush1.msra.mxu0 0.0
      %6611 = vmatprep.subr.mxu0 0.0
      %6612 = vmatpush1.msra.mxu0 0.0
      %6613 = vmatprep.subr.mxu0 0.0
      %6614 = vmatpush1.msra.mxu0 0.0
      %6615 = vmatprep.subr.mxu0 0.0
      %6616 = vmatpush1.msra.mxu0 0.0
      %6617 = vmatprep.subr.mxu0 0.0
      %6618 = vmatpush1.msra.mxu0 0.0
      %6619 = vmatprep.subr.mxu0 0.0
      %6620 = vmatpush1.msra.mxu0 0.0
      %6621 = vmatprep.subr.mxu0 0.0
      %6622 = vmatpush1.msra.mxu0 0.0
      %6623 = vmatprep.subr.mxu0 0.0
      %6624 = vmatpush1.msra.mxu0 0.0
      %6625 = vmatprep.subr.mxu0 0.0
      %6626 = vmatpush1.msra.mxu0 0.0
      %6627 = vmatprep.subr.mxu0 0.0
      %6628 = vmatpush1.msra.mxu0 0.0
      %6629 = vmatprep.subr.mxu0 0.0
      %6630 = vmatpush1.msra.mxu0 0.0
      %6631 = vmatprep.subr.mxu0 0.0
      %6632 = vmatpush1.msra.mxu0 0.0
      %6633 = vmatprep.subr.mxu0 0.0
      %6634 = vmatpush1.msra.mxu0 0.0
      %6635 = vmatprep.subr.mxu0 0.0
      %6636 = vmatpush1.msra.mxu0 0.0
      %6637 = vmatprep.mubr.f32.mxu0 0.0
      %6638 = vmatmul.mubr.f32.gmra.mrb[0].mxu0 %v6292
      %v6639 = vpop.f32.mrb[0].mxu0
      %v6640 = vadd.f32 %v5726, %v6639
      %v6641 = vpop.f32.mrb[0].mxu0
      %6642 = vmatprep.mubr.f32.mxu0 0.0
      %6643 = vmatmul.mubr.f32.gmra.mrb[0].mxu0 %v6294
      %v6644 = vpop.f32.mrb[0].mxu0
      %v6645 = vadd.f32 %v5731, %v6644
      %v6646 = vpop.f32.mrb[0].mxu0
      %6647 = vmatprep.mubr.f32.mxu0 0.0
      %6648 = vmatmul.mubr.f32.gmra.mrb[0].mxu0 %v6296
      %v6649 = vpop.f32.mrb[0].mxu0
      %v6650 = vadd.f32 %v5736, %v6649
      %v6651 = vpop.f32.mrb[0].mxu0
      %6652 = vmatprep.mubr.f32.mxu0 0.0
      %6653 = vmatmul.mubr.f32.gmra.mrb[0].mxu0 %v6298
      %v6654 = vpop.f32.mrb[0].mxu0
      %v6655 = vadd.f32 %v5741, %v6654
      %v6656 = vpop.f32.mrb[0].mxu0
      %6657 = vmatprep.mubr.f32.mxu0 0.0
      %6658 = vmatmul.mubr.f32.gmra.mrb[0].mxu0 %v6300
      %v6659 = vpop.f32.mrb[0].mxu0
      %v6660 = vadd.f32 %v5746, %v6659
      %v6661 = vpop.f32.mrb[0].mxu0
      %6662 = vmatprep.mubr.f32.mxu0 0.0
      %6663 = vmatmul.mubr.f32.gmra.mrb[0].mxu0 %v6302
      %v6664 = vpop.f32.mrb[0].mxu0
      %v6665 = vadd.f32 %v5751, %v6664
      %v6666 = vpop.f32.mrb[0].mxu0
      %6667 = vmatprep.mubr.f32.mxu0 0.0
      %6668 = vmatmul.mubr.f32.gmra.mrb[0].mxu0 %v6304
      %v6669 = vpop.f32.mrb[0].mxu0
      %v6670 = vadd.f32 %v5756, %v6669
      %v6671 = vpop.f32.mrb[0].mxu0
      %6672 = vmatprep.mubr.f32.mxu0 0.0
      %6673 = vmatmul.mubr.f32.gmra.mrb[0].mxu0 %v6306
      %v6674 = vpop.f32.mrb[0].mxu0
      %v6675 = vadd.f32 %v5761, %v6674
      %v6676 = vpop.f32.mrb[0].mxu0
      %6677 = vmatprep.mubr.f32.mxu0 0.0
      %6678 = vmatmul.mubr.f32.gmra.mrb[0].mxu0 %v6308
      %v6679 = vpop.f32.mrb[0].mxu0
      %v6680 = vadd.f32 %v5766, %v6679
      %v6681 = vpop.f32.mrb[0].mxu0
      %6682 = vmatprep.mubr.f32.mxu0 0.0
      %6683 = vmatmul.mubr.f32.gmra.mrb[0].mxu0 %v6310
      %v6684 = vpop.f32.mrb[0].mxu0
      %v6685 = vadd.f32 %v5771, %v6684
      %v6686 = vpop.f32.mrb[0].mxu0
      %6687 = vmatprep.mubr.f32.mxu0 0.0
      %6688 = vmatmul.mubr.f32.gmra.mrb[0].mxu0 %v6312
      %v6689 = vpop.f32.mrb[0].mxu0
      %v6690 = vadd.f32 %v5776, %v6689
      %v6691 = vpop.f32.mrb[0].mxu0
      %6692 = vmatprep.mubr.f32.mxu0 0.0
      %6693 = vmatmul.mubr.f32.gmra.mrb[0].mxu0 %v6314
      %v6694 = vpop.f32.mrb[0].mxu0
      %v6695 = vadd.f32 %v5781, %v6694
      %v6696 = vpop.f32.mrb[0].mxu0
      %6697 = vmatprep.mubr.f32.mxu0 0.0
      %6698 = vmatmul.mubr.f32.gmra.mrb[0].mxu0 %v6316
      %v6699 = vpop.f32.mrb[0].mxu0
      %v6700 = vadd.f32 %v5786, %v6699
      %v6701 = vpop.f32.mrb[0].mxu0
      %6702 = vmatprep.mubr.f32.mxu0 0.0
      %6703 = vmatmul.mubr.f32.gmra.mrb[0].mxu0 %v6318
      %v6704 = vpop.f32.mrb[0].mxu0
      %v6705 = vadd.f32 %v5791, %v6704
      %v6706 = vpop.f32.mrb[0].mxu0
      %6707 = vmatprep.mubr.f32.mxu0 0.0
      %6708 = vmatmul.mubr.f32.gmra.mrb[0].mxu0 %v6320
      %v6709 = vpop.f32.mrb[0].mxu0
      %v6710 = vadd.f32 %v5796, %v6709
      %v6711 = vpop.f32.mrb[0].mxu0
      %6712 = vmatprep.mubr.f32.mxu0 0.0
      %6713 = vmatmul.mubr.f32.gmra.mrb[0].mxu0 %v6322
      %v6714 = vpop.f32.mrb[0].mxu0
      %v6715 = vadd.f32 %v5801, %v6714
      %v6716 = vpop.f32.mrb[0].mxu0
      %6717 = vmatprep.mubr.f32.mxu0 0.0
      %6718 = vmatmul.mubr.f32.gmra.mrb[0].mxu0 %v6324
      %v6719 = vpop.f32.mrb[0].mxu0
      %v6720 = vadd.f32 %v5806, %v6719
      %v6721 = vpop.f32.mrb[0].mxu0
      %6722 = vmatprep.mubr.f32.mxu0 0.0
      %6723 = vmatmul.mubr.f32.gmra.mrb[0].mxu0 %v6326
      %v6724 = vpop.f32.mrb[0].mxu0
      %v6725 = vadd.f32 %v5811, %v6724
      %v6726 = vpop.f32.mrb[0].mxu0
      %6727 = vmatprep.mubr.f32.mxu0 0.0
      %6728 = vmatmul.mubr.f32.gmra.mrb[0].mxu0 %v6328
      %v6729 = vpop.f32.mrb[0].mxu0
      %v6730 = vadd.f32 %v5816, %v6729
      %v6731 = vpop.f32.mrb[0].mxu0
      %6732 = vmatprep.mubr.f32.mxu0 0.0
      %6733 = vmatmul.mubr.f32.gmra.mrb[0].mxu0 %v6330
      %v6734 = vpop.f32.mrb[0].mxu0
      %v6735 = vadd.f32 %v5821, %v6734
      %v6736 = vpop.f32.mrb[0].mxu0
      %6737 = vmatprep.mubr.f32.mxu0 0.0
      %6738 = vmatmul.mubr.f32.gmra.mrb[0].mxu0 %v6332
      %v6739 = vpop.f32.mrb[0].mxu0
      %v6740 = vadd.f32 %v5826, %v6739
      %v6741 = vpop.f32.mrb[0].mxu0
      %6742 = vmatprep.mubr.f32.mxu0 0.0
      %6743 = vmatmul.mubr.f32.gmra.mrb[0].mxu0 %v6334
      %v6744 = vpop.f32.mrb[0].mxu0
      %v6745 = vadd.f32 %v5831, %v6744
      %v6746 = vpop.f32.mrb[0].mxu0
      %6747 = vmatprep.mubr.f32.mxu0 0.0
      %6748 = vmatmul.mubr.f32.gmra.mrb[0].mxu0 %v6336
      %v6749 = vpop.f32.mrb[0].mxu0
      %v6750 = vadd.f32 %v5836, %v6749
      %v6751 = vpop.f32.mrb[0].mxu0
      %6752 = vmatprep.mubr.f32.mxu0 0.0
      %6753 = vmatmul.mubr.f32.gmra.mrb[0].mxu0 %v6338
      %v6754 = vpop.f32.mrb[0].mxu0
      %v6755 = vadd.f32 %v5841, %v6754
      %v6756 = vpop.f32.mrb[0].mxu0
      %6757 = vmatprep.mubr.f32.mxu0 0.0
      %6758 = vmatmul.mubr.f32.gmra.mrb[0].mxu0 %v6340
      %v6759 = vpop.f32.mrb[0].mxu0
      %v6760 = vadd.f32 %v5846, %v6759
      %v6761 = vpop.f32.mrb[0].mxu0
      %6762 = vmatprep.mubr.f32.mxu0 0.0
      %6763 = vmatmul.mubr.f32.gmra.mrb[0].mxu0 %v6342
      %v6764 = vpop.f32.mrb[0].mxu0
      %v6765 = vadd.f32 %v5851, %v6764
      %v6766 = vpop.f32.mrb[0].mxu0
      %6767 = vmatprep.mubr.f32.mxu0 0.0
      %6768 = vmatmul.mubr.f32.gmra.mrb[0].mxu0 %v6344
      %v6769 = vpop.f32.mrb[0].mxu0
      %v6770 = vadd.f32 %v5856, %v6769
      %v6771 = vpop.f32.mrb[0].mxu0
      %6772 = vmatprep.mubr.f32.mxu0 0.0
      %6773 = vmatmul.mubr.f32.gmra.mrb[0].mxu0 %v6346
      %v6774 = vpop.f32.mrb[0].mxu0
      %v6775 = vadd.f32 %v5861, %v6774
      %v6776 = vpop.f32.mrb[0].mxu0
      %6777 = vmatprep.mubr.f32.mxu0 0.0
      %6778 = vmatmul.mubr.f32.gmra.mrb[0].mxu0 %v6348
      %v6779 = vpop.f32.mrb[0].mxu0
      %v6780 = vadd.f32 %v5866, %v6779
      %v6781 = vpop.f32.mrb[0].mxu0
      %6782 = vmatprep.mubr.f32.mxu0 0.0
      %6783 = vmatmul.mubr.f32.gmra.mrb[0].mxu0 %v6350
      %v6784 = vpop.f32.mrb[0].mxu0
      %v6785 = vadd.f32 %v5871, %v6784
      %v6786 = vpop.f32.mrb[0].mxu0
      %6787 = vmatprep.mubr.f32.mxu0 0.0
      %6788 = vmatmul.mubr.f32.gmra.mrb[0].mxu0 %v6352
      %v6789 = vpop.f32.mrb[0].mxu0
      %v6790 = vadd.f32 %v5876, %v6789
      %v6791 = vpop.f32.mrb[0].mxu0
      %6792 = vmatprep.mubr.f32.mxu0 0.0
      %6793 = vmatmul.mubr.f32.gmra.mrb[0].mxu0 %v6354
      %v6794 = vpop.f32.mrb[0].mxu0
      %v6795 = vadd.f32 %v5881, %v6794
      %v6796 = vpop.f32.mrb[0].mxu0
      %6797 = vmatprep.mubr.f32.mxu0 0.0
      %6798 = vmatmul.mubr.f32.gmra.mrb[0].mxu0 %v6356
      %v6799 = vpop.f32.mrb[0].mxu0
      %v6800 = vadd.f32 %v5886, %v6799
      %v6801 = vpop.f32.mrb[0].mxu0
      %6802 = vmatprep.mubr.f32.mxu0 0.0
      %6803 = vmatmul.mubr.f32.gmra.mrb[0].mxu0 %v6358
      %v6804 = vpop.f32.mrb[0].mxu0
      %v6805 = vadd.f32 %v5891, %v6804
      %v6806 = vpop.f32.mrb[0].mxu0
      %6807 = vmatprep.mubr.f32.mxu0 0.0
      %6808 = vmatmul.mubr.f32.gmra.mrb[0].mxu0 %v6360
      %v6809 = vpop.f32.mrb[0].mxu0
      %v6810 = vadd.f32 %v5896, %v6809
      %v6811 = vpop.f32.mrb[0].mxu0
      %6812 = vmatprep.mubr.f32.mxu0 0.0
      %6813 = vmatmul.mubr.f32.gmra.mrb[0].mxu0 %v6362
      %v6814 = vpop.f32.mrb[0].mxu0
      %v6815 = vadd.f32 %v5901, %v6814
      %v6816 = vpop.f32.mrb[0].mxu0
      %6817 = vmatprep.mubr.f32.mxu0 0.0
      %6818 = vmatmul.mubr.f32.gmra.mrb[0].mxu0 %v6364
      %v6819 = vpop.f32.mrb[0].mxu0
      %v6820 = vadd.f32 %v5906, %v6819
      %v6821 = vpop.f32.mrb[0].mxu0
      %6822 = vmatprep.mubr.f32.mxu0 0.0
      %6823 = vmatmul.mubr.f32.gmra.mrb[0].mxu0 %v6366
      %v6824 = vpop.f32.mrb[0].mxu0
      %v6825 = vadd.f32 %v5911, %v6824
      %v6826 = vpop.f32.mrb[0].mxu0
      %6827 = vmatprep.mubr.f32.mxu0 0.0
      %6828 = vmatmul.mubr.f32.gmra.mrb[0].mxu0 %v6368
      %v6829 = vpop.f32.mrb[0].mxu0
      %v6830 = vadd.f32 %v5916, %v6829
      %v6831 = vpop.f32.mrb[0].mxu0
      %6832 = vmatprep.mubr.f32.mxu0 0.0
      %6833 = vmatmul.mubr.f32.gmra.mrb[0].mxu0 %v6370
      %v6834 = vpop.f32.mrb[0].mxu0
      %v6835 = vadd.f32 %v5921, %v6834
      %v6836 = vpop.f32.mrb[0].mxu0
      %6837 = vmatprep.mubr.f32.mxu0 0.0
      %6838 = vmatmul.mubr.f32.gmra.mrb[0].mxu0 %v6372
      %v6839 = vpop.f32.mrb[0].mxu0
      %v6840 = vadd.f32 %v5926, %v6839
      %v6841 = vpop.f32.mrb[0].mxu0
      %6842 = vmatprep.mubr.f32.mxu0 0.0
      %6843 = vmatmul.mubr.f32.gmra.mrb[0].mxu0 %v6374
      %v6844 = vpop.f32.mrb[0].mxu0
      %v6845 = vadd.f32 %v5931, %v6844
      %v6846 = vpop.f32.mrb[0].mxu0
      %6847 = vmatprep.mubr.f32.mxu0 0.0
      %6848 = vmatmul.mubr.f32.gmra.mrb[0].mxu0 %v6376
      %v6849 = vpop.f32.mrb[0].mxu0
      %v6850 = vadd.f32 %v5936, %v6849
      %v6851 = vpop.f32.mrb[0].mxu0
      %6852 = vmatprep.mubr.f32.mxu0 0.0
      %6853 = vmatmul.mubr.f32.gmra.mrb[0].mxu0 %v6378
      %v6854 = vpop.f32.mrb[0].mxu0
      %v6855 = vadd.f32 %v5941, %v6854
      %v6856 = vpop.f32.mrb[0].mxu0
      %6857 = vmatprep.mubr.f32.mxu0 0.0
      %6858 = vmatmul.mubr.f32.gmra.mrb[0].mxu0 %v6380
      %v6859 = vpop.f32.mrb[0].mxu0
      %v6860 = vadd.f32 %v5946, %v6859
      %v6861 = vpop.f32.mrb[0].mxu0
      %6862 = vmatprep.mubr.f32.mxu0 0.0
      %6863 = vmatmul.mubr.f32.gmra.mrb[0].mxu0 %v6382
      %v6864 = vpop.f32.mrb[0].mxu0
      %v6865 = vadd.f32 %v5951, %v6864
      %v6866 = vpop.f32.mrb[0].mxu0
      %6867 = vmatprep.mubr.f32.mxu0 0.0
      %6868 = vmatmul.mubr.f32.gmra.mrb[0].mxu0 %v6384
      %v6869 = vpop.f32.mrb[0].mxu0
      %v6870 = vadd.f32 %v5956, %v6869
      %v6871 = vpop.f32.mrb[0].mxu0
      %6872 = vmatprep.mubr.f32.mxu0 0.0
      %6873 = vmatmul.mubr.f32.gmra.mrb[0].mxu0 %v6386
      %v6874 = vpop.f32.mrb[0].mxu0
      %v6875 = vadd.f32 %v5961, %v6874
      %v6876 = vpop.f32.mrb[0].mxu0
      %6877 = vmatprep.mubr.f32.mxu0 0.0
      %6878 = vmatmul.mubr.f32.gmra.mrb[0].mxu0 %v6388
      %v6879 = vpop.f32.mrb[0].mxu0
      %v6880 = vadd.f32 %v5966, %v6879
      %v6881 = vpop.f32.mrb[0].mxu0
      %6882 = vmatprep.mubr.f32.mxu0 0.0
      %6883 = vmatmul.mubr.f32.gmra.mrb[0].mxu0 %v6390
      %v6884 = vpop.f32.mrb[0].mxu0
      %v6885 = vadd.f32 %v5971, %v6884
      %v6886 = vpop.f32.mrb[0].mxu0
      %6887 = vmatprep.mubr.f32.mxu0 0.0
      %6888 = vmatmul.mubr.f32.gmra.mrb[0].mxu0 %v6392
      %v6889 = vpop.f32.mrb[0].mxu0
      %v6890 = vadd.f32 %v5976, %v6889
      %v6891 = vpop.f32.mrb[0].mxu0
      %6892 = vmatprep.mubr.f32.mxu0 0.0
      %6893 = vmatmul.mubr.f32.gmra.mrb[0].mxu0 %v6394
      %v6894 = vpop.f32.mrb[0].mxu0
      %v6895 = vadd.f32 %v5981, %v6894
      %v6896 = vpop.f32.mrb[0].mxu0
      %6897 = vmatprep.mubr.f32.mxu0 0.0
      %6898 = vmatmul.mubr.f32.gmra.mrb[0].mxu0 %v6396
      %v6899 = vpop.f32.mrb[0].mxu0
      %v6900 = vadd.f32 %v5986, %v6899
      %v6901 = vpop.f32.mrb[0].mxu0
      %6902 = vmatprep.mubr.f32.mxu0 0.0
      %6903 = vmatmul.mubr.f32.gmra.mrb[0].mxu0 %v6398
      %v6904 = vpop.f32.mrb[0].mxu0
      %v6905 = vadd.f32 %v5991, %v6904
      %v6906 = vpop.f32.mrb[0].mxu0
      %6907 = vmatprep.mubr.f32.mxu0 0.0
      %6908 = vmatmul.mubr.f32.gmra.mrb[0].mxu0 %v6400
      %v6909 = vpop.f32.mrb[0].mxu0
      %v6910 = vadd.f32 %v5996, %v6909
      %v6911 = vpop.f32.mrb[0].mxu0
      %6912 = vmatprep.mubr.f32.mxu0 0.0
      %6913 = vmatmul.mubr.f32.gmra.mrb[0].mxu0 %v6402
      %v6914 = vpop.f32.mrb[0].mxu0
      %v6915 = vadd.f32 %v6001, %v6914
      %v6916 = vpop.f32.mrb[0].mxu0
      %6917 = vmatprep.mubr.f32.mxu0 0.0
      %6918 = vmatmul.mubr.f32.gmra.mrb[0].mxu0 %v6404
      %v6919 = vpop.f32.mrb[0].mxu0
      %v6920 = vadd.f32 %v6006, %v6919
      %v6921 = vpop.f32.mrb[0].mxu0
      %6922 = vmatprep.mubr.f32.mxu0 0.0
      %6923 = vmatmul.mubr.f32.gmra.mrb[0].mxu0 %v6406
      %v6924 = vpop.f32.mrb[0].mxu0
      %v6925 = vadd.f32 %v6011, %v6924
      %v6926 = vpop.f32.mrb[0].mxu0
      %6927 = vmatprep.mubr.f32.mxu0 0.0
      %6928 = vmatmul.mubr.f32.gmra.mrb[0].mxu0 %v6408
      %v6929 = vpop.f32.mrb[0].mxu0
      %v6930 = vadd.f32 %v6016, %v6929
      %v6931 = vpop.f32.mrb[0].mxu0
      %6932 = vmatprep.mubr.f32.mxu0 0.0
      %6933 = vmatmul.mubr.f32.gmra.mrb[0].mxu0 %v6410
      %v6934 = vpop.f32.mrb[0].mxu0
      %v6935 = vadd.f32 %v6021, %v6934
      %v6936 = vpop.f32.mrb[0].mxu0
      %6937 = vmatprep.mubr.f32.mxu0 0.0
      %6938 = vmatmul.mubr.f32.gmra.mrb[0].mxu0 %v6412
      %v6939 = vpop.f32.mrb[0].mxu0
      %v6940 = vadd.f32 %v6026, %v6939
      %v6941 = vpop.f32.mrb[0].mxu0
      %6942 = vmatprep.mubr.f32.mxu0 0.0
      %6943 = vmatmul.mubr.f32.gmra.mrb[0].mxu0 %v6414
      %v6944 = vpop.f32.mrb[0].mxu0
      %v6945 = vadd.f32 %v6031, %v6944
      %v6946 = vpop.f32.mrb[0].mxu0
      %6947 = vmatprep.mubr.f32.mxu0 0.0
      %6948 = vmatmul.mubr.f32.gmra.mrb[0].mxu0 %v6416
      %v6949 = vpop.f32.mrb[0].mxu0
      %v6950 = vadd.f32 %v6036, %v6949
      %v6951 = vpop.f32.mrb[0].mxu0
      %6952 = vmatprep.mubr.f32.mxu0 0.0
      %6953 = vmatmul.mubr.f32.gmra.mrb[0].mxu0 %v6418
      %v6954 = vpop.f32.mrb[0].mxu0
      %v6955 = vadd.f32 %v6041, %v6954
      %v6956 = vpop.f32.mrb[0].mxu0
      %6957 = vmatprep.mubr.f32.mxu0 0.0
      %6958 = vmatmul.mubr.f32.gmra.mrb[0].mxu0 %v6420
      %v6959 = vpop.f32.mrb[0].mxu0
      %v6960 = vadd.f32 %v6046, %v6959
      %v6961 = vpop.f32.mrb[0].mxu0
      %6962 = vmatprep.mubr.f32.mxu0 0.0
      %6963 = vmatmul.mubr.f32.gmra.mrb[0].mxu0 %v6422
      %v6964 = vpop.f32.mrb[0].mxu0
      %v6965 = vadd.f32 %v6051, %v6964
      %v6966 = vpop.f32.mrb[0].mxu0
      %6967 = vmatprep.mubr.f32.mxu0 0.0
      %6968 = vmatmul.mubr.f32.gmra.mrb[0].mxu0 %v6424
      %v6969 = vpop.f32.mrb[0].mxu0
      %v6970 = vadd.f32 %v6056, %v6969
      %v6971 = vpop.f32.mrb[0].mxu0
      %6972 = vmatprep.mubr.f32.mxu0 0.0
      %6973 = vmatmul.mubr.f32.gmra.mrb[0].mxu0 %v6426
      %v6974 = vpop.f32.mrb[0].mxu0
      %v6975 = vadd.f32 %v6061, %v6974
      %v6976 = vpop.f32.mrb[0].mxu0
      %6977 = vmatprep.mubr.f32.mxu0 0.0
      %6978 = vmatmul.mubr.f32.gmra.mrb[0].mxu0 %v6428
      %v6979 = vpop.f32.mrb[0].mxu0
      %v6980 = vadd.f32 %v6066, %v6979
      %v6981 = vpop.f32.mrb[0].mxu0
      %6982 = vmatprep.mubr.f32.mxu0 0.0
      %6983 = vmatmul.mubr.f32.gmra.mrb[0].mxu0 %v6430
      %v6984 = vpop.f32.mrb[0].mxu0
      %v6985 = vadd.f32 %v6071, %v6984
      %v6986 = vpop.f32.mrb[0].mxu0
      %6987 = vmatprep.mubr.f32.mxu0 0.0
      %6988 = vmatmul.mubr.f32.gmra.mrb[0].mxu0 %v6432
      %v6989 = vpop.f32.mrb[0].mxu0
      %v6990 = vadd.f32 %v6076, %v6989
      %v6991 = vpop.f32.mrb[0].mxu0
      %6992 = vmatprep.mubr.f32.mxu0 0.0
      %6993 = vmatmul.mubr.f32.gmra.mrb[0].mxu0 %v6434
      %v6994 = vpop.f32.mrb[0].mxu0
      %v6995 = vadd.f32 %v6081, %v6994
      %v6996 = vpop.f32.mrb[0].mxu0
      %6997 = vmatprep.mubr.f32.mxu0 0.0
      %6998 = vmatmul.mubr.f32.gmra.mrb[0].mxu0 %v6436
      %v6999 = vpop.f32.mrb[0].mxu0
      %v7000 = vadd.f32 %v6086, %v6999
      %v7001 = vpop.f32.mrb[0].mxu0
      %7002 = vmatprep.mubr.f32.mxu0 0.0
      %7003 = vmatmul.mubr.f32.gmra.mrb[0].mxu0 %v6438
      %v7004 = vpop.f32.mrb[0].mxu0
      %v7005 = vadd.f32 %v6091, %v7004
      %v7006 = vpop.f32.mrb[0].mxu0
      %7007 = vmatprep.mubr.f32.mxu0 0.0
      %7008 = vmatmul.mubr.f32.gmra.mrb[0].mxu0 %v6440
      %v7009 = vpop.f32.mrb[0].mxu0
      %v7010 = vadd.f32 %v6096, %v7009
      %v7011 = vpop.f32.mrb[0].mxu0
      %7012 = vmatprep.mubr.f32.mxu0 0.0
      %7013 = vmatmul.mubr.f32.gmra.mrb[0].mxu0 %v6442
      %v7014 = vpop.f32.mrb[0].mxu0
      %v7015 = vadd.f32 %v6101, %v7014
      %v7016 = vpop.f32.mrb[0].mxu0
      %7017 = vmatprep.mubr.f32.mxu0 0.0
      %7018 = vmatmul.mubr.f32.gmra.mrb[0].mxu0 %v6444
      %v7019 = vpop.f32.mrb[0].mxu0
      %v7020 = vadd.f32 %v6106, %v7019
      %v7021 = vpop.f32.mrb[0].mxu0
      %7022 = vmatprep.mubr.f32.mxu0 0.0
      %7023 = vmatmul.mubr.f32.gmra.mrb[0].mxu0 %v6446
      %v7024 = vpop.f32.mrb[0].mxu0
      %v7025 = vadd.f32 %v6111, %v7024
      %v7026 = vpop.f32.mrb[0].mxu0
      %7027 = vmatprep.mubr.f32.mxu0 0.0
      %7028 = vmatmul.mubr.f32.gmra.mrb[0].mxu0 %v6448
      %v7029 = vpop.f32.mrb[0].mxu0
      %v7030 = vadd.f32 %v6116, %v7029
      %v7031 = vpop.f32.mrb[0].mxu0
      %7032 = vmatprep.mubr.f32.mxu0 0.0
      %7033 = vmatmul.mubr.f32.gmra.mrb[0].mxu0 %v6450
      %v7034 = vpop.f32.mrb[0].mxu0
      %v7035 = vadd.f32 %v6121, %v7034
      %v7036 = vpop.f32.mrb[0].mxu0
      %7037 = vmatprep.mubr.f32.mxu0 0.0
      %7038 = vmatmul.mubr.f32.gmra.mrb[0].mxu0 %v6452
      %v7039 = vpop.f32.mrb[0].mxu0
      %v7040 = vadd.f32 %v6126, %v7039
      %v7041 = vpop.f32.mrb[0].mxu0
      %7042 = vmatprep.mubr.f32.mxu0 0.0
      %7043 = vmatmul.mubr.f32.gmra.mrb[0].mxu0 %v6454
      %v7044 = vpop.f32.mrb[0].mxu0
      %v7045 = vadd.f32 %v6131, %v7044
      %v7046 = vpop.f32.mrb[0].mxu0
      %7047 = vmatprep.mubr.f32.mxu0 0.0
      %7048 = vmatmul.mubr.f32.gmra.mrb[0].mxu0 %v6456
      %v7049 = vpop.f32.mrb[0].mxu0
      %v7050 = vadd.f32 %v6136, %v7049
      %v7051 = vpop.f32.mrb[0].mxu0
      %7052 = vmatprep.mubr.f32.mxu0 0.0
      %7053 = vmatmul.mubr.f32.gmra.mrb[0].mxu0 %v6458
      %v7054 = vpop.f32.mrb[0].mxu0
      %v7055 = vadd.f32 %v6141, %v7054
      %v7056 = vpop.f32.mrb[0].mxu0
      %7057 = vmatprep.mubr.f32.mxu0 0.0
      %7058 = vmatmul.mubr.f32.gmra.mrb[0].mxu0 %v6460
      %v7059 = vpop.f32.mrb[0].mxu0
      %v7060 = vadd.f32 %v6146, %v7059
      %v7061 = vpop.f32.mrb[0].mxu0
      %7062 = vmatprep.mubr.f32.mxu0 0.0
      %7063 = vmatmul.mubr.f32.gmra.mrb[0].mxu0 %v6462
      %v7064 = vpop.f32.mrb[0].mxu0
      %v7065 = vadd.f32 %v6151, %v7064
      %v7066 = vpop.f32.mrb[0].mxu0
      %7067 = vmatprep.mubr.f32.mxu0 0.0
      %7068 = vmatmul.mubr.f32.gmra.mrb[0].mxu0 %v6464
      %v7069 = vpop.f32.mrb[0].mxu0
      %v7070 = vadd.f32 %v6156, %v7069
      %v7071 = vpop.f32.mrb[0].mxu0
      %7072 = vmatprep.mubr.f32.mxu0 0.0
      %7073 = vmatmul.mubr.f32.gmra.mrb[0].mxu0 %v6466
      %v7074 = vpop.f32.mrb[0].mxu0
      %v7075 = vadd.f32 %v6161, %v7074
      %v7076 = vpop.f32.mrb[0].mxu0
      %7077 = vmatprep.mubr.f32.mxu0 0.0
      %7078 = vmatmul.mubr.f32.gmra.mrb[0].mxu0 %v6468
      %v7079 = vpop.f32.mrb[0].mxu0
      %v7080 = vadd.f32 %v6166, %v7079
      %v7081 = vpop.f32.mrb[0].mxu0
      %7082 = vmatprep.mubr.f32.mxu0 0.0
      %7083 = vmatmul.mubr.f32.gmra.mrb[0].mxu0 %v6470
      %v7084 = vpop.f32.mrb[0].mxu0
      %v7085 = vadd.f32 %v6171, %v7084
      %v7086 = vpop.f32.mrb[0].mxu0
      %7087 = vmatprep.mubr.f32.mxu0 0.0
      %7088 = vmatmul.mubr.f32.gmra.mrb[0].mxu0 %v6472
      %v7089 = vpop.f32.mrb[0].mxu0
      %v7090 = vadd.f32 %v6176, %v7089
      %v7091 = vpop.f32.mrb[0].mxu0
      %7092 = vmatprep.mubr.f32.mxu0 0.0
      %7093 = vmatmul.mubr.f32.gmra.mrb[0].mxu0 %v6474
      %v7094 = vpop.f32.mrb[0].mxu0
      %v7095 = vadd.f32 %v6181, %v7094
      %v7096 = vpop.f32.mrb[0].mxu0
      %7097 = vmatprep.mubr.f32.mxu0 0.0
      %7098 = vmatmul.mubr.f32.gmra.mrb[0].mxu0 %v6476
      %v7099 = vpop.f32.mrb[0].mxu0
      %v7100 = vadd.f32 %v6186, %v7099
      %v7101 = vpop.f32.mrb[0].mxu0
      %7102 = vmatprep.mubr.f32.mxu0 0.0
      %7103 = vmatmul.mubr.f32.gmra.mrb[0].mxu0 %v6478
      %v7104 = vpop.f32.mrb[0].mxu0
      %v7105 = vadd.f32 %v6191, %v7104
      %v7106 = vpop.f32.mrb[0].mxu0
      %7107 = vdwg.mxu0
      %v7109 = vlaneseq
      %v7110 = vshrl.u32 %v7109, 7
      %v7111 = vsub.s32 0, %v7110
      %v7112 = vrot.slane %v5529, %v7111
      %v7114 = vadd.f32 %v6640, %v7112
      %v7115 = vadd.f32 %v6645, %v7112
      %v7116 = vadd.f32 %v6650, %v7112
      %v7117 = vadd.f32 %v6655, %v7112
      %v7118 = vadd.f32 %v6660, %v7112
      %v7119 = vadd.f32 %v6665, %v7112
      %v7120 = vadd.f32 %v6670, %v7112
      %v7121 = vadd.f32 %v6675, %v7112
      %v7122 = vadd.f32 %v6680, %v7112
      %v7123 = vadd.f32 %v6685, %v7112
      %v7124 = vadd.f32 %v6690, %v7112
      %v7125 = vadd.f32 %v6695, %v7112
      %v7126 = vadd.f32 %v6700, %v7112
      %v7127 = vadd.f32 %v6705, %v7112
      %v7128 = vadd.f32 %v6710, %v7112
      %v7129 = vadd.f32 %v6715, %v7112
      %v7130 = vadd.f32 %v6720, %v7112
      %v7131 = vadd.f32 %v6725, %v7112
      %v7132 = vadd.f32 %v6730, %v7112
      %v7133 = vadd.f32 %v6735, %v7112
      %v7134 = vadd.f32 %v6740, %v7112
      %v7135 = vadd.f32 %v6745, %v7112
      %v7136 = vadd.f32 %v6750, %v7112
      %v7137 = vadd.f32 %v6755, %v7112
      %v7138 = vadd.f32 %v6760, %v7112
      %v7139 = vadd.f32 %v6765, %v7112
      %v7140 = vadd.f32 %v6770, %v7112
      %v7141 = vadd.f32 %v6775, %v7112
      %v7142 = vadd.f32 %v6780, %v7112
      %v7143 = vadd.f32 %v6785, %v7112
      %v7144 = vadd.f32 %v6790, %v7112
      %v7145 = vadd.f32 %v6795, %v7112
      %v7146 = vadd.f32 %v6800, %v7112
      %v7147 = vadd.f32 %v6805, %v7112
      %v7148 = vadd.f32 %v6810, %v7112
      %v7149 = vadd.f32 %v6815, %v7112
      %v7150 = vadd.f32 %v6820, %v7112
      %v7151 = vadd.f32 %v6825, %v7112
      %v7152 = vadd.f32 %v6830, %v7112
      %v7153 = vadd.f32 %v6835, %v7112
      %v7154 = vadd.f32 %v6840, %v7112
      %v7155 = vadd.f32 %v6845, %v7112
      %v7156 = vadd.f32 %v6850, %v7112
      %v7157 = vadd.f32 %v6855, %v7112
      %v7158 = vadd.f32 %v6860, %v7112
      %v7159 = vadd.f32 %v6865, %v7112
      %v7160 = vadd.f32 %v6870, %v7112
      %v7161 = vadd.f32 %v6875, %v7112
      %v7162 = vadd.f32 %v6880, %v7112
      %v7163 = vadd.f32 %v6885, %v7112
      %v7164 = vadd.f32 %v6890, %v7112
      %v7165 = vadd.f32 %v6895, %v7112
      %v7166 = vadd.f32 %v6900, %v7112
      %v7167 = vadd.f32 %v6905, %v7112
      %v7168 = vadd.f32 %v6910, %v7112
      %v7169 = vadd.f32 %v6915, %v7112
      %v7170 = vadd.f32 %v6920, %v7112
      %v7171 = vadd.f32 %v6925, %v7112
      %v7172 = vadd.f32 %v6930, %v7112
      %v7173 = vadd.f32 %v6935, %v7112
      %v7174 = vadd.f32 %v6940, %v7112
      %v7175 = vadd.f32 %v6945, %v7112
      %v7176 = vadd.f32 %v6950, %v7112
      %v7177 = vadd.f32 %v6955, %v7112
      %v7178 = vadd.f32 %v6960, %v7112
      %v7179 = vadd.f32 %v6965, %v7112
      %v7180 = vadd.f32 %v6970, %v7112
      %v7181 = vadd.f32 %v6975, %v7112
      %v7182 = vadd.f32 %v6980, %v7112
      %v7183 = vadd.f32 %v6985, %v7112
      %v7184 = vadd.f32 %v6990, %v7112
      %v7185 = vadd.f32 %v6995, %v7112
      %v7186 = vadd.f32 %v7000, %v7112
      %v7187 = vadd.f32 %v7005, %v7112
      %v7188 = vadd.f32 %v7010, %v7112
      %v7189 = vadd.f32 %v7015, %v7112
      %v7190 = vadd.f32 %v7020, %v7112
      %v7191 = vadd.f32 %v7025, %v7112
      %v7192 = vadd.f32 %v7030, %v7112
      %v7193 = vadd.f32 %v7035, %v7112
      %v7194 = vadd.f32 %v7040, %v7112
      %v7195 = vadd.f32 %v7045, %v7112
      %v7196 = vadd.f32 %v7050, %v7112
      %v7197 = vadd.f32 %v7055, %v7112
      %v7198 = vadd.f32 %v7060, %v7112
      %v7199 = vadd.f32 %v7065, %v7112
      %v7200 = vadd.f32 %v7070, %v7112
      %v7201 = vadd.f32 %v7075, %v7112
      %v7202 = vadd.f32 %v7080, %v7112
      %v7203 = vadd.f32 %v7085, %v7112
      %v7204 = vadd.f32 %v7090, %v7112
      %v7205 = vadd.f32 %v7095, %v7112
      %v7206 = vadd.f32 %v7100, %v7112
      %v7207 = vadd.f32 %v7105, %v7112
      %v7208 = vmax.f32 %v7114, 0.0
      %v7209 = vmax.f32 %v7115, 0.0
      %v7210 = vmax.f32 %v7116, 0.0
      %v7211 = vmax.f32 %v7117, 0.0
      %v7212 = vmax.f32 %v7118, 0.0
      %v7213 = vmax.f32 %v7119, 0.0
      %v7214 = vmax.f32 %v7120, 0.0
      %v7215 = vmax.f32 %v7121, 0.0
      %v7216 = vmax.f32 %v7122, 0.0
      %v7217 = vmax.f32 %v7123, 0.0
      %v7218 = vmax.f32 %v7124, 0.0
      %v7219 = vmax.f32 %v7125, 0.0
      %v7220 = vmax.f32 %v7126, 0.0
      %v7221 = vmax.f32 %v7127, 0.0
      %v7222 = vmax.f32 %v7128, 0.0
      %v7223 = vmax.f32 %v7129, 0.0
      %v7224 = vmax.f32 %v7130, 0.0
      %v7225 = vmax.f32 %v7131, 0.0
      %v7226 = vmax.f32 %v7132, 0.0
      %v7227 = vmax.f32 %v7133, 0.0
      %v7228 = vmax.f32 %v7134, 0.0
      %v7229 = vmax.f32 %v7135, 0.0
      %v7230 = vmax.f32 %v7136, 0.0
      %v7231 = vmax.f32 %v7137, 0.0
      %v7232 = vmax.f32 %v7138, 0.0
      %v7233 = vmax.f32 %v7139, 0.0
      %v7234 = vmax.f32 %v7140, 0.0
      %v7235 = vmax.f32 %v7141, 0.0
      %v7236 = vmax.f32 %v7142, 0.0
      %v7237 = vmax.f32 %v7143, 0.0
      %v7238 = vmax.f32 %v7144, 0.0
      %v7239 = vmax.f32 %v7145, 0.0
      %v7240 = vmax.f32 %v7146, 0.0
      %v7241 = vmax.f32 %v7147, 0.0
      %v7242 = vmax.f32 %v7148, 0.0
      %v7243 = vmax.f32 %v7149, 0.0
      %v7244 = vmax.f32 %v7150, 0.0
      %v7245 = vmax.f32 %v7151, 0.0
      %v7246 = vmax.f32 %v7152, 0.0
      %v7247 = vmax.f32 %v7153, 0.0
      %v7248 = vmax.f32 %v7154, 0.0
      %v7249 = vmax.f32 %v7155, 0.0
      %v7250 = vmax.f32 %v7156, 0.0
      %v7251 = vmax.f32 %v7157, 0.0
      %v7252 = vmax.f32 %v7158, 0.0
      %v7253 = vmax.f32 %v7159, 0.0
      %v7254 = vmax.f32 %v7160, 0.0
      %v7255 = vmax.f32 %v7161, 0.0
      %v7256 = vmax.f32 %v7162, 0.0
      %v7257 = vmax.f32 %v7163, 0.0
      %v7258 = vmax.f32 %v7164, 0.0
      %v7259 = vmax.f32 %v7165, 0.0
      %v7260 = vmax.f32 %v7166, 0.0
      %v7261 = vmax.f32 %v7167, 0.0
      %v7262 = vmax.f32 %v7168, 0.0
      %v7263 = vmax.f32 %v7169, 0.0
      %v7264 = vmax.f32 %v7170, 0.0
      %v7265 = vmax.f32 %v7171, 0.0
      %v7266 = vmax.f32 %v7172, 0.0
      %v7267 = vmax.f32 %v7173, 0.0
      %v7268 = vmax.f32 %v7174, 0.0
      %v7269 = vmax.f32 %v7175, 0.0
      %v7270 = vmax.f32 %v7176, 0.0
      %v7271 = vmax.f32 %v7177, 0.0
      %v7272 = vmax.f32 %v7178, 0.0
      %v7273 = vmax.f32 %v7179, 0.0
      %v7274 = vmax.f32 %v7180, 0.0
      %v7275 = vmax.f32 %v7181, 0.0
      %v7276 = vmax.f32 %v7182, 0.0
      %v7277 = vmax.f32 %v7183, 0.0
      %v7278 = vmax.f32 %v7184, 0.0
      %v7279 = vmax.f32 %v7185, 0.0
      %v7280 = vmax.f32 %v7186, 0.0
      %v7281 = vmax.f32 %v7187, 0.0
      %v7282 = vmax.f32 %v7188, 0.0
      %v7283 = vmax.f32 %v7189, 0.0
      %v7284 = vmax.f32 %v7190, 0.0
      %v7285 = vmax.f32 %v7191, 0.0
      %v7286 = vmax.f32 %v7192, 0.0
      %v7287 = vmax.f32 %v7193, 0.0
      %v7288 = vmax.f32 %v7194, 0.0
      %v7289 = vmax.f32 %v7195, 0.0
      %v7290 = vmax.f32 %v7196, 0.0
      %v7291 = vmax.f32 %v7197, 0.0
      %v7292 = vmax.f32 %v7198, 0.0
      %v7293 = vmax.f32 %v7199, 0.0
      %v7294 = vmax.f32 %v7200, 0.0
      %v7295 = vmax.f32 %v7201, 0.0
      %v7296 = vmax.f32 %v7202, 0.0
      %v7297 = vmax.f32 %v7203, 0.0
      %v7298 = vmax.f32 %v7204, 0.0
      %v7299 = vmax.f32 %v7205, 0.0
      %v7300 = vmax.f32 %v7206, 0.0
      %v7301 = vmax.f32 %v7207, 0.0
      %7302 = vst [vmem:[#allocation4 + $0x10] sm:$0xff] %v7208
      %7303 = vst [vmem:[#allocation4 + $0x20] sm:$0xff] %v7209
      %7304 = vst [vmem:[#allocation4 + $0x30] sm:$0xff] %v7210
      %7305 = vst [vmem:[#allocation4 + $0x40] sm:$0xff] %v7211
      %7306 = vst [vmem:[#allocation4 + $0x50] sm:$0xff] %v7212
      %7307 = vst [vmem:[#allocation4 + $0x60] sm:$0xff] %v7213
      %7308 = vst [vmem:[#allocation4 + $0x70] sm:$0xff] %v7214
      %7309 = vst [vmem:[#allocation4 + $0x80] sm:$0xff] %v7215
      %7310 = vst [vmem:[#allocation4 + $0x90] sm:$0xff] %v7216
      %7311 = vst [vmem:[#allocation4 + $0xa0] sm:$0xff] %v7217
      %7312 = vst [vmem:[#allocation4 + $0xb0] sm:$0xff] %v7218
      %7313 = vst [vmem:[#allocation4 + $0xc0] sm:$0xff] %v7219
      %7314 = vst [vmem:[#allocation4 + $0xd0] sm:$0xff] %v7220
      %7315 = vst [vmem:[#allocation4 + $0xe0] sm:$0xff] %v7221
      %7316 = vst [vmem:[#allocation4 + $0xf0] sm:$0xff] %v7222
      %7317 = vst [vmem:[#allocation4 + $0x100] sm:$0xff] %v7223
      %7318 = vst [vmem:[#allocation4 + $0x110] sm:$0xff] %v7224
      %7319 = vst [vmem:[#allocation4 + $0x120] sm:$0xff] %v7225
      %7320 = vst [vmem:[#allocation4 + $0x130] sm:$0xff] %v7226
      %7321 = vst [vmem:[#allocation4 + $0x140] sm:$0xff] %v7227
      %7322 = vst [vmem:[#allocation4 + $0x150] sm:$0xff] %v7228
      %7323 = vst [vmem:[#allocation4 + $0x160] sm:$0xff] %v7229
      %7324 = vst [vmem:[#allocation4 + $0x170] sm:$0xff] %v7230
      %7325 = vst [vmem:[#allocation4 + $0x180] sm:$0xff] %v7231
      %7326 = vst [vmem:[#allocation4 + $0x190] sm:$0xff] %v7232
      %7327 = vst [vmem:[#allocation4 + $0x1a0] sm:$0xff] %v7233
      %7328 = vst [vmem:[#allocation4 + $0x1b0] sm:$0xff] %v7234
      %7329 = vst [vmem:[#allocation4 + $0x1c0] sm:$0xff] %v7235
      %7330 = vst [vmem:[#allocation4 + $0x1d0] sm:$0xff] %v7236
      %7331 = vst [vmem:[#allocation4 + $0x1e0] sm:$0xff] %v7237
      %7332 = vst [vmem:[#allocation4 + $0x1f0] sm:$0xff] %v7238
      %7333 = vst [vmem:[#allocation4 + $0x200] sm:$0xff] %v7239
      %7334 = vst [vmem:[#allocation4 + $0x210] sm:$0xff] %v7240
      %7335 = vst [vmem:[#allocation4 + $0x220] sm:$0xff] %v7241
      %7336 = vst [vmem:[#allocation4 + $0x230] sm:$0xff] %v7242
      %7337 = vst [vmem:[#allocation4 + $0x240] sm:$0xff] %v7243
      %7338 = vst [vmem:[#allocation4 + $0x250] sm:$0xff] %v7244
      %7339 = vst [vmem:[#allocation4 + $0x260] sm:$0xff] %v7245
      %7340 = vst [vmem:[#allocation4 + $0x270] sm:$0xff] %v7246
      %7341 = vst [vmem:[#allocation4 + $0x280] sm:$0xff] %v7247
      %7342 = vst [vmem:[#allocation4 + $0x290] sm:$0xff] %v7248
      %7343 = vst [vmem:[#allocation4 + $0x2a0] sm:$0xff] %v7249
      %7344 = vst [vmem:[#allocation4 + $0x2b0] sm:$0xff] %v7250
      %7345 = vst [vmem:[#allocation4 + $0x2c0] sm:$0xff] %v7251
      %7346 = vst [vmem:[#allocation4 + $0x2d0] sm:$0xff] %v7252
      %7347 = vst [vmem:[#allocation4 + $0x2e0] sm:$0xff] %v7253
      %7348 = vst [vmem:[#allocation4 + $0x2f0] sm:$0xff] %v7254
      %7349 = vst [vmem:[#allocation4 + $0x300] sm:$0xff] %v7255
      %7350 = vst [vmem:[#allocation4 + $0x310] sm:$0xff] %v7256
      %7351 = vst [vmem:[#allocation4 + $0x320] sm:$0xff] %v7257
      %7352 = vst [vmem:[#allocation4 + $0x330] sm:$0xff] %v7258
      %7353 = vst [vmem:[#allocation4 + $0x340] sm:$0xff] %v7259
      %7354 = vst [vmem:[#allocation4 + $0x350] sm:$0xff] %v7260
      %7355 = vst [vmem:[#allocation4 + $0x360] sm:$0xff] %v7261
      %7356 = vst [vmem:[#allocation4 + $0x370] sm:$0xff] %v7262
      %7357 = vst [vmem:[#allocation4 + $0x380] sm:$0xff] %v7263
      %7358 = vst [vmem:[#allocation4 + $0x390] sm:$0xff] %v7264
      %7359 = vst [vmem:[#allocation4 + $0x3a0] sm:$0xff] %v7265
      %7360 = vst [vmem:[#allocation4 + $0x3b0] sm:$0xff] %v7266
      %7361 = vst [vmem:[#allocation4 + $0x3c0] sm:$0xff] %v7267
      %7362 = vst [vmem:[#allocation4 + $0x3d0] sm:$0xff] %v7268
      %7363 = vst [vmem:[#allocation4 + $0x3e0] sm:$0xff] %v7269
      %7364 = vst [vmem:[#allocation4 + $0x3f0] sm:$0xff] %v7270
      %7365 = vst [vmem:[#allocation4 + $0x400] sm:$0xff] %v7271
      %7366 = vst [vmem:[#allocation4 + $0x410] sm:$0xff] %v7272
      %7367 = vst [vmem:[#allocation4 + $0x420] sm:$0xff] %v7273
      %7368 = vst [vmem:[#allocation4 + $0x430] sm:$0xff] %v7274
      %7369 = vst [vmem:[#allocation4 + $0x440] sm:$0xff] %v7275
      %7370 = vst [vmem:[#allocation4 + $0x450] sm:$0xff] %v7276
      %7371 = vst [vmem:[#allocation4 + $0x460] sm:$0xff] %v7277
      %7372 = vst [vmem:[#allocation4 + $0x470] sm:$0xff] %v7278
      %7373 = vst [vmem:[#allocation4 + $0x480] sm:$0xff] %v7279
      %7374 = vst [vmem:[#allocation4 + $0x490] sm:$0xff] %v7280
      %7375 = vst [vmem:[#allocation4 + $0x4a0] sm:$0xff] %v7281
      %7376 = vst [vmem:[#allocation4 + $0x4b0] sm:$0xff] %v7282
      %7377 = vst [vmem:[#allocation4 + $0x4c0] sm:$0xff] %v7283
      %7378 = vst [vmem:[#allocation4 + $0x4d0] sm:$0xff] %v7284
      %7379 = vst [vmem:[#allocation4 + $0x4e0] sm:$0xff] %v7285
      %7380 = vst [vmem:[#allocation4 + $0x4f0] sm:$0xff] %v7286
      %7381 = vst [vmem:[#allocation4 + $0x500] sm:$0xff] %v7287
      %7382 = vst [vmem:[#allocation4 + $0x510] sm:$0xff] %v7288
      %7383 = vst [vmem:[#allocation4 + $0x520] sm:$0xff] %v7289
      %7384 = vst [vmem:[#allocation4 + $0x530] sm:$0xff] %v7290
      %7385 = vst [vmem:[#allocation4 + $0x540] sm:$0xff] %v7291
      %7386 = vst [vmem:[#allocation4 + $0x550] sm:$0xff] %v7292
      %7387 = vst [vmem:[#allocation4 + $0x560] sm:$0xff] %v7293
      %7388 = vst [vmem:[#allocation4 + $0x570] sm:$0xff] %v7294
      %7389 = vst [vmem:[#allocation4 + $0x580] sm:$0xff] %v7295
      %7390 = vst [vmem:[#allocation4 + $0x590] sm:$0xff] %v7296
      %7391 = vst [vmem:[#allocation4 + $0x5a0] sm:$0xff] %v7297
      %7392 = vst [vmem:[#allocation4 + $0x5b0] sm:$0xff] %v7298
      %7393 = vst [vmem:[#allocation4 + $0x5c0] sm:$0xff] %v7299
      %7394 = vst [vmem:[#allocation4 + $0x5d0] sm:$0xff] %v7300
      %7395 = vst [vmem:[#allocation4 + $0x5e0] sm:$0xff] %v7301
      %v7396 = vld [vmem:[#allocation4] sm:$0xc0]
      %v7397 = vld [vmem:[#allocation4 + $0x10] sm:$0xff]
      %v7398 = vld [vmem:[#allocation4 + $0x20] sm:$0xff]
      %v7399 = vld [vmem:[#allocation4 + $0x30] sm:$0xff]
      %v7400 = vld [vmem:[#allocation4 + $0x40] sm:$0xff]
      %v7401 = vld [vmem:[#allocation4 + $0x50] sm:$0xff]
      %v7402 = vld [vmem:[#allocation4 + $0x60] sm:$0xff]
      %v7403 = vld [vmem:[#allocation4 + $0x70] sm:$0xff]
      %v7404 = vld [vmem:[#allocation4 + $0x80] sm:$0xff]
      %v7405 = vld [vmem:[#allocation4 + $0x90] sm:$0xff]
      %v7406 = vld [vmem:[#allocation4 + $0xa0] sm:$0xff]
      %v7407 = vld [vmem:[#allocation4 + $0xb0] sm:$0xff]
      %v7408 = vld [vmem:[#allocation4 + $0xc0] sm:$0xff]
      %v7409 = vld [vmem:[#allocation4 + $0xd0] sm:$0xff]
      %v7410 = vld [vmem:[#allocation4 + $0xe0] sm:$0xff]
      %v7411 = vld [vmem:[#allocation4 + $0xf0] sm:$0xff]
      %v7412 = vld [vmem:[#allocation4 + $0x100] sm:$0xff]
      %v7413 = vld [vmem:[#allocation4 + $0x110] sm:$0xff]
      %v7414 = vld [vmem:[#allocation4 + $0x120] sm:$0xff]
      %v7415 = vld [vmem:[#allocation4 + $0x130] sm:$0xff]
      %v7416 = vld [vmem:[#allocation4 + $0x140] sm:$0xff]
      %v7417 = vld [vmem:[#allocation4 + $0x150] sm:$0xff]
      %v7418 = vld [vmem:[#allocation4 + $0x160] sm:$0xff]
      %v7419 = vld [vmem:[#allocation4 + $0x170] sm:$0xff]
      %v7420 = vld [vmem:[#allocation4 + $0x180] sm:$0xff]
      %v7421 = vld [vmem:[#allocation4 + $0x190] sm:$0xff]
      %v7422 = vld [vmem:[#allocation4 + $0x1a0] sm:$0xff]
      %v7423 = vld [vmem:[#allocation4 + $0x1b0] sm:$0xff]
      %v7424 = vld [vmem:[#allocation4 + $0x1c0] sm:$0xff]
      %v7425 = vld [vmem:[#allocation4 + $0x1d0] sm:$0xff]
      %v7426 = vld [vmem:[#allocation4 + $0x1e0] sm:$0xff]
      %v7427 = vld [vmem:[#allocation4 + $0x1f0] sm:$0xff]
      %v7428 = vld [vmem:[#allocation4 + $0x200] sm:$0xff]
      %v7429 = vld [vmem:[#allocation4 + $0x210] sm:$0xff]
      %v7430 = vld [vmem:[#allocation4 + $0x220] sm:$0xff]
      %v7431 = vld [vmem:[#allocation4 + $0x230] sm:$0xff]
      %v7432 = vld [vmem:[#allocation4 + $0x240] sm:$0xff]
      %v7433 = vld [vmem:[#allocation4 + $0x250] sm:$0xff]
      %v7434 = vld [vmem:[#allocation4 + $0x260] sm:$0xff]
      %v7435 = vld [vmem:[#allocation4 + $0x270] sm:$0xff]
      %v7436 = vld [vmem:[#allocation4 + $0x280] sm:$0xff]
      %v7437 = vld [vmem:[#allocation4 + $0x290] sm:$0xff]
      %v7438 = vld [vmem:[#allocation4 + $0x2a0] sm:$0xff]
      %v7439 = vld [vmem:[#allocation4 + $0x2b0] sm:$0xff]
      %v7440 = vld [vmem:[#allocation4 + $0x2c0] sm:$0xff]
      %v7441 = vld [vmem:[#allocation4 + $0x2d0] sm:$0xff]
      %v7442 = vld [vmem:[#allocation4 + $0x2e0] sm:$0xff]
      %v7443 = vld [vmem:[#allocation4 + $0x2f0] sm:$0xff]
      %v7444 = vld [vmem:[#allocation4 + $0x300] sm:$0xff]
      %v7445 = vld [vmem:[#allocation4 + $0x310] sm:$0xff]
      %v7446 = vld [vmem:[#allocation4 + $0x320] sm:$0xff]
      %v7447 = vld [vmem:[#allocation4 + $0x330] sm:$0xff]
      %v7448 = vld [vmem:[#allocation4 + $0x340] sm:$0xff]
      %v7449 = vld [vmem:[#allocation4 + $0x350] sm:$0xff]
      %v7450 = vld [vmem:[#allocation4 + $0x360] sm:$0xff]
      %v7451 = vld [vmem:[#allocation4 + $0x370] sm:$0xff]
      %v7452 = vld [vmem:[#allocation4 + $0x380] sm:$0xff]
      %v7453 = vld [vmem:[#allocation4 + $0x390] sm:$0xff]
      %v7454 = vld [vmem:[#allocation4 + $0x3a0] sm:$0xff]
      %v7455 = vld [vmem:[#allocation4 + $0x3b0] sm:$0xff]
      %v7456 = vld [vmem:[#allocation4 + $0x3c0] sm:$0xff]
      %v7457 = vld [vmem:[#allocation4 + $0x3d0] sm:$0xff]
      %v7458 = vld [vmem:[#allocation4 + $0x3e0] sm:$0xff]
      %v7459 = vld [vmem:[#allocation4 + $0x3f0] sm:$0xff]
      %v7460 = vld [vmem:[#allocation4 + $0x400] sm:$0xff]
      %v7461 = vld [vmem:[#allocation4 + $0x410] sm:$0xff]
      %v7462 = vld [vmem:[#allocation4 + $0x420] sm:$0xff]
      %v7463 = vld [vmem:[#allocation4 + $0x430] sm:$0xff]
      %v7464 = vld [vmem:[#allocation4 + $0x440] sm:$0xff]
      %v7465 = vld [vmem:[#allocation4 + $0x450] sm:$0xff]
      %v7466 = vld [vmem:[#allocation4 + $0x460] sm:$0xff]
      %v7467 = vld [vmem:[#allocation4 + $0x470] sm:$0xff]
      %v7468 = vld [vmem:[#allocation4 + $0x480] sm:$0xff]
      %v7469 = vld [vmem:[#allocation4 + $0x490] sm:$0xff]
      %v7470 = vld [vmem:[#allocation4 + $0x4a0] sm:$0xff]
      %v7471 = vld [vmem:[#allocation4 + $0x4b0] sm:$0xff]
      %v7472 = vld [vmem:[#allocation4 + $0x4c0] sm:$0xff]
      %v7473 = vld [vmem:[#allocation4 + $0x4d0] sm:$0xff]
      %v7474 = vld [vmem:[#allocation4 + $0x4e0] sm:$0xff]
      %v7475 = vld [vmem:[#allocation4 + $0x4f0] sm:$0xff]
      %v7476 = vld [vmem:[#allocation4 + $0x500] sm:$0xff]
      %v7477 = vld [vmem:[#allocation4 + $0x510] sm:$0xff]
      %v7478 = vld [vmem:[#allocation4 + $0x520] sm:$0xff]
      %v7479 = vld [vmem:[#allocation4 + $0x530] sm:$0xff]
      %v7480 = vld [vmem:[#allocation4 + $0x540] sm:$0xff]
      %v7481 = vld [vmem:[#allocation4 + $0x550] sm:$0xff]
      %v7482 = vld [vmem:[#allocation4 + $0x560] sm:$0xff]
      %v7483 = vld [vmem:[#allocation4 + $0x570] sm:$0xff]
      %v7484 = vld [vmem:[#allocation4 + $0x580] sm:$0xff]
      %v7485 = vld [vmem:[#allocation4 + $0x590] sm:$0xff]
      %v7486 = vld [vmem:[#allocation4 + $0x5a0] sm:$0xff]
      %v7487 = vld [vmem:[#allocation4 + $0x5b0] sm:$0xff]
      %v7488 = vld [vmem:[#allocation4 + $0x5c0] sm:$0xff]
      %v7489 = vld [vmem:[#allocation4 + $0x5d0] sm:$0xff]
      %v7490 = vld [vmem:[#allocation4 + $0x5e0] sm:$0x3f]
      %7491 = vmatprep.subr.mxu0 0.0
      %7492 = vmatpush1.msra.mxu0 %v5546
      %7493 = vmatprep.subr.mxu0 0.0
      %7494 = vmatpush1.msra.mxu0 %v5547
      %7495 = vmatprep.subr.mxu0 0.0
      %7496 = vmatpush1.msra.mxu0 %v5548
      %7497 = vmatprep.subr.mxu0 0.0
      %7498 = vmatpush1.msra.mxu0 %v5549
      %7499 = vmatprep.subr.mxu0 0.0
      %7500 = vmatpush1.msra.mxu0 %v5550
      %7501 = vmatprep.subr.mxu0 0.0
      %7502 = vmatpush1.msra.mxu0 %v5551
      %7503 = vmatprep.subr.mxu0 0.0
      %7504 = vmatpush1.msra.mxu0 %v5552
      %7505 = vmatprep.subr.mxu0 0.0
      %7506 = vmatpush1.msra.mxu0 %v5553
      %7507 = vmatprep.subr.mxu0 0.0
      %7508 = vmatpush1.msra.mxu0 %v5554
      %7509 = vmatprep.subr.mxu0 0.0
      %7510 = vmatpush1.msra.mxu0 %v5555
      %7511 = vmatprep.subr.mxu0 0.0
      %7512 = vmatpush1.msra.mxu0 %v5556
      %7513 = vmatprep.subr.mxu0 0.0
      %7514 = vmatpush1.msra.mxu0 %v5557
      %7515 = vmatprep.subr.mxu0 0.0
      %7516 = vmatpush1.msra.mxu0 %v5558
      %7517 = vmatprep.subr.mxu0 0.0
      %7518 = vmatpush1.msra.mxu0 %v5559
      %7519 = vmatprep.subr.mxu0 0.0
      %7520 = vmatpush1.msra.mxu0 %v5560
      %7521 = vmatprep.subr.mxu0 0.0
      %7522 = vmatpush1.msra.mxu0 %v5561
      %7523 = vmatprep.subr.mxu0 0.0
      %7524 = vmatpush1.msra.mxu0 0.0
      %7525 = vmatprep.subr.mxu0 0.0
      %7526 = vmatpush1.msra.mxu0 0.0
      %7527 = vmatprep.subr.mxu0 0.0
      %7528 = vmatpush1.msra.mxu0 0.0
      %7529 = vmatprep.subr.mxu0 0.0
      %7530 = vmatpush1.msra.mxu0 0.0
      %7531 = vmatprep.subr.mxu0 0.0
      %7532 = vmatpush1.msra.mxu0 0.0
      %7533 = vmatprep.subr.mxu0 0.0
      %7534 = vmatpush1.msra.mxu0 0.0
      %7535 = vmatprep.subr.mxu0 0.0
      %7536 = vmatpush1.msra.mxu0 0.0
      %7537 = vmatprep.subr.mxu0 0.0
      %7538 = vmatpush1.msra.mxu0 0.0
      %7539 = vmatprep.subr.mxu0 0.0
      %7540 = vmatpush1.msra.mxu0 0.0
      %7541 = vmatprep.subr.mxu0 0.0
      %7542 = vmatpush1.msra.mxu0 0.0
      %7543 = vmatprep.subr.mxu0 0.0
      %7544 = vmatpush1.msra.mxu0 0.0
      %7545 = vmatprep.subr.mxu0 0.0
      %7546 = vmatpush1.msra.mxu0 0.0
      %7547 = vmatprep.subr.mxu0 0.0
      %7548 = vmatpush1.msra.mxu0 0.0
      %7549 = vmatprep.subr.mxu0 0.0
      %7550 = vmatpush1.msra.mxu0 0.0
      %7551 = vmatprep.subr.mxu0 0.0
      %7552 = vmatpush1.msra.mxu0 0.0
      %7553 = vmatprep.subr.mxu0 0.0
      %7554 = vmatpush1.msra.mxu0 0.0
      %7555 = vmatprep.mubr.f32.mxu0 0.0
      %7556 = vmatmul.mubr.f32.gmra.mrb[0].mxu0 %v7208
      %v7557 = vpop.f32.mrb[0].mxu0
      %v7558 = vpop.f32.mrb[0].mxu0
      %7559 = vmatprep.mubr.f32.mxu0 0.0
      %7560 = vmatmul.mubr.f32.gmra.mrb[0].mxu0 %v7209
      %v7561 = vpop.f32.mrb[0].mxu0
      %v7562 = vpop.f32.mrb[0].mxu0
      %7563 = vmatprep.mubr.f32.mxu0 0.0
      %7564 = vmatmul.mubr.f32.gmra.mrb[0].mxu0 %v7210
      %v7565 = vpop.f32.mrb[0].mxu0
      %v7566 = vpop.f32.mrb[0].mxu0
      %7567 = vmatprep.mubr.f32.mxu0 0.0
      %7568 = vmatmul.mubr.f32.gmra.mrb[0].mxu0 %v7211
      %v7569 = vpop.f32.mrb[0].mxu0
      %v7570 = vpop.f32.mrb[0].mxu0
      %7571 = vmatprep.mubr.f32.mxu0 0.0
      %7572 = vmatmul.mubr.f32.gmra.mrb[0].mxu0 %v7212
      %v7573 = vpop.f32.mrb[0].mxu0
      %v7574 = vpop.f32.mrb[0].mxu0
      %7575 = vmatprep.mubr.f32.mxu0 0.0
      %7576 = vmatmul.mubr.f32.gmra.mrb[0].mxu0 %v7213
      %v7577 = vpop.f32.mrb[0].mxu0
      %v7578 = vpop.f32.mrb[0].mxu0
      %7579 = vmatprep.mubr.f32.mxu0 0.0
      %7580 = vmatmul.mubr.f32.gmra.mrb[0].mxu0 %v7214
      %v7581 = vpop.f32.mrb[0].mxu0
      %v7582 = vpop.f32.mrb[0].mxu0
      %7583 = vmatprep.mubr.f32.mxu0 0.0
      %7584 = vmatmul.mubr.f32.gmra.mrb[0].mxu0 %v7215
      %v7585 = vpop.f32.mrb[0].mxu0
      %v7586 = vpop.f32.mrb[0].mxu0
      %7587 = vmatprep.mubr.f32.mxu0 0.0
      %7588 = vmatmul.mubr.f32.gmra.mrb[0].mxu0 %v7216
      %v7589 = vpop.f32.mrb[0].mxu0
      %v7590 = vpop.f32.mrb[0].mxu0
      %7591 = vmatprep.mubr.f32.mxu0 0.0
      %7592 = vmatmul.mubr.f32.gmra.mrb[0].mxu0 %v7217
      %v7593 = vpop.f32.mrb[0].mxu0
      %v7594 = vpop.f32.mrb[0].mxu0
      %7595 = vmatprep.mubr.f32.mxu0 0.0
      %7596 = vmatmul.mubr.f32.gmra.mrb[0].mxu0 %v7218
      %v7597 = vpop.f32.mrb[0].mxu0
      %v7598 = vpop.f32.mrb[0].mxu0
      %7599 = vmatprep.mubr.f32.mxu0 0.0
      %7600 = vmatmul.mubr.f32.gmra.mrb[0].mxu0 %v7219
      %v7601 = vpop.f32.mrb[0].mxu0
      %v7602 = vpop.f32.mrb[0].mxu0
      %7603 = vmatprep.mubr.f32.mxu0 0.0
      %7604 = vmatmul.mubr.f32.gmra.mrb[0].mxu0 %v7220
      %v7605 = vpop.f32.mrb[0].mxu0
      %v7606 = vpop.f32.mrb[0].mxu0
      %7607 = vmatprep.mubr.f32.mxu0 0.0
      %7608 = vmatmul.mubr.f32.gmra.mrb[0].mxu0 %v7221
      %v7609 = vpop.f32.mrb[0].mxu0
      %v7610 = vpop.f32.mrb[0].mxu0
      %7611 = vmatprep.mubr.f32.mxu0 0.0
      %7612 = vmatmul.mubr.f32.gmra.mrb[0].mxu0 %v7222
      %v7613 = vpop.f32.mrb[0].mxu0
      %v7614 = vpop.f32.mrb[0].mxu0
      %7615 = vmatprep.mubr.f32.mxu0 0.0
      %7616 = vmatmul.mubr.f32.gmra.mrb[0].mxu0 %v7223
      %v7617 = vpop.f32.mrb[0].mxu0
      %v7618 = vpop.f32.mrb[0].mxu0
      %7619 = vmatprep.mubr.f32.mxu0 0.0
      %7620 = vmatmul.mubr.f32.gmra.mrb[0].mxu0 %v7224
      %v7621 = vpop.f32.mrb[0].mxu0
      %v7622 = vpop.f32.mrb[0].mxu0
      %7623 = vmatprep.mubr.f32.mxu0 0.0
      %7624 = vmatmul.mubr.f32.gmra.mrb[0].mxu0 %v7225
      %v7625 = vpop.f32.mrb[0].mxu0
      %v7626 = vpop.f32.mrb[0].mxu0
      %7627 = vmatprep.mubr.f32.mxu0 0.0
      %7628 = vmatmul.mubr.f32.gmra.mrb[0].mxu0 %v7226
      %v7629 = vpop.f32.mrb[0].mxu0
      %v7630 = vpop.f32.mrb[0].mxu0
      %7631 = vmatprep.mubr.f32.mxu0 0.0
      %7632 = vmatmul.mubr.f32.gmra.mrb[0].mxu0 %v7227
      %v7633 = vpop.f32.mrb[0].mxu0
      %v7634 = vpop.f32.mrb[0].mxu0
      %7635 = vmatprep.mubr.f32.mxu0 0.0
      %7636 = vmatmul.mubr.f32.gmra.mrb[0].mxu0 %v7228
      %v7637 = vpop.f32.mrb[0].mxu0
      %v7638 = vpop.f32.mrb[0].mxu0
      %7639 = vmatprep.mubr.f32.mxu0 0.0
      %7640 = vmatmul.mubr.f32.gmra.mrb[0].mxu0 %v7229
      %v7641 = vpop.f32.mrb[0].mxu0
      %v7642 = vpop.f32.mrb[0].mxu0
      %7643 = vmatprep.mubr.f32.mxu0 0.0
      %7644 = vmatmul.mubr.f32.gmra.mrb[0].mxu0 %v7230
      %v7645 = vpop.f32.mrb[0].mxu0
      %v7646 = vpop.f32.mrb[0].mxu0
      %7647 = vmatprep.mubr.f32.mxu0 0.0
      %7648 = vmatmul.mubr.f32.gmra.mrb[0].mxu0 %v7231
      %v7649 = vpop.f32.mrb[0].mxu0
      %v7650 = vpop.f32.mrb[0].mxu0
      %7651 = vmatprep.mubr.f32.mxu0 0.0
      %7652 = vmatmul.mubr.f32.gmra.mrb[0].mxu0 %v7232
      %v7653 = vpop.f32.mrb[0].mxu0
      %v7654 = vpop.f32.mrb[0].mxu0
      %7655 = vmatprep.mubr.f32.mxu0 0.0
      %7656 = vmatmul.mubr.f32.gmra.mrb[0].mxu0 %v7233
      %v7657 = vpop.f32.mrb[0].mxu0
      %v7658 = vpop.f32.mrb[0].mxu0
      %7659 = vmatprep.mubr.f32.mxu0 0.0
      %7660 = vmatmul.mubr.f32.gmra.mrb[0].mxu0 %v7234
      %v7661 = vpop.f32.mrb[0].mxu0
      %v7662 = vpop.f32.mrb[0].mxu0
      %7663 = vmatprep.mubr.f32.mxu0 0.0
      %7664 = vmatmul.mubr.f32.gmra.mrb[0].mxu0 %v7235
      %v7665 = vpop.f32.mrb[0].mxu0
      %v7666 = vpop.f32.mrb[0].mxu0
      %7667 = vmatprep.mubr.f32.mxu0 0.0
      %7668 = vmatmul.mubr.f32.gmra.mrb[0].mxu0 %v7236
      %v7669 = vpop.f32.mrb[0].mxu0
      %v7670 = vpop.f32.mrb[0].mxu0
      %7671 = vmatprep.mubr.f32.mxu0 0.0
      %7672 = vmatmul.mubr.f32.gmra.mrb[0].mxu0 %v7237
      %v7673 = vpop.f32.mrb[0].mxu0
      %v7674 = vpop.f32.mrb[0].mxu0
      %7675 = vmatprep.mubr.f32.mxu0 0.0
      %7676 = vmatmul.mubr.f32.gmra.mrb[0].mxu0 %v7238
      %v7677 = vpop.f32.mrb[0].mxu0
      %v7678 = vpop.f32.mrb[0].mxu0
      %7679 = vmatprep.mubr.f32.mxu0 0.0
      %7680 = vmatmul.mubr.f32.gmra.mrb[0].mxu0 %v7239
      %v7681 = vpop.f32.mrb[0].mxu0
      %v7682 = vpop.f32.mrb[0].mxu0
      %7683 = vmatprep.mubr.f32.mxu0 0.0
      %7684 = vmatmul.mubr.f32.gmra.mrb[0].mxu0 %v7240
      %v7685 = vpop.f32.mrb[0].mxu0
      %v7686 = vpop.f32.mrb[0].mxu0
      %7687 = vmatprep.mubr.f32.mxu0 0.0
      %7688 = vmatmul.mubr.f32.gmra.mrb[0].mxu0 %v7241
      %v7689 = vpop.f32.mrb[0].mxu0
      %v7690 = vpop.f32.mrb[0].mxu0
      %7691 = vmatprep.mubr.f32.mxu0 0.0
      %7692 = vmatmul.mubr.f32.gmra.mrb[0].mxu0 %v7242
      %v7693 = vpop.f32.mrb[0].mxu0
      %v7694 = vpop.f32.mrb[0].mxu0
      %7695 = vmatprep.mubr.f32.mxu0 0.0
      %7696 = vmatmul.mubr.f32.gmra.mrb[0].mxu0 %v7243
      %v7697 = vpop.f32.mrb[0].mxu0
      %v7698 = vpop.f32.mrb[0].mxu0
      %7699 = vmatprep.mubr.f32.mxu0 0.0
      %7700 = vmatmul.mubr.f32.gmra.mrb[0].mxu0 %v7244
      %v7701 = vpop.f32.mrb[0].mxu0
      %v7702 = vpop.f32.mrb[0].mxu0
      %7703 = vmatprep.mubr.f32.mxu0 0.0
      %7704 = vmatmul.mubr.f32.gmra.mrb[0].mxu0 %v7245
      %v7705 = vpop.f32.mrb[0].mxu0
      %v7706 = vpop.f32.mrb[0].mxu0
      %7707 = vmatprep.mubr.f32.mxu0 0.0
      %7708 = vmatmul.mubr.f32.gmra.mrb[0].mxu0 %v7246
      %v7709 = vpop.f32.mrb[0].mxu0
      %v7710 = vpop.f32.mrb[0].mxu0
      %7711 = vmatprep.mubr.f32.mxu0 0.0
      %7712 = vmatmul.mubr.f32.gmra.mrb[0].mxu0 %v7247
      %v7713 = vpop.f32.mrb[0].mxu0
      %v7714 = vpop.f32.mrb[0].mxu0
      %7715 = vmatprep.mubr.f32.mxu0 0.0
      %7716 = vmatmul.mubr.f32.gmra.mrb[0].mxu0 %v7248
      %v7717 = vpop.f32.mrb[0].mxu0
      %v7718 = vpop.f32.mrb[0].mxu0
      %7719 = vmatprep.mubr.f32.mxu0 0.0
      %7720 = vmatmul.mubr.f32.gmra.mrb[0].mxu0 %v7249
      %v7721 = vpop.f32.mrb[0].mxu0
      %v7722 = vpop.f32.mrb[0].mxu0
      %7723 = vmatprep.mubr.f32.mxu0 0.0
      %7724 = vmatmul.mubr.f32.gmra.mrb[0].mxu0 %v7250
      %v7725 = vpop.f32.mrb[0].mxu0
      %v7726 = vpop.f32.mrb[0].mxu0
      %7727 = vmatprep.mubr.f32.mxu0 0.0
      %7728 = vmatmul.mubr.f32.gmra.mrb[0].mxu0 %v7251
      %v7729 = vpop.f32.mrb[0].mxu0
      %v7730 = vpop.f32.mrb[0].mxu0
      %7731 = vmatprep.mubr.f32.mxu0 0.0
      %7732 = vmatmul.mubr.f32.gmra.mrb[0].mxu0 %v7252
      %v7733 = vpop.f32.mrb[0].mxu0
      %v7734 = vpop.f32.mrb[0].mxu0
      %7735 = vmatprep.mubr.f32.mxu0 0.0
      %7736 = vmatmul.mubr.f32.gmra.mrb[0].mxu0 %v7253
      %v7737 = vpop.f32.mrb[0].mxu0
      %v7738 = vpop.f32.mrb[0].mxu0
      %7739 = vmatprep.mubr.f32.mxu0 0.0
      %7740 = vmatmul.mubr.f32.gmra.mrb[0].mxu0 %v7254
      %v7741 = vpop.f32.mrb[0].mxu0
      %v7742 = vpop.f32.mrb[0].mxu0
      %7743 = vmatprep.mubr.f32.mxu0 0.0
      %7744 = vmatmul.mubr.f32.gmra.mrb[0].mxu0 %v7255
      %v7745 = vpop.f32.mrb[0].mxu0
      %v7746 = vpop.f32.mrb[0].mxu0
      %7747 = vmatprep.mubr.f32.mxu0 0.0
      %7748 = vmatmul.mubr.f32.gmra.mrb[0].mxu0 %v7256
      %v7749 = vpop.f32.mrb[0].mxu0
      %v7750 = vpop.f32.mrb[0].mxu0
      %7751 = vmatprep.mubr.f32.mxu0 0.0
      %7752 = vmatmul.mubr.f32.gmra.mrb[0].mxu0 %v7257
      %v7753 = vpop.f32.mrb[0].mxu0
      %v7754 = vpop.f32.mrb[0].mxu0
      %7755 = vmatprep.mubr.f32.mxu0 0.0
      %7756 = vmatmul.mubr.f32.gmra.mrb[0].mxu0 %v7258
      %v7757 = vpop.f32.mrb[0].mxu0
      %v7758 = vpop.f32.mrb[0].mxu0
      %7759 = vmatprep.mubr.f32.mxu0 0.0
      %7760 = vmatmul.mubr.f32.gmra.mrb[0].mxu0 %v7259
      %v7761 = vpop.f32.mrb[0].mxu0
      %v7762 = vpop.f32.mrb[0].mxu0
      %7763 = vmatprep.mubr.f32.mxu0 0.0
      %7764 = vmatmul.mubr.f32.gmra.mrb[0].mxu0 %v7260
      %v7765 = vpop.f32.mrb[0].mxu0
      %v7766 = vpop.f32.mrb[0].mxu0
      %7767 = vmatprep.mubr.f32.mxu0 0.0
      %7768 = vmatmul.mubr.f32.gmra.mrb[0].mxu0 %v7261
      %v7769 = vpop.f32.mrb[0].mxu0
      %v7770 = vpop.f32.mrb[0].mxu0
      %7771 = vmatprep.mubr.f32.mxu0 0.0
      %7772 = vmatmul.mubr.f32.gmra.mrb[0].mxu0 %v7262
      %v7773 = vpop.f32.mrb[0].mxu0
      %v7774 = vpop.f32.mrb[0].mxu0
      %7775 = vmatprep.mubr.f32.mxu0 0.0
      %7776 = vmatmul.mubr.f32.gmra.mrb[0].mxu0 %v7263
      %v7777 = vpop.f32.mrb[0].mxu0
      %v7778 = vpop.f32.mrb[0].mxu0
      %7779 = vmatprep.mubr.f32.mxu0 0.0
      %7780 = vmatmul.mubr.f32.gmra.mrb[0].mxu0 %v7264
      %v7781 = vpop.f32.mrb[0].mxu0
      %v7782 = vpop.f32.mrb[0].mxu0
      %7783 = vmatprep.mubr.f32.mxu0 0.0
      %7784 = vmatmul.mubr.f32.gmra.mrb[0].mxu0 %v7265
      %v7785 = vpop.f32.mrb[0].mxu0
      %v7786 = vpop.f32.mrb[0].mxu0
      %7787 = vmatprep.mubr.f32.mxu0 0.0
      %7788 = vmatmul.mubr.f32.gmra.mrb[0].mxu0 %v7266
      %v7789 = vpop.f32.mrb[0].mxu0
      %v7790 = vpop.f32.mrb[0].mxu0
      %7791 = vmatprep.mubr.f32.mxu0 0.0
      %7792 = vmatmul.mubr.f32.gmra.mrb[0].mxu0 %v7267
      %v7793 = vpop.f32.mrb[0].mxu0
      %v7794 = vpop.f32.mrb[0].mxu0
      %7795 = vmatprep.mubr.f32.mxu0 0.0
      %7796 = vmatmul.mubr.f32.gmra.mrb[0].mxu0 %v7268
      %v7797 = vpop.f32.mrb[0].mxu0
      %v7798 = vpop.f32.mrb[0].mxu0
      %7799 = vmatprep.mubr.f32.mxu0 0.0
      %7800 = vmatmul.mubr.f32.gmra.mrb[0].mxu0 %v7269
      %v7801 = vpop.f32.mrb[0].mxu0
      %v7802 = vpop.f32.mrb[0].mxu0
      %7803 = vmatprep.mubr.f32.mxu0 0.0
      %7804 = vmatmul.mubr.f32.gmra.mrb[0].mxu0 %v7270
      %v7805 = vpop.f32.mrb[0].mxu0
      %v7806 = vpop.f32.mrb[0].mxu0
      %7807 = vmatprep.mubr.f32.mxu0 0.0
      %7808 = vmatmul.mubr.f32.gmra.mrb[0].mxu0 %v7271
      %v7809 = vpop.f32.mrb[0].mxu0
      %v7810 = vpop.f32.mrb[0].mxu0
      %7811 = vmatprep.mubr.f32.mxu0 0.0
      %7812 = vmatmul.mubr.f32.gmra.mrb[0].mxu0 %v7272
      %v7813 = vpop.f32.mrb[0].mxu0
      %v7814 = vpop.f32.mrb[0].mxu0
      %7815 = vmatprep.mubr.f32.mxu0 0.0
      %7816 = vmatmul.mubr.f32.gmra.mrb[0].mxu0 %v7273
      %v7817 = vpop.f32.mrb[0].mxu0
      %v7818 = vpop.f32.mrb[0].mxu0
      %7819 = vmatprep.mubr.f32.mxu0 0.0
      %7820 = vmatmul.mubr.f32.gmra.mrb[0].mxu0 %v7274
      %v7821 = vpop.f32.mrb[0].mxu0
      %v7822 = vpop.f32.mrb[0].mxu0
      %7823 = vmatprep.mubr.f32.mxu0 0.0
      %7824 = vmatmul.mubr.f32.gmra.mrb[0].mxu0 %v7275
      %v7825 = vpop.f32.mrb[0].mxu0
      %v7826 = vpop.f32.mrb[0].mxu0
      %7827 = vmatprep.mubr.f32.mxu0 0.0
      %7828 = vmatmul.mubr.f32.gmra.mrb[0].mxu0 %v7276
      %v7829 = vpop.f32.mrb[0].mxu0
      %v7830 = vpop.f32.mrb[0].mxu0
      %7831 = vmatprep.mubr.f32.mxu0 0.0
      %7832 = vmatmul.mubr.f32.gmra.mrb[0].mxu0 %v7277
      %v7833 = vpop.f32.mrb[0].mxu0
      %v7834 = vpop.f32.mrb[0].mxu0
      %7835 = vmatprep.mubr.f32.mxu0 0.0
      %7836 = vmatmul.mubr.f32.gmra.mrb[0].mxu0 %v7278
      %v7837 = vpop.f32.mrb[0].mxu0
      %v7838 = vpop.f32.mrb[0].mxu0
      %7839 = vmatprep.mubr.f32.mxu0 0.0
      %7840 = vmatmul.mubr.f32.gmra.mrb[0].mxu0 %v7279
      %v7841 = vpop.f32.mrb[0].mxu0
      %v7842 = vpop.f32.mrb[0].mxu0
      %7843 = vmatprep.mubr.f32.mxu0 0.0
      %7844 = vmatmul.mubr.f32.gmra.mrb[0].mxu0 %v7280
      %v7845 = vpop.f32.mrb[0].mxu0
      %v7846 = vpop.f32.mrb[0].mxu0
      %7847 = vmatprep.mubr.f32.mxu0 0.0
      %7848 = vmatmul.mubr.f32.gmra.mrb[0].mxu0 %v7281
      %v7849 = vpop.f32.mrb[0].mxu0
      %v7850 = vpop.f32.mrb[0].mxu0
      %7851 = vmatprep.mubr.f32.mxu0 0.0
      %7852 = vmatmul.mubr.f32.gmra.mrb[0].mxu0 %v7282
      %v7853 = vpop.f32.mrb[0].mxu0
      %v7854 = vpop.f32.mrb[0].mxu0
      %7855 = vmatprep.mubr.f32.mxu0 0.0
      %7856 = vmatmul.mubr.f32.gmra.mrb[0].mxu0 %v7283
      %v7857 = vpop.f32.mrb[0].mxu0
      %v7858 = vpop.f32.mrb[0].mxu0
      %7859 = vmatprep.mubr.f32.mxu0 0.0
      %7860 = vmatmul.mubr.f32.gmra.mrb[0].mxu0 %v7284
      %v7861 = vpop.f32.mrb[0].mxu0
      %v7862 = vpop.f32.mrb[0].mxu0
      %7863 = vmatprep.mubr.f32.mxu0 0.0
      %7864 = vmatmul.mubr.f32.gmra.mrb[0].mxu0 %v7285
      %v7865 = vpop.f32.mrb[0].mxu0
      %v7866 = vpop.f32.mrb[0].mxu0
      %7867 = vmatprep.mubr.f32.mxu0 0.0
      %7868 = vmatmul.mubr.f32.gmra.mrb[0].mxu0 %v7286
      %v7869 = vpop.f32.mrb[0].mxu0
      %v7870 = vpop.f32.mrb[0].mxu0
      %7871 = vmatprep.mubr.f32.mxu0 0.0
      %7872 = vmatmul.mubr.f32.gmra.mrb[0].mxu0 %v7287
      %v7873 = vpop.f32.mrb[0].mxu0
      %v7874 = vpop.f32.mrb[0].mxu0
      %7875 = vmatprep.mubr.f32.mxu0 0.0
      %7876 = vmatmul.mubr.f32.gmra.mrb[0].mxu0 %v7288
      %v7877 = vpop.f32.mrb[0].mxu0
      %v7878 = vpop.f32.mrb[0].mxu0
      %7879 = vmatprep.mubr.f32.mxu0 0.0
      %7880 = vmatmul.mubr.f32.gmra.mrb[0].mxu0 %v7289
      %v7881 = vpop.f32.mrb[0].mxu0
      %v7882 = vpop.f32.mrb[0].mxu0
      %7883 = vmatprep.mubr.f32.mxu0 0.0
      %7884 = vmatmul.mubr.f32.gmra.mrb[0].mxu0 %v7290
      %v7885 = vpop.f32.mrb[0].mxu0
      %v7886 = vpop.f32.mrb[0].mxu0
      %7887 = vmatprep.mubr.f32.mxu0 0.0
      %7888 = vmatmul.mubr.f32.gmra.mrb[0].mxu0 %v7291
      %v7889 = vpop.f32.mrb[0].mxu0
      %v7890 = vpop.f32.mrb[0].mxu0
      %7891 = vmatprep.mubr.f32.mxu0 0.0
      %7892 = vmatmul.mubr.f32.gmra.mrb[0].mxu0 %v7292
      %v7893 = vpop.f32.mrb[0].mxu0
      %v7894 = vpop.f32.mrb[0].mxu0
      %7895 = vmatprep.mubr.f32.mxu0 0.0
      %7896 = vmatmul.mubr.f32.gmra.mrb[0].mxu0 %v7293
      %v7897 = vpop.f32.mrb[0].mxu0
      %v7898 = vpop.f32.mrb[0].mxu0
      %7899 = vmatprep.mubr.f32.mxu0 0.0
      %7900 = vmatmul.mubr.f32.gmra.mrb[0].mxu0 %v7294
      %v7901 = vpop.f32.mrb[0].mxu0
      %v7902 = vpop.f32.mrb[0].mxu0
      %7903 = vmatprep.mubr.f32.mxu0 0.0
      %7904 = vmatmul.mubr.f32.gmra.mrb[0].mxu0 %v7295
      %v7905 = vpop.f32.mrb[0].mxu0
      %v7906 = vpop.f32.mrb[0].mxu0
      %7907 = vmatprep.mubr.f32.mxu0 0.0
      %7908 = vmatmul.mubr.f32.gmra.mrb[0].mxu0 %v7296
      %v7909 = vpop.f32.mrb[0].mxu0
      %v7910 = vpop.f32.mrb[0].mxu0
      %7911 = vmatprep.mubr.f32.mxu0 0.0
      %7912 = vmatmul.mubr.f32.gmra.mrb[0].mxu0 %v7297
      %v7913 = vpop.f32.mrb[0].mxu0
      %v7914 = vpop.f32.mrb[0].mxu0
      %7915 = vmatprep.mubr.f32.mxu0 0.0
      %7916 = vmatmul.mubr.f32.gmra.mrb[0].mxu0 %v7298
      %v7917 = vpop.f32.mrb[0].mxu0
      %v7918 = vpop.f32.mrb[0].mxu0
      %7919 = vmatprep.mubr.f32.mxu0 0.0
      %7920 = vmatmul.mubr.f32.gmra.mrb[0].mxu0 %v7299
      %v7921 = vpop.f32.mrb[0].mxu0
      %v7922 = vpop.f32.mrb[0].mxu0
      %7923 = vmatprep.mubr.f32.mxu0 0.0
      %7924 = vmatmul.mubr.f32.gmra.mrb[0].mxu0 %v7300
      %v7925 = vpop.f32.mrb[0].mxu0
      %v7926 = vpop.f32.mrb[0].mxu0
      %7927 = vmatprep.mubr.f32.mxu0 0.0
      %7928 = vmatmul.mubr.f32.gmra.mrb[0].mxu0 %v7301
      %v7929 = vpop.f32.mrb[0].mxu0
      %v7930 = vadd.f32 0.0, %v7929
      %v7931 = vpop.f32.mrb[0].mxu0
      %7932 = vdwg.mxu0
      %v8028 = vrot.slane %v7396, 6
      %v8029 = vrot.slane %v7397, 6
      %v8030 = vsel %vm6289, %v8028, %v8029
      %v8031 = vrot.slane %v7398, 6
      %v8032 = vsel %vm6289, %v8029, %v8031
      %v8033 = vrot.slane %v7399, 6
      %v8034 = vsel %vm6289, %v8031, %v8033
      %v8035 = vrot.slane %v7400, 6
      %v8036 = vsel %vm6289, %v8033, %v8035
      %v8037 = vrot.slane %v7401, 6
      %v8038 = vsel %vm6289, %v8035, %v8037
      %v8039 = vrot.slane %v7402, 6
      %v8040 = vsel %vm6289, %v8037, %v8039
      %v8041 = vrot.slane %v7403, 6
      %v8042 = vsel %vm6289, %v8039, %v8041
      %v8043 = vrot.slane %v7404, 6
      %v8044 = vsel %vm6289, %v8041, %v8043
      %v8045 = vrot.slane %v7405, 6
      %v8046 = vsel %vm6289, %v8043, %v8045
      %v8047 = vrot.slane %v7406, 6
      %v8048 = vsel %vm6289, %v8045, %v8047
      %v8049 = vrot.slane %v7407, 6
      %v8050 = vsel %vm6289, %v8047, %v8049
      %v8051 = vrot.slane %v7408, 6
      %v8052 = vsel %vm6289, %v8049, %v8051
      %v8053 = vrot.slane %v7409, 6
      %v8054 = vsel %vm6289, %v8051, %v8053
      %v8055 = vrot.slane %v7410, 6
      %v8056 = vsel %vm6289, %v8053, %v8055
      %v8057 = vrot.slane %v7411, 6
      %v8058 = vsel %vm6289, %v8055, %v8057
      %v8059 = vrot.slane %v7412, 6
      %v8060 = vsel %vm6289, %v8057, %v8059
      %v8061 = vrot.slane %v7413, 6
      %v8062 = vsel %vm6289, %v8059, %v8061
      %v8063 = vrot.slane %v7414, 6
      %v8064 = vsel %vm6289, %v8061, %v8063
      %v8065 = vrot.slane %v7415, 6
      %v8066 = vsel %vm6289, %v8063, %v8065
      %v8067 = vrot.slane %v7416, 6
      %v8068 = vsel %vm6289, %v8065, %v8067
      %v8069 = vrot.slane %v7417, 6
      %v8070 = vsel %vm6289, %v8067, %v8069
      %v8071 = vrot.slane %v7418, 6
      %v8072 = vsel %vm6289, %v8069, %v8071
      %v8073 = vrot.slane %v7419, 6
      %v8074 = vsel %vm6289, %v8071, %v8073
      %v8075 = vrot.slane %v7420, 6
      %v8076 = vsel %vm6289, %v8073, %v8075
      %v8077 = vrot.slane %v7421, 6
      %v8078 = vsel %vm6289, %v8075, %v8077
      %v8079 = vrot.slane %v7422, 6
      %v8080 = vsel %vm6289, %v8077, %v8079
      %v8081 = vrot.slane %v7423, 6
      %v8082 = vsel %vm6289, %v8079, %v8081
      %v8083 = vrot.slane %v7424, 6
      %v8084 = vsel %vm6289, %v8081, %v8083
      %v8085 = vrot.slane %v7425, 6
      %v8086 = vsel %vm6289, %v8083, %v8085
      %v8087 = vrot.slane %v7426, 6
      %v8088 = vsel %vm6289, %v8085, %v8087
      %v8089 = vrot.slane %v7427, 6
      %v8090 = vsel %vm6289, %v8087, %v8089
      %v8091 = vrot.slane %v7428, 6
      %v8092 = vsel %vm6289, %v8089, %v8091
      %v8093 = vrot.slane %v7429, 6
      %v8094 = vsel %vm6289, %v8091, %v8093
      %v8095 = vrot.slane %v7430, 6
      %v8096 = vsel %vm6289, %v8093, %v8095
      %v8097 = vrot.slane %v7431, 6
      %v8098 = vsel %vm6289, %v8095, %v8097
      %v8099 = vrot.slane %v7432, 6
      %v8100 = vsel %vm6289, %v8097, %v8099
      %v8101 = vrot.slane %v7433, 6
      %v8102 = vsel %vm6289, %v8099, %v8101
      %v8103 = vrot.slane %v7434, 6
      %v8104 = vsel %vm6289, %v8101, %v8103
      %v8105 = vrot.slane %v7435, 6
      %v8106 = vsel %vm6289, %v8103, %v8105
      %v8107 = vrot.slane %v7436, 6
      %v8108 = vsel %vm6289, %v8105, %v8107
      %v8109 = vrot.slane %v7437, 6
      %v8110 = vsel %vm6289, %v8107, %v8109
      %v8111 = vrot.slane %v7438, 6
      %v8112 = vsel %vm6289, %v8109, %v8111
      %v8113 = vrot.slane %v7439, 6
      %v8114 = vsel %vm6289, %v8111, %v8113
      %v8115 = vrot.slane %v7440, 6
      %v8116 = vsel %vm6289, %v8113, %v8115
      %v8117 = vrot.slane %v7441, 6
      %v8118 = vsel %vm6289, %v8115, %v8117
      %v8119 = vrot.slane %v7442, 6
      %v8120 = vsel %vm6289, %v8117, %v8119
      %v8121 = vrot.slane %v7443, 6
      %v8122 = vsel %vm6289, %v8119, %v8121
      %v8123 = vrot.slane %v7444, 6
      %v8124 = vsel %vm6289, %v8121, %v8123
      %v8125 = vrot.slane %v7445, 6
      %v8126 = vsel %vm6289, %v8123, %v8125
      %v8127 = vrot.slane %v7446, 6
      %v8128 = vsel %vm6289, %v8125, %v8127
      %v8129 = vrot.slane %v7447, 6
      %v8130 = vsel %vm6289, %v8127, %v8129
      %v8131 = vrot.slane %v7448, 6
      %v8132 = vsel %vm6289, %v8129, %v8131
      %v8133 = vrot.slane %v7449, 6
      %v8134 = vsel %vm6289, %v8131, %v8133
      %v8135 = vrot.slane %v7450, 6
      %v8136 = vsel %vm6289, %v8133, %v8135
      %v8137 = vrot.slane %v7451, 6
      %v8138 = vsel %vm6289, %v8135, %v8137
      %v8139 = vrot.slane %v7452, 6
      %v8140 = vsel %vm6289, %v8137, %v8139
      %v8141 = vrot.slane %v7453, 6
      %v8142 = vsel %vm6289, %v8139, %v8141
      %v8143 = vrot.slane %v7454, 6
      %v8144 = vsel %vm6289, %v8141, %v8143
      %v8145 = vrot.slane %v7455, 6
      %v8146 = vsel %vm6289, %v8143, %v8145
      %v8147 = vrot.slane %v7456, 6
      %v8148 = vsel %vm6289, %v8145, %v8147
      %v8149 = vrot.slane %v7457, 6
      %v8150 = vsel %vm6289, %v8147, %v8149
      %v8151 = vrot.slane %v7458, 6
      %v8152 = vsel %vm6289, %v8149, %v8151
      %v8153 = vrot.slane %v7459, 6
      %v8154 = vsel %vm6289, %v8151, %v8153
      %v8155 = vrot.slane %v7460, 6
      %v8156 = vsel %vm6289, %v8153, %v8155
      %v8157 = vrot.slane %v7461, 6
      %v8158 = vsel %vm6289, %v8155, %v8157
      %v8159 = vrot.slane %v7462, 6
      %v8160 = vsel %vm6289, %v8157, %v8159
      %v8161 = vrot.slane %v7463, 6
      %v8162 = vsel %vm6289, %v8159, %v8161
      %v8163 = vrot.slane %v7464, 6
      %v8164 = vsel %vm6289, %v8161, %v8163
      %v8165 = vrot.slane %v7465, 6
      %v8166 = vsel %vm6289, %v8163, %v8165
      %v8167 = vrot.slane %v7466, 6
      %v8168 = vsel %vm6289, %v8165, %v8167
      %v8169 = vrot.slane %v7467, 6
      %v8170 = vsel %vm6289, %v8167, %v8169
      %v8171 = vrot.slane %v7468, 6
      %v8172 = vsel %vm6289, %v8169, %v8171
      %v8173 = vrot.slane %v7469, 6
      %v8174 = vsel %vm6289, %v8171, %v8173
      %v8175 = vrot.slane %v7470, 6
      %v8176 = vsel %vm6289, %v8173, %v8175
      %v8177 = vrot.slane %v7471, 6
      %v8178 = vsel %vm6289, %v8175, %v8177
      %v8179 = vrot.slane %v7472, 6
      %v8180 = vsel %vm6289, %v8177, %v8179
      %v8181 = vrot.slane %v7473, 6
      %v8182 = vsel %vm6289, %v8179, %v8181
      %v8183 = vrot.slane %v7474, 6
      %v8184 = vsel %vm6289, %v8181, %v8183
      %v8185 = vrot.slane %v7475, 6
      %v8186 = vsel %vm6289, %v8183, %v8185
      %v8187 = vrot.slane %v7476, 6
      %v8188 = vsel %vm6289, %v8185, %v8187
      %v8189 = vrot.slane %v7477, 6
      %v8190 = vsel %vm6289, %v8187, %v8189
      %v8191 = vrot.slane %v7478, 6
      %v8192 = vsel %vm6289, %v8189, %v8191
      %v8193 = vrot.slane %v7479, 6
      %v8194 = vsel %vm6289, %v8191, %v8193
      %v8195 = vrot.slane %v7480, 6
      %v8196 = vsel %vm6289, %v8193, %v8195
      %v8197 = vrot.slane %v7481, 6
      %v8198 = vsel %vm6289, %v8195, %v8197
      %v8199 = vrot.slane %v7482, 6
      %v8200 = vsel %vm6289, %v8197, %v8199
      %v8201 = vrot.slane %v7483, 6
      %v8202 = vsel %vm6289, %v8199, %v8201
      %v8203 = vrot.slane %v7484, 6
      %v8204 = vsel %vm6289, %v8201, %v8203
      %v8205 = vrot.slane %v7485, 6
      %v8206 = vsel %vm6289, %v8203, %v8205
      %v8207 = vrot.slane %v7486, 6
      %v8208 = vsel %vm6289, %v8205, %v8207
      %v8209 = vrot.slane %v7487, 6
      %v8210 = vsel %vm6289, %v8207, %v8209
      %v8211 = vrot.slane %v7488, 6
      %v8212 = vsel %vm6289, %v8209, %v8211
      %v8213 = vrot.slane %v7489, 6
      %v8214 = vsel %vm6289, %v8211, %v8213
      %v8215 = vrot.slane %v7490, 6
      %v8216 = vsel %vm6289, %v8213, %v8215
      %8311 = vmatprep.subr.mxu0 0.0
      %8312 = vmatpush1.msra.mxu0 %v5530
      %8313 = vmatprep.subr.mxu0 0.0
      %8314 = vmatpush1.msra.mxu0 %v5531
      %8315 = vmatprep.subr.mxu0 0.0
      %8316 = vmatpush1.msra.mxu0 %v5532
      %8317 = vmatprep.subr.mxu0 0.0
      %8318 = vmatpush1.msra.mxu0 %v5533
      %8319 = vmatprep.subr.mxu0 0.0
      %8320 = vmatpush1.msra.mxu0 %v5534
      %8321 = vmatprep.subr.mxu0 0.0
      %8322 = vmatpush1.msra.mxu0 %v5535
      %8323 = vmatprep.subr.mxu0 0.0
      %8324 = vmatpush1.msra.mxu0 %v5536
      %8325 = vmatprep.subr.mxu0 0.0
      %8326 = vmatpush1.msra.mxu0 %v5537
      %8327 = vmatprep.subr.mxu0 0.0
      %8328 = vmatpush1.msra.mxu0 %v5538
      %8329 = vmatprep.subr.mxu0 0.0
      %8330 = vmatpush1.msra.mxu0 %v5539
      %8331 = vmatprep.subr.mxu0 0.0
      %8332 = vmatpush1.msra.mxu0 %v5540
      %8333 = vmatprep.subr.mxu0 0.0
      %8334 = vmatpush1.msra.mxu0 %v5541
      %8335 = vmatprep.subr.mxu0 0.0
      %8336 = vmatpush1.msra.mxu0 %v5542
      %8337 = vmatprep.subr.mxu0 0.0
      %8338 = vmatpush1.msra.mxu0 %v5543
      %8339 = vmatprep.subr.mxu0 0.0
      %8340 = vmatpush1.msra.mxu0 %v5544
      %8341 = vmatprep.subr.mxu0 0.0
      %8342 = vmatpush1.msra.mxu0 %v5545
      %8343 = vmatprep.subr.mxu0 0.0
      %8344 = vmatpush1.msra.mxu0 0.0
      %8345 = vmatprep.subr.mxu0 0.0
      %8346 = vmatpush1.msra.mxu0 0.0
      %8347 = vmatprep.subr.mxu0 0.0
      %8348 = vmatpush1.msra.mxu0 0.0
      %8349 = vmatprep.subr.mxu0 0.0
      %8350 = vmatpush1.msra.mxu0 0.0
      %8351 = vmatprep.subr.mxu0 0.0
      %8352 = vmatpush1.msra.mxu0 0.0
      %8353 = vmatprep.subr.mxu0 0.0
      %8354 = vmatpush1.msra.mxu0 0.0
      %8355 = vmatprep.subr.mxu0 0.0
      %8356 = vmatpush1.msra.mxu0 0.0
      %8357 = vmatprep.subr.mxu0 0.0
      %8358 = vmatpush1.msra.mxu0 0.0
      %8359 = vmatprep.subr.mxu0 0.0
      %8360 = vmatpush1.msra.mxu0 0.0
      %8361 = vmatprep.subr.mxu0 0.0
      %8362 = vmatpush1.msra.mxu0 0.0
      %8363 = vmatprep.subr.mxu0 0.0
      %8364 = vmatpush1.msra.mxu0 0.0
      %8365 = vmatprep.subr.mxu0 0.0
      %8366 = vmatpush1.msra.mxu0 0.0
      %8367 = vmatprep.subr.mxu0 0.0
      %8368 = vmatpush1.msra.mxu0 0.0
      %8369 = vmatprep.subr.mxu0 0.0
      %8370 = vmatpush1.msra.mxu0 0.0
      %8371 = vmatprep.subr.mxu0 0.0
      %8372 = vmatpush1.msra.mxu0 0.0
      %8373 = vmatprep.subr.mxu0 0.0
      %8374 = vmatpush1.msra.mxu0 0.0
      %8375 = vmatprep.mubr.f32.mxu0 0.0
      %8376 = vmatmul.mubr.f32.gmra.mrb[0].mxu0 %v8030
      %v8377 = vpop.f32.mrb[0].mxu0
      %v8378 = vpop.f32.mrb[0].mxu0
      %8379 = vmatprep.mubr.f32.mxu0 0.0
      %8380 = vmatmul.mubr.f32.gmra.mrb[0].mxu0 %v8032
      %v8381 = vpop.f32.mrb[0].mxu0
      %v8382 = vpop.f32.mrb[0].mxu0
      %8383 = vmatprep.mubr.f32.mxu0 0.0
      %8384 = vmatmul.mubr.f32.gmra.mrb[0].mxu0 %v8034
      %v8385 = vpop.f32.mrb[0].mxu0
      %v8386 = vpop.f32.mrb[0].mxu0
      %8387 = vmatprep.mubr.f32.mxu0 0.0
      %8388 = vmatmul.mubr.f32.gmra.mrb[0].mxu0 %v8036
      %v8389 = vpop.f32.mrb[0].mxu0
      %v8390 = vpop.f32.mrb[0].mxu0
      %8391 = vmatprep.mubr.f32.mxu0 0.0
      %8392 = vmatmul.mubr.f32.gmra.mrb[0].mxu0 %v8038
      %v8393 = vpop.f32.mrb[0].mxu0
      %v8394 = vpop.f32.mrb[0].mxu0
      %8395 = vmatprep.mubr.f32.mxu0 0.0
      %8396 = vmatmul.mubr.f32.gmra.mrb[0].mxu0 %v8040
      %v8397 = vpop.f32.mrb[0].mxu0
      %v8398 = vpop.f32.mrb[0].mxu0
      %8399 = vmatprep.mubr.f32.mxu0 0.0
      %8400 = vmatmul.mubr.f32.gmra.mrb[0].mxu0 %v8042
      %v8401 = vpop.f32.mrb[0].mxu0
      %v8402 = vpop.f32.mrb[0].mxu0
      %8403 = vmatprep.mubr.f32.mxu0 0.0
      %8404 = vmatmul.mubr.f32.gmra.mrb[0].mxu0 %v8044
      %v8405 = vpop.f32.mrb[0].mxu0
      %v8406 = vpop.f32.mrb[0].mxu0
      %8407 = vmatprep.mubr.f32.mxu0 0.0
      %8408 = vmatmul.mubr.f32.gmra.mrb[0].mxu0 %v8046
      %v8409 = vpop.f32.mrb[0].mxu0
      %v8410 = vpop.f32.mrb[0].mxu0
      %8411 = vmatprep.mubr.f32.mxu0 0.0
      %8412 = vmatmul.mubr.f32.gmra.mrb[0].mxu0 %v8048
      %v8413 = vpop.f32.mrb[0].mxu0
      %v8414 = vpop.f32.mrb[0].mxu0
      %8415 = vmatprep.mubr.f32.mxu0 0.0
      %8416 = vmatmul.mubr.f32.gmra.mrb[0].mxu0 %v8050
      %v8417 = vpop.f32.mrb[0].mxu0
      %v8418 = vpop.f32.mrb[0].mxu0
      %8419 = vmatprep.mubr.f32.mxu0 0.0
      %8420 = vmatmul.mubr.f32.gmra.mrb[0].mxu0 %v8052
      %v8421 = vpop.f32.mrb[0].mxu0
      %v8422 = vpop.f32.mrb[0].mxu0
      %8423 = vmatprep.mubr.f32.mxu0 0.0
      %8424 = vmatmul.mubr.f32.gmra.mrb[0].mxu0 %v8054
      %v8425 = vpop.f32.mrb[0].mxu0
      %v8426 = vpop.f32.mrb[0].mxu0
      %8427 = vmatprep.mubr.f32.mxu0 0.0
      %8428 = vmatmul.mubr.f32.gmra.mrb[0].mxu0 %v8056
      %v8429 = vpop.f32.mrb[0].mxu0
      %v8430 = vpop.f32.mrb[0].mxu0
      %8431 = vmatprep.mubr.f32.mxu0 0.0
      %8432 = vmatmul.mubr.f32.gmra.mrb[0].mxu0 %v8058
      %v8433 = vpop.f32.mrb[0].mxu0
      %v8434 = vpop.f32.mrb[0].mxu0
      %8435 = vmatprep.mubr.f32.mxu0 0.0
      %8436 = vmatmul.mubr.f32.gmra.mrb[0].mxu0 %v8060
      %v8437 = vpop.f32.mrb[0].mxu0
      %v8438 = vpop.f32.mrb[0].mxu0
      %8439 = vmatprep.mubr.f32.mxu0 0.0
      %8440 = vmatmul.mubr.f32.gmra.mrb[0].mxu0 %v8062
      %v8441 = vpop.f32.mrb[0].mxu0
      %v8442 = vpop.f32.mrb[0].mxu0
      %8443 = vmatprep.mubr.f32.mxu0 0.0
      %8444 = vmatmul.mubr.f32.gmra.mrb[0].mxu0 %v8064
      %v8445 = vpop.f32.mrb[0].mxu0
      %v8446 = vpop.f32.mrb[0].mxu0
      %8447 = vmatprep.mubr.f32.mxu0 0.0
      %8448 = vmatmul.mubr.f32.gmra.mrb[0].mxu0 %v8066
      %v8449 = vpop.f32.mrb[0].mxu0
      %v8450 = vpop.f32.mrb[0].mxu0
      %8451 = vmatprep.mubr.f32.mxu0 0.0
      %8452 = vmatmul.mubr.f32.gmra.mrb[0].mxu0 %v8068
      %v8453 = vpop.f32.mrb[0].mxu0
      %v8454 = vpop.f32.mrb[0].mxu0
      %8455 = vmatprep.mubr.f32.mxu0 0.0
      %8456 = vmatmul.mubr.f32.gmra.mrb[0].mxu0 %v8070
      %v8457 = vpop.f32.mrb[0].mxu0
      %v8458 = vpop.f32.mrb[0].mxu0
      %8459 = vmatprep.mubr.f32.mxu0 0.0
      %8460 = vmatmul.mubr.f32.gmra.mrb[0].mxu0 %v8072
      %v8461 = vpop.f32.mrb[0].mxu0
      %v8462 = vpop.f32.mrb[0].mxu0
      %8463 = vmatprep.mubr.f32.mxu0 0.0
      %8464 = vmatmul.mubr.f32.gmra.mrb[0].mxu0 %v8074
      %v8465 = vpop.f32.mrb[0].mxu0
      %v8466 = vpop.f32.mrb[0].mxu0
      %8467 = vmatprep.mubr.f32.mxu0 0.0
      %8468 = vmatmul.mubr.f32.gmra.mrb[0].mxu0 %v8076
      %v8469 = vpop.f32.mrb[0].mxu0
      %v8470 = vpop.f32.mrb[0].mxu0
      %8471 = vmatprep.mubr.f32.mxu0 0.0
      %8472 = vmatmul.mubr.f32.gmra.mrb[0].mxu0 %v8078
      %v8473 = vpop.f32.mrb[0].mxu0
      %v8474 = vpop.f32.mrb[0].mxu0
      %8475 = vmatprep.mubr.f32.mxu0 0.0
      %8476 = vmatmul.mubr.f32.gmra.mrb[0].mxu0 %v8080
      %v8477 = vpop.f32.mrb[0].mxu0
      %v8478 = vpop.f32.mrb[0].mxu0
      %8479 = vmatprep.mubr.f32.mxu0 0.0
      %8480 = vmatmul.mubr.f32.gmra.mrb[0].mxu0 %v8082
      %v8481 = vpop.f32.mrb[0].mxu0
      %v8482 = vpop.f32.mrb[0].mxu0
      %8483 = vmatprep.mubr.f32.mxu0 0.0
      %8484 = vmatmul.mubr.f32.gmra.mrb[0].mxu0 %v8084
      %v8485 = vpop.f32.mrb[0].mxu0
      %v8486 = vpop.f32.mrb[0].mxu0
      %8487 = vmatprep.mubr.f32.mxu0 0.0
      %8488 = vmatmul.mubr.f32.gmra.mrb[0].mxu0 %v8086
      %v8489 = vpop.f32.mrb[0].mxu0
      %v8490 = vpop.f32.mrb[0].mxu0
      %8491 = vmatprep.mubr.f32.mxu0 0.0
      %8492 = vmatmul.mubr.f32.gmra.mrb[0].mxu0 %v8088
      %v8493 = vpop.f32.mrb[0].mxu0
      %v8494 = vpop.f32.mrb[0].mxu0
      %8495 = vmatprep.mubr.f32.mxu0 0.0
      %8496 = vmatmul.mubr.f32.gmra.mrb[0].mxu0 %v8090
      %v8497 = vpop.f32.mrb[0].mxu0
      %v8498 = vpop.f32.mrb[0].mxu0
      %8499 = vmatprep.mubr.f32.mxu0 0.0
      %8500 = vmatmul.mubr.f32.gmra.mrb[0].mxu0 %v8092
      %v8501 = vpop.f32.mrb[0].mxu0
      %v8502 = vpop.f32.mrb[0].mxu0
      %8503 = vmatprep.mubr.f32.mxu0 0.0
      %8504 = vmatmul.mubr.f32.gmra.mrb[0].mxu0 %v8094
      %v8505 = vpop.f32.mrb[0].mxu0
      %v8506 = vpop.f32.mrb[0].mxu0
      %8507 = vmatprep.mubr.f32.mxu0 0.0
      %8508 = vmatmul.mubr.f32.gmra.mrb[0].mxu0 %v8096
      %v8509 = vpop.f32.mrb[0].mxu0
      %v8510 = vpop.f32.mrb[0].mxu0
      %8511 = vmatprep.mubr.f32.mxu0 0.0
      %8512 = vmatmul.mubr.f32.gmra.mrb[0].mxu0 %v8098
      %v8513 = vpop.f32.mrb[0].mxu0
      %v8514 = vpop.f32.mrb[0].mxu0
      %8515 = vmatprep.mubr.f32.mxu0 0.0
      %8516 = vmatmul.mubr.f32.gmra.mrb[0].mxu0 %v8100
      %v8517 = vpop.f32.mrb[0].mxu0
      %v8518 = vpop.f32.mrb[0].mxu0
      %8519 = vmatprep.mubr.f32.mxu0 0.0
      %8520 = vmatmul.mubr.f32.gmra.mrb[0].mxu0 %v8102
      %v8521 = vpop.f32.mrb[0].mxu0
      %v8522 = vpop.f32.mrb[0].mxu0
      %8523 = vmatprep.mubr.f32.mxu0 0.0
      %8524 = vmatmul.mubr.f32.gmra.mrb[0].mxu0 %v8104
      %v8525 = vpop.f32.mrb[0].mxu0
      %v8526 = vpop.f32.mrb[0].mxu0
      %8527 = vmatprep.mubr.f32.mxu0 0.0
      %8528 = vmatmul.mubr.f32.gmra.mrb[0].mxu0 %v8106
      %v8529 = vpop.f32.mrb[0].mxu0
      %v8530 = vpop.f32.mrb[0].mxu0
      %8531 = vmatprep.mubr.f32.mxu0 0.0
      %8532 = vmatmul.mubr.f32.gmra.mrb[0].mxu0 %v8108
      %v8533 = vpop.f32.mrb[0].mxu0
      %v8534 = vpop.f32.mrb[0].mxu0
      %8535 = vmatprep.mubr.f32.mxu0 0.0
      %8536 = vmatmul.mubr.f32.gmra.mrb[0].mxu0 %v8110
      %v8537 = vpop.f32.mrb[0].mxu0
      %v8538 = vpop.f32.mrb[0].mxu0
      %8539 = vmatprep.mubr.f32.mxu0 0.0
      %8540 = vmatmul.mubr.f32.gmra.mrb[0].mxu0 %v8112
      %v8541 = vpop.f32.mrb[0].mxu0
      %v8542 = vpop.f32.mrb[0].mxu0
      %8543 = vmatprep.mubr.f32.mxu0 0.0
      %8544 = vmatmul.mubr.f32.gmra.mrb[0].mxu0 %v8114
      %v8545 = vpop.f32.mrb[0].mxu0
      %v8546 = vpop.f32.mrb[0].mxu0
      %8547 = vmatprep.mubr.f32.mxu0 0.0
      %8548 = vmatmul.mubr.f32.gmra.mrb[0].mxu0 %v8116
      %v8549 = vpop.f32.mrb[0].mxu0
      %v8550 = vpop.f32.mrb[0].mxu0
      %8551 = vmatprep.mubr.f32.mxu0 0.0
      %8552 = vmatmul.mubr.f32.gmra.mrb[0].mxu0 %v8118
      %v8553 = vpop.f32.mrb[0].mxu0
      %v8554 = vpop.f32.mrb[0].mxu0
      %8555 = vmatprep.mubr.f32.mxu0 0.0
      %8556 = vmatmul.mubr.f32.gmra.mrb[0].mxu0 %v8120
      %v8557 = vpop.f32.mrb[0].mxu0
      %v8558 = vpop.f32.mrb[0].mxu0
      %8559 = vmatprep.mubr.f32.mxu0 0.0
      %8560 = vmatmul.mubr.f32.gmra.mrb[0].mxu0 %v8122
      %v8561 = vpop.f32.mrb[0].mxu0
      %v8562 = vpop.f32.mrb[0].mxu0
      %8563 = vmatprep.mubr.f32.mxu0 0.0
      %8564 = vmatmul.mubr.f32.gmra.mrb[0].mxu0 %v8124
      %v8565 = vpop.f32.mrb[0].mxu0
      %v8566 = vpop.f32.mrb[0].mxu0
      %8567 = vmatprep.mubr.f32.mxu0 0.0
      %8568 = vmatmul.mubr.f32.gmra.mrb[0].mxu0 %v8126
      %v8569 = vpop.f32.mrb[0].mxu0
      %v8570 = vpop.f32.mrb[0].mxu0
      %8571 = vmatprep.mubr.f32.mxu0 0.0
      %8572 = vmatmul.mubr.f32.gmra.mrb[0].mxu0 %v8128
      %v8573 = vpop.f32.mrb[0].mxu0
      %v8574 = vpop.f32.mrb[0].mxu0
      %8575 = vmatprep.mubr.f32.mxu0 0.0
      %8576 = vmatmul.mubr.f32.gmra.mrb[0].mxu0 %v8130
      %v8577 = vpop.f32.mrb[0].mxu0
      %v8578 = vpop.f32.mrb[0].mxu0
      %8579 = vmatprep.mubr.f32.mxu0 0.0
      %8580 = vmatmul.mubr.f32.gmra.mrb[0].mxu0 %v8132
      %v8581 = vpop.f32.mrb[0].mxu0
      %v8582 = vpop.f32.mrb[0].mxu0
      %8583 = vmatprep.mubr.f32.mxu0 0.0
      %8584 = vmatmul.mubr.f32.gmra.mrb[0].mxu0 %v8134
      %v8585 = vpop.f32.mrb[0].mxu0
      %v8586 = vpop.f32.mrb[0].mxu0
      %8587 = vmatprep.mubr.f32.mxu0 0.0
      %8588 = vmatmul.mubr.f32.gmra.mrb[0].mxu0 %v8136
      %v8589 = vpop.f32.mrb[0].mxu0
      %v8590 = vpop.f32.mrb[0].mxu0
      %8591 = vmatprep.mubr.f32.mxu0 0.0
      %8592 = vmatmul.mubr.f32.gmra.mrb[0].mxu0 %v8138
      %v8593 = vpop.f32.mrb[0].mxu0
      %v8594 = vpop.f32.mrb[0].mxu0
      %8595 = vmatprep.mubr.f32.mxu0 0.0
      %8596 = vmatmul.mubr.f32.gmra.mrb[0].mxu0 %v8140
      %v8597 = vpop.f32.mrb[0].mxu0
      %v8598 = vpop.f32.mrb[0].mxu0
      %8599 = vmatprep.mubr.f32.mxu0 0.0
      %8600 = vmatmul.mubr.f32.gmra.mrb[0].mxu0 %v8142
      %v8601 = vpop.f32.mrb[0].mxu0
      %v8602 = vpop.f32.mrb[0].mxu0
      %8603 = vmatprep.mubr.f32.mxu0 0.0
      %8604 = vmatmul.mubr.f32.gmra.mrb[0].mxu0 %v8144
      %v8605 = vpop.f32.mrb[0].mxu0
      %v8606 = vpop.f32.mrb[0].mxu0
      %8607 = vmatprep.mubr.f32.mxu0 0.0
      %8608 = vmatmul.mubr.f32.gmra.mrb[0].mxu0 %v8146
      %v8609 = vpop.f32.mrb[0].mxu0
      %v8610 = vpop.f32.mrb[0].mxu0
      %8611 = vmatprep.mubr.f32.mxu0 0.0
      %8612 = vmatmul.mubr.f32.gmra.mrb[0].mxu0 %v8148
      %v8613 = vpop.f32.mrb[0].mxu0
      %v8614 = vpop.f32.mrb[0].mxu0
      %8615 = vmatprep.mubr.f32.mxu0 0.0
      %8616 = vmatmul.mubr.f32.gmra.mrb[0].mxu0 %v8150
      %v8617 = vpop.f32.mrb[0].mxu0
      %v8618 = vpop.f32.mrb[0].mxu0
      %8619 = vmatprep.mubr.f32.mxu0 0.0
      %8620 = vmatmul.mubr.f32.gmra.mrb[0].mxu0 %v8152
      %v8621 = vpop.f32.mrb[0].mxu0
      %v8622 = vpop.f32.mrb[0].mxu0
      %8623 = vmatprep.mubr.f32.mxu0 0.0
      %8624 = vmatmul.mubr.f32.gmra.mrb[0].mxu0 %v8154
      %v8625 = vpop.f32.mrb[0].mxu0
      %v8626 = vpop.f32.mrb[0].mxu0
      %8627 = vmatprep.mubr.f32.mxu0 0.0
      %8628 = vmatmul.mubr.f32.gmra.mrb[0].mxu0 %v8156
      %v8629 = vpop.f32.mrb[0].mxu0
      %v8630 = vpop.f32.mrb[0].mxu0
      %8631 = vmatprep.mubr.f32.mxu0 0.0
      %8632 = vmatmul.mubr.f32.gmra.mrb[0].mxu0 %v8158
      %v8633 = vpop.f32.mrb[0].mxu0
      %v8634 = vpop.f32.mrb[0].mxu0
      %8635 = vmatprep.mubr.f32.mxu0 0.0
      %8636 = vmatmul.mubr.f32.gmra.mrb[0].mxu0 %v8160
      %v8637 = vpop.f32.mrb[0].mxu0
      %v8638 = vpop.f32.mrb[0].mxu0
      %8639 = vmatprep.mubr.f32.mxu0 0.0
      %8640 = vmatmul.mubr.f32.gmra.mrb[0].mxu0 %v8162
      %v8641 = vpop.f32.mrb[0].mxu0
      %v8642 = vpop.f32.mrb[0].mxu0
      %8643 = vmatprep.mubr.f32.mxu0 0.0
      %8644 = vmatmul.mubr.f32.gmra.mrb[0].mxu0 %v8164
      %v8645 = vpop.f32.mrb[0].mxu0
      %v8646 = vpop.f32.mrb[0].mxu0
      %8647 = vmatprep.mubr.f32.mxu0 0.0
      %8648 = vmatmul.mubr.f32.gmra.mrb[0].mxu0 %v8166
      %v8649 = vpop.f32.mrb[0].mxu0
      %v8650 = vpop.f32.mrb[0].mxu0
      %8651 = vmatprep.mubr.f32.mxu0 0.0
      %8652 = vmatmul.mubr.f32.gmra.mrb[0].mxu0 %v8168
      %v8653 = vpop.f32.mrb[0].mxu0
      %v8654 = vpop.f32.mrb[0].mxu0
      %8655 = vmatprep.mubr.f32.mxu0 0.0
      %8656 = vmatmul.mubr.f32.gmra.mrb[0].mxu0 %v8170
      %v8657 = vpop.f32.mrb[0].mxu0
      %v8658 = vpop.f32.mrb[0].mxu0
      %8659 = vmatprep.mubr.f32.mxu0 0.0
      %8660 = vmatmul.mubr.f32.gmra.mrb[0].mxu0 %v8172
      %v8661 = vpop.f32.mrb[0].mxu0
      %v8662 = vpop.f32.mrb[0].mxu0
      %8663 = vmatprep.mubr.f32.mxu0 0.0
      %8664 = vmatmul.mubr.f32.gmra.mrb[0].mxu0 %v8174
      %v8665 = vpop.f32.mrb[0].mxu0
      %v8666 = vpop.f32.mrb[0].mxu0
      %8667 = vmatprep.mubr.f32.mxu0 0.0
      %8668 = vmatmul.mubr.f32.gmra.mrb[0].mxu0 %v8176
      %v8669 = vpop.f32.mrb[0].mxu0
      %v8670 = vpop.f32.mrb[0].mxu0
      %8671 = vmatprep.mubr.f32.mxu0 0.0
      %8672 = vmatmul.mubr.f32.gmra.mrb[0].mxu0 %v8178
      %v8673 = vpop.f32.mrb[0].mxu0
      %v8674 = vpop.f32.mrb[0].mxu0
      %8675 = vmatprep.mubr.f32.mxu0 0.0
      %8676 = vmatmul.mubr.f32.gmra.mrb[0].mxu0 %v8180
      %v8677 = vpop.f32.mrb[0].mxu0
      %v8678 = vpop.f32.mrb[0].mxu0
      %8679 = vmatprep.mubr.f32.mxu0 0.0
      %8680 = vmatmul.mubr.f32.gmra.mrb[0].mxu0 %v8182
      %v8681 = vpop.f32.mrb[0].mxu0
      %v8682 = vpop.f32.mrb[0].mxu0
      %8683 = vmatprep.mubr.f32.mxu0 0.0
      %8684 = vmatmul.mubr.f32.gmra.mrb[0].mxu0 %v8184
      %v8685 = vpop.f32.mrb[0].mxu0
      %v8686 = vpop.f32.mrb[0].mxu0
      %8687 = vmatprep.mubr.f32.mxu0 0.0
      %8688 = vmatmul.mubr.f32.gmra.mrb[0].mxu0 %v8186
      %v8689 = vpop.f32.mrb[0].mxu0
      %v8690 = vpop.f32.mrb[0].mxu0
      %8691 = vmatprep.mubr.f32.mxu0 0.0
      %8692 = vmatmul.mubr.f32.gmra.mrb[0].mxu0 %v8188
      %v8693 = vpop.f32.mrb[0].mxu0
      %v8694 = vpop.f32.mrb[0].mxu0
      %8695 = vmatprep.mubr.f32.mxu0 0.0
      %8696 = vmatmul.mubr.f32.gmra.mrb[0].mxu0 %v8190
      %v8697 = vpop.f32.mrb[0].mxu0
      %v8698 = vpop.f32.mrb[0].mxu0
      %8699 = vmatprep.mubr.f32.mxu0 0.0
      %8700 = vmatmul.mubr.f32.gmra.mrb[0].mxu0 %v8192
      %v8701 = vpop.f32.mrb[0].mxu0
      %v8702 = vpop.f32.mrb[0].mxu0
      %8703 = vmatprep.mubr.f32.mxu0 0.0
      %8704 = vmatmul.mubr.f32.gmra.mrb[0].mxu0 %v8194
      %v8705 = vpop.f32.mrb[0].mxu0
      %v8706 = vpop.f32.mrb[0].mxu0
      %8707 = vmatprep.mubr.f32.mxu0 0.0
      %8708 = vmatmul.mubr.f32.gmra.mrb[0].mxu0 %v8196
      %v8709 = vpop.f32.mrb[0].mxu0
      %v8710 = vpop.f32.mrb[0].mxu0
      %8711 = vmatprep.mubr.f32.mxu0 0.0
      %8712 = vmatmul.mubr.f32.gmra.mrb[0].mxu0 %v8198
      %v8713 = vpop.f32.mrb[0].mxu0
      %v8714 = vpop.f32.mrb[0].mxu0
      %8715 = vmatprep.mubr.f32.mxu0 0.0
      %8716 = vmatmul.mubr.f32.gmra.mrb[0].mxu0 %v8200
      %v8717 = vpop.f32.mrb[0].mxu0
      %v8718 = vpop.f32.mrb[0].mxu0
      %8719 = vmatprep.mubr.f32.mxu0 0.0
      %8720 = vmatmul.mubr.f32.gmra.mrb[0].mxu0 %v8202
      %v8721 = vpop.f32.mrb[0].mxu0
      %v8722 = vpop.f32.mrb[0].mxu0
      %8723 = vmatprep.mubr.f32.mxu0 0.0
      %8724 = vmatmul.mubr.f32.gmra.mrb[0].mxu0 %v8204
      %v8725 = vpop.f32.mrb[0].mxu0
      %v8726 = vpop.f32.mrb[0].mxu0
      %8727 = vmatprep.mubr.f32.mxu0 0.0
      %8728 = vmatmul.mubr.f32.gmra.mrb[0].mxu0 %v8206
      %v8729 = vpop.f32.mrb[0].mxu0
      %v8730 = vpop.f32.mrb[0].mxu0
      %8731 = vmatprep.mubr.f32.mxu0 0.0
      %8732 = vmatmul.mubr.f32.gmra.mrb[0].mxu0 %v8208
      %v8733 = vpop.f32.mrb[0].mxu0
      %v8734 = vpop.f32.mrb[0].mxu0
      %8735 = vmatprep.mubr.f32.mxu0 0.0
      %8736 = vmatmul.mubr.f32.gmra.mrb[0].mxu0 %v8210
      %v8737 = vpop.f32.mrb[0].mxu0
      %v8738 = vpop.f32.mrb[0].mxu0
      %8739 = vmatprep.mubr.f32.mxu0 0.0
      %8740 = vmatmul.mubr.f32.gmra.mrb[0].mxu0 %v8212
      %v8741 = vpop.f32.mrb[0].mxu0
      %v8742 = vpop.f32.mrb[0].mxu0
      %8743 = vmatprep.mubr.f32.mxu0 0.0
      %8744 = vmatmul.mubr.f32.gmra.mrb[0].mxu0 %v8214
      %v8745 = vpop.f32.mrb[0].mxu0
      %v8746 = vpop.f32.mrb[0].mxu0
      %8747 = vmatprep.mubr.f32.mxu0 0.0
      %8748 = vmatmul.mubr.f32.gmra.mrb[0].mxu0 %v8216
      %v8749 = vpop.f32.mrb[0].mxu0
      %v8750 = vadd.f32 %v7930, %v8749
      %v8751 = vpop.f32.mrb[0].mxu0
      %8752 = vdwg.mxu0
      %v8754 = vlaneseq
      %v8755 = vshrl.u32 %v8754, 7
      %v8756 = vsub.s32 0, %v8755
      %v8757 = vrot.slane %v5562, %v8756
      %v8759 = vadd.f32 %v8750, %v8757
      %v8760 = vmax.f32 %v8759, 0.0
      %v8761 = vadd.f32 %v8760, %v5658
      %v8762 = vmax.f32 %v8761, 0.0
      %8763 = vst [vmem:[%s492] sm:$0xff] %v8762
      %p8764 = scmp.lt.s32.totalorder %s26, 1
      %s8765 = scalar_select %p8764, %s26, 1
      %s8766 = smul.addr %s8765, 8
      %s8767 = scalar_lea.vmem %s15, %s8766
      // Predicated region
      $region81: #{tcn_forward.1} parent=79 // pred_check
        %p8768 = pneg %p364
      $region82: #{tcn_forward.1} parent=79 // pred_check_branch
        %8770 = sbr.rel (%p8768) target = $region84
      $region83: #{tcn_forward.1} parent=79 // pred_region
        _
      $region84: #{tcn_forward.1} parent=79 // pred_fallthru
        _
    $region80: #{tcn_forward.1} parent=5 // pred_fallthru
      _
    %p8771 = scmp.le.s32.totalorder 2, %s21
    // Predicated region
    $region85: #{tcn_forward.1} parent=5 // pred_check
      %p8772 = pneg %p8771
    $region86: #{tcn_forward.1} parent=5 // pred_check_branch
      %8774 = sbr.rel (%p8772) target = $region88
    $region87: #{tcn_forward.1} parent=5 // pred_region
      %s8775 = ssub.s32 %s21, 2
      // Predicated region
      $region89: #{tcn_forward.1} parent=87 // pred_check
        %p8776 = pneg %p370
      $region90: #{tcn_forward.1} parent=87 // pred_check_branch
        %8778 = sbr.rel (%p8776) target = $region92
      $region91: #{tcn_forward.1} parent=87 // pred_region
        %p8779 = scmp.lt.s32.totalorder %s27, 1
        %s8780 = scalar_select %p8779, %s27, 1
        %s8781 = smul.addr %s8780, 8
        %s8782 = scalar_lea.vmem %s15, %s8781
      $region92: #{tcn_forward.1} parent=87 // pred_fallthru
        _
    $region88: #{tcn_forward.1} parent=5 // pred_fallthru
      _
  $region6: #{tcn_forward.1} parent=0 // loop_footer
    %s25 = sadd.s32 1, %s21
  $region7: #{tcn_forward.1} parent=0 // loop_footer_branch
    %20 = sbr.rel target = $region3
  $region8: #{tcn_forward.1} parent=0 // loop_exit
    _

</llo_original>
